<compile_context>
chip_gen: v7x
topology: tpu7x:2x2x1
jax: 0.10.0
libtpu: 0.0.40
codegen_flags: <defaults>
</compile_context>

<pallas_src>
import functools

import jax
import jax.numpy as jnp
from jax import lax
from jax.experimental import pallas as pl
from jax.experimental.pallas import tpu as pltpu


def _round_up(x, m):
    return (x + m - 1) // m * m


def _silu(x):
    # x * sigmoid(x); reciprocal on the EUP instead of a VALU divide.
    return x * pl.reciprocal(1.0 + jnp.exp(-x), approx=True)


def _bottleneck_kernel(xp_ref, xr_ref, w1_ref, b1_ref, w2_ref, b2_ref,
                       out_ref, y1_ref,
                       *, H, W, C1, Cm, C2, TR, WQ, L1, L2, LY1):
    """One (image, row-tile) step of the fused Bottleneck.

    xp_ref:  (1, HP, WQ, C1) bf16  zero-padded input (image at rows/cols +2)
    xr_ref:  (1, TR, W, C1)  f32   residual rows of this tile
    w1_ref:  (9, C1, Cm)     bf16  conv1 weights (BN1 scale folded in)
    b1_ref:  (1, Cm)         f32   folded BN1 offset
    w2_ref:  (9, Cm, C2)     bf16  conv2 weights (BN2 scale folded in)
    b2_ref:  (1, C2)         f32   folded BN2 offset
    out_ref: (1, TR, W, C2)        output rows of this tile
    y1_ref:  (LY1, Cm)       bf16  conv1 output band, flat (TR+2, WQ) + slack
    """
    r = pl.program_id(1)
    s = pl.multiple_of(r * TR, TR)            # first output row of this tile

    # ---- conv1 (+BN1+SiLU) on the band: y1[a, b] <-> image (s-1+a, b-1) ----
    acc1 = jnp.zeros((L1, Cm), jnp.float32)
    for dy in range(3):
        # Aligned row-band load (leading-dim slice); flatten is layout-free
        # because WQ is a multiple of the bf16 sublane tile (16).
        band = xp_ref[0, pl.ds(s + dy, TR + 3), :, :].reshape((TR + 3) * WQ, C1)
        for dx in range(3):
            # TODO(synk): move the dx shift onto the XLU (pltpu.roll) or
            # pre-build the 3 column-shifted copies once per step.
            acc1 = acc1 + jnp.dot(band[dx:dx + L1, :], w1_ref[3 * dy + dx],
                                  preferred_element_type=jnp.float32)
    y1 = _silu(acc1 + b1_ref[...]).reshape(TR + 2, WQ, Cm)

    # Zero positions outside the real image so conv2 sees true zero padding
    # (replaces the old full-image mask multiply; also handles padded tail rows).
    a_ids = lax.broadcasted_iota(jnp.int32, (TR + 2, WQ, 1), 0)
    b_ids = lax.broadcasted_iota(jnp.int32, (TR + 2, WQ, 1), 1)
    row_ok = (a_ids + (s - 1) >= 0) & (a_ids + (s - 1) < H)
    col_ok = (b_ids >= 1) & (b_ids < W + 1)
    y1 = jnp.where(row_ok & col_ok, y1, 0.0)

    y1_ref[0:L1, :] = y1.reshape(L1, Cm).astype(y1_ref.dtype)
    y1_ref[L1:LY1, :] = jnp.zeros((LY1 - L1, Cm), y1_ref.dtype)   # slack tail

    # ---- conv2 (+BN2+SiLU) + residual for output rows [s, s+TR) ----
    acc2 = jnp.zeros((L2, C2), jnp.float32)
    for dy in range(3):
        base = dy * WQ                                     # 16-row aligned
        band = y1_ref[base:base + L2 + 16, :]
        for dx in range(3):
            acc2 = acc2 + jnp.dot(band[dx:dx + L2, :], w2_ref[3 * dy + dx],
                                  preferred_element_type=jnp.float32)
    y2 = _silu(acc2 + b2_ref[...]).reshape(TR, WQ, C2)[:, 0:W, :]
    out_ref[0, :, :, :] = (xr_ref[0, :, :, :] + y2).astype(out_ref.dtype)


def bottleneck_forward(x, params, *, eps=1e-5):
    """Fused Bottleneck forward.  x: (N, H, W, C1) float32, channels-last."""
    N, H, W, C1 = x.shape
    w1 = params["cv1_w"]                      # (Cm, C1, 3, 3) PyTorch layout
    w2 = params["cv2_w"]                      # (C2, Cm, 3, 3)
    Cm, C2 = w1.shape[0], w2.shape[0]
    assert w1.shape[1] == C1 and w2.shape[1] == Cm
    assert C1 == C2, "shortcut add requires c1 == c2"

    # Fold eval-mode BatchNorm into conv weights / bias; weights go bf16.
    s1 = params["bn1_gamma"] / jnp.sqrt(params["bn1_var"] + eps)
    o1 = params["bn1_beta"] - params["bn1_mean"] * s1
    s2 = params["bn2_gamma"] / jnp.sqrt(params["bn2_var"] + eps)
    o2 = params["bn2_beta"] - params["bn2_mean"] * s2
    # (Cout, Cin, ky, kx) -> (ky, kx, Cin, Cout) -> (9, Cin, Cout)
    w1f = (jnp.transpose(w1, (2, 3, 1, 0)) * s1).reshape(9, C1, Cm).astype(jnp.bfloat16)
    w2f = (jnp.transpose(w2, (2, 3, 1, 0)) * s2).reshape(9, Cm, C2).astype(jnp.bfloat16)
    b1f = o1.reshape(1, Cm).astype(jnp.float32)
    b2f = o2.reshape(1, C2).astype(jnp.float32)

    TR = 8                                    # output rows per grid step
    HQ = _round_up(H, TR)                     # grid-padded height
    WQ = _round_up(W + 4, 16)                 # padded width (bf16 sublane tile)
    HP = HQ + 5                               # padded input rows (2-halo + band slack)
    L1 = (TR + 2) * WQ                        # conv1 band positions per step
    L2 = TR * WQ                              # conv2 band positions per step
    LY1 = L1 + 16                             # y1 scratch rows (+ aligned slack)

    # Zero-padded bf16 copy of x for the conv path (image at +2,+2); the f32
    # residual path streams rows straight from the (grid-padded) original x.
    xp = jnp.zeros((N, HP, WQ, C1), jnp.bfloat16)
    xp = xp.at[:, 2:2 + H, 2:2 + W, :].set(x.astype(jnp.bfloat16))
    xr = x if HQ == H else jnp.pad(x, ((0, 0), (0, HQ - H), (0, 0), (0, 0)))

    # VMEM budget (double-buffered pipeline blocks + scratch) and explicit limit,
    # kept under v7x's 64 MiB physical VMEM (v5e/v6e have 128 MiB).
    vmem_bytes = (2 * HP * WQ * C1 * 2            # xp block (bf16), double-buffered
                  + 2 * TR * W * C1 * 4           # residual rows (f32)
                  + 2 * TR * W * C2 * 4           # output block (f32)
                  + LY1 * Cm * 2                  # y1 band scratch (bf16)
                  + 2 * 9 * (C1 * Cm + Cm * C2) * 2 + 2 * (Cm + C2) * 4)
    assert vmem_bytes < (52 << 20), (
        "feature map too large for the whole-image VMEM plan; band xp from HBM")
    vmem_limit = int(min(56 << 20, max(32 << 20, 2 * vmem_bytes)))

    kernel = functools.partial(_bottleneck_kernel, H=H, W=W, C1=C1, Cm=Cm, C2=C2,
                               TR=TR, WQ=WQ, L1=L1, L2=L2, LY1=LY1)

    out = pl.pallas_call(
        kernel,
        out_shape=jax.ShapeDtypeStruct((N, HQ, W, C2), x.dtype),
        grid=(N, HQ // TR),
        in_specs=[
            pl.BlockSpec((1, HP, WQ, C1), lambda n, r: (n, 0, 0, 0)),  # padded x (bf16)
            pl.BlockSpec((1, TR, W, C1), lambda n, r: (n, r, 0, 0)),   # residual rows
            pl.BlockSpec((9, C1, Cm), lambda n, r: (0, 0, 0)),         # folded conv1 w
            pl.BlockSpec((1, Cm), lambda n, r: (0, 0)),                # folded conv1 b
            pl.BlockSpec((9, Cm, C2), lambda n, r: (0, 0, 0)),         # folded conv2 w
            pl.BlockSpec((1, C2), lambda n, r: (0, 0)),                # folded conv2 b
        ],
        out_specs=pl.BlockSpec((1, TR, W, C2), lambda n, r: (n, r, 0, 0)),
        scratch_shapes=[pltpu.VMEM((LY1, Cm), jnp.bfloat16)],          # conv1 band
        compiler_params=pltpu.CompilerParams(
            # Row tiles are now fully independent (banded conv1), so both grid
            # axes can feed both TensorCores.
            dimension_semantics=("parallel", "parallel"),
            vmem_limit_bytes=vmem_limit),
    )(xp, xr, w1f, b1f, w2f, b2f)
    return out if HQ == H else out[:, :H]


def make_params(key, c1, c2, e=0.5):
    """Deterministic synthetic parameters matching Bottleneck(c1, c2)."""
    cm = int(c2 * e)
    ks = jax.random.split(key, 10)

    def bn(k0, k1, k2, k3, c):
        return (1.0 + 0.1 * jax.random.normal(k0, (c,), jnp.float32),      # gamma
                0.1 * jax.random.normal(k1, (c,), jnp.float32),            # beta
                0.1 * jax.random.normal(k2, (c,), jnp.float32),            # run. mean
                1.0 + jnp.abs(jax.random.normal(k3, (c,), jnp.float32)))   # run. var

    g1, b1, m1, v1 = bn(ks[0], ks[1], ks[2], ks[3], cm)
    g2, b2, m2, v2 = bn(ks[4], ks[5], ks[6], ks[7], c2)
    w1 = 0.1 * jax.random.normal(ks[8], (cm, c1, 3, 3), jnp.float32)
    w2 = 0.1 * jax.random.normal(ks[9], (c2, cm, 3, 3), jnp.float32)
    return dict(cv1_w=w1, cv2_w=w2,
                bn1_gamma=g1, bn1_beta=b1, bn1_mean=m1, bn1_var=v1,
                bn2_gamma=g2, bn2_beta=b2, bn2_mean=m2, bn2_var=v2)


def reference_forward(x, params, *, eps=1e-5):
    """Independent pure-JAX f32 reference (lax.conv + explicit eval-mode BN)."""
    def conv_bn_silu(h, w_torch, g, b, mu, var):
        w_hwio = jnp.transpose(w_torch, (2, 3, 1, 0))
        y = lax.conv_general_dilated(
            h, w_hwio, window_strides=(1, 1), padding="SAME",
            dimension_numbers=("NHWC", "HWIO", "NHWC"))
        y = (y - mu) / jnp.sqrt(var + eps) * g + b
        return jax.nn.silu(y)

    y = conv_bn_silu(x, params["cv1_w"], params["bn1_gamma"], params["bn1_beta"],
                     params["bn1_mean"], params["bn1_var"])
    y = conv_bn_silu(y, params["cv2_w"], params["bn2_gamma"], params["bn2_beta"],
                     params["bn2_mean"], params["bn2_var"])
    return x + y


if __name__ == "__main__":
    key = jax.random.PRNGKey(0)
    kx, kp = jax.random.split(key)
    N, H, W, C = 2, 16, 16, 4                 # Bottleneck(c1=4, c2=4), c_ = 2
    x = jax.random.normal(kx, (N, H, W, C), jnp.float32)
    params = make_params(kp, C, C)

    out = jax.block_until_ready(bottleneck_forward(x, params))
    ref = jax.block_until_ready(reference_forward(x, params))

    assert out.shape == ref.shape == (N, H, W, C)
    # Conv path runs in bf16 (f32 accumulation / residual), so compare against
    # the f32 reference with a bf16-appropriate tolerance.
    max_err = float(jnp.max(jnp.abs(out - ref)))
    assert max_err < 6e-2, f"max abs err {max_err}"
    print("KERNEL_OK")
</pallas_src>

<mosaic_0001>
module attributes {stable_mosaic.version = 11 : i64} {
  func.func @_bottleneck_kernel(%arg0: i32, %arg1: i32, %arg2: memref<1x21x32x4xbf16, #tpu.memory_space<vmem>>, %arg3: memref<1x8x16x4xf32, #tpu.memory_space<vmem>>, %arg4: memref<9x4x2xbf16, #tpu.memory_space<vmem>>, %arg5: memref<1x2xf32, #tpu.memory_space<vmem>>, %arg6: memref<9x2x4xbf16, #tpu.memory_space<vmem>>, %arg7: memref<1x4xf32, #tpu.memory_space<vmem>>, %arg8: memref<1x8x16x4xf32, #tpu.memory_space<vmem>>, %arg9: memref<336x2xbf16, #tpu.memory_space<vmem>>) attributes {dimension_semantics = [#tpu.dimension_semantics<parallel>, #tpu.dimension_semantics<parallel>], iteration_bounds = array<i64: 2, 2>, scalar_prefetch = 0 : i64, scratch_operands = 1 : i64, tpu.core_type = #tpu.core_type<tc>, window_params = [{transform_indices = @transform_0, window_bounds = array<i64: 1, 21, 32, 4>}, {transform_indices = @transform_1, window_bounds = array<i64: 1, 8, 16, 4>}, {pipeline_mode = #tpu.pipeline_mode<synchronous>, transform_indices = @transform_2, window_bounds = array<i64: 9, 4, 2>}, {pipeline_mode = #tpu.pipeline_mode<synchronous>, transform_indices = @transform_3, window_bounds = array<i64: 1, 2>}, {pipeline_mode = #tpu.pipeline_mode<synchronous>, transform_indices = @transform_4, window_bounds = array<i64: 9, 2, 4>}, {pipeline_mode = #tpu.pipeline_mode<synchronous>, transform_indices = @transform_5, window_bounds = array<i64: 1, 4>}, {transform_indices = @transform_6, window_bounds = array<i64: 1, 8, 16, 4>}]} {
    %c8_i32 = arith.constant 8 : i32
    %0 = arith.muli %arg1, %c8_i32 : i32
    %1 = tpu.assume_multiple %0, 8 : i32
    %cst = arith.constant 0.000000e+00 : f32
    %2 = vector.broadcast %cst : f32 to vector<320x2xf32>
    %c0_i32 = arith.constant 0 : i32
    %3 = arith.addi %1, %c0_i32 : i32
    %c0 = arith.constant 0 : index
    %4 = arith.index_cast %3 : i32 to index
    %c0_0 = arith.constant 0 : index
    %c0_1 = arith.constant 0 : index
    %5 = vector.load %arg2[%c0, %4, %c0_0, %c0_1] : memref<1x21x32x4xbf16, #tpu.memory_space<vmem>>, vector<1x11x32x4xbf16>
    %6 = vector.shape_cast %5 : vector<1x11x32x4xbf16> to vector<11x32x4xbf16>
    %7 = vector.shape_cast %6 : vector<11x32x4xbf16> to vector<352x4xbf16>
    %8 = vector.extract_strided_slice %7 {offsets = [0, 0], sizes = [320, 4], strides = [1, 1]} : vector<352x4xbf16> to vector<320x4xbf16>
    %c0_2 = arith.constant 0 : index
    %c0_3 = arith.constant 0 : index
    %c0_4 = arith.constant 0 : index
    %9 = vector.load %arg4[%c0_2, %c0_3, %c0_4] : memref<9x4x2xbf16, #tpu.memory_space<vmem>>, vector<1x4x2xbf16>
    %10 = vector.shape_cast %9 : vector<1x4x2xbf16> to vector<4x2xbf16>
    %cst_5 = arith.constant dense<0.000000e+00> : vector<320x2xf32>
    %11 = tpu.matmul %8, %10, %cst_5 {dimension_numbers = #tpu.dot_dimension_numbers<[1], [0], [0], [1], [0, 0, 1, 1], [], []>} : vector<320x4xbf16>, vector<4x2xbf16>, vector<320x2xf32> -> vector<320x2xf32>
    %12 = arith.addf %2, %11 : vector<320x2xf32>
    %13 = vector.extract_strided_slice %7 {offsets = [1, 0], sizes = [320, 4], strides = [1, 1]} : vector<352x4xbf16> to vector<320x4xbf16>
    %c1 = arith.constant 1 : index
    %c0_6 = arith.constant 0 : index
    %c0_7 = arith.constant 0 : index
    %14 = vector.load %arg4[%c1, %c0_6, %c0_7] : memref<9x4x2xbf16, #tpu.memory_space<vmem>>, vector<1x4x2xbf16>
    %15 = vector.shape_cast %14 : vector<1x4x2xbf16> to vector<4x2xbf16>
    %cst_8 = arith.constant dense<0.000000e+00> : vector<320x2xf32>
    %16 = tpu.matmul %13, %15, %cst_8 {dimension_numbers = #tpu.dot_dimension_numbers<[1], [0], [0], [1], [0, 0, 1, 1], [], []>} : vector<320x4xbf16>, vector<4x2xbf16>, vector<320x2xf32> -> vector<320x2xf32>
    %17 = arith.addf %12, %16 : vector<320x2xf32>
    %18 = vector.extract_strided_slice %7 {offsets = [2, 0], sizes = [320, 4], strides = [1, 1]} : vector<352x4xbf16> to vector<320x4xbf16>
    %c2 = arith.constant 2 : index
    %c0_9 = arith.constant 0 : index
    %c0_10 = arith.constant 0 : index
    %19 = vector.load %arg4[%c2, %c0_9, %c0_10] : memref<9x4x2xbf16, #tpu.memory_space<vmem>>, vector<1x4x2xbf16>
    %20 = vector.shape_cast %19 : vector<1x4x2xbf16> to vector<4x2xbf16>
    %cst_11 = arith.constant dense<0.000000e+00> : vector<320x2xf32>
    %21 = tpu.matmul %18, %20, %cst_11 {dimension_numbers = #tpu.dot_dimension_numbers<[1], [0], [0], [1], [0, 0, 1, 1], [], []>} : vector<320x4xbf16>, vector<4x2xbf16>, vector<320x2xf32> -> vector<320x2xf32>
    %22 = arith.addf %17, %21 : vector<320x2xf32>
    %c1_i32 = arith.constant 1 : i32
    %23 = arith.addi %1, %c1_i32 : i32
    %c0_12 = arith.constant 0 : index
    %24 = arith.index_cast %23 : i32 to index
    %c0_13 = arith.constant 0 : index
    %c0_14 = arith.constant 0 : index
    %25 = vector.load %arg2[%c0_12, %24, %c0_13, %c0_14] : memref<1x21x32x4xbf16, #tpu.memory_space<vmem>>, vector<1x11x32x4xbf16>
    %26 = vector.shape_cast %25 : vector<1x11x32x4xbf16> to vector<11x32x4xbf16>
    %27 = vector.shape_cast %26 : vector<11x32x4xbf16> to vector<352x4xbf16>
    %28 = vector.extract_strided_slice %27 {offsets = [0, 0], sizes = [320, 4], strides = [1, 1]} : vector<352x4xbf16> to vector<320x4xbf16>
    %c3 = arith.constant 3 : index
    %c0_15 = arith.constant 0 : index
    %c0_16 = arith.constant 0 : index
    %29 = vector.load %arg4[%c3, %c0_15, %c0_16] : memref<9x4x2xbf16, #tpu.memory_space<vmem>>, vector<1x4x2xbf16>
    %30 = vector.shape_cast %29 : vector<1x4x2xbf16> to vector<4x2xbf16>
    %cst_17 = arith.constant dense<0.000000e+00> : vector<320x2xf32>
    %31 = tpu.matmul %28, %30, %cst_17 {dimension_numbers = #tpu.dot_dimension_numbers<[1], [0], [0], [1], [0, 0, 1, 1], [], []>} : vector<320x4xbf16>, vector<4x2xbf16>, vector<320x2xf32> -> vector<320x2xf32>
    %32 = arith.addf %22, %31 : vector<320x2xf32>
    %33 = vector.extract_strided_slice %27 {offsets = [1, 0], sizes = [320, 4], strides = [1, 1]} : vector<352x4xbf16> to vector<320x4xbf16>
    %c4 = arith.constant 4 : index
    %c0_18 = arith.constant 0 : index
    %c0_19 = arith.constant 0 : index
    %34 = vector.load %arg4[%c4, %c0_18, %c0_19] : memref<9x4x2xbf16, #tpu.memory_space<vmem>>, vector<1x4x2xbf16>
    %35 = vector.shape_cast %34 : vector<1x4x2xbf16> to vector<4x2xbf16>
    %cst_20 = arith.constant dense<0.000000e+00> : vector<320x2xf32>
    %36 = tpu.matmul %33, %35, %cst_20 {dimension_numbers = #tpu.dot_dimension_numbers<[1], [0], [0], [1], [0, 0, 1, 1], [], []>} : vector<320x4xbf16>, vector<4x2xbf16>, vector<320x2xf32> -> vector<320x2xf32>
    %37 = arith.addf %32, %36 : vector<320x2xf32>
    %38 = vector.extract_strided_slice %27 {offsets = [2, 0], sizes = [320, 4], strides = [1, 1]} : vector<352x4xbf16> to vector<320x4xbf16>
    %c5 = arith.constant 5 : index
    %c0_21 = arith.constant 0 : index
    %c0_22 = arith.constant 0 : index
    %39 = vector.load %arg4[%c5, %c0_21, %c0_22] : memref<9x4x2xbf16, #tpu.memory_space<vmem>>, vector<1x4x2xbf16>
    %40 = vector.shape_cast %39 : vector<1x4x2xbf16> to vector<4x2xbf16>
    %cst_23 = arith.constant dense<0.000000e+00> : vector<320x2xf32>
    %41 = tpu.matmul %38, %40, %cst_23 {dimension_numbers = #tpu.dot_dimension_numbers<[1], [0], [0], [1], [0, 0, 1, 1], [], []>} : vector<320x4xbf16>, vector<4x2xbf16>, vector<320x2xf32> -> vector<320x2xf32>
    %42 = arith.addf %37, %41 : vector<320x2xf32>
    %c2_i32 = arith.constant 2 : i32
    %43 = arith.addi %1, %c2_i32 : i32
    %c0_24 = arith.constant 0 : index
    %44 = arith.index_cast %43 : i32 to index
    %c0_25 = arith.constant 0 : index
    %c0_26 = arith.constant 0 : index
    %45 = vector.load %arg2[%c0_24, %44, %c0_25, %c0_26] : memref<1x21x32x4xbf16, #tpu.memory_space<vmem>>, vector<1x11x32x4xbf16>
    %46 = vector.shape_cast %45 : vector<1x11x32x4xbf16> to vector<11x32x4xbf16>
    %47 = vector.shape_cast %46 : vector<11x32x4xbf16> to vector<352x4xbf16>
    %48 = vector.extract_strided_slice %47 {offsets = [0, 0], sizes = [320, 4], strides = [1, 1]} : vector<352x4xbf16> to vector<320x4xbf16>
    %c6 = arith.constant 6 : index
    %c0_27 = arith.constant 0 : index
    %c0_28 = arith.constant 0 : index
    %49 = vector.load %arg4[%c6, %c0_27, %c0_28] : memref<9x4x2xbf16, #tpu.memory_space<vmem>>, vector<1x4x2xbf16>
    %50 = vector.shape_cast %49 : vector<1x4x2xbf16> to vector<4x2xbf16>
    %cst_29 = arith.constant dense<0.000000e+00> : vector<320x2xf32>
    %51 = tpu.matmul %48, %50, %cst_29 {dimension_numbers = #tpu.dot_dimension_numbers<[1], [0], [0], [1], [0, 0, 1, 1], [], []>} : vector<320x4xbf16>, vector<4x2xbf16>, vector<320x2xf32> -> vector<320x2xf32>
    %52 = arith.addf %42, %51 : vector<320x2xf32>
    %53 = vector.extract_strided_slice %47 {offsets = [1, 0], sizes = [320, 4], strides = [1, 1]} : vector<352x4xbf16> to vector<320x4xbf16>
    %c7 = arith.constant 7 : index
    %c0_30 = arith.constant 0 : index
    %c0_31 = arith.constant 0 : index
    %54 = vector.load %arg4[%c7, %c0_30, %c0_31] : memref<9x4x2xbf16, #tpu.memory_space<vmem>>, vector<1x4x2xbf16>
    %55 = vector.shape_cast %54 : vector<1x4x2xbf16> to vector<4x2xbf16>
    %cst_32 = arith.constant dense<0.000000e+00> : vector<320x2xf32>
    %56 = tpu.matmul %53, %55, %cst_32 {dimension_numbers = #tpu.dot_dimension_numbers<[1], [0], [0], [1], [0, 0, 1, 1], [], []>} : vector<320x4xbf16>, vector<4x2xbf16>, vector<320x2xf32> -> vector<320x2xf32>
    %57 = arith.addf %52, %56 : vector<320x2xf32>
    %58 = vector.extract_strided_slice %47 {offsets = [2, 0], sizes = [320, 4], strides = [1, 1]} : vector<352x4xbf16> to vector<320x4xbf16>
    %c8 = arith.constant 8 : index
    %c0_33 = arith.constant 0 : index
    %c0_34 = arith.constant 0 : index
    %59 = vector.load %arg4[%c8, %c0_33, %c0_34] : memref<9x4x2xbf16, #tpu.memory_space<vmem>>, vector<1x4x2xbf16>
    %60 = vector.shape_cast %59 : vector<1x4x2xbf16> to vector<4x2xbf16>
    %cst_35 = arith.constant dense<0.000000e+00> : vector<320x2xf32>
    %61 = tpu.matmul %58, %60, %cst_35 {dimension_numbers = #tpu.dot_dimension_numbers<[1], [0], [0], [1], [0, 0, 1, 1], [], []>} : vector<320x4xbf16>, vector<4x2xbf16>, vector<320x2xf32> -> vector<320x2xf32>
    %62 = arith.addf %57, %61 : vector<320x2xf32>
    %c0_36 = arith.constant 0 : index
    %c0_37 = arith.constant 0 : index
    %63 = vector.load %arg5[%c0_36, %c0_37] : memref<1x2xf32, #tpu.memory_space<vmem>>, vector<1x2xf32>
    %64 = vector.broadcast %63 : vector<1x2xf32> to vector<320x2xf32>
    %65 = arith.addf %62, %64 : vector<320x2xf32>
    %cst_38 = arith.constant 0.000000e+00 : f32
    %66 = vector.broadcast %cst_38 : f32 to vector<320x2xf32>
    %67 = arith.subf %66, %65 : vector<320x2xf32>
    %68 = math.exp %67 : vector<320x2xf32>
    %cst_39 = arith.constant 1.000000e+00 : f32
    %69 = vector.broadcast %cst_39 : f32 to vector<320x2xf32>
    %70 = arith.addf %69, %68 : vector<320x2xf32>
    %71 = tpu.reciprocal %70 {approx = true} : vector<320x2xf32> -> vector<320x2xf32>
    %72 = arith.mulf %65, %71 : vector<320x2xf32>
    %73 = vector.shape_cast %72 : vector<320x2xf32> to vector<10x32x2xf32>
    %74 = tpu.iota {dimensions = array<i32: 0>} : vector<10x32x1xi32>
    %75 = tpu.iota {dimensions = array<i32: 1>} : vector<10x32x1xi32>
    %c1_i32_40 = arith.constant 1 : i32
    %76 = arith.subi %1, %c1_i32_40 : i32
    %77 = vector.broadcast %76 : i32 to vector<10x32x1xi32>
    %78 = arith.addi %74, %77 : vector<10x32x1xi32>
    %c0_i32_41 = arith.constant 0 : i32
    %79 = vector.broadcast %c0_i32_41 : i32 to vector<10x32x1xi32>
    %80 = arith.cmpi sge, %78, %79 : vector<10x32x1xi32>
    %c1_i32_42 = arith.constant 1 : i32
    %81 = arith.subi %1, %c1_i32_42 : i32
    %82 = vector.broadcast %81 : i32 to vector<10x32x1xi32>
    %83 = arith.addi %74, %82 : vector<10x32x1xi32>
    %c16_i32 = arith.constant 16 : i32
    %84 = vector.broadcast %c16_i32 : i32 to vector<10x32x1xi32>
    %85 = arith.cmpi slt, %83, %84 : vector<10x32x1xi32>
    %86 = arith.andi %80, %85 : vector<10x32x1xi1>
    %c1_i32_43 = arith.constant 1 : i32
    %87 = vector.broadcast %c1_i32_43 : i32 to vector<10x32x1xi32>
    %88 = arith.cmpi sge, %75, %87 : vector<10x32x1xi32>
    %c17_i32 = arith.constant 17 : i32
    %89 = vector.broadcast %c17_i32 : i32 to vector<10x32x1xi32>
    %90 = arith.cmpi slt, %75, %89 : vector<10x32x1xi32>
    %91 = arith.andi %88, %90 : vector<10x32x1xi1>
    %92 = arith.andi %86, %91 : vector<10x32x1xi1>
    %cst_44 = arith.constant 0.000000e+00 : f32
    %93 = vector.shape_cast %92 : vector<10x32x1xi1> to vector<10x32x1xi1>
    %94 = vector.broadcast %93 : vector<10x32x1xi1> to vector<10x32x2xi1>
    %95 = vector.broadcast %cst_44 : f32 to vector<10x32x2xf32>
    %96 = arith.select %94, %73, %95 : vector<10x32x2xi1>, vector<10x32x2xf32>
    %97 = vector.shape_cast %96 : vector<10x32x2xf32> to vector<320x2xf32>
    %98 = arith.truncf %97 : vector<320x2xf32> to vector<320x2xbf16>
    %c0_45 = arith.constant 0 : index
    %c0_46 = arith.constant 0 : index
    %99 = vector.load %arg9[%c0_45, %c0_46] : memref<336x2xbf16, #tpu.memory_space<vmem>>, vector<320x2xbf16>
    tpu.vector_store %arg9[%c0_45, %c0_46], %98 {strides = array<i32>} : memref<336x2xbf16, #tpu.memory_space<vmem>>, vector<320x2xbf16>,
    %cst_47 = arith.constant 0.000000e+00 : bf16
    %100 = vector.broadcast %cst_47 : bf16 to vector<16x2xbf16>
    %c320 = arith.constant 320 : index
    %c0_48 = arith.constant 0 : index
    %101 = vector.load %arg9[%c320, %c0_48] : memref<336x2xbf16, #tpu.memory_space<vmem>>, vector<16x2xbf16>
    tpu.vector_store %arg9[%c320, %c0_48], %100 {strides = array<i32>} : memref<336x2xbf16, #tpu.memory_space<vmem>>, vector<16x2xbf16>,
    %cst_49 = arith.constant 0.000000e+00 : f32
    %102 = vector.broadcast %cst_49 : f32 to vector<256x4xf32>
    %c0_50 = arith.constant 0 : index
    %c0_51 = arith.constant 0 : index
    %103 = vector.load %arg9[%c0_50, %c0_51] : memref<336x2xbf16, #tpu.memory_space<vmem>>, vector<272x2xbf16>
    %104 = vector.extract_strided_slice %103 {offsets = [0, 0], sizes = [256, 2], strides = [1, 1]} : vector<272x2xbf16> to vector<256x2xbf16>
    %c0_52 = arith.constant 0 : index
    %c0_53 = arith.constant 0 : index
    %c0_54 = arith.constant 0 : index
    %105 = vector.load %arg6[%c0_52, %c0_53, %c0_54] : memref<9x2x4xbf16, #tpu.memory_space<vmem>>, vector<1x2x4xbf16>
    %106 = vector.shape_cast %105 : vector<1x2x4xbf16> to vector<2x4xbf16>
    %cst_55 = arith.constant dense<0.000000e+00> : vector<256x4xf32>
    %107 = tpu.matmul %104, %106, %cst_55 {dimension_numbers = #tpu.dot_dimension_numbers<[1], [0], [0], [1], [0, 0, 1, 1], [], []>} : vector<256x2xbf16>, vector<2x4xbf16>, vector<256x4xf32> -> vector<256x4xf32>
    %108 = arith.addf %102, %107 : vector<256x4xf32>
    %109 = vector.extract_strided_slice %103 {offsets = [1, 0], sizes = [256, 2], strides = [1, 1]} : vector<272x2xbf16> to vector<256x2xbf16>
    %c1_56 = arith.constant 1 : index
    %c0_57 = arith.constant 0 : index
    %c0_58 = arith.constant 0 : index
    %110 = vector.load %arg6[%c1_56, %c0_57, %c0_58] : memref<9x2x4xbf16, #tpu.memory_space<vmem>>, vector<1x2x4xbf16>
    %111 = vector.shape_cast %110 : vector<1x2x4xbf16> to vector<2x4xbf16>
    %cst_59 = arith.constant dense<0.000000e+00> : vector<256x4xf32>
    %112 = tpu.matmul %109, %111, %cst_59 {dimension_numbers = #tpu.dot_dimension_numbers<[1], [0], [0], [1], [0, 0, 1, 1], [], []>} : vector<256x2xbf16>, vector<2x4xbf16>, vector<256x4xf32> -> vector<256x4xf32>
    %113 = arith.addf %108, %112 : vector<256x4xf32>
    %114 = vector.extract_strided_slice %103 {offsets = [2, 0], sizes = [256, 2], strides = [1, 1]} : vector<272x2xbf16> to vector<256x2xbf16>
    %c2_60 = arith.constant 2 : index
    %c0_61 = arith.constant 0 : index
    %c0_62 = arith.constant 0 : index
    %115 = vector.load %arg6[%c2_60, %c0_61, %c0_62] : memref<9x2x4xbf16, #tpu.memory_space<vmem>>, vector<1x2x4xbf16>
    %116 = vector.shape_cast %115 : vector<1x2x4xbf16> to vector<2x4xbf16>
    %cst_63 = arith.constant dense<0.000000e+00> : vector<256x4xf32>
    %117 = tpu.matmul %114, %116, %cst_63 {dimension_numbers = #tpu.dot_dimension_numbers<[1], [0], [0], [1], [0, 0, 1, 1], [], []>} : vector<256x2xbf16>, vector<2x4xbf16>, vector<256x4xf32> -> vector<256x4xf32>
    %118 = arith.addf %113, %117 : vector<256x4xf32>
    %c32 = arith.constant 32 : index
    %c0_64 = arith.constant 0 : index
    %119 = vector.load %arg9[%c32, %c0_64] : memref<336x2xbf16, #tpu.memory_space<vmem>>, vector<272x2xbf16>
    %120 = vector.extract_strided_slice %119 {offsets = [0, 0], sizes = [256, 2], strides = [1, 1]} : vector<272x2xbf16> to vector<256x2xbf16>
    %c3_65 = arith.constant 3 : index
    %c0_66 = arith.constant 0 : index
    %c0_67 = arith.constant 0 : index
    %121 = vector.load %arg6[%c3_65, %c0_66, %c0_67] : memref<9x2x4xbf16, #tpu.memory_space<vmem>>, vector<1x2x4xbf16>
    %122 = vector.shape_cast %121 : vector<1x2x4xbf16> to vector<2x4xbf16>
    %cst_68 = arith.constant dense<0.000000e+00> : vector<256x4xf32>
    %123 = tpu.matmul %120, %122, %cst_68 {dimension_numbers = #tpu.dot_dimension_numbers<[1], [0], [0], [1], [0, 0, 1, 1], [], []>} : vector<256x2xbf16>, vector<2x4xbf16>, vector<256x4xf32> -> vector<256x4xf32>
    %124 = arith.addf %118, %123 : vector<256x4xf32>
    %125 = vector.extract_strided_slice %119 {offsets = [1, 0], sizes = [256, 2], strides = [1, 1]} : vector<272x2xbf16> to vector<256x2xbf16>
    %c4_69 = arith.constant 4 : index
    %c0_70 = arith.constant 0 : index
    %c0_71 = arith.constant 0 : index
    %126 = vector.load %arg6[%c4_69, %c0_70, %c0_71] : memref<9x2x4xbf16, #tpu.memory_space<vmem>>, vector<1x2x4xbf16>
    %127 = vector.shape_cast %126 : vector<1x2x4xbf16> to vector<2x4xbf16>
    %cst_72 = arith.constant dense<0.000000e+00> : vector<256x4xf32>
    %128 = tpu.matmul %125, %127, %cst_72 {dimension_numbers = #tpu.dot_dimension_numbers<[1], [0], [0], [1], [0, 0, 1, 1], [], []>} : vector<256x2xbf16>, vector<2x4xbf16>, vector<256x4xf32> -> vector<256x4xf32>
    %129 = arith.addf %124, %128 : vector<256x4xf32>
    %130 = vector.extract_strided_slice %119 {offsets = [2, 0], sizes = [256, 2], strides = [1, 1]} : vector<272x2xbf16> to vector<256x2xbf16>
    %c5_73 = arith.constant 5 : index
    %c0_74 = arith.constant 0 : index
    %c0_75 = arith.constant 0 : index
    %131 = vector.load %arg6[%c5_73, %c0_74, %c0_75] : memref<9x2x4xbf16, #tpu.memory_space<vmem>>, vector<1x2x4xbf16>
    %132 = vector.shape_cast %131 : vector<1x2x4xbf16> to vector<2x4xbf16>
    %cst_76 = arith.constant dense<0.000000e+00> : vector<256x4xf32>
    %133 = tpu.matmul %130, %132, %cst_76 {dimension_numbers = #tpu.dot_dimension_numbers<[1], [0], [0], [1], [0, 0, 1, 1], [], []>} : vector<256x2xbf16>, vector<2x4xbf16>, vector<256x4xf32> -> vector<256x4xf32>
    %134 = arith.addf %129, %133 : vector<256x4xf32>
    %c64 = arith.constant 64 : index
    %c0_77 = arith.constant 0 : index
    %135 = vector.load %arg9[%c64, %c0_77] : memref<336x2xbf16, #tpu.memory_space<vmem>>, vector<272x2xbf16>
    %136 = vector.extract_strided_slice %135 {offsets = [0, 0], sizes = [256, 2], strides = [1, 1]} : vector<272x2xbf16> to vector<256x2xbf16>
    %c6_78 = arith.constant 6 : index
    %c0_79 = arith.constant 0 : index
    %c0_80 = arith.constant 0 : index
    %137 = vector.load %arg6[%c6_78, %c0_79, %c0_80] : memref<9x2x4xbf16, #tpu.memory_space<vmem>>, vector<1x2x4xbf16>
    %138 = vector.shape_cast %137 : vector<1x2x4xbf16> to vector<2x4xbf16>
    %cst_81 = arith.constant dense<0.000000e+00> : vector<256x4xf32>
    %139 = tpu.matmul %136, %138, %cst_81 {dimension_numbers = #tpu.dot_dimension_numbers<[1], [0], [0], [1], [0, 0, 1, 1], [], []>} : vector<256x2xbf16>, vector<2x4xbf16>, vector<256x4xf32> -> vector<256x4xf32>
    %140 = arith.addf %134, %139 : vector<256x4xf32>
    %141 = vector.extract_strided_slice %135 {offsets = [1, 0], sizes = [256, 2], strides = [1, 1]} : vector<272x2xbf16> to vector<256x2xbf16>
    %c7_82 = arith.constant 7 : index
    %c0_83 = arith.constant 0 : index
    %c0_84 = arith.constant 0 : index
    %142 = vector.load %arg6[%c7_82, %c0_83, %c0_84] : memref<9x2x4xbf16, #tpu.memory_space<vmem>>, vector<1x2x4xbf16>
    %143 = vector.shape_cast %142 : vector<1x2x4xbf16> to vector<2x4xbf16>
    %cst_85 = arith.constant dense<0.000000e+00> : vector<256x4xf32>
    %144 = tpu.matmul %141, %143, %cst_85 {dimension_numbers = #tpu.dot_dimension_numbers<[1], [0], [0], [1], [0, 0, 1, 1], [], []>} : vector<256x2xbf16>, vector<2x4xbf16>, vector<256x4xf32> -> vector<256x4xf32>
    %145 = arith.addf %140, %144 : vector<256x4xf32>
    %146 = vector.extract_strided_slice %135 {offsets = [2, 0], sizes = [256, 2], strides = [1, 1]} : vector<272x2xbf16> to vector<256x2xbf16>
    %c8_86 = arith.constant 8 : index
    %c0_87 = arith.constant 0 : index
    %c0_88 = arith.constant 0 : index
    %147 = vector.load %arg6[%c8_86, %c0_87, %c0_88] : memref<9x2x4xbf16, #tpu.memory_space<vmem>>, vector<1x2x4xbf16>
    %148 = vector.shape_cast %147 : vector<1x2x4xbf16> to vector<2x4xbf16>
    %cst_89 = arith.constant dense<0.000000e+00> : vector<256x4xf32>
    %149 = tpu.matmul %146, %148, %cst_89 {dimension_numbers = #tpu.dot_dimension_numbers<[1], [0], [0], [1], [0, 0, 1, 1], [], []>} : vector<256x2xbf16>, vector<2x4xbf16>, vector<256x4xf32> -> vector<256x4xf32>
    %150 = arith.addf %145, %149 : vector<256x4xf32>
    %c0_90 = arith.constant 0 : index
    %c0_91 = arith.constant 0 : index
    %151 = vector.load %arg7[%c0_90, %c0_91] : memref<1x4xf32, #tpu.memory_space<vmem>>, vector<1x4xf32>
    %152 = vector.broadcast %151 : vector<1x4xf32> to vector<256x4xf32>
    %153 = arith.addf %150, %152 : vector<256x4xf32>
    %cst_92 = arith.constant 0.000000e+00 : f32
    %154 = vector.broadcast %cst_92 : f32 to vector<256x4xf32>
    %155 = arith.subf %154, %153 : vector<256x4xf32>
    %156 = math.exp %155 : vector<256x4xf32>
    %cst_93 = arith.constant 1.000000e+00 : f32
    %157 = vector.broadcast %cst_93 : f32 to vector<256x4xf32>
    %158 = arith.addf %157, %156 : vector<256x4xf32>
    %159 = tpu.reciprocal %158 {approx = true} : vector<256x4xf32> -> vector<256x4xf32>
    %160 = arith.mulf %153, %159 : vector<256x4xf32>
    %161 = vector.shape_cast %160 : vector<256x4xf32> to vector<8x32x4xf32>
    %162 = vector.extract_strided_slice %161 {offsets = [0, 0, 0], sizes = [8, 16, 4], strides = [1, 1, 1]} : vector<8x32x4xf32> to vector<8x16x4xf32>
    %c0_94 = arith.constant 0 : index
    %c0_95 = arith.constant 0 : index
    %c0_96 = arith.constant 0 : index
    %c0_97 = arith.constant 0 : index
    %163 = vector.load %arg3[%c0_94, %c0_95, %c0_96, %c0_97] : memref<1x8x16x4xf32, #tpu.memory_space<vmem>>, vector<1x8x16x4xf32>
    %164 = vector.shape_cast %163 : vector<1x8x16x4xf32> to vector<8x16x4xf32>
    %165 = arith.addf %164, %162 : vector<8x16x4xf32>
    %c0_98 = arith.constant 0 : index
    %c0_99 = arith.constant 0 : index
    %c0_100 = arith.constant 0 : index
    %c0_101 = arith.constant 0 : index
    %166 = vector.load %arg8[%c0_98, %c0_99, %c0_100, %c0_101] : memref<1x8x16x4xf32, #tpu.memory_space<vmem>>, vector<1x8x16x4xf32>
    %167 = vector.shape_cast %166 : vector<1x8x16x4xf32> to vector<8x16x4xf32>
    %168 = vector.shape_cast %165 : vector<8x16x4xf32> to vector<1x8x16x4xf32>
    tpu.vector_store %arg8[%c0_98, %c0_99, %c0_100, %c0_101], %168 {strides = array<i32>} : memref<1x8x16x4xf32, #tpu.memory_space<vmem>>, vector<1x8x16x4xf32>,
    return
  }
  func.func @transform_0(%arg0: i32, %arg1: i32) -> (i32, i32, i32, i32) {
    %c0_i32 = arith.constant 0 : i32
    %c0_i32_0 = arith.constant 0 : i32
    %c0_i32_1 = arith.constant 0 : i32
    %c0_i32_2 = arith.constant 0 : i32
    return %arg0, %c0_i32, %c0_i32_0, %c0_i32_1 : i32, i32, i32, i32
  }
  func.func @transform_1(%arg0: i32, %arg1: i32) -> (i32, i32, i32, i32) {
    %c0_i32 = arith.constant 0 : i32
    %c0_i32_0 = arith.constant 0 : i32
    %c0_i32_1 = arith.constant 0 : i32
    return %arg0, %arg1, %c0_i32, %c0_i32_0 : i32, i32, i32, i32
  }
  func.func @transform_2(%arg0: i32, %arg1: i32) -> (i32, i32, i32) {
    %c0_i32 = arith.constant 0 : i32
    %c0_i32_0 = arith.constant 0 : i32
    %c0_i32_1 = arith.constant 0 : i32
    %c0_i32_2 = arith.constant 0 : i32
    return %c0_i32, %c0_i32_0, %c0_i32_1 : i32, i32, i32
  }
  func.func @transform_3(%arg0: i32, %arg1: i32) -> (i32, i32) {
    %c0_i32 = arith.constant 0 : i32
    %c0_i32_0 = arith.constant 0 : i32
    %c0_i32_1 = arith.constant 0 : i32
    return %c0_i32, %c0_i32_0 : i32, i32
  }
  func.func @transform_4(%arg0: i32, %arg1: i32) -> (i32, i32, i32) {
    %c0_i32 = arith.constant 0 : i32
    %c0_i32_0 = arith.constant 0 : i32
    %c0_i32_1 = arith.constant 0 : i32
    %c0_i32_2 = arith.constant 0 : i32
    return %c0_i32, %c0_i32_0, %c0_i32_1 : i32, i32, i32
  }
  func.func @transform_5(%arg0: i32, %arg1: i32) -> (i32, i32) {
    %c0_i32 = arith.constant 0 : i32
    %c0_i32_0 = arith.constant 0 : i32
    %c0_i32_1 = arith.constant 0 : i32
    return %c0_i32, %c0_i32_0 : i32, i32
  }
  func.func @transform_6(%arg0: i32, %arg1: i32) -> (i32, i32, i32, i32) {
    %c0_i32 = arith.constant 0 : i32
    %c0_i32_0 = arith.constant 0 : i32
    %c0_i32_1 = arith.constant 0 : i32
    return %arg0, %arg1, %c0_i32, %c0_i32_0 : i32, i32, i32, i32
  }
}

</mosaic_0001>

<llo_original>
// kernel: tpu_custom_call.1
$region0: #{tpu_custom_call.1}
  #allocation0 [shape = 'u32[]', space=smem, size = 0x4, offset = 0x4, fixed_abs, tag = 'smem constant byte address 0x4 - core index']
  #allocation1 [shape = 'u32[144,128]{1,0:T(1,128)}', space=vmem, size = 0x12000, scoped, tag = 'internal scratch']
  #allocation2 [shape = 'bf16[336,2]{1,0:T(16,128)(2,1)}', space=vmem, size = 0x15000, scoped, tag = 'scratch operand']
  %s0 = inlined_call_operand.vmem [shape: bf16[2,21,32,4], index: 0, kind: input, shape index: {}]
  %s1 = inlined_call_operand.vmem [shape: f32[2,16,16,4], index: 1, kind: input, shape index: {}]
  %s2 = inlined_call_operand.vmem [shape: bf16[9,4,2], index: 2, kind: input, shape index: {}]
  %s3 = inlined_call_operand.vmem [shape: f32[1,2], index: 3, kind: input, shape index: {}]
  %s4 = inlined_call_operand.vmem [shape: bf16[9,2,4], index: 4, kind: input, shape index: {}]
  %s5 = inlined_call_operand.vmem [shape: f32[1,4], index: 5, kind: input, shape index: {}]
  %s6 = inlined_call_operand.vmem [shape: f32[2,16,16,4], index: 6, kind: output, shape index: {}]
  %s7 = sld [smem:[#allocation0]]
  $region57: #{tpu_custom_call.1} parent=0
    _
  %s9 = ssub.s32 1, %s7
  %s10 = scalar_select 0, %s9, %s7
  loop: start=0, step=1, limit=6
  $region2: #{tpu_custom_call.1} parent=0 // loop_pre_header
    _
  $region3: #{tpu_custom_call.1} parent=0 // loop_header
    %s12 = sphi 0, %s16
    %p13 = scmp.ge.s32.totalorder %s12, 6
    %s19 = sphi 0, %s31
    %s20 = sphi 0, %s27
    %s21 = sphi 0, %s19
    %s22 = sphi 0, %s20
    %s23 = sphi 0, %s21
    %s24 = sphi 0, %s22
    %s34 = sphi 0, %s36
    %s37 = sphi 0, %s34
    %s38 = sphi 0, %s37
    %s54 = sphi 0, %s38
    %s62 = sphi 0, %s64
    %s65 = sphi 0, %s62
    %s66 = sphi 0, %s65
    %s82 = sphi 0, %s66
    %s86 = sphi 0, %s86
    %s88 = sphi 0, %s86
    %s89 = sphi 0, %s88
    %s103 = sphi 0, %s89
    %s107 = sphi 0, %s107
    %s109 = sphi 0, %s107
    %s110 = sphi 0, %s109
    %s124 = sphi 0, %s110
    %s128 = sphi 0, %s128
    %s130 = sphi 0, %s128
    %s131 = sphi 0, %s130
    %s145 = sphi 0, %s131
    %s149 = sphi 0, %s149
    %s151 = sphi 0, %s149
    %s152 = sphi 0, %s151
    %s166 = sphi 0, %s152
    %s174 = sphi 0, %s176
    %s177 = sphi 0, %s174
    %s178 = sphi 0, %s177
    %s194 = sphi 0, %s178
  $region4: #{tpu_custom_call.1} parent=0 // loop_header_branch
    %15 = sbr.rel (%p13) target = $region8
  $region5: #{tpu_custom_call.1} parent=0 // loop_body
    %s17 = ssub.s32 %s12, 1
    %s18 = ssub.s32 %s12, 2
    %s25 = sadd.s32 1, %s20
    %p26 = scmp.ge.s32.totalorder %s25, 2
    %s27 = scalar_select %p26, 0, %s25
    %s28 = sadd.s32 1, %s19
    %s29 = scalar_select %p26, %s28, %s19
    %p30 = scmp.ge.s32.totalorder %s29, 2
    %s31 = scalar_select %p30, 0, %s29
    %s32 = ssub.s32 %s19, %s31
    %p33 = scmp.eq.s32.totalorder %s32, 0
    %s35 = sadd.s32 %s34, 1
    %s36 = scalar_select %p33, %s34, %s35
    %p39 = pneg %p33
    %p40 = scmp.eq.s32.totalorder %s12, 3
    %p41 = por %p39, %p40
    %p42 = scmp.ne.s32.totalorder %s34, %s37
    %p43 = scmp.eq.s32.totalorder %s12, 0
    %p44 = por %p42, %p43
    %p45 = scmp.ne.s32.totalorder %s34, %s37
    %p46 = scmp.eq.s32.totalorder %s17, 3
    %p47 = por %p45, %p46
    %p48 = scmp.ne.s32.totalorder %s37, %s38
    %p49 = scmp.eq.s32.totalorder %s17, 0
    %p50 = por %p48, %p49
    %p51 = scmp.ne.s32.totalorder %s37, %s38
    %p52 = scmp.eq.s32.totalorder %s18, 3
    %p53 = por %p51, %p52
    %p55 = scmp.ne.s32.totalorder %s38, %s54
    %p56 = scmp.eq.s32.totalorder %s18, 0
    %p57 = por %p55, %p56
    %s58 = ssub.s32 %s19, %s31
    %s59 = ssub.s32 %s20, %s27
    %s60 = sor.u32 %s58, %s59
    %p61 = scmp.eq.s32.totalorder %s60, 0
    %s63 = sadd.s32 %s62, 1
    %s64 = scalar_select %p61, %s62, %s63
    %p67 = pneg %p61
    %p68 = scmp.eq.s32.totalorder %s12, 3
    %p69 = por %p67, %p68
    %p70 = scmp.ne.s32.totalorder %s62, %s65
    %p71 = scmp.eq.s32.totalorder %s12, 0
    %p72 = por %p70, %p71
    %p73 = scmp.ne.s32.totalorder %s62, %s65
    %p74 = scmp.eq.s32.totalorder %s17, 3
    %p75 = por %p73, %p74
    %p76 = scmp.ne.s32.totalorder %s65, %s66
    %p77 = scmp.eq.s32.totalorder %s17, 0
    %p78 = por %p76, %p77
    %p79 = scmp.ne.s32.totalorder %s65, %s66
    %p80 = scmp.eq.s32.totalorder %s18, 3
    %p81 = por %p79, %p80
    %p83 = scmp.ne.s32.totalorder %s66, %s82
    %p84 = scmp.eq.s32.totalorder %s18, 0
    %p85 = por %p83, %p84
    %s87 = sadd.s32 %s86, 1
    %p90 = scmp.eq.s32.totalorder %s12, 3
    %p91 = scmp.ne.s32.totalorder %s86, %s88
    %p92 = scmp.eq.s32.totalorder %s12, 0
    %p93 = por %p91, %p92
    %p94 = scmp.ne.s32.totalorder %s86, %s88
    %p95 = scmp.eq.s32.totalorder %s17, 3
    %p96 = por %p94, %p95
    %p97 = scmp.ne.s32.totalorder %s88, %s89
    %p98 = scmp.eq.s32.totalorder %s17, 0
    %p99 = por %p97, %p98
    %p100 = scmp.ne.s32.totalorder %s88, %s89
    %p101 = scmp.eq.s32.totalorder %s18, 3
    %p102 = por %p100, %p101
    %p104 = scmp.ne.s32.totalorder %s89, %s103
    %p105 = scmp.eq.s32.totalorder %s18, 0
    %p106 = por %p104, %p105
    %s108 = sadd.s32 %s107, 1
    %p111 = scmp.eq.s32.totalorder %s12, 3
    %p112 = scmp.ne.s32.totalorder %s107, %s109
    %p113 = scmp.eq.s32.totalorder %s12, 0
    %p114 = por %p112, %p113
    %p115 = scmp.ne.s32.totalorder %s107, %s109
    %p116 = scmp.eq.s32.totalorder %s17, 3
    %p117 = por %p115, %p116
    %p118 = scmp.ne.s32.totalorder %s109, %s110
    %p119 = scmp.eq.s32.totalorder %s17, 0
    %p120 = por %p118, %p119
    %p121 = scmp.ne.s32.totalorder %s109, %s110
    %p122 = scmp.eq.s32.totalorder %s18, 3
    %p123 = por %p121, %p122
    %p125 = scmp.ne.s32.totalorder %s110, %s124
    %p126 = scmp.eq.s32.totalorder %s18, 0
    %p127 = por %p125, %p126
    %s129 = sadd.s32 %s128, 1
    %p132 = scmp.eq.s32.totalorder %s12, 3
    %p133 = scmp.ne.s32.totalorder %s128, %s130
    %p134 = scmp.eq.s32.totalorder %s12, 0
    %p135 = por %p133, %p134
    %p136 = scmp.ne.s32.totalorder %s128, %s130
    %p137 = scmp.eq.s32.totalorder %s17, 3
    %p138 = por %p136, %p137
    %p139 = scmp.ne.s32.totalorder %s130, %s131
    %p140 = scmp.eq.s32.totalorder %s17, 0
    %p141 = por %p139, %p140
    %p142 = scmp.ne.s32.totalorder %s130, %s131
    %p143 = scmp.eq.s32.totalorder %s18, 3
    %p144 = por %p142, %p143
    %p146 = scmp.ne.s32.totalorder %s131, %s145
    %p147 = scmp.eq.s32.totalorder %s18, 0
    %p148 = por %p146, %p147
    %s150 = sadd.s32 %s149, 1
    %p153 = scmp.eq.s32.totalorder %s12, 3
    %p154 = scmp.ne.s32.totalorder %s149, %s151
    %p155 = scmp.eq.s32.totalorder %s12, 0
    %p156 = por %p154, %p155
    %p157 = scmp.ne.s32.totalorder %s149, %s151
    %p158 = scmp.eq.s32.totalorder %s17, 3
    %p159 = por %p157, %p158
    %p160 = scmp.ne.s32.totalorder %s151, %s152
    %p161 = scmp.eq.s32.totalorder %s17, 0
    %p162 = por %p160, %p161
    %p163 = scmp.ne.s32.totalorder %s151, %s152
    %p164 = scmp.eq.s32.totalorder %s18, 3
    %p165 = por %p163, %p164
    %p167 = scmp.ne.s32.totalorder %s152, %s166
    %p168 = scmp.eq.s32.totalorder %s18, 0
    %p169 = por %p167, %p168
    %s170 = ssub.s32 %s19, %s31
    %s171 = ssub.s32 %s20, %s27
    %s172 = sor.u32 %s170, %s171
    %p173 = scmp.eq.s32.totalorder %s172, 0
    %s175 = sadd.s32 %s174, 1
    %s176 = scalar_select %p173, %s174, %s175
    %p179 = pneg %p173
    %p180 = scmp.eq.s32.totalorder %s12, 3
    %p181 = por %p179, %p180
    %p182 = scmp.ne.s32.totalorder %s174, %s177
    %p183 = scmp.eq.s32.totalorder %s12, 0
    %p184 = por %p182, %p183
    %p185 = scmp.ne.s32.totalorder %s174, %s177
    %p186 = scmp.eq.s32.totalorder %s17, 3
    %p187 = por %p185, %p186
    %p188 = scmp.ne.s32.totalorder %s177, %s178
    %p189 = scmp.eq.s32.totalorder %s17, 0
    %p190 = por %p188, %p189
    %p191 = scmp.ne.s32.totalorder %s177, %s178
    %p192 = scmp.eq.s32.totalorder %s18, 3
    %p193 = por %p191, %p192
    %p195 = scmp.ne.s32.totalorder %s178, %s194
    %p196 = scmp.eq.s32.totalorder %s18, 0
    %p197 = por %p195, %p196
    %p198 = scmp.le.s32.totalorder 1, %s12
    %p199 = scmp.lt.s32.totalorder %s12, 5
    %p200 = pnand %p198, %p199
    %p201 = pneg %p200
    // Predicated region
    $region9: #{tpu_custom_call.1} parent=5 // pred_check
      _
    $region10: #{tpu_custom_call.1} parent=5 // pred_check_branch
      %203 = sbr.rel (%p200) target = $region12
    $region11: #{tpu_custom_call.1} parent=5 // pred_region
      %s204 = ssub.s32 %s12, 1
      // Predicated region
      $region13: #{tpu_custom_call.1} parent=11 // pred_check
        %p205 = pneg %p99
      $region14: #{tpu_custom_call.1} parent=11 // pred_check_branch
        %207 = sbr.rel (%p205) target = $region16
      $region15: #{tpu_custom_call.1} parent=11 // pred_region
        _
      $region16: #{tpu_custom_call.1} parent=11 // pred_fallthru
        _
      // Predicated region
      $region17: #{tpu_custom_call.1} parent=11 // pred_check
        %p208 = pneg %p120
      $region18: #{tpu_custom_call.1} parent=11 // pred_check_branch
        %210 = sbr.rel (%p208) target = $region20
      $region19: #{tpu_custom_call.1} parent=11 // pred_region
        _
      $region20: #{tpu_custom_call.1} parent=11 // pred_fallthru
        _
      // Predicated region
      $region21: #{tpu_custom_call.1} parent=11 // pred_check
        %p211 = pneg %p141
      $region22: #{tpu_custom_call.1} parent=11 // pred_check_branch
        %213 = sbr.rel (%p211) target = $region24
      $region23: #{tpu_custom_call.1} parent=11 // pred_region
        _
      $region24: #{tpu_custom_call.1} parent=11 // pred_fallthru
        _
      // Predicated region
      $region25: #{tpu_custom_call.1} parent=11 // pred_check
        %p214 = pneg %p162
      $region26: #{tpu_custom_call.1} parent=11 // pred_check_branch
        %216 = sbr.rel (%p214) target = $region28
      $region27: #{tpu_custom_call.1} parent=11 // pred_region
        _
      $region28: #{tpu_custom_call.1} parent=11 // pred_fallthru
        _
    $region12: #{tpu_custom_call.1} parent=5 // pred_fallthru
      _
    %p217 = scmp.lt.s32.totalorder %s12, 4
    // Predicated region
    $region29: #{tpu_custom_call.1} parent=5 // pred_check
      %p218 = pneg %p217
    $region30: #{tpu_custom_call.1} parent=5 // pred_check_branch
      %220 = sbr.rel (%p218) target = $region32
    $region31: #{tpu_custom_call.1} parent=5 // pred_region
      // Predicated region
      $region33: #{tpu_custom_call.1} parent=31 // pred_check
        %p221 = pneg %p44
      $region34: #{tpu_custom_call.1} parent=31 // pred_check_branch
        %223 = sbr.rel (%p221) target = $region36
      $region35: #{tpu_custom_call.1} parent=31 // pred_region
        %p224 = scmp.lt.s32.totalorder %s19, 1
        %s225 = scalar_select %p224, %s19, 1
        %s226 = smul.addr %s225, 84
        %s227 = smul.addr %s226, 4
        %s228 = scalar_lea.vmem %s0, %s227
      $region36: #{tpu_custom_call.1} parent=31 // pred_fallthru
        _
      // Predicated region
      $region37: #{tpu_custom_call.1} parent=31 // pred_check
        %p229 = pneg %p72
      $region38: #{tpu_custom_call.1} parent=31 // pred_check_branch
        %231 = sbr.rel (%p229) target = $region40
      $region39: #{tpu_custom_call.1} parent=31 // pred_region
        %s232 = smul.u32 8, %s20
        %p233 = scmp.lt.s32.totalorder %s19, 1
        %s234 = scalar_select %p233, %s19, 1
        %p235 = scmp.lt.s32.totalorder %s232, 15
        %s236 = scalar_select %p235, %s232, 15
        %s237 = smul.addr %s236, 2
        %s238 = smul.addr %s234, 32
        %s239 = sadd.s32 %s237, %s238
        %s240 = smul.addr %s239, 8
        %s241 = scalar_lea.vmem %s1, %s240
        %s242 = smul.u32 8, %s20
      $region40: #{tpu_custom_call.1} parent=31 // pred_fallthru
        _
    $region32: #{tpu_custom_call.1} parent=5 // pred_fallthru
      _
    %p243 = scmp.le.s32.totalorder 1, %s12
    %p244 = scmp.lt.s32.totalorder %s12, 5
    %p245 = pnand %p243, %p244
    %p246 = pneg %p245
    // Predicated region
    $region41: #{tpu_custom_call.1} parent=5 // pred_check
      _
    $region42: #{tpu_custom_call.1} parent=5 // pred_check_branch
      %248 = sbr.rel (%p245) target = $region44
    $region43: #{tpu_custom_call.1} parent=5 // pred_region
      %s249 = ssub.s32 %s12, 1
      %p250 = scmp.lt.s32.totalorder %s21, 1
      %s251 = scalar_select %p250, %s21, 1
      %s252 = smul.addr %s251, 84
      %s253 = smul.addr %s252, 4
      %s254 = scalar_lea.vmem %s0, %s253
      %p255 = pneg %p50
      %p256 = pneg %p47
      %s257 = smul.u32 8, %s22
      %p258 = scmp.lt.s32.totalorder %s21, 1
      %s259 = scalar_select %p258, %s21, 1
      %p260 = scmp.lt.s32.totalorder %s257, 15
      %s261 = scalar_select %p260, %s257, 15
      %s262 = smul.addr %s261, 2
      %s263 = smul.addr %s259, 32
      %s264 = sadd.s32 %s262, %s263
      %s265 = smul.addr %s264, 8
      %s266 = scalar_lea.vmem %s1, %s265
      %p267 = pneg %p78
      %p268 = pneg %p75
      %p269 = pneg %p99
      %p270 = pneg %p96
      %p271 = pneg %p120
      %p272 = pneg %p117
      %p273 = pneg %p141
      %p274 = pneg %p138
      %p275 = pneg %p162
      %p276 = pneg %p159
      %p277 = pneg %p190
      %p278 = pneg %p187
      %s279 = smul.u32 8, %s22
      %p280 = scmp.lt.s32.totalorder %s21, 1
      %s281 = scalar_select %p280, %s21, 1
      %p282 = scmp.lt.s32.totalorder %s279, 15
      %s283 = scalar_select %p282, %s279, 15
      %s284 = smul.addr %s283, 2
      %s285 = smul.addr %s281, 32
      %s286 = sadd.s32 %s284, %s285
      %s287 = smul.addr %s286, 8
      %s288 = scalar_lea.vmem %s6, %s287
      %p289 = scmp.lt.s32.totalorder %s21, 1
      %s290 = scalar_select %p289, %s21, 1
      %s291 = smul.addr %s290, 84
      %s292 = smul.addr %s291, 4
      %s293 = scalar_lea.vmem %s0, %s292
      %s294 = smul.u32 8, %s22
      %p295 = scmp.lt.s32.totalorder %s21, 1
      %s296 = scalar_select %p295, %s21, 1
      %p297 = scmp.lt.s32.totalorder %s294, 15
      %s298 = scalar_select %p297, %s294, 15
      %s299 = smul.addr %s298, 2
      %s300 = smul.addr %s296, 32
      %s301 = sadd.s32 %s299, %s300
      %s302 = smul.addr %s301, 8
      %s303 = scalar_lea.vmem %s1, %s302
      %s304 = smul.u32 8, %s22
      %s305 = smul.u32 8, %s22
      %p306 = scmp.lt.s32.totalorder %s21, 1
      %s307 = scalar_select %p306, %s21, 1
      %p308 = scmp.lt.s32.totalorder %s305, 15
      %s309 = scalar_select %p308, %s305, 15
      %s310 = smul.addr %s309, 2
      %s311 = smul.addr %s307, 32
      %s312 = sadd.s32 %s310, %s311
      %s313 = smul.addr %s312, 8
      %s314 = scalar_lea.vmem %s6, %s313
      %s315 = smul.u32 8, %s22
      %s317 = smul.u32 %s22, 8
      %s318 = smul.u32 %s317, 4
      %s319 = smul.addr %s318, 4
      %s320 = scalar_lea.vmem %s293, %s319
      %v321 = vld [vmem:[%s320] sm:$0xf]
      %v322 = vld [vmem:[%s320 + $0x4] sm:$0xf]
      %v323 = vld [vmem:[%s320 + $0x8] sm:$0xf]
      %v324 = vld [vmem:[%s320 + $0xc] sm:$0xf]
      %v325 = vld [vmem:[%s320 + $0x10] sm:$0xf]
      %v326 = vld [vmem:[%s320 + $0x14] sm:$0xf]
      %v327 = vld [vmem:[%s320 + $0x18] sm:$0xf]
      %v328 = vld [vmem:[%s320 + $0x1c] sm:$0xf]
      %v329 = vld [vmem:[%s320 + $0x20] sm:$0xf]
      %v330 = vld [vmem:[%s320 + $0x24] sm:$0xf]
      %v331 = vld [vmem:[%s320 + $0x28] sm:$0xf]
      %v332 = vld [vmem:[%s320 + $0x2c] sm:$0xf]
      %v333 = vld [vmem:[%s320 + $0x30] sm:$0xf]
      %v334 = vld [vmem:[%s320 + $0x34] sm:$0xf]
      %v335 = vld [vmem:[%s320 + $0x38] sm:$0xf]
      %v336 = vld [vmem:[%s320 + $0x3c] sm:$0xf]
      %v337 = vld [vmem:[%s320 + $0x40] sm:$0xf]
      %v338 = vld [vmem:[%s320 + $0x44] sm:$0xf]
      %v339 = vld [vmem:[%s320 + $0x48] sm:$0xf]
      %v340 = vld [vmem:[%s320 + $0x4c] sm:$0xf]
      %v341 = vld [vmem:[%s320 + $0x50] sm:$0xf]
      %v342 = vld [vmem:[%s320 + $0x54] sm:$0xf]
      %v343 = vld [vmem:[%s320 + $0x58] sm:$0xf]
      %v344 = vld [vmem:[%s320 + $0x5c] sm:$0xf]
      %v345 = vld [vmem:[%s320 + $0x60] sm:$0xf]
      %v346 = vld [vmem:[%s320 + $0x64] sm:$0xf]
      %v347 = vld [vmem:[%s320 + $0x68] sm:$0xf]
      %v348 = vld [vmem:[%s320 + $0x6c] sm:$0xf]
      %v349 = vld [vmem:[%s320 + $0x70] sm:$0xf]
      %v350 = vld [vmem:[%s320 + $0x74] sm:$0xf]
      %v351 = vld [vmem:[%s320 + $0x78] sm:$0xf]
      %v352 = vld [vmem:[%s320 + $0x7c] sm:$0xf]
      %v353 = vld [vmem:[%s320 + $0x80] sm:$0xf]
      %v354 = vld [vmem:[%s320 + $0x84] sm:$0xf]
      %v355 = vld [vmem:[%s320 + $0x88] sm:$0xf]
      %v356 = vld [vmem:[%s320 + $0x8c] sm:$0xf]
      %v357 = vld [vmem:[%s320 + $0x90] sm:$0xf]
      %v358 = vld [vmem:[%s320 + $0x94] sm:$0xf]
      %v359 = vld [vmem:[%s320 + $0x98] sm:$0xf]
      %v360 = vld [vmem:[%s320 + $0x9c] sm:$0xf]
      %v361 = vld [vmem:[%s320 + $0xa0] sm:$0xf]
      %v362 = vld [vmem:[%s2] sm:$0x3]
      %s363 = scalar_lea.vmem %s2, 2
      %v364 = vld [vmem:[%s363] sm:$0x3]
      %v406 = vunpack.c.l.b16 %v321
      %v407 = vunpack.c.l.b16 %v322
      %v408 = vunpack.c.l.b16 %v323
      %v409 = vunpack.c.l.b16 %v324
      %v410 = vunpack.c.l.b16 %v325
      %v411 = vunpack.c.l.b16 %v326
      %v412 = vunpack.c.l.b16 %v327
      %v413 = vunpack.c.l.b16 %v328
      %v414 = vunpack.c.l.b16 %v329
      %v415 = vunpack.c.l.b16 %v330
      %v416 = vunpack.c.l.b16 %v331
      %v417 = vunpack.c.l.b16 %v332
      %v418 = vunpack.c.l.b16 %v333
      %v419 = vunpack.c.l.b16 %v334
      %v420 = vunpack.c.l.b16 %v335
      %v421 = vunpack.c.l.b16 %v336
      %v422 = vunpack.c.l.b16 %v337
      %v423 = vunpack.c.l.b16 %v338
      %v424 = vunpack.c.l.b16 %v339
      %v425 = vunpack.c.l.b16 %v340
      %v426 = vunpack.c.l.b16 %v341
      %v427 = vunpack.c.l.b16 %v342
      %v428 = vunpack.c.l.b16 %v343
      %v429 = vunpack.c.l.b16 %v344
      %v430 = vunpack.c.l.b16 %v345
      %v431 = vunpack.c.l.b16 %v346
      %v432 = vunpack.c.l.b16 %v347
      %v433 = vunpack.c.l.b16 %v348
      %v434 = vunpack.c.l.b16 %v349
      %v435 = vunpack.c.l.b16 %v350
      %v436 = vunpack.c.l.b16 %v351
      %v437 = vunpack.c.l.b16 %v352
      %v438 = vunpack.c.l.b16 %v353
      %v439 = vunpack.c.l.b16 %v354
      %v440 = vunpack.c.l.b16 %v355
      %v441 = vunpack.c.l.b16 %v356
      %v442 = vunpack.c.l.b16 %v357
      %v443 = vunpack.c.l.b16 %v358
      %v444 = vunpack.c.l.b16 %v359
      %v445 = vunpack.c.l.b16 %v360
      %v446 = vunpack.c.l.b16 %v361
      %v447 = vpack.c.b16 %v407, %v406
      %v448 = vpack.c.b16 %v409, %v408
      %v449 = vpack.c.b16 %v411, %v410
      %v450 = vpack.c.b16 %v413, %v412
      %v451 = vpack.c.b16 %v415, %v414
      %v452 = vpack.c.b16 %v417, %v416
      %v453 = vpack.c.b16 %v419, %v418
      %v454 = vpack.c.b16 %v421, %v420
      %v455 = vpack.c.b16 %v423, %v422
      %v456 = vpack.c.b16 %v425, %v424
      %v457 = vpack.c.b16 %v427, %v426
      %v458 = vpack.c.b16 %v429, %v428
      %v459 = vpack.c.b16 %v431, %v430
      %v460 = vpack.c.b16 %v433, %v432
      %v461 = vpack.c.b16 %v435, %v434
      %v462 = vpack.c.b16 %v437, %v436
      %v463 = vpack.c.b16 %v439, %v438
      %v464 = vpack.c.b16 %v441, %v440
      %v465 = vpack.c.b16 %v443, %v442
      %v466 = vpack.c.b16 %v445, %v444
      %v467 = vpack.c.b16 %v446, %v446
      %vm468 = vsmask.f32 7424
      %v470 = vshrl.u32 %v447, 16
      %v472 = vshll.u32 %v447, 16
      %v474 = vrot.slane %v472, 1
      %v475 = vor.u32 %v470, %v474
      %v477 = vshll.u32 %v448, 16
      %v479 = vrot.slane %v477, 1
      %v480 = vsel %vm468, %v475, %v479
      %v481 = vshrl.u32 %v448, 16
      %v483 = vor.u32 %v481, %v479
      %v485 = vshll.u32 %v449, 16
      %v487 = vrot.slane %v485, 1
      %v488 = vsel %vm468, %v483, %v487
      %v489 = vshrl.u32 %v449, 16
      %v491 = vor.u32 %v489, %v487
      %v493 = vshll.u32 %v450, 16
      %v495 = vrot.slane %v493, 1
      %v496 = vsel %vm468, %v491, %v495
      %v497 = vshrl.u32 %v450, 16
      %v499 = vor.u32 %v497, %v495
      %v501 = vshll.u32 %v451, 16
      %v503 = vrot.slane %v501, 1
      %v504 = vsel %vm468, %v499, %v503
      %v505 = vshrl.u32 %v451, 16
      %v507 = vor.u32 %v505, %v503
      %v509 = vshll.u32 %v452, 16
      %v511 = vrot.slane %v509, 1
      %v512 = vsel %vm468, %v507, %v511
      %v513 = vshrl.u32 %v452, 16
      %v515 = vor.u32 %v513, %v511
      %v517 = vshll.u32 %v453, 16
      %v519 = vrot.slane %v517, 1
      %v520 = vsel %vm468, %v515, %v519
      %v521 = vshrl.u32 %v453, 16
      %v523 = vor.u32 %v521, %v519
      %v525 = vshll.u32 %v454, 16
      %v527 = vrot.slane %v525, 1
      %v528 = vsel %vm468, %v523, %v527
      %v529 = vshrl.u32 %v454, 16
      %v531 = vor.u32 %v529, %v527
      %v533 = vshll.u32 %v455, 16
      %v535 = vrot.slane %v533, 1
      %v536 = vsel %vm468, %v531, %v535
      %v537 = vshrl.u32 %v455, 16
      %v539 = vor.u32 %v537, %v535
      %v541 = vshll.u32 %v456, 16
      %v543 = vrot.slane %v541, 1
      %v544 = vsel %vm468, %v539, %v543
      %v545 = vshrl.u32 %v456, 16
      %v547 = vor.u32 %v545, %v543
      %v549 = vshll.u32 %v457, 16
      %v551 = vrot.slane %v549, 1
      %v552 = vsel %vm468, %v547, %v551
      %v553 = vshrl.u32 %v457, 16
      %v555 = vor.u32 %v553, %v551
      %v557 = vshll.u32 %v458, 16
      %v559 = vrot.slane %v557, 1
      %v560 = vsel %vm468, %v555, %v559
      %v561 = vshrl.u32 %v458, 16
      %v563 = vor.u32 %v561, %v559
      %v565 = vshll.u32 %v459, 16
      %v567 = vrot.slane %v565, 1
      %v568 = vsel %vm468, %v563, %v567
      %v569 = vshrl.u32 %v459, 16
      %v571 = vor.u32 %v569, %v567
      %v573 = vshll.u32 %v460, 16
      %v575 = vrot.slane %v573, 1
      %v576 = vsel %vm468, %v571, %v575
      %v577 = vshrl.u32 %v460, 16
      %v579 = vor.u32 %v577, %v575
      %v581 = vshll.u32 %v461, 16
      %v583 = vrot.slane %v581, 1
      %v584 = vsel %vm468, %v579, %v583
      %v585 = vshrl.u32 %v461, 16
      %v587 = vor.u32 %v585, %v583
      %v589 = vshll.u32 %v462, 16
      %v591 = vrot.slane %v589, 1
      %v592 = vsel %vm468, %v587, %v591
      %v593 = vshrl.u32 %v462, 16
      %v595 = vor.u32 %v593, %v591
      %v597 = vshll.u32 %v463, 16
      %v599 = vrot.slane %v597, 1
      %v600 = vsel %vm468, %v595, %v599
      %v601 = vshrl.u32 %v463, 16
      %v603 = vor.u32 %v601, %v599
      %v605 = vshll.u32 %v464, 16
      %v607 = vrot.slane %v605, 1
      %v608 = vsel %vm468, %v603, %v607
      %v609 = vshrl.u32 %v464, 16
      %v611 = vor.u32 %v609, %v607
      %v613 = vshll.u32 %v465, 16
      %v615 = vrot.slane %v613, 1
      %v616 = vsel %vm468, %v611, %v615
      %v617 = vshrl.u32 %v465, 16
      %v619 = vor.u32 %v617, %v615
      %v621 = vshll.u32 %v466, 16
      %v623 = vrot.slane %v621, 1
      %v624 = vsel %vm468, %v619, %v623
      %v625 = vshrl.u32 %v466, 16
      %v627 = vor.u32 %v625, %v623
      %v629 = vshll.u32 %v467, 16
      %v631 = vrot.slane %v629, 1
      %v632 = vsel %vm468, %v627, %v631
      %vm633 = vcmask 31744
      %v635 = vsel %vm633, %v480, 0
      %v638 = vsel %vm633, %v488, 0
      %v641 = vsel %vm633, %v496, 0
      %v644 = vsel %vm633, %v504, 0
      %v647 = vsel %vm633, %v512, 0
      %v650 = vsel %vm633, %v520, 0
      %v653 = vsel %vm633, %v528, 0
      %v656 = vsel %vm633, %v536, 0
      %v659 = vsel %vm633, %v544, 0
      %v662 = vsel %vm633, %v552, 0
      %v665 = vsel %vm633, %v560, 0
      %v668 = vsel %vm633, %v568, 0
      %v671 = vsel %vm633, %v576, 0
      %v674 = vsel %vm633, %v584, 0
      %v677 = vsel %vm633, %v592, 0
      %v680 = vsel %vm633, %v600, 0
      %v683 = vsel %vm633, %v608, 0
      %v686 = vsel %vm633, %v616, 0
      %v689 = vsel %vm633, %v624, 0
      %v692 = vsel %vm633, %v632, 0
      %vm694 = vcmask 1041408
      %v696 = vsel %vm694, %v364, 0
      %698 = vmatprep.subr.bf16.mxu0 0
      %699 = vmatpush1.bf16.msra.mxu0 %v696
      %700 = vmatprep.subr.bf16.mxu0 0
      %701 = vmatpush1.bf16.msra.mxu0 0
      %702 = vmatprep.subr.bf16.mxu0 0
      %703 = vmatpush1.bf16.msra.mxu0 0
      %704 = vmatprep.subr.bf16.mxu0 0
      %705 = vmatpush1.bf16.msra.mxu0 0
      %706 = vmatprep.subr.bf16.mxu0 0
      %707 = vmatpush1.bf16.msra.mxu0 0
      %708 = vmatprep.subr.bf16.mxu0 0
      %709 = vmatpush1.bf16.msra.mxu0 0
      %710 = vmatprep.subr.bf16.mxu0 0
      %711 = vmatpush1.bf16.msra.mxu0 0
      %712 = vmatprep.subr.bf16.mxu0 0
      %713 = vmatpush1.bf16.msra.mxu0 0
      %714 = vmatprep.subr.bf16.mxu0 0
      %715 = vmatpush1.bf16.msra.mxu0 0
      %716 = vmatprep.subr.bf16.mxu0 0
      %717 = vmatpush1.bf16.msra.mxu0 0
      %718 = vmatprep.subr.bf16.mxu0 0
      %719 = vmatpush1.bf16.msra.mxu0 0
      %720 = vmatprep.subr.bf16.mxu0 0
      %721 = vmatpush1.bf16.msra.mxu0 0
      %722 = vmatprep.subr.bf16.mxu0 0
      %723 = vmatpush1.bf16.msra.mxu0 0
      %724 = vmatprep.subr.bf16.mxu0 0
      %725 = vmatpush1.bf16.msra.mxu0 0
      %726 = vmatprep.subr.bf16.mxu0 0
      %727 = vmatpush1.bf16.msra.mxu0 0
      %728 = vmatprep.subr.bf16.mxu0 0
      %729 = vmatpush1.bf16.msra.mxu0 0
      %730 = vmatprep.mubr.bf16.mxu0 0
      %731 = vmatmul.mubr.bf16.gmra.mrb[0].mxu0 %v635
      %v732 = vpop.f32.mrb[0].mxu0
      %v733 = vadd.f32 0.0, %v732
      %v734 = vpop.f32.mrb[0].mxu0
      %v735 = vpop.f32.mrb[0].mxu0
      %v736 = vadd.f32 0.0, %v735
      %v737 = vpop.f32.mrb[0].mxu0
      %738 = vmatprep.mubr.bf16.mxu0 0
      %739 = vmatmul.mubr.bf16.gmra.mrb[0].mxu0 %v638
      %v740 = vpop.f32.mrb[0].mxu0
      %v741 = vadd.f32 0.0, %v740
      %v742 = vpop.f32.mrb[0].mxu0
      %v743 = vpop.f32.mrb[0].mxu0
      %v744 = vadd.f32 0.0, %v743
      %v745 = vpop.f32.mrb[0].mxu0
      %746 = vmatprep.mubr.bf16.mxu0 0
      %747 = vmatmul.mubr.bf16.gmra.mrb[0].mxu0 %v641
      %v748 = vpop.f32.mrb[0].mxu0
      %v749 = vadd.f32 0.0, %v748
      %v750 = vpop.f32.mrb[0].mxu0
      %v751 = vpop.f32.mrb[0].mxu0
      %v752 = vadd.f32 0.0, %v751
      %v753 = vpop.f32.mrb[0].mxu0
      %754 = vmatprep.mubr.bf16.mxu0 0
      %755 = vmatmul.mubr.bf16.gmra.mrb[0].mxu0 %v644
      %v756 = vpop.f32.mrb[0].mxu0
      %v757 = vadd.f32 0.0, %v756
      %v758 = vpop.f32.mrb[0].mxu0
      %v759 = vpop.f32.mrb[0].mxu0
      %v760 = vadd.f32 0.0, %v759
      %v761 = vpop.f32.mrb[0].mxu0
      %762 = vmatprep.mubr.bf16.mxu0 0
      %763 = vmatmul.mubr.bf16.gmra.mrb[0].mxu0 %v647
      %v764 = vpop.f32.mrb[0].mxu0
      %v765 = vadd.f32 0.0, %v764
      %v766 = vpop.f32.mrb[0].mxu0
      %v767 = vpop.f32.mrb[0].mxu0
      %v768 = vadd.f32 0.0, %v767
      %v769 = vpop.f32.mrb[0].mxu0
      %770 = vmatprep.mubr.bf16.mxu0 0
      %771 = vmatmul.mubr.bf16.gmra.mrb[0].mxu0 %v650
      %v772 = vpop.f32.mrb[0].mxu0
      %v773 = vadd.f32 0.0, %v772
      %v774 = vpop.f32.mrb[0].mxu0
      %v775 = vpop.f32.mrb[0].mxu0
      %v776 = vadd.f32 0.0, %v775
      %v777 = vpop.f32.mrb[0].mxu0
      %778 = vmatprep.mubr.bf16.mxu0 0
      %779 = vmatmul.mubr.bf16.gmra.mrb[0].mxu0 %v653
      %v780 = vpop.f32.mrb[0].mxu0
      %v781 = vadd.f32 0.0, %v780
      %v782 = vpop.f32.mrb[0].mxu0
      %v783 = vpop.f32.mrb[0].mxu0
      %v784 = vadd.f32 0.0, %v783
      %v785 = vpop.f32.mrb[0].mxu0
      %786 = vmatprep.mubr.bf16.mxu0 0
      %787 = vmatmul.mubr.bf16.gmra.mrb[0].mxu0 %v656
      %v788 = vpop.f32.mrb[0].mxu0
      %v789 = vadd.f32 0.0, %v788
      %v790 = vpop.f32.mrb[0].mxu0
      %v791 = vpop.f32.mrb[0].mxu0
      %v792 = vadd.f32 0.0, %v791
      %v793 = vpop.f32.mrb[0].mxu0
      %794 = vmatprep.mubr.bf16.mxu0 0
      %795 = vmatmul.mubr.bf16.gmra.mrb[0].mxu0 %v659
      %v796 = vpop.f32.mrb[0].mxu0
      %v797 = vadd.f32 0.0, %v796
      %v798 = vpop.f32.mrb[0].mxu0
      %v799 = vpop.f32.mrb[0].mxu0
      %v800 = vadd.f32 0.0, %v799
      %v801 = vpop.f32.mrb[0].mxu0
      %802 = vmatprep.mubr.bf16.mxu0 0
      %803 = vmatmul.mubr.bf16.gmra.mrb[0].mxu0 %v662
      %v804 = vpop.f32.mrb[0].mxu0
      %v805 = vadd.f32 0.0, %v804
      %v806 = vpop.f32.mrb[0].mxu0
      %v807 = vpop.f32.mrb[0].mxu0
      %v808 = vadd.f32 0.0, %v807
      %v809 = vpop.f32.mrb[0].mxu0
      %810 = vmatprep.mubr.bf16.mxu0 0
      %811 = vmatmul.mubr.bf16.gmra.mrb[0].mxu0 %v665
      %v812 = vpop.f32.mrb[0].mxu0
      %v813 = vadd.f32 0.0, %v812
      %v814 = vpop.f32.mrb[0].mxu0
      %v815 = vpop.f32.mrb[0].mxu0
      %v816 = vadd.f32 0.0, %v815
      %v817 = vpop.f32.mrb[0].mxu0
      %818 = vmatprep.mubr.bf16.mxu0 0
      %819 = vmatmul.mubr.bf16.gmra.mrb[0].mxu0 %v668
      %v820 = vpop.f32.mrb[0].mxu0
      %v821 = vadd.f32 0.0, %v820
      %v822 = vpop.f32.mrb[0].mxu0
      %v823 = vpop.f32.mrb[0].mxu0
      %v824 = vadd.f32 0.0, %v823
      %v825 = vpop.f32.mrb[0].mxu0
      %826 = vmatprep.mubr.bf16.mxu0 0
      %827 = vmatmul.mubr.bf16.gmra.mrb[0].mxu0 %v671
      %v828 = vpop.f32.mrb[0].mxu0
      %v829 = vadd.f32 0.0, %v828
      %v830 = vpop.f32.mrb[0].mxu0
      %v831 = vpop.f32.mrb[0].mxu0
      %v832 = vadd.f32 0.0, %v831
      %v833 = vpop.f32.mrb[0].mxu0
      %834 = vmatprep.mubr.bf16.mxu0 0
      %835 = vmatmul.mubr.bf16.gmra.mrb[0].mxu0 %v674
      %v836 = vpop.f32.mrb[0].mxu0
      %v837 = vadd.f32 0.0, %v836
      %v838 = vpop.f32.mrb[0].mxu0
      %v839 = vpop.f32.mrb[0].mxu0
      %v840 = vadd.f32 0.0, %v839
      %v841 = vpop.f32.mrb[0].mxu0
      %842 = vmatprep.mubr.bf16.mxu0 0
      %843 = vmatmul.mubr.bf16.gmra.mrb[0].mxu0 %v677
      %v844 = vpop.f32.mrb[0].mxu0
      %v845 = vadd.f32 0.0, %v844
      %v846 = vpop.f32.mrb[0].mxu0
      %v847 = vpop.f32.mrb[0].mxu0
      %v848 = vadd.f32 0.0, %v847
      %v849 = vpop.f32.mrb[0].mxu0
      %850 = vmatprep.mubr.bf16.mxu0 0
      %851 = vmatmul.mubr.bf16.gmra.mrb[0].mxu0 %v680
      %v852 = vpop.f32.mrb[0].mxu0
      %v853 = vadd.f32 0.0, %v852
      %v854 = vpop.f32.mrb[0].mxu0
      %v855 = vpop.f32.mrb[0].mxu0
      %v856 = vadd.f32 0.0, %v855
      %v857 = vpop.f32.mrb[0].mxu0
      %858 = vmatprep.mubr.bf16.mxu0 0
      %859 = vmatmul.mubr.bf16.gmra.mrb[0].mxu0 %v683
      %v860 = vpop.f32.mrb[0].mxu0
      %v861 = vadd.f32 0.0, %v860
      %v862 = vpop.f32.mrb[0].mxu0
      %v863 = vpop.f32.mrb[0].mxu0
      %v864 = vadd.f32 0.0, %v863
      %v865 = vpop.f32.mrb[0].mxu0
      %866 = vmatprep.mubr.bf16.mxu0 0
      %867 = vmatmul.mubr.bf16.gmra.mrb[0].mxu0 %v686
      %v868 = vpop.f32.mrb[0].mxu0
      %v869 = vadd.f32 0.0, %v868
      %v870 = vpop.f32.mrb[0].mxu0
      %v871 = vpop.f32.mrb[0].mxu0
      %v872 = vadd.f32 0.0, %v871
      %v873 = vpop.f32.mrb[0].mxu0
      %874 = vmatprep.mubr.bf16.mxu0 0
      %875 = vmatmul.mubr.bf16.gmra.mrb[0].mxu0 %v689
      %v876 = vpop.f32.mrb[0].mxu0
      %v877 = vadd.f32 0.0, %v876
      %v878 = vpop.f32.mrb[0].mxu0
      %v879 = vpop.f32.mrb[0].mxu0
      %v880 = vadd.f32 0.0, %v879
      %v881 = vpop.f32.mrb[0].mxu0
      %882 = vmatprep.mubr.bf16.mxu0 0
      %883 = vmatmul.mubr.bf16.gmra.mrb[0].mxu0 %v692
      %v884 = vpop.f32.mrb[0].mxu0
      %v885 = vadd.f32 0.0, %v884
      %v886 = vpop.f32.mrb[0].mxu0
      %v887 = vpop.f32.mrb[0].mxu0
      %v888 = vadd.f32 0.0, %v887
      %v889 = vpop.f32.mrb[0].mxu0
      %890 = vdwg.mxu0
      %v891 = vsel %vm633, %v447, 0
      %v893 = vsel %vm633, %v448, 0
      %v895 = vsel %vm633, %v449, 0
      %v897 = vsel %vm633, %v450, 0
      %v899 = vsel %vm633, %v451, 0
      %v901 = vsel %vm633, %v452, 0
      %v903 = vsel %vm633, %v453, 0
      %v905 = vsel %vm633, %v454, 0
      %v907 = vsel %vm633, %v455, 0
      %v909 = vsel %vm633, %v456, 0
      %v911 = vsel %vm633, %v457, 0
      %v913 = vsel %vm633, %v458, 0
      %v915 = vsel %vm633, %v459, 0
      %v917 = vsel %vm633, %v460, 0
      %v919 = vsel %vm633, %v461, 0
      %v921 = vsel %vm633, %v462, 0
      %v923 = vsel %vm633, %v463, 0
      %v925 = vsel %vm633, %v464, 0
      %v927 = vsel %vm633, %v465, 0
      %v929 = vsel %vm633, %v466, 0
      %v932 = vsel %vm694, %v362, 0
      %934 = vmatprep.subr.bf16.mxu0 0
      %935 = vmatpush1.bf16.msra.mxu0 %v932
      %936 = vmatprep.subr.bf16.mxu0 0
      %937 = vmatpush1.bf16.msra.mxu0 0
      %938 = vmatprep.subr.bf16.mxu0 0
      %939 = vmatpush1.bf16.msra.mxu0 0
      %940 = vmatprep.subr.bf16.mxu0 0
      %941 = vmatpush1.bf16.msra.mxu0 0
      %942 = vmatprep.subr.bf16.mxu0 0
      %943 = vmatpush1.bf16.msra.mxu0 0
      %944 = vmatprep.subr.bf16.mxu0 0
      %945 = vmatpush1.bf16.msra.mxu0 0
      %946 = vmatprep.subr.bf16.mxu0 0
      %947 = vmatpush1.bf16.msra.mxu0 0
      %948 = vmatprep.subr.bf16.mxu0 0
      %949 = vmatpush1.bf16.msra.mxu0 0
      %950 = vmatprep.subr.bf16.mxu0 0
      %951 = vmatpush1.bf16.msra.mxu0 0
      %952 = vmatprep.subr.bf16.mxu0 0
      %953 = vmatpush1.bf16.msra.mxu0 0
      %954 = vmatprep.subr.bf16.mxu0 0
      %955 = vmatpush1.bf16.msra.mxu0 0
      %956 = vmatprep.subr.bf16.mxu0 0
      %957 = vmatpush1.bf16.msra.mxu0 0
      %958 = vmatprep.subr.bf16.mxu0 0
      %959 = vmatpush1.bf16.msra.mxu0 0
      %960 = vmatprep.subr.bf16.mxu0 0
      %961 = vmatpush1.bf16.msra.mxu0 0
      %962 = vmatprep.subr.bf16.mxu0 0
      %963 = vmatpush1.bf16.msra.mxu0 0
      %964 = vmatprep.subr.bf16.mxu0 0
      %965 = vmatpush1.bf16.msra.mxu0 0
      %966 = vmatprep.mubr.bf16.mxu0 0
      %967 = vmatmul.mubr.bf16.gmra.mrb[0].mxu0 %v891
      %v968 = vpop.f32.mrb[0].mxu0
      %v969 = vadd.f32 %v733, %v968
      %v970 = vpop.f32.mrb[0].mxu0
      %v971 = vpop.f32.mrb[0].mxu0
      %v972 = vadd.f32 %v736, %v971
      %v973 = vpop.f32.mrb[0].mxu0
      %974 = vmatprep.mubr.bf16.mxu0 0
      %975 = vmatmul.mubr.bf16.gmra.mrb[0].mxu0 %v893
      %v976 = vpop.f32.mrb[0].mxu0
      %v977 = vadd.f32 %v741, %v976
      %v978 = vpop.f32.mrb[0].mxu0
      %v979 = vpop.f32.mrb[0].mxu0
      %v980 = vadd.f32 %v744, %v979
      %v981 = vpop.f32.mrb[0].mxu0
      %982 = vmatprep.mubr.bf16.mxu0 0
      %983 = vmatmul.mubr.bf16.gmra.mrb[0].mxu0 %v895
      %v984 = vpop.f32.mrb[0].mxu0
      %v985 = vadd.f32 %v749, %v984
      %v986 = vpop.f32.mrb[0].mxu0
      %v987 = vpop.f32.mrb[0].mxu0
      %v988 = vadd.f32 %v752, %v987
      %v989 = vpop.f32.mrb[0].mxu0
      %990 = vmatprep.mubr.bf16.mxu0 0
      %991 = vmatmul.mubr.bf16.gmra.mrb[0].mxu0 %v897
      %v992 = vpop.f32.mrb[0].mxu0
      %v993 = vadd.f32 %v757, %v992
      %v994 = vpop.f32.mrb[0].mxu0
      %v995 = vpop.f32.mrb[0].mxu0
      %v996 = vadd.f32 %v760, %v995
      %v997 = vpop.f32.mrb[0].mxu0
      %998 = vmatprep.mubr.bf16.mxu0 0
      %999 = vmatmul.mubr.bf16.gmra.mrb[0].mxu0 %v899
      %v1000 = vpop.f32.mrb[0].mxu0
      %v1001 = vadd.f32 %v765, %v1000
      %v1002 = vpop.f32.mrb[0].mxu0
      %v1003 = vpop.f32.mrb[0].mxu0
      %v1004 = vadd.f32 %v768, %v1003
      %v1005 = vpop.f32.mrb[0].mxu0
      %1006 = vmatprep.mubr.bf16.mxu0 0
      %1007 = vmatmul.mubr.bf16.gmra.mrb[0].mxu0 %v901
      %v1008 = vpop.f32.mrb[0].mxu0
      %v1009 = vadd.f32 %v773, %v1008
      %v1010 = vpop.f32.mrb[0].mxu0
      %v1011 = vpop.f32.mrb[0].mxu0
      %v1012 = vadd.f32 %v776, %v1011
      %v1013 = vpop.f32.mrb[0].mxu0
      %1014 = vmatprep.mubr.bf16.mxu0 0
      %1015 = vmatmul.mubr.bf16.gmra.mrb[0].mxu0 %v903
      %v1016 = vpop.f32.mrb[0].mxu0
      %v1017 = vadd.f32 %v781, %v1016
      %v1018 = vpop.f32.mrb[0].mxu0
      %v1019 = vpop.f32.mrb[0].mxu0
      %v1020 = vadd.f32 %v784, %v1019
      %v1021 = vpop.f32.mrb[0].mxu0
      %1022 = vmatprep.mubr.bf16.mxu0 0
      %1023 = vmatmul.mubr.bf16.gmra.mrb[0].mxu0 %v905
      %v1024 = vpop.f32.mrb[0].mxu0
      %v1025 = vadd.f32 %v789, %v1024
      %v1026 = vpop.f32.mrb[0].mxu0
      %v1027 = vpop.f32.mrb[0].mxu0
      %v1028 = vadd.f32 %v792, %v1027
      %v1029 = vpop.f32.mrb[0].mxu0
      %1030 = vmatprep.mubr.bf16.mxu0 0
      %1031 = vmatmul.mubr.bf16.gmra.mrb[0].mxu0 %v907
      %v1032 = vpop.f32.mrb[0].mxu0
      %v1033 = vadd.f32 %v797, %v1032
      %v1034 = vpop.f32.mrb[0].mxu0
      %v1035 = vpop.f32.mrb[0].mxu0
      %v1036 = vadd.f32 %v800, %v1035
      %v1037 = vpop.f32.mrb[0].mxu0
      %1038 = vmatprep.mubr.bf16.mxu0 0
      %1039 = vmatmul.mubr.bf16.gmra.mrb[0].mxu0 %v909
      %v1040 = vpop.f32.mrb[0].mxu0
      %v1041 = vadd.f32 %v805, %v1040
      %v1042 = vpop.f32.mrb[0].mxu0
      %v1043 = vpop.f32.mrb[0].mxu0
      %v1044 = vadd.f32 %v808, %v1043
      %v1045 = vpop.f32.mrb[0].mxu0
      %1046 = vmatprep.mubr.bf16.mxu0 0
      %1047 = vmatmul.mubr.bf16.gmra.mrb[0].mxu0 %v911
      %v1048 = vpop.f32.mrb[0].mxu0
      %v1049 = vadd.f32 %v813, %v1048
      %v1050 = vpop.f32.mrb[0].mxu0
      %v1051 = vpop.f32.mrb[0].mxu0
      %v1052 = vadd.f32 %v816, %v1051
      %v1053 = vpop.f32.mrb[0].mxu0
      %1054 = vmatprep.mubr.bf16.mxu0 0
      %1055 = vmatmul.mubr.bf16.gmra.mrb[0].mxu0 %v913
      %v1056 = vpop.f32.mrb[0].mxu0
      %v1057 = vadd.f32 %v821, %v1056
      %v1058 = vpop.f32.mrb[0].mxu0
      %v1059 = vpop.f32.mrb[0].mxu0
      %v1060 = vadd.f32 %v824, %v1059
      %v1061 = vpop.f32.mrb[0].mxu0
      %1062 = vmatprep.mubr.bf16.mxu0 0
      %1063 = vmatmul.mubr.bf16.gmra.mrb[0].mxu0 %v915
      %v1064 = vpop.f32.mrb[0].mxu0
      %v1065 = vadd.f32 %v829, %v1064
      %v1066 = vpop.f32.mrb[0].mxu0
      %v1067 = vpop.f32.mrb[0].mxu0
      %v1068 = vadd.f32 %v832, %v1067
      %v1069 = vpop.f32.mrb[0].mxu0
      %1070 = vmatprep.mubr.bf16.mxu0 0
      %1071 = vmatmul.mubr.bf16.gmra.mrb[0].mxu0 %v917
      %v1072 = vpop.f32.mrb[0].mxu0
      %v1073 = vadd.f32 %v837, %v1072
      %v1074 = vpop.f32.mrb[0].mxu0
      %v1075 = vpop.f32.mrb[0].mxu0
      %v1076 = vadd.f32 %v840, %v1075
      %v1077 = vpop.f32.mrb[0].mxu0
      %1078 = vmatprep.mubr.bf16.mxu0 0
      %1079 = vmatmul.mubr.bf16.gmra.mrb[0].mxu0 %v919
      %v1080 = vpop.f32.mrb[0].mxu0
      %v1081 = vadd.f32 %v845, %v1080
      %v1082 = vpop.f32.mrb[0].mxu0
      %v1083 = vpop.f32.mrb[0].mxu0
      %v1084 = vadd.f32 %v848, %v1083
      %v1085 = vpop.f32.mrb[0].mxu0
      %1086 = vmatprep.mubr.bf16.mxu0 0
      %1087 = vmatmul.mubr.bf16.gmra.mrb[0].mxu0 %v921
      %v1088 = vpop.f32.mrb[0].mxu0
      %v1089 = vadd.f32 %v853, %v1088
      %v1090 = vpop.f32.mrb[0].mxu0
      %v1091 = vpop.f32.mrb[0].mxu0
      %v1092 = vadd.f32 %v856, %v1091
      %v1093 = vpop.f32.mrb[0].mxu0
      %1094 = vmatprep.mubr.bf16.mxu0 0
      %1095 = vmatmul.mubr.bf16.gmra.mrb[0].mxu0 %v923
      %v1096 = vpop.f32.mrb[0].mxu0
      %v1097 = vadd.f32 %v861, %v1096
      %v1098 = vpop.f32.mrb[0].mxu0
      %v1099 = vpop.f32.mrb[0].mxu0
      %v1100 = vadd.f32 %v864, %v1099
      %v1101 = vpop.f32.mrb[0].mxu0
      %1102 = vmatprep.mubr.bf16.mxu0 0
      %1103 = vmatmul.mubr.bf16.gmra.mrb[0].mxu0 %v925
      %v1104 = vpop.f32.mrb[0].mxu0
      %v1105 = vadd.f32 %v869, %v1104
      %v1106 = vpop.f32.mrb[0].mxu0
      %v1107 = vpop.f32.mrb[0].mxu0
      %v1108 = vadd.f32 %v872, %v1107
      %v1109 = vpop.f32.mrb[0].mxu0
      %1110 = vmatprep.mubr.bf16.mxu0 0
      %1111 = vmatmul.mubr.bf16.gmra.mrb[0].mxu0 %v927
      %v1112 = vpop.f32.mrb[0].mxu0
      %v1113 = vadd.f32 %v877, %v1112
      %v1114 = vpop.f32.mrb[0].mxu0
      %v1115 = vpop.f32.mrb[0].mxu0
      %v1116 = vadd.f32 %v880, %v1115
      %v1117 = vpop.f32.mrb[0].mxu0
      %1118 = vmatprep.mubr.bf16.mxu0 0
      %1119 = vmatmul.mubr.bf16.gmra.mrb[0].mxu0 %v929
      %v1120 = vpop.f32.mrb[0].mxu0
      %v1121 = vadd.f32 %v885, %v1120
      %v1122 = vpop.f32.mrb[0].mxu0
      %v1123 = vpop.f32.mrb[0].mxu0
      %v1124 = vadd.f32 %v888, %v1123
      %v1125 = vpop.f32.mrb[0].mxu0
      %1126 = vdwg.mxu0
      %s1127 = scalar_lea.vmem %s2, 4
      %v1128 = vld [vmem:[%s1127] sm:$0x3]
      %vm1129 = vcmask 1046528
      %v1130 = vrot.slane %v447, 1
      %v1131 = vrot.slane %v448, 1
      %v1132 = vsel %vm1129, %v1130, %v1131
      %v1133 = vrot.slane %v449, 1
      %v1134 = vsel %vm1129, %v1131, %v1133
      %v1135 = vrot.slane %v450, 1
      %v1136 = vsel %vm1129, %v1133, %v1135
      %v1137 = vrot.slane %v451, 1
      %v1138 = vsel %vm1129, %v1135, %v1137
      %v1139 = vrot.slane %v452, 1
      %v1140 = vsel %vm1129, %v1137, %v1139
      %v1141 = vrot.slane %v453, 1
      %v1142 = vsel %vm1129, %v1139, %v1141
      %v1143 = vrot.slane %v454, 1
      %v1144 = vsel %vm1129, %v1141, %v1143
      %v1145 = vrot.slane %v455, 1
      %v1146 = vsel %vm1129, %v1143, %v1145
      %v1147 = vrot.slane %v456, 1
      %v1148 = vsel %vm1129, %v1145, %v1147
      %v1149 = vrot.slane %v457, 1
      %v1150 = vsel %vm1129, %v1147, %v1149
      %v1151 = vrot.slane %v458, 1
      %v1152 = vsel %vm1129, %v1149, %v1151
      %v1153 = vrot.slane %v459, 1
      %v1154 = vsel %vm1129, %v1151, %v1153
      %v1155 = vrot.slane %v460, 1
      %v1156 = vsel %vm1129, %v1153, %v1155
      %v1157 = vrot.slane %v461, 1
      %v1158 = vsel %vm1129, %v1155, %v1157
      %v1159 = vrot.slane %v462, 1
      %v1160 = vsel %vm1129, %v1157, %v1159
      %v1161 = vrot.slane %v463, 1
      %v1162 = vsel %vm1129, %v1159, %v1161
      %v1163 = vrot.slane %v464, 1
      %v1164 = vsel %vm1129, %v1161, %v1163
      %v1165 = vrot.slane %v465, 1
      %v1166 = vsel %vm1129, %v1163, %v1165
      %v1167 = vrot.slane %v466, 1
      %v1168 = vsel %vm1129, %v1165, %v1167
      %v1169 = vrot.slane %v467, 1
      %v1170 = vsel %vm1129, %v1167, %v1169
      %v1172 = vsel %vm633, %v1132, 0
      %v1175 = vsel %vm633, %v1134, 0
      %v1178 = vsel %vm633, %v1136, 0
      %v1181 = vsel %vm633, %v1138, 0
      %v1184 = vsel %vm633, %v1140, 0
      %v1187 = vsel %vm633, %v1142, 0
      %v1190 = vsel %vm633, %v1144, 0
      %v1193 = vsel %vm633, %v1146, 0
      %v1196 = vsel %vm633, %v1148, 0
      %v1199 = vsel %vm633, %v1150, 0
      %v1202 = vsel %vm633, %v1152, 0
      %v1205 = vsel %vm633, %v1154, 0
      %v1208 = vsel %vm633, %v1156, 0
      %v1211 = vsel %vm633, %v1158, 0
      %v1214 = vsel %vm633, %v1160, 0
      %v1217 = vsel %vm633, %v1162, 0
      %v1220 = vsel %vm633, %v1164, 0
      %v1223 = vsel %vm633, %v1166, 0
      %v1226 = vsel %vm633, %v1168, 0
      %v1229 = vsel %vm633, %v1170, 0
      %v1232 = vsel %vm694, %v1128, 0
      %1234 = vmatprep.subr.bf16.mxu0 0
      %1235 = vmatpush1.bf16.msra.mxu0 %v1232
      %1236 = vmatprep.subr.bf16.mxu0 0
      %1237 = vmatpush1.bf16.msra.mxu0 0
      %1238 = vmatprep.subr.bf16.mxu0 0
      %1239 = vmatpush1.bf16.msra.mxu0 0
      %1240 = vmatprep.subr.bf16.mxu0 0
      %1241 = vmatpush1.bf16.msra.mxu0 0
      %1242 = vmatprep.subr.bf16.mxu0 0
      %1243 = vmatpush1.bf16.msra.mxu0 0
      %1244 = vmatprep.subr.bf16.mxu0 0
      %1245 = vmatpush1.bf16.msra.mxu0 0
      %1246 = vmatprep.subr.bf16.mxu0 0
      %1247 = vmatpush1.bf16.msra.mxu0 0
      %1248 = vmatprep.subr.bf16.mxu0 0
      %1249 = vmatpush1.bf16.msra.mxu0 0
      %1250 = vmatprep.subr.bf16.mxu0 0
      %1251 = vmatpush1.bf16.msra.mxu0 0
      %1252 = vmatprep.subr.bf16.mxu0 0
      %1253 = vmatpush1.bf16.msra.mxu0 0
      %1254 = vmatprep.subr.bf16.mxu0 0
      %1255 = vmatpush1.bf16.msra.mxu0 0
      %1256 = vmatprep.subr.bf16.mxu0 0
      %1257 = vmatpush1.bf16.msra.mxu0 0
      %1258 = vmatprep.subr.bf16.mxu0 0
      %1259 = vmatpush1.bf16.msra.mxu0 0
      %1260 = vmatprep.subr.bf16.mxu0 0
      %1261 = vmatpush1.bf16.msra.mxu0 0
      %1262 = vmatprep.subr.bf16.mxu0 0
      %1263 = vmatpush1.bf16.msra.mxu0 0
      %1264 = vmatprep.subr.bf16.mxu0 0
      %1265 = vmatpush1.bf16.msra.mxu0 0
      %1266 = vmatprep.mubr.bf16.mxu0 0
      %1267 = vmatmul.mubr.bf16.gmra.mrb[0].mxu0 %v1172
      %v1268 = vpop.f32.mrb[0].mxu0
      %v1269 = vadd.f32 0.0, %v1268
      %v1270 = vpop.f32.mrb[0].mxu0
      %v1271 = vpop.f32.mrb[0].mxu0
      %v1272 = vadd.f32 0.0, %v1271
      %v1273 = vpop.f32.mrb[0].mxu0
      %1274 = vmatprep.mubr.bf16.mxu0 0
      %1275 = vmatmul.mubr.bf16.gmra.mrb[0].mxu0 %v1175
      %v1276 = vpop.f32.mrb[0].mxu0
      %v1277 = vadd.f32 0.0, %v1276
      %v1278 = vpop.f32.mrb[0].mxu0
      %v1279 = vpop.f32.mrb[0].mxu0
      %v1280 = vadd.f32 0.0, %v1279
      %v1281 = vpop.f32.mrb[0].mxu0
      %1282 = vmatprep.mubr.bf16.mxu0 0
      %1283 = vmatmul.mubr.bf16.gmra.mrb[0].mxu0 %v1178
      %v1284 = vpop.f32.mrb[0].mxu0
      %v1285 = vadd.f32 0.0, %v1284
      %v1286 = vpop.f32.mrb[0].mxu0
      %v1287 = vpop.f32.mrb[0].mxu0
      %v1288 = vadd.f32 0.0, %v1287
      %v1289 = vpop.f32.mrb[0].mxu0
      %1290 = vmatprep.mubr.bf16.mxu0 0
      %1291 = vmatmul.mubr.bf16.gmra.mrb[0].mxu0 %v1181
      %v1292 = vpop.f32.mrb[0].mxu0
      %v1293 = vadd.f32 0.0, %v1292
      %v1294 = vpop.f32.mrb[0].mxu0
      %v1295 = vpop.f32.mrb[0].mxu0
      %v1296 = vadd.f32 0.0, %v1295
      %v1297 = vpop.f32.mrb[0].mxu0
      %1298 = vmatprep.mubr.bf16.mxu0 0
      %1299 = vmatmul.mubr.bf16.gmra.mrb[0].mxu0 %v1184
      %v1300 = vpop.f32.mrb[0].mxu0
      %v1301 = vadd.f32 0.0, %v1300
      %v1302 = vpop.f32.mrb[0].mxu0
      %v1303 = vpop.f32.mrb[0].mxu0
      %v1304 = vadd.f32 0.0, %v1303
      %v1305 = vpop.f32.mrb[0].mxu0
      %1306 = vmatprep.mubr.bf16.mxu0 0
      %1307 = vmatmul.mubr.bf16.gmra.mrb[0].mxu0 %v1187
      %v1308 = vpop.f32.mrb[0].mxu0
      %v1309 = vadd.f32 0.0, %v1308
      %v1310 = vpop.f32.mrb[0].mxu0
      %v1311 = vpop.f32.mrb[0].mxu0
      %v1312 = vadd.f32 0.0, %v1311
      %v1313 = vpop.f32.mrb[0].mxu0
      %1314 = vmatprep.mubr.bf16.mxu0 0
      %1315 = vmatmul.mubr.bf16.gmra.mrb[0].mxu0 %v1190
      %v1316 = vpop.f32.mrb[0].mxu0
      %v1317 = vadd.f32 0.0, %v1316
      %v1318 = vpop.f32.mrb[0].mxu0
      %v1319 = vpop.f32.mrb[0].mxu0
      %v1320 = vadd.f32 0.0, %v1319
      %v1321 = vpop.f32.mrb[0].mxu0
      %1322 = vmatprep.mubr.bf16.mxu0 0
      %1323 = vmatmul.mubr.bf16.gmra.mrb[0].mxu0 %v1193
      %v1324 = vpop.f32.mrb[0].mxu0
      %v1325 = vadd.f32 0.0, %v1324
      %v1326 = vpop.f32.mrb[0].mxu0
      %v1327 = vpop.f32.mrb[0].mxu0
      %v1328 = vadd.f32 0.0, %v1327
      %v1329 = vpop.f32.mrb[0].mxu0
      %1330 = vmatprep.mubr.bf16.mxu0 0
      %1331 = vmatmul.mubr.bf16.gmra.mrb[0].mxu0 %v1196
      %v1332 = vpop.f32.mrb[0].mxu0
      %v1333 = vadd.f32 0.0, %v1332
      %v1334 = vpop.f32.mrb[0].mxu0
      %v1335 = vpop.f32.mrb[0].mxu0
      %v1336 = vadd.f32 0.0, %v1335
      %v1337 = vpop.f32.mrb[0].mxu0
      %1338 = vmatprep.mubr.bf16.mxu0 0
      %1339 = vmatmul.mubr.bf16.gmra.mrb[0].mxu0 %v1199
      %v1340 = vpop.f32.mrb[0].mxu0
      %v1341 = vadd.f32 0.0, %v1340
      %v1342 = vpop.f32.mrb[0].mxu0
      %v1343 = vpop.f32.mrb[0].mxu0
      %v1344 = vadd.f32 0.0, %v1343
      %v1345 = vpop.f32.mrb[0].mxu0
      %1346 = vmatprep.mubr.bf16.mxu0 0
      %1347 = vmatmul.mubr.bf16.gmra.mrb[0].mxu0 %v1202
      %v1348 = vpop.f32.mrb[0].mxu0
      %v1349 = vadd.f32 0.0, %v1348
      %v1350 = vpop.f32.mrb[0].mxu0
      %v1351 = vpop.f32.mrb[0].mxu0
      %v1352 = vadd.f32 0.0, %v1351
      %v1353 = vpop.f32.mrb[0].mxu0
      %1354 = vmatprep.mubr.bf16.mxu0 0
      %1355 = vmatmul.mubr.bf16.gmra.mrb[0].mxu0 %v1205
      %v1356 = vpop.f32.mrb[0].mxu0
      %v1357 = vadd.f32 0.0, %v1356
      %v1358 = vpop.f32.mrb[0].mxu0
      %v1359 = vpop.f32.mrb[0].mxu0
      %v1360 = vadd.f32 0.0, %v1359
      %v1361 = vpop.f32.mrb[0].mxu0
      %1362 = vmatprep.mubr.bf16.mxu0 0
      %1363 = vmatmul.mubr.bf16.gmra.mrb[0].mxu0 %v1208
      %v1364 = vpop.f32.mrb[0].mxu0
      %v1365 = vadd.f32 0.0, %v1364
      %v1366 = vpop.f32.mrb[0].mxu0
      %v1367 = vpop.f32.mrb[0].mxu0
      %v1368 = vadd.f32 0.0, %v1367
      %v1369 = vpop.f32.mrb[0].mxu0
      %1370 = vmatprep.mubr.bf16.mxu0 0
      %1371 = vmatmul.mubr.bf16.gmra.mrb[0].mxu0 %v1211
      %v1372 = vpop.f32.mrb[0].mxu0
      %v1373 = vadd.f32 0.0, %v1372
      %v1374 = vpop.f32.mrb[0].mxu0
      %v1375 = vpop.f32.mrb[0].mxu0
      %v1376 = vadd.f32 0.0, %v1375
      %v1377 = vpop.f32.mrb[0].mxu0
      %1378 = vmatprep.mubr.bf16.mxu0 0
      %1379 = vmatmul.mubr.bf16.gmra.mrb[0].mxu0 %v1214
      %v1380 = vpop.f32.mrb[0].mxu0
      %v1381 = vadd.f32 0.0, %v1380
      %v1382 = vpop.f32.mrb[0].mxu0
      %v1383 = vpop.f32.mrb[0].mxu0
      %v1384 = vadd.f32 0.0, %v1383
      %v1385 = vpop.f32.mrb[0].mxu0
      %1386 = vmatprep.mubr.bf16.mxu0 0
      %1387 = vmatmul.mubr.bf16.gmra.mrb[0].mxu0 %v1217
      %v1388 = vpop.f32.mrb[0].mxu0
      %v1389 = vadd.f32 0.0, %v1388
      %v1390 = vpop.f32.mrb[0].mxu0
      %v1391 = vpop.f32.mrb[0].mxu0
      %v1392 = vadd.f32 0.0, %v1391
      %v1393 = vpop.f32.mrb[0].mxu0
      %1394 = vmatprep.mubr.bf16.mxu0 0
      %1395 = vmatmul.mubr.bf16.gmra.mrb[0].mxu0 %v1220
      %v1396 = vpop.f32.mrb[0].mxu0
      %v1397 = vadd.f32 0.0, %v1396
      %v1398 = vpop.f32.mrb[0].mxu0
      %v1399 = vpop.f32.mrb[0].mxu0
      %v1400 = vadd.f32 0.0, %v1399
      %v1401 = vpop.f32.mrb[0].mxu0
      %1402 = vmatprep.mubr.bf16.mxu0 0
      %1403 = vmatmul.mubr.bf16.gmra.mrb[0].mxu0 %v1223
      %v1404 = vpop.f32.mrb[0].mxu0
      %v1405 = vadd.f32 0.0, %v1404
      %v1406 = vpop.f32.mrb[0].mxu0
      %v1407 = vpop.f32.mrb[0].mxu0
      %v1408 = vadd.f32 0.0, %v1407
      %v1409 = vpop.f32.mrb[0].mxu0
      %1410 = vmatprep.mubr.bf16.mxu0 0
      %1411 = vmatmul.mubr.bf16.gmra.mrb[0].mxu0 %v1226
      %v1412 = vpop.f32.mrb[0].mxu0
      %v1413 = vadd.f32 0.0, %v1412
      %v1414 = vpop.f32.mrb[0].mxu0
      %v1415 = vpop.f32.mrb[0].mxu0
      %v1416 = vadd.f32 0.0, %v1415
      %v1417 = vpop.f32.mrb[0].mxu0
      %1418 = vmatprep.mubr.bf16.mxu0 0
      %1419 = vmatmul.mubr.bf16.gmra.mrb[0].mxu0 %v1229
      %v1420 = vpop.f32.mrb[0].mxu0
      %v1421 = vadd.f32 0.0, %v1420
      %v1422 = vpop.f32.mrb[0].mxu0
      %v1423 = vpop.f32.mrb[0].mxu0
      %v1424 = vadd.f32 0.0, %v1423
      %v1425 = vpop.f32.mrb[0].mxu0
      %1426 = vdwg.mxu0
      %v1427 = vadd.f32 %v969, %v1269
      %v1428 = vadd.f32 %v972, %v1272
      %v1429 = vadd.f32 %v977, %v1277
      %v1430 = vadd.f32 %v980, %v1280
      %v1431 = vadd.f32 %v985, %v1285
      %v1432 = vadd.f32 %v988, %v1288
      %v1433 = vadd.f32 %v993, %v1293
      %v1434 = vadd.f32 %v996, %v1296
      %v1435 = vadd.f32 %v1001, %v1301
      %v1436 = vadd.f32 %v1004, %v1304
      %v1437 = vadd.f32 %v1009, %v1309
      %v1438 = vadd.f32 %v1012, %v1312
      %v1439 = vadd.f32 %v1017, %v1317
      %v1440 = vadd.f32 %v1020, %v1320
      %v1441 = vadd.f32 %v1025, %v1325
      %v1442 = vadd.f32 %v1028, %v1328
      %v1443 = vadd.f32 %v1033, %v1333
      %v1444 = vadd.f32 %v1036, %v1336
      %v1445 = vadd.f32 %v1041, %v1341
      %v1446 = vadd.f32 %v1044, %v1344
      %v1447 = vadd.f32 %v1049, %v1349
      %v1448 = vadd.f32 %v1052, %v1352
      %v1449 = vadd.f32 %v1057, %v1357
      %v1450 = vadd.f32 %v1060, %v1360
      %v1451 = vadd.f32 %v1065, %v1365
      %v1452 = vadd.f32 %v1068, %v1368
      %v1453 = vadd.f32 %v1073, %v1373
      %v1454 = vadd.f32 %v1076, %v1376
      %v1455 = vadd.f32 %v1081, %v1381
      %v1456 = vadd.f32 %v1084, %v1384
      %v1457 = vadd.f32 %v1089, %v1389
      %v1458 = vadd.f32 %v1092, %v1392
      %v1459 = vadd.f32 %v1097, %v1397
      %v1460 = vadd.f32 %v1100, %v1400
      %v1461 = vadd.f32 %v1105, %v1405
      %v1462 = vadd.f32 %v1108, %v1408
      %v1463 = vadd.f32 %v1113, %v1413
      %v1464 = vadd.f32 %v1116, %v1416
      %v1465 = vadd.f32 %v1121, %v1421
      %v1466 = vadd.f32 %v1124, %v1424
      %s1467 = sadd.s32 %s317, 1
      %s1468 = smul.u32 %s1467, 4
      %s1469 = smul.addr %s1468, 4
      %s1470 = scalar_lea.vmem %s293, %s1469
      %v1471 = vld [vmem:[%s1470] sm:$0xf]
      %v1472 = vld [vmem:[%s1470 + $0x4] sm:$0xf]
      %v1473 = vld [vmem:[%s1470 + $0x8] sm:$0xf]
      %v1474 = vld [vmem:[%s1470 + $0xc] sm:$0xf]
      %v1475 = vld [vmem:[%s1470 + $0x10] sm:$0xf]
      %v1476 = vld [vmem:[%s1470 + $0x14] sm:$0xf]
      %v1477 = vld [vmem:[%s1470 + $0x18] sm:$0xf]
      %v1478 = vld [vmem:[%s1470 + $0x1c] sm:$0xf]
      %v1479 = vld [vmem:[%s1470 + $0x20] sm:$0xf]
      %v1480 = vld [vmem:[%s1470 + $0x24] sm:$0xf]
      %v1481 = vld [vmem:[%s1470 + $0x28] sm:$0xf]
      %v1482 = vld [vmem:[%s1470 + $0x2c] sm:$0xf]
      %v1483 = vld [vmem:[%s1470 + $0x30] sm:$0xf]
      %v1484 = vld [vmem:[%s1470 + $0x34] sm:$0xf]
      %v1485 = vld [vmem:[%s1470 + $0x38] sm:$0xf]
      %v1486 = vld [vmem:[%s1470 + $0x3c] sm:$0xf]
      %v1487 = vld [vmem:[%s1470 + $0x40] sm:$0xf]
      %v1488 = vld [vmem:[%s1470 + $0x44] sm:$0xf]
      %v1489 = vld [vmem:[%s1470 + $0x48] sm:$0xf]
      %v1490 = vld [vmem:[%s1470 + $0x4c] sm:$0xf]
      %v1491 = vld [vmem:[%s1470 + $0x50] sm:$0xf]
      %v1492 = vld [vmem:[%s1470 + $0x54] sm:$0xf]
      %v1493 = vld [vmem:[%s1470 + $0x58] sm:$0xf]
      %v1494 = vld [vmem:[%s1470 + $0x5c] sm:$0xf]
      %v1495 = vld [vmem:[%s1470 + $0x60] sm:$0xf]
      %v1496 = vld [vmem:[%s1470 + $0x64] sm:$0xf]
      %v1497 = vld [vmem:[%s1470 + $0x68] sm:$0xf]
      %v1498 = vld [vmem:[%s1470 + $0x6c] sm:$0xf]
      %v1499 = vld [vmem:[%s1470 + $0x70] sm:$0xf]
      %v1500 = vld [vmem:[%s1470 + $0x74] sm:$0xf]
      %v1501 = vld [vmem:[%s1470 + $0x78] sm:$0xf]
      %v1502 = vld [vmem:[%s1470 + $0x7c] sm:$0xf]
      %v1503 = vld [vmem:[%s1470 + $0x80] sm:$0xf]
      %v1504 = vld [vmem:[%s1470 + $0x84] sm:$0xf]
      %v1505 = vld [vmem:[%s1470 + $0x88] sm:$0xf]
      %v1506 = vld [vmem:[%s1470 + $0x8c] sm:$0xf]
      %v1507 = vld [vmem:[%s1470 + $0x90] sm:$0xf]
      %v1508 = vld [vmem:[%s1470 + $0x94] sm:$0xf]
      %v1509 = vld [vmem:[%s1470 + $0x98] sm:$0xf]
      %v1510 = vld [vmem:[%s1470 + $0x9c] sm:$0xf]
      %v1511 = vld [vmem:[%s1470 + $0xa0] sm:$0xf]
      %s1512 = scalar_lea.vmem %s2, 6
      %v1513 = vld [vmem:[%s1512] sm:$0x3]
      %v1554 = vunpack.c.l.b16 %v1471
      %v1555 = vunpack.c.l.b16 %v1472
      %v1556 = vunpack.c.l.b16 %v1473
      %v1557 = vunpack.c.l.b16 %v1474
      %v1558 = vunpack.c.l.b16 %v1475
      %v1559 = vunpack.c.l.b16 %v1476
      %v1560 = vunpack.c.l.b16 %v1477
      %v1561 = vunpack.c.l.b16 %v1478
      %v1562 = vunpack.c.l.b16 %v1479
      %v1563 = vunpack.c.l.b16 %v1480
      %v1564 = vunpack.c.l.b16 %v1481
      %v1565 = vunpack.c.l.b16 %v1482
      %v1566 = vunpack.c.l.b16 %v1483
      %v1567 = vunpack.c.l.b16 %v1484
      %v1568 = vunpack.c.l.b16 %v1485
      %v1569 = vunpack.c.l.b16 %v1486
      %v1570 = vunpack.c.l.b16 %v1487
      %v1571 = vunpack.c.l.b16 %v1488
      %v1572 = vunpack.c.l.b16 %v1489
      %v1573 = vunpack.c.l.b16 %v1490
      %v1574 = vunpack.c.l.b16 %v1491
      %v1575 = vunpack.c.l.b16 %v1492
      %v1576 = vunpack.c.l.b16 %v1493
      %v1577 = vunpack.c.l.b16 %v1494
      %v1578 = vunpack.c.l.b16 %v1495
      %v1579 = vunpack.c.l.b16 %v1496
      %v1580 = vunpack.c.l.b16 %v1497
      %v1581 = vunpack.c.l.b16 %v1498
      %v1582 = vunpack.c.l.b16 %v1499
      %v1583 = vunpack.c.l.b16 %v1500
      %v1584 = vunpack.c.l.b16 %v1501
      %v1585 = vunpack.c.l.b16 %v1502
      %v1586 = vunpack.c.l.b16 %v1503
      %v1587 = vunpack.c.l.b16 %v1504
      %v1588 = vunpack.c.l.b16 %v1505
      %v1589 = vunpack.c.l.b16 %v1506
      %v1590 = vunpack.c.l.b16 %v1507
      %v1591 = vunpack.c.l.b16 %v1508
      %v1592 = vunpack.c.l.b16 %v1509
      %v1593 = vunpack.c.l.b16 %v1510
      %v1594 = vpack.c.b16 %v1555, %v1554
      %v1595 = vpack.c.b16 %v1557, %v1556
      %v1596 = vpack.c.b16 %v1559, %v1558
      %v1597 = vpack.c.b16 %v1561, %v1560
      %v1598 = vpack.c.b16 %v1563, %v1562
      %v1599 = vpack.c.b16 %v1565, %v1564
      %v1600 = vpack.c.b16 %v1567, %v1566
      %v1601 = vpack.c.b16 %v1569, %v1568
      %v1602 = vpack.c.b16 %v1571, %v1570
      %v1603 = vpack.c.b16 %v1573, %v1572
      %v1604 = vpack.c.b16 %v1575, %v1574
      %v1605 = vpack.c.b16 %v1577, %v1576
      %v1606 = vpack.c.b16 %v1579, %v1578
      %v1607 = vpack.c.b16 %v1581, %v1580
      %v1608 = vpack.c.b16 %v1583, %v1582
      %v1609 = vpack.c.b16 %v1585, %v1584
      %v1610 = vpack.c.b16 %v1587, %v1586
      %v1611 = vpack.c.b16 %v1589, %v1588
      %v1612 = vpack.c.b16 %v1591, %v1590
      %v1613 = vpack.c.b16 %v1593, %v1592
      %v1615 = vsel %vm633, %v1594, 0
      %v1618 = vsel %vm633, %v1595, 0
      %v1621 = vsel %vm633, %v1596, 0
      %v1624 = vsel %vm633, %v1597, 0
      %v1627 = vsel %vm633, %v1598, 0
      %v1630 = vsel %vm633, %v1599, 0
      %v1633 = vsel %vm633, %v1600, 0
      %v1636 = vsel %vm633, %v1601, 0
      %v1639 = vsel %vm633, %v1602, 0
      %v1642 = vsel %vm633, %v1603, 0
      %v1645 = vsel %vm633, %v1604, 0
      %v1648 = vsel %vm633, %v1605, 0
      %v1651 = vsel %vm633, %v1606, 0
      %v1654 = vsel %vm633, %v1607, 0
      %v1657 = vsel %vm633, %v1608, 0
      %v1660 = vsel %vm633, %v1609, 0
      %v1663 = vsel %vm633, %v1610, 0
      %v1666 = vsel %vm633, %v1611, 0
      %v1669 = vsel %vm633, %v1612, 0
      %v1672 = vsel %vm633, %v1613, 0
      %v1675 = vsel %vm694, %v1513, 0
      %1677 = vmatprep.subr.bf16.mxu0 0
      %1678 = vmatpush1.bf16.msra.mxu0 %v1675
      %1679 = vmatprep.subr.bf16.mxu0 0
      %1680 = vmatpush1.bf16.msra.mxu0 0
      %1681 = vmatprep.subr.bf16.mxu0 0
      %1682 = vmatpush1.bf16.msra.mxu0 0
      %1683 = vmatprep.subr.bf16.mxu0 0
      %1684 = vmatpush1.bf16.msra.mxu0 0
      %1685 = vmatprep.subr.bf16.mxu0 0
      %1686 = vmatpush1.bf16.msra.mxu0 0
      %1687 = vmatprep.subr.bf16.mxu0 0
      %1688 = vmatpush1.bf16.msra.mxu0 0
      %1689 = vmatprep.subr.bf16.mxu0 0
      %1690 = vmatpush1.bf16.msra.mxu0 0
      %1691 = vmatprep.subr.bf16.mxu0 0
      %1692 = vmatpush1.bf16.msra.mxu0 0
      %1693 = vmatprep.subr.bf16.mxu0 0
      %1694 = vmatpush1.bf16.msra.mxu0 0
      %1695 = vmatprep.subr.bf16.mxu0 0
      %1696 = vmatpush1.bf16.msra.mxu0 0
      %1697 = vmatprep.subr.bf16.mxu0 0
      %1698 = vmatpush1.bf16.msra.mxu0 0
      %1699 = vmatprep.subr.bf16.mxu0 0
      %1700 = vmatpush1.bf16.msra.mxu0 0
      %1701 = vmatprep.subr.bf16.mxu0 0
      %1702 = vmatpush1.bf16.msra.mxu0 0
      %1703 = vmatprep.subr.bf16.mxu0 0
      %1704 = vmatpush1.bf16.msra.mxu0 0
      %1705 = vmatprep.subr.bf16.mxu0 0
      %1706 = vmatpush1.bf16.msra.mxu0 0
      %1707 = vmatprep.subr.bf16.mxu0 0
      %1708 = vmatpush1.bf16.msra.mxu0 0
      %1709 = vmatprep.mubr.bf16.mxu0 0
      %1710 = vmatmul.mubr.bf16.gmra.mrb[0].mxu0 %v1615
      %v1711 = vpop.f32.mrb[0].mxu0
      %v1712 = vadd.f32 0.0, %v1711
      %v1713 = vpop.f32.mrb[0].mxu0
      %v1714 = vpop.f32.mrb[0].mxu0
      %v1715 = vadd.f32 0.0, %v1714
      %v1716 = vpop.f32.mrb[0].mxu0
      %1717 = vmatprep.mubr.bf16.mxu0 0
      %1718 = vmatmul.mubr.bf16.gmra.mrb[0].mxu0 %v1618
      %v1719 = vpop.f32.mrb[0].mxu0
      %v1720 = vadd.f32 0.0, %v1719
      %v1721 = vpop.f32.mrb[0].mxu0
      %v1722 = vpop.f32.mrb[0].mxu0
      %v1723 = vadd.f32 0.0, %v1722
      %v1724 = vpop.f32.mrb[0].mxu0
      %1725 = vmatprep.mubr.bf16.mxu0 0
      %1726 = vmatmul.mubr.bf16.gmra.mrb[0].mxu0 %v1621
      %v1727 = vpop.f32.mrb[0].mxu0
      %v1728 = vadd.f32 0.0, %v1727
      %v1729 = vpop.f32.mrb[0].mxu0
      %v1730 = vpop.f32.mrb[0].mxu0
      %v1731 = vadd.f32 0.0, %v1730
      %v1732 = vpop.f32.mrb[0].mxu0
      %1733 = vmatprep.mubr.bf16.mxu0 0
      %1734 = vmatmul.mubr.bf16.gmra.mrb[0].mxu0 %v1624
      %v1735 = vpop.f32.mrb[0].mxu0
      %v1736 = vadd.f32 0.0, %v1735
      %v1737 = vpop.f32.mrb[0].mxu0
      %v1738 = vpop.f32.mrb[0].mxu0
      %v1739 = vadd.f32 0.0, %v1738
      %v1740 = vpop.f32.mrb[0].mxu0
      %1741 = vmatprep.mubr.bf16.mxu0 0
      %1742 = vmatmul.mubr.bf16.gmra.mrb[0].mxu0 %v1627
      %v1743 = vpop.f32.mrb[0].mxu0
      %v1744 = vadd.f32 0.0, %v1743
      %v1745 = vpop.f32.mrb[0].mxu0
      %v1746 = vpop.f32.mrb[0].mxu0
      %v1747 = vadd.f32 0.0, %v1746
      %v1748 = vpop.f32.mrb[0].mxu0
      %1749 = vmatprep.mubr.bf16.mxu0 0
      %1750 = vmatmul.mubr.bf16.gmra.mrb[0].mxu0 %v1630
      %v1751 = vpop.f32.mrb[0].mxu0
      %v1752 = vadd.f32 0.0, %v1751
      %v1753 = vpop.f32.mrb[0].mxu0
      %v1754 = vpop.f32.mrb[0].mxu0
      %v1755 = vadd.f32 0.0, %v1754
      %v1756 = vpop.f32.mrb[0].mxu0
      %1757 = vmatprep.mubr.bf16.mxu0 0
      %1758 = vmatmul.mubr.bf16.gmra.mrb[0].mxu0 %v1633
      %v1759 = vpop.f32.mrb[0].mxu0
      %v1760 = vadd.f32 0.0, %v1759
      %v1761 = vpop.f32.mrb[0].mxu0
      %v1762 = vpop.f32.mrb[0].mxu0
      %v1763 = vadd.f32 0.0, %v1762
      %v1764 = vpop.f32.mrb[0].mxu0
      %1765 = vmatprep.mubr.bf16.mxu0 0
      %1766 = vmatmul.mubr.bf16.gmra.mrb[0].mxu0 %v1636
      %v1767 = vpop.f32.mrb[0].mxu0
      %v1768 = vadd.f32 0.0, %v1767
      %v1769 = vpop.f32.mrb[0].mxu0
      %v1770 = vpop.f32.mrb[0].mxu0
      %v1771 = vadd.f32 0.0, %v1770
      %v1772 = vpop.f32.mrb[0].mxu0
      %1773 = vmatprep.mubr.bf16.mxu0 0
      %1774 = vmatmul.mubr.bf16.gmra.mrb[0].mxu0 %v1639
      %v1775 = vpop.f32.mrb[0].mxu0
      %v1776 = vadd.f32 0.0, %v1775
      %v1777 = vpop.f32.mrb[0].mxu0
      %v1778 = vpop.f32.mrb[0].mxu0
      %v1779 = vadd.f32 0.0, %v1778
      %v1780 = vpop.f32.mrb[0].mxu0
      %1781 = vmatprep.mubr.bf16.mxu0 0
      %1782 = vmatmul.mubr.bf16.gmra.mrb[0].mxu0 %v1642
      %v1783 = vpop.f32.mrb[0].mxu0
      %v1784 = vadd.f32 0.0, %v1783
      %v1785 = vpop.f32.mrb[0].mxu0
      %v1786 = vpop.f32.mrb[0].mxu0
      %v1787 = vadd.f32 0.0, %v1786
      %v1788 = vpop.f32.mrb[0].mxu0
      %1789 = vmatprep.mubr.bf16.mxu0 0
      %1790 = vmatmul.mubr.bf16.gmra.mrb[0].mxu0 %v1645
      %v1791 = vpop.f32.mrb[0].mxu0
      %v1792 = vadd.f32 0.0, %v1791
      %v1793 = vpop.f32.mrb[0].mxu0
      %v1794 = vpop.f32.mrb[0].mxu0
      %v1795 = vadd.f32 0.0, %v1794
      %v1796 = vpop.f32.mrb[0].mxu0
      %1797 = vmatprep.mubr.bf16.mxu0 0
      %1798 = vmatmul.mubr.bf16.gmra.mrb[0].mxu0 %v1648
      %v1799 = vpop.f32.mrb[0].mxu0
      %v1800 = vadd.f32 0.0, %v1799
      %v1801 = vpop.f32.mrb[0].mxu0
      %v1802 = vpop.f32.mrb[0].mxu0
      %v1803 = vadd.f32 0.0, %v1802
      %v1804 = vpop.f32.mrb[0].mxu0
      %1805 = vmatprep.mubr.bf16.mxu0 0
      %1806 = vmatmul.mubr.bf16.gmra.mrb[0].mxu0 %v1651
      %v1807 = vpop.f32.mrb[0].mxu0
      %v1808 = vadd.f32 0.0, %v1807
      %v1809 = vpop.f32.mrb[0].mxu0
      %v1810 = vpop.f32.mrb[0].mxu0
      %v1811 = vadd.f32 0.0, %v1810
      %v1812 = vpop.f32.mrb[0].mxu0
      %1813 = vmatprep.mubr.bf16.mxu0 0
      %1814 = vmatmul.mubr.bf16.gmra.mrb[0].mxu0 %v1654
      %v1815 = vpop.f32.mrb[0].mxu0
      %v1816 = vadd.f32 0.0, %v1815
      %v1817 = vpop.f32.mrb[0].mxu0
      %v1818 = vpop.f32.mrb[0].mxu0
      %v1819 = vadd.f32 0.0, %v1818
      %v1820 = vpop.f32.mrb[0].mxu0
      %1821 = vmatprep.mubr.bf16.mxu0 0
      %1822 = vmatmul.mubr.bf16.gmra.mrb[0].mxu0 %v1657
      %v1823 = vpop.f32.mrb[0].mxu0
      %v1824 = vadd.f32 0.0, %v1823
      %v1825 = vpop.f32.mrb[0].mxu0
      %v1826 = vpop.f32.mrb[0].mxu0
      %v1827 = vadd.f32 0.0, %v1826
      %v1828 = vpop.f32.mrb[0].mxu0
      %1829 = vmatprep.mubr.bf16.mxu0 0
      %1830 = vmatmul.mubr.bf16.gmra.mrb[0].mxu0 %v1660
      %v1831 = vpop.f32.mrb[0].mxu0
      %v1832 = vadd.f32 0.0, %v1831
      %v1833 = vpop.f32.mrb[0].mxu0
      %v1834 = vpop.f32.mrb[0].mxu0
      %v1835 = vadd.f32 0.0, %v1834
      %v1836 = vpop.f32.mrb[0].mxu0
      %1837 = vmatprep.mubr.bf16.mxu0 0
      %1838 = vmatmul.mubr.bf16.gmra.mrb[0].mxu0 %v1663
      %v1839 = vpop.f32.mrb[0].mxu0
      %v1840 = vadd.f32 0.0, %v1839
      %v1841 = vpop.f32.mrb[0].mxu0
      %v1842 = vpop.f32.mrb[0].mxu0
      %v1843 = vadd.f32 0.0, %v1842
      %v1844 = vpop.f32.mrb[0].mxu0
      %1845 = vmatprep.mubr.bf16.mxu0 0
      %1846 = vmatmul.mubr.bf16.gmra.mrb[0].mxu0 %v1666
      %v1847 = vpop.f32.mrb[0].mxu0
      %v1848 = vadd.f32 0.0, %v1847
      %v1849 = vpop.f32.mrb[0].mxu0
      %v1850 = vpop.f32.mrb[0].mxu0
      %v1851 = vadd.f32 0.0, %v1850
      %v1852 = vpop.f32.mrb[0].mxu0
      %1853 = vmatprep.mubr.bf16.mxu0 0
      %1854 = vmatmul.mubr.bf16.gmra.mrb[0].mxu0 %v1669
      %v1855 = vpop.f32.mrb[0].mxu0
      %v1856 = vadd.f32 0.0, %v1855
      %v1857 = vpop.f32.mrb[0].mxu0
      %v1858 = vpop.f32.mrb[0].mxu0
      %v1859 = vadd.f32 0.0, %v1858
      %v1860 = vpop.f32.mrb[0].mxu0
      %1861 = vmatprep.mubr.bf16.mxu0 0
      %1862 = vmatmul.mubr.bf16.gmra.mrb[0].mxu0 %v1672
      %v1863 = vpop.f32.mrb[0].mxu0
      %v1864 = vadd.f32 0.0, %v1863
      %v1865 = vpop.f32.mrb[0].mxu0
      %v1866 = vpop.f32.mrb[0].mxu0
      %v1867 = vadd.f32 0.0, %v1866
      %v1868 = vpop.f32.mrb[0].mxu0
      %1869 = vdwg.mxu0
      %v1870 = vadd.f32 %v1427, %v1712
      %v1871 = vadd.f32 %v1428, %v1715
      %v1872 = vadd.f32 %v1429, %v1720
      %v1873 = vadd.f32 %v1430, %v1723
      %v1874 = vadd.f32 %v1431, %v1728
      %v1875 = vadd.f32 %v1432, %v1731
      %v1876 = vadd.f32 %v1433, %v1736
      %v1877 = vadd.f32 %v1434, %v1739
      %v1878 = vadd.f32 %v1435, %v1744
      %v1879 = vadd.f32 %v1436, %v1747
      %v1880 = vadd.f32 %v1437, %v1752
      %v1881 = vadd.f32 %v1438, %v1755
      %v1882 = vadd.f32 %v1439, %v1760
      %v1883 = vadd.f32 %v1440, %v1763
      %v1884 = vadd.f32 %v1441, %v1768
      %v1885 = vadd.f32 %v1442, %v1771
      %v1886 = vadd.f32 %v1443, %v1776
      %v1887 = vadd.f32 %v1444, %v1779
      %v1888 = vadd.f32 %v1445, %v1784
      %v1889 = vadd.f32 %v1446, %v1787
      %v1890 = vadd.f32 %v1447, %v1792
      %v1891 = vadd.f32 %v1448, %v1795
      %v1892 = vadd.f32 %v1449, %v1800
      %v1893 = vadd.f32 %v1450, %v1803
      %v1894 = vadd.f32 %v1451, %v1808
      %v1895 = vadd.f32 %v1452, %v1811
      %v1896 = vadd.f32 %v1453, %v1816
      %v1897 = vadd.f32 %v1454, %v1819
      %v1898 = vadd.f32 %v1455, %v1824
      %v1899 = vadd.f32 %v1456, %v1827
      %v1900 = vadd.f32 %v1457, %v1832
      %v1901 = vadd.f32 %v1458, %v1835
      %v1902 = vadd.f32 %v1459, %v1840
      %v1903 = vadd.f32 %v1460, %v1843
      %v1904 = vadd.f32 %v1461, %v1848
      %v1905 = vadd.f32 %v1462, %v1851
      %v1906 = vadd.f32 %v1463, %v1856
      %v1907 = vadd.f32 %v1464, %v1859
      %v1908 = vadd.f32 %v1465, %v1864
      %v1909 = vadd.f32 %v1466, %v1867
      %s1910 = scalar_lea.vmem %s2, 8
      %v1911 = vld [vmem:[%s1910] sm:$0x3]
      %v1913 = vunpack.c.l.b16 %v1511
      %v1914 = vpack.c.b16 %v1913, %v1913
      %v1915 = vshrl.u32 %v1594, 16
      %v1917 = vshll.u32 %v1594, 16
      %v1919 = vrot.slane %v1917, 1
      %v1920 = vor.u32 %v1915, %v1919
      %v1921 = vshll.u32 %v1595, 16
      %v1923 = vrot.slane %v1921, 1
      %v1924 = vsel %vm468, %v1920, %v1923
      %v1925 = vshrl.u32 %v1595, 16
      %v1927 = vor.u32 %v1925, %v1923
      %v1928 = vshll.u32 %v1596, 16
      %v1930 = vrot.slane %v1928, 1
      %v1931 = vsel %vm468, %v1927, %v1930
      %v1932 = vshrl.u32 %v1596, 16
      %v1934 = vor.u32 %v1932, %v1930
      %v1935 = vshll.u32 %v1597, 16
      %v1937 = vrot.slane %v1935, 1
      %v1938 = vsel %vm468, %v1934, %v1937
      %v1939 = vshrl.u32 %v1597, 16
      %v1941 = vor.u32 %v1939, %v1937
      %v1942 = vshll.u32 %v1598, 16
      %v1944 = vrot.slane %v1942, 1
      %v1945 = vsel %vm468, %v1941, %v1944
      %v1946 = vshrl.u32 %v1598, 16
      %v1948 = vor.u32 %v1946, %v1944
      %v1949 = vshll.u32 %v1599, 16
      %v1951 = vrot.slane %v1949, 1
      %v1952 = vsel %vm468, %v1948, %v1951
      %v1953 = vshrl.u32 %v1599, 16
      %v1955 = vor.u32 %v1953, %v1951
      %v1956 = vshll.u32 %v1600, 16
      %v1958 = vrot.slane %v1956, 1
      %v1959 = vsel %vm468, %v1955, %v1958
      %v1960 = vshrl.u32 %v1600, 16
      %v1962 = vor.u32 %v1960, %v1958
      %v1963 = vshll.u32 %v1601, 16
      %v1965 = vrot.slane %v1963, 1
      %v1966 = vsel %vm468, %v1962, %v1965
      %v1967 = vshrl.u32 %v1601, 16
      %v1969 = vor.u32 %v1967, %v1965
      %v1970 = vshll.u32 %v1602, 16
      %v1972 = vrot.slane %v1970, 1
      %v1973 = vsel %vm468, %v1969, %v1972
      %v1974 = vshrl.u32 %v1602, 16
      %v1976 = vor.u32 %v1974, %v1972
      %v1977 = vshll.u32 %v1603, 16
      %v1979 = vrot.slane %v1977, 1
      %v1980 = vsel %vm468, %v1976, %v1979
      %v1981 = vshrl.u32 %v1603, 16
      %v1983 = vor.u32 %v1981, %v1979
      %v1984 = vshll.u32 %v1604, 16
      %v1986 = vrot.slane %v1984, 1
      %v1987 = vsel %vm468, %v1983, %v1986
      %v1988 = vshrl.u32 %v1604, 16
      %v1990 = vor.u32 %v1988, %v1986
      %v1991 = vshll.u32 %v1605, 16
      %v1993 = vrot.slane %v1991, 1
      %v1994 = vsel %vm468, %v1990, %v1993
      %v1995 = vshrl.u32 %v1605, 16
      %v1997 = vor.u32 %v1995, %v1993
      %v1998 = vshll.u32 %v1606, 16
      %v2000 = vrot.slane %v1998, 1
      %v2001 = vsel %vm468, %v1997, %v2000
      %v2002 = vshrl.u32 %v1606, 16
      %v2004 = vor.u32 %v2002, %v2000
      %v2005 = vshll.u32 %v1607, 16
      %v2007 = vrot.slane %v2005, 1
      %v2008 = vsel %vm468, %v2004, %v2007
      %v2009 = vshrl.u32 %v1607, 16
      %v2011 = vor.u32 %v2009, %v2007
      %v2012 = vshll.u32 %v1608, 16
      %v2014 = vrot.slane %v2012, 1
      %v2015 = vsel %vm468, %v2011, %v2014
      %v2016 = vshrl.u32 %v1608, 16
      %v2018 = vor.u32 %v2016, %v2014
      %v2019 = vshll.u32 %v1609, 16
      %v2021 = vrot.slane %v2019, 1
      %v2022 = vsel %vm468, %v2018, %v2021
      %v2023 = vshrl.u32 %v1609, 16
      %v2025 = vor.u32 %v2023, %v2021
      %v2026 = vshll.u32 %v1610, 16
      %v2028 = vrot.slane %v2026, 1
      %v2029 = vsel %vm468, %v2025, %v2028
      %v2030 = vshrl.u32 %v1610, 16
      %v2032 = vor.u32 %v2030, %v2028
      %v2033 = vshll.u32 %v1611, 16
      %v2035 = vrot.slane %v2033, 1
      %v2036 = vsel %vm468, %v2032, %v2035
      %v2037 = vshrl.u32 %v1611, 16
      %v2039 = vor.u32 %v2037, %v2035
      %v2040 = vshll.u32 %v1612, 16
      %v2042 = vrot.slane %v2040, 1
      %v2043 = vsel %vm468, %v2039, %v2042
      %v2044 = vshrl.u32 %v1612, 16
      %v2046 = vor.u32 %v2044, %v2042
      %v2047 = vshll.u32 %v1613, 16
      %v2049 = vrot.slane %v2047, 1
      %v2050 = vsel %vm468, %v2046, %v2049
      %v2051 = vshrl.u32 %v1613, 16
      %v2053 = vor.u32 %v2051, %v2049
      %v2055 = vshll.u32 %v1914, 16
      %v2057 = vrot.slane %v2055, 1
      %v2058 = vsel %vm468, %v2053, %v2057
      %v2060 = vsel %vm633, %v1924, 0
      %v2063 = vsel %vm633, %v1931, 0
      %v2066 = vsel %vm633, %v1938, 0
      %v2069 = vsel %vm633, %v1945, 0
      %v2072 = vsel %vm633, %v1952, 0
      %v2075 = vsel %vm633, %v1959, 0
      %v2078 = vsel %vm633, %v1966, 0
      %v2081 = vsel %vm633, %v1973, 0
      %v2084 = vsel %vm633, %v1980, 0
      %v2087 = vsel %vm633, %v1987, 0
      %v2090 = vsel %vm633, %v1994, 0
      %v2093 = vsel %vm633, %v2001, 0
      %v2096 = vsel %vm633, %v2008, 0
      %v2099 = vsel %vm633, %v2015, 0
      %v2102 = vsel %vm633, %v2022, 0
      %v2105 = vsel %vm633, %v2029, 0
      %v2108 = vsel %vm633, %v2036, 0
      %v2111 = vsel %vm633, %v2043, 0
      %v2114 = vsel %vm633, %v2050, 0
      %v2117 = vsel %vm633, %v2058, 0
      %v2120 = vsel %vm694, %v1911, 0
      %2122 = vmatprep.subr.bf16.mxu0 0
      %2123 = vmatpush1.bf16.msra.mxu0 %v2120
      %2124 = vmatprep.subr.bf16.mxu0 0
      %2125 = vmatpush1.bf16.msra.mxu0 0
      %2126 = vmatprep.subr.bf16.mxu0 0
      %2127 = vmatpush1.bf16.msra.mxu0 0
      %2128 = vmatprep.subr.bf16.mxu0 0
      %2129 = vmatpush1.bf16.msra.mxu0 0
      %2130 = vmatprep.subr.bf16.mxu0 0
      %2131 = vmatpush1.bf16.msra.mxu0 0
      %2132 = vmatprep.subr.bf16.mxu0 0
      %2133 = vmatpush1.bf16.msra.mxu0 0
      %2134 = vmatprep.subr.bf16.mxu0 0
      %2135 = vmatpush1.bf16.msra.mxu0 0
      %2136 = vmatprep.subr.bf16.mxu0 0
      %2137 = vmatpush1.bf16.msra.mxu0 0
      %2138 = vmatprep.subr.bf16.mxu0 0
      %2139 = vmatpush1.bf16.msra.mxu0 0
      %2140 = vmatprep.subr.bf16.mxu0 0
      %2141 = vmatpush1.bf16.msra.mxu0 0
      %2142 = vmatprep.subr.bf16.mxu0 0
      %2143 = vmatpush1.bf16.msra.mxu0 0
      %2144 = vmatprep.subr.bf16.mxu0 0
      %2145 = vmatpush1.bf16.msra.mxu0 0
      %2146 = vmatprep.subr.bf16.mxu0 0
      %2147 = vmatpush1.bf16.msra.mxu0 0
      %2148 = vmatprep.subr.bf16.mxu0 0
      %2149 = vmatpush1.bf16.msra.mxu0 0
      %2150 = vmatprep.subr.bf16.mxu0 0
      %2151 = vmatpush1.bf16.msra.mxu0 0
      %2152 = vmatprep.subr.bf16.mxu0 0
      %2153 = vmatpush1.bf16.msra.mxu0 0
      %2154 = vmatprep.mubr.bf16.mxu0 0
      %2155 = vmatmul.mubr.bf16.gmra.mrb[0].mxu0 %v2060
      %v2156 = vpop.f32.mrb[0].mxu0
      %v2157 = vadd.f32 0.0, %v2156
      %v2158 = vpop.f32.mrb[0].mxu0
      %v2159 = vpop.f32.mrb[0].mxu0
      %v2160 = vadd.f32 0.0, %v2159
      %v2161 = vpop.f32.mrb[0].mxu0
      %2162 = vmatprep.mubr.bf16.mxu0 0
      %2163 = vmatmul.mubr.bf16.gmra.mrb[0].mxu0 %v2063
      %v2164 = vpop.f32.mrb[0].mxu0
      %v2165 = vadd.f32 0.0, %v2164
      %v2166 = vpop.f32.mrb[0].mxu0
      %v2167 = vpop.f32.mrb[0].mxu0
      %v2168 = vadd.f32 0.0, %v2167
      %v2169 = vpop.f32.mrb[0].mxu0
      %2170 = vmatprep.mubr.bf16.mxu0 0
      %2171 = vmatmul.mubr.bf16.gmra.mrb[0].mxu0 %v2066
      %v2172 = vpop.f32.mrb[0].mxu0
      %v2173 = vadd.f32 0.0, %v2172
      %v2174 = vpop.f32.mrb[0].mxu0
      %v2175 = vpop.f32.mrb[0].mxu0
      %v2176 = vadd.f32 0.0, %v2175
      %v2177 = vpop.f32.mrb[0].mxu0
      %2178 = vmatprep.mubr.bf16.mxu0 0
      %2179 = vmatmul.mubr.bf16.gmra.mrb[0].mxu0 %v2069
      %v2180 = vpop.f32.mrb[0].mxu0
      %v2181 = vadd.f32 0.0, %v2180
      %v2182 = vpop.f32.mrb[0].mxu0
      %v2183 = vpop.f32.mrb[0].mxu0
      %v2184 = vadd.f32 0.0, %v2183
      %v2185 = vpop.f32.mrb[0].mxu0
      %2186 = vmatprep.mubr.bf16.mxu0 0
      %2187 = vmatmul.mubr.bf16.gmra.mrb[0].mxu0 %v2072
      %v2188 = vpop.f32.mrb[0].mxu0
      %v2189 = vadd.f32 0.0, %v2188
      %v2190 = vpop.f32.mrb[0].mxu0
      %v2191 = vpop.f32.mrb[0].mxu0
      %v2192 = vadd.f32 0.0, %v2191
      %v2193 = vpop.f32.mrb[0].mxu0
      %2194 = vmatprep.mubr.bf16.mxu0 0
      %2195 = vmatmul.mubr.bf16.gmra.mrb[0].mxu0 %v2075
      %v2196 = vpop.f32.mrb[0].mxu0
      %v2197 = vadd.f32 0.0, %v2196
      %v2198 = vpop.f32.mrb[0].mxu0
      %v2199 = vpop.f32.mrb[0].mxu0
      %v2200 = vadd.f32 0.0, %v2199
      %v2201 = vpop.f32.mrb[0].mxu0
      %2202 = vmatprep.mubr.bf16.mxu0 0
      %2203 = vmatmul.mubr.bf16.gmra.mrb[0].mxu0 %v2078
      %v2204 = vpop.f32.mrb[0].mxu0
      %v2205 = vadd.f32 0.0, %v2204
      %v2206 = vpop.f32.mrb[0].mxu0
      %v2207 = vpop.f32.mrb[0].mxu0
      %v2208 = vadd.f32 0.0, %v2207
      %v2209 = vpop.f32.mrb[0].mxu0
      %2210 = vmatprep.mubr.bf16.mxu0 0
      %2211 = vmatmul.mubr.bf16.gmra.mrb[0].mxu0 %v2081
      %v2212 = vpop.f32.mrb[0].mxu0
      %v2213 = vadd.f32 0.0, %v2212
      %v2214 = vpop.f32.mrb[0].mxu0
      %v2215 = vpop.f32.mrb[0].mxu0
      %v2216 = vadd.f32 0.0, %v2215
      %v2217 = vpop.f32.mrb[0].mxu0
      %2218 = vmatprep.mubr.bf16.mxu0 0
      %2219 = vmatmul.mubr.bf16.gmra.mrb[0].mxu0 %v2084
      %v2220 = vpop.f32.mrb[0].mxu0
      %v2221 = vadd.f32 0.0, %v2220
      %v2222 = vpop.f32.mrb[0].mxu0
      %v2223 = vpop.f32.mrb[0].mxu0
      %v2224 = vadd.f32 0.0, %v2223
      %v2225 = vpop.f32.mrb[0].mxu0
      %2226 = vmatprep.mubr.bf16.mxu0 0
      %2227 = vmatmul.mubr.bf16.gmra.mrb[0].mxu0 %v2087
      %v2228 = vpop.f32.mrb[0].mxu0
      %v2229 = vadd.f32 0.0, %v2228
      %v2230 = vpop.f32.mrb[0].mxu0
      %v2231 = vpop.f32.mrb[0].mxu0
      %v2232 = vadd.f32 0.0, %v2231
      %v2233 = vpop.f32.mrb[0].mxu0
      %2234 = vmatprep.mubr.bf16.mxu0 0
      %2235 = vmatmul.mubr.bf16.gmra.mrb[0].mxu0 %v2090
      %v2236 = vpop.f32.mrb[0].mxu0
      %v2237 = vadd.f32 0.0, %v2236
      %v2238 = vpop.f32.mrb[0].mxu0
      %v2239 = vpop.f32.mrb[0].mxu0
      %v2240 = vadd.f32 0.0, %v2239
      %v2241 = vpop.f32.mrb[0].mxu0
      %2242 = vmatprep.mubr.bf16.mxu0 0
      %2243 = vmatmul.mubr.bf16.gmra.mrb[0].mxu0 %v2093
      %v2244 = vpop.f32.mrb[0].mxu0
      %v2245 = vadd.f32 0.0, %v2244
      %v2246 = vpop.f32.mrb[0].mxu0
      %v2247 = vpop.f32.mrb[0].mxu0
      %v2248 = vadd.f32 0.0, %v2247
      %v2249 = vpop.f32.mrb[0].mxu0
      %2250 = vmatprep.mubr.bf16.mxu0 0
      %2251 = vmatmul.mubr.bf16.gmra.mrb[0].mxu0 %v2096
      %v2252 = vpop.f32.mrb[0].mxu0
      %v2253 = vadd.f32 0.0, %v2252
      %v2254 = vpop.f32.mrb[0].mxu0
      %v2255 = vpop.f32.mrb[0].mxu0
      %v2256 = vadd.f32 0.0, %v2255
      %v2257 = vpop.f32.mrb[0].mxu0
      %2258 = vmatprep.mubr.bf16.mxu0 0
      %2259 = vmatmul.mubr.bf16.gmra.mrb[0].mxu0 %v2099
      %v2260 = vpop.f32.mrb[0].mxu0
      %v2261 = vadd.f32 0.0, %v2260
      %v2262 = vpop.f32.mrb[0].mxu0
      %v2263 = vpop.f32.mrb[0].mxu0
      %v2264 = vadd.f32 0.0, %v2263
      %v2265 = vpop.f32.mrb[0].mxu0
      %2266 = vmatprep.mubr.bf16.mxu0 0
      %2267 = vmatmul.mubr.bf16.gmra.mrb[0].mxu0 %v2102
      %v2268 = vpop.f32.mrb[0].mxu0
      %v2269 = vadd.f32 0.0, %v2268
      %v2270 = vpop.f32.mrb[0].mxu0
      %v2271 = vpop.f32.mrb[0].mxu0
      %v2272 = vadd.f32 0.0, %v2271
      %v2273 = vpop.f32.mrb[0].mxu0
      %2274 = vmatprep.mubr.bf16.mxu0 0
      %2275 = vmatmul.mubr.bf16.gmra.mrb[0].mxu0 %v2105
      %v2276 = vpop.f32.mrb[0].mxu0
      %v2277 = vadd.f32 0.0, %v2276
      %v2278 = vpop.f32.mrb[0].mxu0
      %v2279 = vpop.f32.mrb[0].mxu0
      %v2280 = vadd.f32 0.0, %v2279
      %v2281 = vpop.f32.mrb[0].mxu0
      %2282 = vmatprep.mubr.bf16.mxu0 0
      %2283 = vmatmul.mubr.bf16.gmra.mrb[0].mxu0 %v2108
      %v2284 = vpop.f32.mrb[0].mxu0
      %v2285 = vadd.f32 0.0, %v2284
      %v2286 = vpop.f32.mrb[0].mxu0
      %v2287 = vpop.f32.mrb[0].mxu0
      %v2288 = vadd.f32 0.0, %v2287
      %v2289 = vpop.f32.mrb[0].mxu0
      %2290 = vmatprep.mubr.bf16.mxu0 0
      %2291 = vmatmul.mubr.bf16.gmra.mrb[0].mxu0 %v2111
      %v2292 = vpop.f32.mrb[0].mxu0
      %v2293 = vadd.f32 0.0, %v2292
      %v2294 = vpop.f32.mrb[0].mxu0
      %v2295 = vpop.f32.mrb[0].mxu0
      %v2296 = vadd.f32 0.0, %v2295
      %v2297 = vpop.f32.mrb[0].mxu0
      %2298 = vmatprep.mubr.bf16.mxu0 0
      %2299 = vmatmul.mubr.bf16.gmra.mrb[0].mxu0 %v2114
      %v2300 = vpop.f32.mrb[0].mxu0
      %v2301 = vadd.f32 0.0, %v2300
      %v2302 = vpop.f32.mrb[0].mxu0
      %v2303 = vpop.f32.mrb[0].mxu0
      %v2304 = vadd.f32 0.0, %v2303
      %v2305 = vpop.f32.mrb[0].mxu0
      %2306 = vmatprep.mubr.bf16.mxu0 0
      %2307 = vmatmul.mubr.bf16.gmra.mrb[0].mxu0 %v2117
      %v2308 = vpop.f32.mrb[0].mxu0
      %v2309 = vadd.f32 0.0, %v2308
      %v2310 = vpop.f32.mrb[0].mxu0
      %v2311 = vpop.f32.mrb[0].mxu0
      %v2312 = vadd.f32 0.0, %v2311
      %v2313 = vpop.f32.mrb[0].mxu0
      %2314 = vdwg.mxu0
      %v2315 = vadd.f32 %v1870, %v2157
      %v2316 = vadd.f32 %v1871, %v2160
      %v2317 = vadd.f32 %v1872, %v2165
      %v2318 = vadd.f32 %v1873, %v2168
      %v2319 = vadd.f32 %v1874, %v2173
      %v2320 = vadd.f32 %v1875, %v2176
      %v2321 = vadd.f32 %v1876, %v2181
      %v2322 = vadd.f32 %v1877, %v2184
      %v2323 = vadd.f32 %v1878, %v2189
      %v2324 = vadd.f32 %v1879, %v2192
      %v2325 = vadd.f32 %v1880, %v2197
      %v2326 = vadd.f32 %v1881, %v2200
      %v2327 = vadd.f32 %v1882, %v2205
      %v2328 = vadd.f32 %v1883, %v2208
      %v2329 = vadd.f32 %v1884, %v2213
      %v2330 = vadd.f32 %v1885, %v2216
      %v2331 = vadd.f32 %v1886, %v2221
      %v2332 = vadd.f32 %v1887, %v2224
      %v2333 = vadd.f32 %v1888, %v2229
      %v2334 = vadd.f32 %v1889, %v2232
      %v2335 = vadd.f32 %v1890, %v2237
      %v2336 = vadd.f32 %v1891, %v2240
      %v2337 = vadd.f32 %v1892, %v2245
      %v2338 = vadd.f32 %v1893, %v2248
      %v2339 = vadd.f32 %v1894, %v2253
      %v2340 = vadd.f32 %v1895, %v2256
      %v2341 = vadd.f32 %v1896, %v2261
      %v2342 = vadd.f32 %v1897, %v2264
      %v2343 = vadd.f32 %v1898, %v2269
      %v2344 = vadd.f32 %v1899, %v2272
      %v2345 = vadd.f32 %v1900, %v2277
      %v2346 = vadd.f32 %v1901, %v2280
      %v2347 = vadd.f32 %v1902, %v2285
      %v2348 = vadd.f32 %v1903, %v2288
      %v2349 = vadd.f32 %v1904, %v2293
      %v2350 = vadd.f32 %v1905, %v2296
      %v2351 = vadd.f32 %v1906, %v2301
      %v2352 = vadd.f32 %v1907, %v2304
      %v2353 = vadd.f32 %v1908, %v2309
      %v2354 = vadd.f32 %v1909, %v2312
      %s2355 = scalar_lea.vmem %s2, 10
      %v2356 = vld [vmem:[%s2355] sm:$0x3]
      %v2357 = vrot.slane %v1594, 1
      %v2358 = vrot.slane %v1595, 1
      %v2359 = vsel %vm1129, %v2357, %v2358
      %v2360 = vrot.slane %v1596, 1
      %v2361 = vsel %vm1129, %v2358, %v2360
      %v2362 = vrot.slane %v1597, 1
      %v2363 = vsel %vm1129, %v2360, %v2362
      %v2364 = vrot.slane %v1598, 1
      %v2365 = vsel %vm1129, %v2362, %v2364
      %v2366 = vrot.slane %v1599, 1
      %v2367 = vsel %vm1129, %v2364, %v2366
      %v2368 = vrot.slane %v1600, 1
      %v2369 = vsel %vm1129, %v2366, %v2368
      %v2370 = vrot.slane %v1601, 1
      %v2371 = vsel %vm1129, %v2368, %v2370
      %v2372 = vrot.slane %v1602, 1
      %v2373 = vsel %vm1129, %v2370, %v2372
      %v2374 = vrot.slane %v1603, 1
      %v2375 = vsel %vm1129, %v2372, %v2374
      %v2376 = vrot.slane %v1604, 1
      %v2377 = vsel %vm1129, %v2374, %v2376
      %v2378 = vrot.slane %v1605, 1
      %v2379 = vsel %vm1129, %v2376, %v2378
      %v2380 = vrot.slane %v1606, 1
      %v2381 = vsel %vm1129, %v2378, %v2380
      %v2382 = vrot.slane %v1607, 1
      %v2383 = vsel %vm1129, %v2380, %v2382
      %v2384 = vrot.slane %v1608, 1
      %v2385 = vsel %vm1129, %v2382, %v2384
      %v2386 = vrot.slane %v1609, 1
      %v2387 = vsel %vm1129, %v2384, %v2386
      %v2388 = vrot.slane %v1610, 1
      %v2389 = vsel %vm1129, %v2386, %v2388
      %v2390 = vrot.slane %v1611, 1
      %v2391 = vsel %vm1129, %v2388, %v2390
      %v2392 = vrot.slane %v1612, 1
      %v2393 = vsel %vm1129, %v2390, %v2392
      %v2394 = vrot.slane %v1613, 1
      %v2395 = vsel %vm1129, %v2392, %v2394
      %v2396 = vrot.slane %v1914, 1
      %v2397 = vsel %vm1129, %v2394, %v2396
      %v2399 = vsel %vm633, %v2359, 0
      %v2402 = vsel %vm633, %v2361, 0
      %v2405 = vsel %vm633, %v2363, 0
      %v2408 = vsel %vm633, %v2365, 0
      %v2411 = vsel %vm633, %v2367, 0
      %v2414 = vsel %vm633, %v2369, 0
      %v2417 = vsel %vm633, %v2371, 0
      %v2420 = vsel %vm633, %v2373, 0
      %v2423 = vsel %vm633, %v2375, 0
      %v2426 = vsel %vm633, %v2377, 0
      %v2429 = vsel %vm633, %v2379, 0
      %v2432 = vsel %vm633, %v2381, 0
      %v2435 = vsel %vm633, %v2383, 0
      %v2438 = vsel %vm633, %v2385, 0
      %v2441 = vsel %vm633, %v2387, 0
      %v2444 = vsel %vm633, %v2389, 0
      %v2447 = vsel %vm633, %v2391, 0
      %v2450 = vsel %vm633, %v2393, 0
      %v2453 = vsel %vm633, %v2395, 0
      %v2456 = vsel %vm633, %v2397, 0
      %v2459 = vsel %vm694, %v2356, 0
      %2461 = vmatprep.subr.bf16.mxu0 0
      %2462 = vmatpush1.bf16.msra.mxu0 %v2459
      %2463 = vmatprep.subr.bf16.mxu0 0
      %2464 = vmatpush1.bf16.msra.mxu0 0
      %2465 = vmatprep.subr.bf16.mxu0 0
      %2466 = vmatpush1.bf16.msra.mxu0 0
      %2467 = vmatprep.subr.bf16.mxu0 0
      %2468 = vmatpush1.bf16.msra.mxu0 0
      %2469 = vmatprep.subr.bf16.mxu0 0
      %2470 = vmatpush1.bf16.msra.mxu0 0
      %2471 = vmatprep.subr.bf16.mxu0 0
      %2472 = vmatpush1.bf16.msra.mxu0 0
      %2473 = vmatprep.subr.bf16.mxu0 0
      %2474 = vmatpush1.bf16.msra.mxu0 0
      %2475 = vmatprep.subr.bf16.mxu0 0
      %2476 = vmatpush1.bf16.msra.mxu0 0
      %2477 = vmatprep.subr.bf16.mxu0 0
      %2478 = vmatpush1.bf16.msra.mxu0 0
      %2479 = vmatprep.subr.bf16.mxu0 0
      %2480 = vmatpush1.bf16.msra.mxu0 0
      %2481 = vmatprep.subr.bf16.mxu0 0
      %2482 = vmatpush1.bf16.msra.mxu0 0
      %2483 = vmatprep.subr.bf16.mxu0 0
      %2484 = vmatpush1.bf16.msra.mxu0 0
      %2485 = vmatprep.subr.bf16.mxu0 0
      %2486 = vmatpush1.bf16.msra.mxu0 0
      %2487 = vmatprep.subr.bf16.mxu0 0
      %2488 = vmatpush1.bf16.msra.mxu0 0
      %2489 = vmatprep.subr.bf16.mxu0 0
      %2490 = vmatpush1.bf16.msra.mxu0 0
      %2491 = vmatprep.subr.bf16.mxu0 0
      %2492 = vmatpush1.bf16.msra.mxu0 0
      %2493 = vmatprep.mubr.bf16.mxu0 0
      %2494 = vmatmul.mubr.bf16.gmra.mrb[0].mxu0 %v2399
      %v2495 = vpop.f32.mrb[0].mxu0
      %v2496 = vadd.f32 0.0, %v2495
      %v2497 = vpop.f32.mrb[0].mxu0
      %v2498 = vpop.f32.mrb[0].mxu0
      %v2499 = vadd.f32 0.0, %v2498
      %v2500 = vpop.f32.mrb[0].mxu0
      %2501 = vmatprep.mubr.bf16.mxu0 0
      %2502 = vmatmul.mubr.bf16.gmra.mrb[0].mxu0 %v2402
      %v2503 = vpop.f32.mrb[0].mxu0
      %v2504 = vadd.f32 0.0, %v2503
      %v2505 = vpop.f32.mrb[0].mxu0
      %v2506 = vpop.f32.mrb[0].mxu0
      %v2507 = vadd.f32 0.0, %v2506
      %v2508 = vpop.f32.mrb[0].mxu0
      %2509 = vmatprep.mubr.bf16.mxu0 0
      %2510 = vmatmul.mubr.bf16.gmra.mrb[0].mxu0 %v2405
      %v2511 = vpop.f32.mrb[0].mxu0
      %v2512 = vadd.f32 0.0, %v2511
      %v2513 = vpop.f32.mrb[0].mxu0
      %v2514 = vpop.f32.mrb[0].mxu0
      %v2515 = vadd.f32 0.0, %v2514
      %v2516 = vpop.f32.mrb[0].mxu0
      %2517 = vmatprep.mubr.bf16.mxu0 0
      %2518 = vmatmul.mubr.bf16.gmra.mrb[0].mxu0 %v2408
      %v2519 = vpop.f32.mrb[0].mxu0
      %v2520 = vadd.f32 0.0, %v2519
      %v2521 = vpop.f32.mrb[0].mxu0
      %v2522 = vpop.f32.mrb[0].mxu0
      %v2523 = vadd.f32 0.0, %v2522
      %v2524 = vpop.f32.mrb[0].mxu0
      %2525 = vmatprep.mubr.bf16.mxu0 0
      %2526 = vmatmul.mubr.bf16.gmra.mrb[0].mxu0 %v2411
      %v2527 = vpop.f32.mrb[0].mxu0
      %v2528 = vadd.f32 0.0, %v2527
      %v2529 = vpop.f32.mrb[0].mxu0
      %v2530 = vpop.f32.mrb[0].mxu0
      %v2531 = vadd.f32 0.0, %v2530
      %v2532 = vpop.f32.mrb[0].mxu0
      %2533 = vmatprep.mubr.bf16.mxu0 0
      %2534 = vmatmul.mubr.bf16.gmra.mrb[0].mxu0 %v2414
      %v2535 = vpop.f32.mrb[0].mxu0
      %v2536 = vadd.f32 0.0, %v2535
      %v2537 = vpop.f32.mrb[0].mxu0
      %v2538 = vpop.f32.mrb[0].mxu0
      %v2539 = vadd.f32 0.0, %v2538
      %v2540 = vpop.f32.mrb[0].mxu0
      %2541 = vmatprep.mubr.bf16.mxu0 0
      %2542 = vmatmul.mubr.bf16.gmra.mrb[0].mxu0 %v2417
      %v2543 = vpop.f32.mrb[0].mxu0
      %v2544 = vadd.f32 0.0, %v2543
      %v2545 = vpop.f32.mrb[0].mxu0
      %v2546 = vpop.f32.mrb[0].mxu0
      %v2547 = vadd.f32 0.0, %v2546
      %v2548 = vpop.f32.mrb[0].mxu0
      %2549 = vmatprep.mubr.bf16.mxu0 0
      %2550 = vmatmul.mubr.bf16.gmra.mrb[0].mxu0 %v2420
      %v2551 = vpop.f32.mrb[0].mxu0
      %v2552 = vadd.f32 0.0, %v2551
      %v2553 = vpop.f32.mrb[0].mxu0
      %v2554 = vpop.f32.mrb[0].mxu0
      %v2555 = vadd.f32 0.0, %v2554
      %v2556 = vpop.f32.mrb[0].mxu0
      %2557 = vmatprep.mubr.bf16.mxu0 0
      %2558 = vmatmul.mubr.bf16.gmra.mrb[0].mxu0 %v2423
      %v2559 = vpop.f32.mrb[0].mxu0
      %v2560 = vadd.f32 0.0, %v2559
      %v2561 = vpop.f32.mrb[0].mxu0
      %v2562 = vpop.f32.mrb[0].mxu0
      %v2563 = vadd.f32 0.0, %v2562
      %v2564 = vpop.f32.mrb[0].mxu0
      %2565 = vmatprep.mubr.bf16.mxu0 0
      %2566 = vmatmul.mubr.bf16.gmra.mrb[0].mxu0 %v2426
      %v2567 = vpop.f32.mrb[0].mxu0
      %v2568 = vadd.f32 0.0, %v2567
      %v2569 = vpop.f32.mrb[0].mxu0
      %v2570 = vpop.f32.mrb[0].mxu0
      %v2571 = vadd.f32 0.0, %v2570
      %v2572 = vpop.f32.mrb[0].mxu0
      %2573 = vmatprep.mubr.bf16.mxu0 0
      %2574 = vmatmul.mubr.bf16.gmra.mrb[0].mxu0 %v2429
      %v2575 = vpop.f32.mrb[0].mxu0
      %v2576 = vadd.f32 0.0, %v2575
      %v2577 = vpop.f32.mrb[0].mxu0
      %v2578 = vpop.f32.mrb[0].mxu0
      %v2579 = vadd.f32 0.0, %v2578
      %v2580 = vpop.f32.mrb[0].mxu0
      %2581 = vmatprep.mubr.bf16.mxu0 0
      %2582 = vmatmul.mubr.bf16.gmra.mrb[0].mxu0 %v2432
      %v2583 = vpop.f32.mrb[0].mxu0
      %v2584 = vadd.f32 0.0, %v2583
      %v2585 = vpop.f32.mrb[0].mxu0
      %v2586 = vpop.f32.mrb[0].mxu0
      %v2587 = vadd.f32 0.0, %v2586
      %v2588 = vpop.f32.mrb[0].mxu0
      %2589 = vmatprep.mubr.bf16.mxu0 0
      %2590 = vmatmul.mubr.bf16.gmra.mrb[0].mxu0 %v2435
      %v2591 = vpop.f32.mrb[0].mxu0
      %v2592 = vadd.f32 0.0, %v2591
      %v2593 = vpop.f32.mrb[0].mxu0
      %v2594 = vpop.f32.mrb[0].mxu0
      %v2595 = vadd.f32 0.0, %v2594
      %v2596 = vpop.f32.mrb[0].mxu0
      %2597 = vmatprep.mubr.bf16.mxu0 0
      %2598 = vmatmul.mubr.bf16.gmra.mrb[0].mxu0 %v2438
      %v2599 = vpop.f32.mrb[0].mxu0
      %v2600 = vadd.f32 0.0, %v2599
      %v2601 = vpop.f32.mrb[0].mxu0
      %v2602 = vpop.f32.mrb[0].mxu0
      %v2603 = vadd.f32 0.0, %v2602
      %v2604 = vpop.f32.mrb[0].mxu0
      %2605 = vmatprep.mubr.bf16.mxu0 0
      %2606 = vmatmul.mubr.bf16.gmra.mrb[0].mxu0 %v2441
      %v2607 = vpop.f32.mrb[0].mxu0
      %v2608 = vadd.f32 0.0, %v2607
      %v2609 = vpop.f32.mrb[0].mxu0
      %v2610 = vpop.f32.mrb[0].mxu0
      %v2611 = vadd.f32 0.0, %v2610
      %v2612 = vpop.f32.mrb[0].mxu0
      %2613 = vmatprep.mubr.bf16.mxu0 0
      %2614 = vmatmul.mubr.bf16.gmra.mrb[0].mxu0 %v2444
      %v2615 = vpop.f32.mrb[0].mxu0
      %v2616 = vadd.f32 0.0, %v2615
      %v2617 = vpop.f32.mrb[0].mxu0
      %v2618 = vpop.f32.mrb[0].mxu0
      %v2619 = vadd.f32 0.0, %v2618
      %v2620 = vpop.f32.mrb[0].mxu0
      %2621 = vmatprep.mubr.bf16.mxu0 0
      %2622 = vmatmul.mubr.bf16.gmra.mrb[0].mxu0 %v2447
      %v2623 = vpop.f32.mrb[0].mxu0
      %v2624 = vadd.f32 0.0, %v2623
      %v2625 = vpop.f32.mrb[0].mxu0
      %v2626 = vpop.f32.mrb[0].mxu0
      %v2627 = vadd.f32 0.0, %v2626
      %v2628 = vpop.f32.mrb[0].mxu0
      %2629 = vmatprep.mubr.bf16.mxu0 0
      %2630 = vmatmul.mubr.bf16.gmra.mrb[0].mxu0 %v2450
      %v2631 = vpop.f32.mrb[0].mxu0
      %v2632 = vadd.f32 0.0, %v2631
      %v2633 = vpop.f32.mrb[0].mxu0
      %v2634 = vpop.f32.mrb[0].mxu0
      %v2635 = vadd.f32 0.0, %v2634
      %v2636 = vpop.f32.mrb[0].mxu0
      %2637 = vmatprep.mubr.bf16.mxu0 0
      %2638 = vmatmul.mubr.bf16.gmra.mrb[0].mxu0 %v2453
      %v2639 = vpop.f32.mrb[0].mxu0
      %v2640 = vadd.f32 0.0, %v2639
      %v2641 = vpop.f32.mrb[0].mxu0
      %v2642 = vpop.f32.mrb[0].mxu0
      %v2643 = vadd.f32 0.0, %v2642
      %v2644 = vpop.f32.mrb[0].mxu0
      %2645 = vmatprep.mubr.bf16.mxu0 0
      %2646 = vmatmul.mubr.bf16.gmra.mrb[0].mxu0 %v2456
      %v2647 = vpop.f32.mrb[0].mxu0
      %v2648 = vadd.f32 0.0, %v2647
      %v2649 = vpop.f32.mrb[0].mxu0
      %v2650 = vpop.f32.mrb[0].mxu0
      %v2651 = vadd.f32 0.0, %v2650
      %v2652 = vpop.f32.mrb[0].mxu0
      %2653 = vdwg.mxu0
      %v2654 = vadd.f32 %v2315, %v2496
      %v2655 = vadd.f32 %v2316, %v2499
      %v2656 = vadd.f32 %v2317, %v2504
      %v2657 = vadd.f32 %v2318, %v2507
      %v2658 = vadd.f32 %v2319, %v2512
      %v2659 = vadd.f32 %v2320, %v2515
      %v2660 = vadd.f32 %v2321, %v2520
      %v2661 = vadd.f32 %v2322, %v2523
      %v2662 = vadd.f32 %v2323, %v2528
      %v2663 = vadd.f32 %v2324, %v2531
      %v2664 = vadd.f32 %v2325, %v2536
      %v2665 = vadd.f32 %v2326, %v2539
      %v2666 = vadd.f32 %v2327, %v2544
      %v2667 = vadd.f32 %v2328, %v2547
      %v2668 = vadd.f32 %v2329, %v2552
      %v2669 = vadd.f32 %v2330, %v2555
      %v2670 = vadd.f32 %v2331, %v2560
      %v2671 = vadd.f32 %v2332, %v2563
      %v2672 = vadd.f32 %v2333, %v2568
      %v2673 = vadd.f32 %v2334, %v2571
      %v2674 = vadd.f32 %v2335, %v2576
      %v2675 = vadd.f32 %v2336, %v2579
      %v2676 = vadd.f32 %v2337, %v2584
      %v2677 = vadd.f32 %v2338, %v2587
      %v2678 = vadd.f32 %v2339, %v2592
      %v2679 = vadd.f32 %v2340, %v2595
      %v2680 = vadd.f32 %v2341, %v2600
      %v2681 = vadd.f32 %v2342, %v2603
      %v2682 = vadd.f32 %v2343, %v2608
      %v2683 = vadd.f32 %v2344, %v2611
      %v2684 = vadd.f32 %v2345, %v2616
      %v2685 = vadd.f32 %v2346, %v2619
      %v2686 = vadd.f32 %v2347, %v2624
      %v2687 = vadd.f32 %v2348, %v2627
      %v2688 = vadd.f32 %v2349, %v2632
      %v2689 = vadd.f32 %v2350, %v2635
      %v2690 = vadd.f32 %v2351, %v2640
      %v2691 = vadd.f32 %v2352, %v2643
      %v2692 = vadd.f32 %v2353, %v2648
      %v2693 = vadd.f32 %v2354, %v2651
      %s2694 = sadd.s32 %s317, 2
      %s2695 = smul.u32 %s2694, 4
      %s2696 = smul.addr %s2695, 4
      %s2697 = scalar_lea.vmem %s293, %s2696
      %v2698 = vld [vmem:[%s2697] sm:$0xf]
      %v2699 = vld [vmem:[%s2697 + $0x4] sm:$0xf]
      %v2700 = vld [vmem:[%s2697 + $0x8] sm:$0xf]
      %v2701 = vld [vmem:[%s2697 + $0xc] sm:$0xf]
      %v2702 = vld [vmem:[%s2697 + $0x10] sm:$0xf]
      %v2703 = vld [vmem:[%s2697 + $0x14] sm:$0xf]
      %v2704 = vld [vmem:[%s2697 + $0x18] sm:$0xf]
      %v2705 = vld [vmem:[%s2697 + $0x1c] sm:$0xf]
      %v2706 = vld [vmem:[%s2697 + $0x20] sm:$0xf]
      %v2707 = vld [vmem:[%s2697 + $0x24] sm:$0xf]
      %v2708 = vld [vmem:[%s2697 + $0x28] sm:$0xf]
      %v2709 = vld [vmem:[%s2697 + $0x2c] sm:$0xf]
      %v2710 = vld [vmem:[%s2697 + $0x30] sm:$0xf]
      %v2711 = vld [vmem:[%s2697 + $0x34] sm:$0xf]
      %v2712 = vld [vmem:[%s2697 + $0x38] sm:$0xf]
      %v2713 = vld [vmem:[%s2697 + $0x3c] sm:$0xf]
      %v2714 = vld [vmem:[%s2697 + $0x40] sm:$0xf]
      %v2715 = vld [vmem:[%s2697 + $0x44] sm:$0xf]
      %v2716 = vld [vmem:[%s2697 + $0x48] sm:$0xf]
      %v2717 = vld [vmem:[%s2697 + $0x4c] sm:$0xf]
      %v2718 = vld [vmem:[%s2697 + $0x50] sm:$0xf]
      %v2719 = vld [vmem:[%s2697 + $0x54] sm:$0xf]
      %v2720 = vld [vmem:[%s2697 + $0x58] sm:$0xf]
      %v2721 = vld [vmem:[%s2697 + $0x5c] sm:$0xf]
      %v2722 = vld [vmem:[%s2697 + $0x60] sm:$0xf]
      %v2723 = vld [vmem:[%s2697 + $0x64] sm:$0xf]
      %v2724 = vld [vmem:[%s2697 + $0x68] sm:$0xf]
      %v2725 = vld [vmem:[%s2697 + $0x6c] sm:$0xf]
      %v2726 = vld [vmem:[%s2697 + $0x70] sm:$0xf]
      %v2727 = vld [vmem:[%s2697 + $0x74] sm:$0xf]
      %v2728 = vld [vmem:[%s2697 + $0x78] sm:$0xf]
      %v2729 = vld [vmem:[%s2697 + $0x7c] sm:$0xf]
      %v2730 = vld [vmem:[%s2697 + $0x80] sm:$0xf]
      %v2731 = vld [vmem:[%s2697 + $0x84] sm:$0xf]
      %v2732 = vld [vmem:[%s2697 + $0x88] sm:$0xf]
      %v2733 = vld [vmem:[%s2697 + $0x8c] sm:$0xf]
      %v2734 = vld [vmem:[%s2697 + $0x90] sm:$0xf]
      %v2735 = vld [vmem:[%s2697 + $0x94] sm:$0xf]
      %v2736 = vld [vmem:[%s2697 + $0x98] sm:$0xf]
      %v2737 = vld [vmem:[%s2697 + $0x9c] sm:$0xf]
      %v2738 = vld [vmem:[%s2697 + $0xa0] sm:$0xf]
      %s2739 = scalar_lea.vmem %s2, 12
      %v2740 = vld [vmem:[%s2739] sm:$0x3]
      %v2781 = vunpack.c.l.b16 %v2698
      %v2782 = vunpack.c.l.b16 %v2699
      %v2783 = vunpack.c.l.b16 %v2700
      %v2784 = vunpack.c.l.b16 %v2701
      %v2785 = vunpack.c.l.b16 %v2702
      %v2786 = vunpack.c.l.b16 %v2703
      %v2787 = vunpack.c.l.b16 %v2704
      %v2788 = vunpack.c.l.b16 %v2705
      %v2789 = vunpack.c.l.b16 %v2706
      %v2790 = vunpack.c.l.b16 %v2707
      %v2791 = vunpack.c.l.b16 %v2708
      %v2792 = vunpack.c.l.b16 %v2709
      %v2793 = vunpack.c.l.b16 %v2710
      %v2794 = vunpack.c.l.b16 %v2711
      %v2795 = vunpack.c.l.b16 %v2712
      %v2796 = vunpack.c.l.b16 %v2713
      %v2797 = vunpack.c.l.b16 %v2714
      %v2798 = vunpack.c.l.b16 %v2715
      %v2799 = vunpack.c.l.b16 %v2716
      %v2800 = vunpack.c.l.b16 %v2717
      %v2801 = vunpack.c.l.b16 %v2718
      %v2802 = vunpack.c.l.b16 %v2719
      %v2803 = vunpack.c.l.b16 %v2720
      %v2804 = vunpack.c.l.b16 %v2721
      %v2805 = vunpack.c.l.b16 %v2722
      %v2806 = vunpack.c.l.b16 %v2723
      %v2807 = vunpack.c.l.b16 %v2724
      %v2808 = vunpack.c.l.b16 %v2725
      %v2809 = vunpack.c.l.b16 %v2726
      %v2810 = vunpack.c.l.b16 %v2727
      %v2811 = vunpack.c.l.b16 %v2728
      %v2812 = vunpack.c.l.b16 %v2729
      %v2813 = vunpack.c.l.b16 %v2730
      %v2814 = vunpack.c.l.b16 %v2731
      %v2815 = vunpack.c.l.b16 %v2732
      %v2816 = vunpack.c.l.b16 %v2733
      %v2817 = vunpack.c.l.b16 %v2734
      %v2818 = vunpack.c.l.b16 %v2735
      %v2819 = vunpack.c.l.b16 %v2736
      %v2820 = vunpack.c.l.b16 %v2737
      %v2821 = vpack.c.b16 %v2782, %v2781
      %v2822 = vpack.c.b16 %v2784, %v2783
      %v2823 = vpack.c.b16 %v2786, %v2785
      %v2824 = vpack.c.b16 %v2788, %v2787
      %v2825 = vpack.c.b16 %v2790, %v2789
      %v2826 = vpack.c.b16 %v2792, %v2791
      %v2827 = vpack.c.b16 %v2794, %v2793
      %v2828 = vpack.c.b16 %v2796, %v2795
      %v2829 = vpack.c.b16 %v2798, %v2797
      %v2830 = vpack.c.b16 %v2800, %v2799
      %v2831 = vpack.c.b16 %v2802, %v2801
      %v2832 = vpack.c.b16 %v2804, %v2803
      %v2833 = vpack.c.b16 %v2806, %v2805
      %v2834 = vpack.c.b16 %v2808, %v2807
      %v2835 = vpack.c.b16 %v2810, %v2809
      %v2836 = vpack.c.b16 %v2812, %v2811
      %v2837 = vpack.c.b16 %v2814, %v2813
      %v2838 = vpack.c.b16 %v2816, %v2815
      %v2839 = vpack.c.b16 %v2818, %v2817
      %v2840 = vpack.c.b16 %v2820, %v2819
      %v2842 = vsel %vm633, %v2821, 0
      %v2845 = vsel %vm633, %v2822, 0
      %v2848 = vsel %vm633, %v2823, 0
      %v2851 = vsel %vm633, %v2824, 0
      %v2854 = vsel %vm633, %v2825, 0
      %v2857 = vsel %vm633, %v2826, 0
      %v2860 = vsel %vm633, %v2827, 0
      %v2863 = vsel %vm633, %v2828, 0
      %v2866 = vsel %vm633, %v2829, 0
      %v2869 = vsel %vm633, %v2830, 0
      %v2872 = vsel %vm633, %v2831, 0
      %v2875 = vsel %vm633, %v2832, 0
      %v2878 = vsel %vm633, %v2833, 0
      %v2881 = vsel %vm633, %v2834, 0
      %v2884 = vsel %vm633, %v2835, 0
      %v2887 = vsel %vm633, %v2836, 0
      %v2890 = vsel %vm633, %v2837, 0
      %v2893 = vsel %vm633, %v2838, 0
      %v2896 = vsel %vm633, %v2839, 0
      %v2899 = vsel %vm633, %v2840, 0
      %v2902 = vsel %vm694, %v2740, 0
      %2904 = vmatprep.subr.bf16.mxu0 0
      %2905 = vmatpush1.bf16.msra.mxu0 %v2902
      %2906 = vmatprep.subr.bf16.mxu0 0
      %2907 = vmatpush1.bf16.msra.mxu0 0
      %2908 = vmatprep.subr.bf16.mxu0 0
      %2909 = vmatpush1.bf16.msra.mxu0 0
      %2910 = vmatprep.subr.bf16.mxu0 0
      %2911 = vmatpush1.bf16.msra.mxu0 0
      %2912 = vmatprep.subr.bf16.mxu0 0
      %2913 = vmatpush1.bf16.msra.mxu0 0
      %2914 = vmatprep.subr.bf16.mxu0 0
      %2915 = vmatpush1.bf16.msra.mxu0 0
      %2916 = vmatprep.subr.bf16.mxu0 0
      %2917 = vmatpush1.bf16.msra.mxu0 0
      %2918 = vmatprep.subr.bf16.mxu0 0
      %2919 = vmatpush1.bf16.msra.mxu0 0
      %2920 = vmatprep.subr.bf16.mxu0 0
      %2921 = vmatpush1.bf16.msra.mxu0 0
      %2922 = vmatprep.subr.bf16.mxu0 0
      %2923 = vmatpush1.bf16.msra.mxu0 0
      %2924 = vmatprep.subr.bf16.mxu0 0
      %2925 = vmatpush1.bf16.msra.mxu0 0
      %2926 = vmatprep.subr.bf16.mxu0 0
      %2927 = vmatpush1.bf16.msra.mxu0 0
      %2928 = vmatprep.subr.bf16.mxu0 0
      %2929 = vmatpush1.bf16.msra.mxu0 0
      %2930 = vmatprep.subr.bf16.mxu0 0
      %2931 = vmatpush1.bf16.msra.mxu0 0
      %2932 = vmatprep.subr.bf16.mxu0 0
      %2933 = vmatpush1.bf16.msra.mxu0 0
      %2934 = vmatprep.subr.bf16.mxu0 0
      %2935 = vmatpush1.bf16.msra.mxu0 0
      %2936 = vmatprep.mubr.bf16.mxu0 0
      %2937 = vmatmul.mubr.bf16.gmra.mrb[0].mxu0 %v2842
      %v2938 = vpop.f32.mrb[0].mxu0
      %v2939 = vadd.f32 0.0, %v2938
      %v2940 = vpop.f32.mrb[0].mxu0
      %v2941 = vpop.f32.mrb[0].mxu0
      %v2942 = vadd.f32 0.0, %v2941
      %v2943 = vpop.f32.mrb[0].mxu0
      %2944 = vmatprep.mubr.bf16.mxu0 0
      %2945 = vmatmul.mubr.bf16.gmra.mrb[0].mxu0 %v2845
      %v2946 = vpop.f32.mrb[0].mxu0
      %v2947 = vadd.f32 0.0, %v2946
      %v2948 = vpop.f32.mrb[0].mxu0
      %v2949 = vpop.f32.mrb[0].mxu0
      %v2950 = vadd.f32 0.0, %v2949
      %v2951 = vpop.f32.mrb[0].mxu0
      %2952 = vmatprep.mubr.bf16.mxu0 0
      %2953 = vmatmul.mubr.bf16.gmra.mrb[0].mxu0 %v2848
      %v2954 = vpop.f32.mrb[0].mxu0
      %v2955 = vadd.f32 0.0, %v2954
      %v2956 = vpop.f32.mrb[0].mxu0
      %v2957 = vpop.f32.mrb[0].mxu0
      %v2958 = vadd.f32 0.0, %v2957
      %v2959 = vpop.f32.mrb[0].mxu0
      %2960 = vmatprep.mubr.bf16.mxu0 0
      %2961 = vmatmul.mubr.bf16.gmra.mrb[0].mxu0 %v2851
      %v2962 = vpop.f32.mrb[0].mxu0
      %v2963 = vadd.f32 0.0, %v2962
      %v2964 = vpop.f32.mrb[0].mxu0
      %v2965 = vpop.f32.mrb[0].mxu0
      %v2966 = vadd.f32 0.0, %v2965
      %v2967 = vpop.f32.mrb[0].mxu0
      %2968 = vmatprep.mubr.bf16.mxu0 0
      %2969 = vmatmul.mubr.bf16.gmra.mrb[0].mxu0 %v2854
      %v2970 = vpop.f32.mrb[0].mxu0
      %v2971 = vadd.f32 0.0, %v2970
      %v2972 = vpop.f32.mrb[0].mxu0
      %v2973 = vpop.f32.mrb[0].mxu0
      %v2974 = vadd.f32 0.0, %v2973
      %v2975 = vpop.f32.mrb[0].mxu0
      %2976 = vmatprep.mubr.bf16.mxu0 0
      %2977 = vmatmul.mubr.bf16.gmra.mrb[0].mxu0 %v2857
      %v2978 = vpop.f32.mrb[0].mxu0
      %v2979 = vadd.f32 0.0, %v2978
      %v2980 = vpop.f32.mrb[0].mxu0
      %v2981 = vpop.f32.mrb[0].mxu0
      %v2982 = vadd.f32 0.0, %v2981
      %v2983 = vpop.f32.mrb[0].mxu0
      %2984 = vmatprep.mubr.bf16.mxu0 0
      %2985 = vmatmul.mubr.bf16.gmra.mrb[0].mxu0 %v2860
      %v2986 = vpop.f32.mrb[0].mxu0
      %v2987 = vadd.f32 0.0, %v2986
      %v2988 = vpop.f32.mrb[0].mxu0
      %v2989 = vpop.f32.mrb[0].mxu0
      %v2990 = vadd.f32 0.0, %v2989
      %v2991 = vpop.f32.mrb[0].mxu0
      %2992 = vmatprep.mubr.bf16.mxu0 0
      %2993 = vmatmul.mubr.bf16.gmra.mrb[0].mxu0 %v2863
      %v2994 = vpop.f32.mrb[0].mxu0
      %v2995 = vadd.f32 0.0, %v2994
      %v2996 = vpop.f32.mrb[0].mxu0
      %v2997 = vpop.f32.mrb[0].mxu0
      %v2998 = vadd.f32 0.0, %v2997
      %v2999 = vpop.f32.mrb[0].mxu0
      %3000 = vmatprep.mubr.bf16.mxu0 0
      %3001 = vmatmul.mubr.bf16.gmra.mrb[0].mxu0 %v2866
      %v3002 = vpop.f32.mrb[0].mxu0
      %v3003 = vadd.f32 0.0, %v3002
      %v3004 = vpop.f32.mrb[0].mxu0
      %v3005 = vpop.f32.mrb[0].mxu0
      %v3006 = vadd.f32 0.0, %v3005
      %v3007 = vpop.f32.mrb[0].mxu0
      %3008 = vmatprep.mubr.bf16.mxu0 0
      %3009 = vmatmul.mubr.bf16.gmra.mrb[0].mxu0 %v2869
      %v3010 = vpop.f32.mrb[0].mxu0
      %v3011 = vadd.f32 0.0, %v3010
      %v3012 = vpop.f32.mrb[0].mxu0
      %v3013 = vpop.f32.mrb[0].mxu0
      %v3014 = vadd.f32 0.0, %v3013
      %v3015 = vpop.f32.mrb[0].mxu0
      %3016 = vmatprep.mubr.bf16.mxu0 0
      %3017 = vmatmul.mubr.bf16.gmra.mrb[0].mxu0 %v2872
      %v3018 = vpop.f32.mrb[0].mxu0
      %v3019 = vadd.f32 0.0, %v3018
      %v3020 = vpop.f32.mrb[0].mxu0
      %v3021 = vpop.f32.mrb[0].mxu0
      %v3022 = vadd.f32 0.0, %v3021
      %v3023 = vpop.f32.mrb[0].mxu0
      %3024 = vmatprep.mubr.bf16.mxu0 0
      %3025 = vmatmul.mubr.bf16.gmra.mrb[0].mxu0 %v2875
      %v3026 = vpop.f32.mrb[0].mxu0
      %v3027 = vadd.f32 0.0, %v3026
      %v3028 = vpop.f32.mrb[0].mxu0
      %v3029 = vpop.f32.mrb[0].mxu0
      %v3030 = vadd.f32 0.0, %v3029
      %v3031 = vpop.f32.mrb[0].mxu0
      %3032 = vmatprep.mubr.bf16.mxu0 0
      %3033 = vmatmul.mubr.bf16.gmra.mrb[0].mxu0 %v2878
      %v3034 = vpop.f32.mrb[0].mxu0
      %v3035 = vadd.f32 0.0, %v3034
      %v3036 = vpop.f32.mrb[0].mxu0
      %v3037 = vpop.f32.mrb[0].mxu0
      %v3038 = vadd.f32 0.0, %v3037
      %v3039 = vpop.f32.mrb[0].mxu0
      %3040 = vmatprep.mubr.bf16.mxu0 0
      %3041 = vmatmul.mubr.bf16.gmra.mrb[0].mxu0 %v2881
      %v3042 = vpop.f32.mrb[0].mxu0
      %v3043 = vadd.f32 0.0, %v3042
      %v3044 = vpop.f32.mrb[0].mxu0
      %v3045 = vpop.f32.mrb[0].mxu0
      %v3046 = vadd.f32 0.0, %v3045
      %v3047 = vpop.f32.mrb[0].mxu0
      %3048 = vmatprep.mubr.bf16.mxu0 0
      %3049 = vmatmul.mubr.bf16.gmra.mrb[0].mxu0 %v2884
      %v3050 = vpop.f32.mrb[0].mxu0
      %v3051 = vadd.f32 0.0, %v3050
      %v3052 = vpop.f32.mrb[0].mxu0
      %v3053 = vpop.f32.mrb[0].mxu0
      %v3054 = vadd.f32 0.0, %v3053
      %v3055 = vpop.f32.mrb[0].mxu0
      %3056 = vmatprep.mubr.bf16.mxu0 0
      %3057 = vmatmul.mubr.bf16.gmra.mrb[0].mxu0 %v2887
      %v3058 = vpop.f32.mrb[0].mxu0
      %v3059 = vadd.f32 0.0, %v3058
      %v3060 = vpop.f32.mrb[0].mxu0
      %v3061 = vpop.f32.mrb[0].mxu0
      %v3062 = vadd.f32 0.0, %v3061
      %v3063 = vpop.f32.mrb[0].mxu0
      %3064 = vmatprep.mubr.bf16.mxu0 0
      %3065 = vmatmul.mubr.bf16.gmra.mrb[0].mxu0 %v2890
      %v3066 = vpop.f32.mrb[0].mxu0
      %v3067 = vadd.f32 0.0, %v3066
      %v3068 = vpop.f32.mrb[0].mxu0
      %v3069 = vpop.f32.mrb[0].mxu0
      %v3070 = vadd.f32 0.0, %v3069
      %v3071 = vpop.f32.mrb[0].mxu0
      %3072 = vmatprep.mubr.bf16.mxu0 0
      %3073 = vmatmul.mubr.bf16.gmra.mrb[0].mxu0 %v2893
      %v3074 = vpop.f32.mrb[0].mxu0
      %v3075 = vadd.f32 0.0, %v3074
      %v3076 = vpop.f32.mrb[0].mxu0
      %v3077 = vpop.f32.mrb[0].mxu0
      %v3078 = vadd.f32 0.0, %v3077
      %v3079 = vpop.f32.mrb[0].mxu0
      %3080 = vmatprep.mubr.bf16.mxu0 0
      %3081 = vmatmul.mubr.bf16.gmra.mrb[0].mxu0 %v2896
      %v3082 = vpop.f32.mrb[0].mxu0
      %v3083 = vadd.f32 0.0, %v3082
      %v3084 = vpop.f32.mrb[0].mxu0
      %v3085 = vpop.f32.mrb[0].mxu0
      %v3086 = vadd.f32 0.0, %v3085
      %v3087 = vpop.f32.mrb[0].mxu0
      %3088 = vmatprep.mubr.bf16.mxu0 0
      %3089 = vmatmul.mubr.bf16.gmra.mrb[0].mxu0 %v2899
      %v3090 = vpop.f32.mrb[0].mxu0
      %v3091 = vadd.f32 0.0, %v3090
      %v3092 = vpop.f32.mrb[0].mxu0
      %v3093 = vpop.f32.mrb[0].mxu0
      %v3094 = vadd.f32 0.0, %v3093
      %v3095 = vpop.f32.mrb[0].mxu0
      %3096 = vdwg.mxu0
      %v3097 = vadd.f32 %v2654, %v2939
      %v3098 = vadd.f32 %v2655, %v2942
      %v3099 = vadd.f32 %v2656, %v2947
      %v3100 = vadd.f32 %v2657, %v2950
      %v3101 = vadd.f32 %v2658, %v2955
      %v3102 = vadd.f32 %v2659, %v2958
      %v3103 = vadd.f32 %v2660, %v2963
      %v3104 = vadd.f32 %v2661, %v2966
      %v3105 = vadd.f32 %v2662, %v2971
      %v3106 = vadd.f32 %v2663, %v2974
      %v3107 = vadd.f32 %v2664, %v2979
      %v3108 = vadd.f32 %v2665, %v2982
      %v3109 = vadd.f32 %v2666, %v2987
      %v3110 = vadd.f32 %v2667, %v2990
      %v3111 = vadd.f32 %v2668, %v2995
      %v3112 = vadd.f32 %v2669, %v2998
      %v3113 = vadd.f32 %v2670, %v3003
      %v3114 = vadd.f32 %v2671, %v3006
      %v3115 = vadd.f32 %v2672, %v3011
      %v3116 = vadd.f32 %v2673, %v3014
      %v3117 = vadd.f32 %v2674, %v3019
      %v3118 = vadd.f32 %v2675, %v3022
      %v3119 = vadd.f32 %v2676, %v3027
      %v3120 = vadd.f32 %v2677, %v3030
      %v3121 = vadd.f32 %v2678, %v3035
      %v3122 = vadd.f32 %v2679, %v3038
      %v3123 = vadd.f32 %v2680, %v3043
      %v3124 = vadd.f32 %v2681, %v3046
      %v3125 = vadd.f32 %v2682, %v3051
      %v3126 = vadd.f32 %v2683, %v3054
      %v3127 = vadd.f32 %v2684, %v3059
      %v3128 = vadd.f32 %v2685, %v3062
      %v3129 = vadd.f32 %v2686, %v3067
      %v3130 = vadd.f32 %v2687, %v3070
      %v3131 = vadd.f32 %v2688, %v3075
      %v3132 = vadd.f32 %v2689, %v3078
      %v3133 = vadd.f32 %v2690, %v3083
      %v3134 = vadd.f32 %v2691, %v3086
      %v3135 = vadd.f32 %v2692, %v3091
      %v3136 = vadd.f32 %v2693, %v3094
      %s3137 = scalar_lea.vmem %s2, 14
      %v3138 = vld [vmem:[%s3137] sm:$0x3]
      %v3140 = vunpack.c.l.b16 %v2738
      %v3141 = vpack.c.b16 %v3140, %v3140
      %v3142 = vshrl.u32 %v2821, 16
      %v3144 = vshll.u32 %v2821, 16
      %v3146 = vrot.slane %v3144, 1
      %v3147 = vor.u32 %v3142, %v3146
      %v3148 = vshll.u32 %v2822, 16
      %v3150 = vrot.slane %v3148, 1
      %v3151 = vsel %vm468, %v3147, %v3150
      %v3152 = vshrl.u32 %v2822, 16
      %v3154 = vor.u32 %v3152, %v3150
      %v3155 = vshll.u32 %v2823, 16
      %v3157 = vrot.slane %v3155, 1
      %v3158 = vsel %vm468, %v3154, %v3157
      %v3159 = vshrl.u32 %v2823, 16
      %v3161 = vor.u32 %v3159, %v3157
      %v3162 = vshll.u32 %v2824, 16
      %v3164 = vrot.slane %v3162, 1
      %v3165 = vsel %vm468, %v3161, %v3164
      %v3166 = vshrl.u32 %v2824, 16
      %v3168 = vor.u32 %v3166, %v3164
      %v3169 = vshll.u32 %v2825, 16
      %v3171 = vrot.slane %v3169, 1
      %v3172 = vsel %vm468, %v3168, %v3171
      %v3173 = vshrl.u32 %v2825, 16
      %v3175 = vor.u32 %v3173, %v3171
      %v3176 = vshll.u32 %v2826, 16
      %v3178 = vrot.slane %v3176, 1
      %v3179 = vsel %vm468, %v3175, %v3178
      %v3180 = vshrl.u32 %v2826, 16
      %v3182 = vor.u32 %v3180, %v3178
      %v3183 = vshll.u32 %v2827, 16
      %v3185 = vrot.slane %v3183, 1
      %v3186 = vsel %vm468, %v3182, %v3185
      %v3187 = vshrl.u32 %v2827, 16
      %v3189 = vor.u32 %v3187, %v3185
      %v3190 = vshll.u32 %v2828, 16
      %v3192 = vrot.slane %v3190, 1
      %v3193 = vsel %vm468, %v3189, %v3192
      %v3194 = vshrl.u32 %v2828, 16
      %v3196 = vor.u32 %v3194, %v3192
      %v3197 = vshll.u32 %v2829, 16
      %v3199 = vrot.slane %v3197, 1
      %v3200 = vsel %vm468, %v3196, %v3199
      %v3201 = vshrl.u32 %v2829, 16
      %v3203 = vor.u32 %v3201, %v3199
      %v3204 = vshll.u32 %v2830, 16
      %v3206 = vrot.slane %v3204, 1
      %v3207 = vsel %vm468, %v3203, %v3206
      %v3208 = vshrl.u32 %v2830, 16
      %v3210 = vor.u32 %v3208, %v3206
      %v3211 = vshll.u32 %v2831, 16
      %v3213 = vrot.slane %v3211, 1
      %v3214 = vsel %vm468, %v3210, %v3213
      %v3215 = vshrl.u32 %v2831, 16
      %v3217 = vor.u32 %v3215, %v3213
      %v3218 = vshll.u32 %v2832, 16
      %v3220 = vrot.slane %v3218, 1
      %v3221 = vsel %vm468, %v3217, %v3220
      %v3222 = vshrl.u32 %v2832, 16
      %v3224 = vor.u32 %v3222, %v3220
      %v3225 = vshll.u32 %v2833, 16
      %v3227 = vrot.slane %v3225, 1
      %v3228 = vsel %vm468, %v3224, %v3227
      %v3229 = vshrl.u32 %v2833, 16
      %v3231 = vor.u32 %v3229, %v3227
      %v3232 = vshll.u32 %v2834, 16
      %v3234 = vrot.slane %v3232, 1
      %v3235 = vsel %vm468, %v3231, %v3234
      %v3236 = vshrl.u32 %v2834, 16
      %v3238 = vor.u32 %v3236, %v3234
      %v3239 = vshll.u32 %v2835, 16
      %v3241 = vrot.slane %v3239, 1
      %v3242 = vsel %vm468, %v3238, %v3241
      %v3243 = vshrl.u32 %v2835, 16
      %v3245 = vor.u32 %v3243, %v3241
      %v3246 = vshll.u32 %v2836, 16
      %v3248 = vrot.slane %v3246, 1
      %v3249 = vsel %vm468, %v3245, %v3248
      %v3250 = vshrl.u32 %v2836, 16
      %v3252 = vor.u32 %v3250, %v3248
      %v3253 = vshll.u32 %v2837, 16
      %v3255 = vrot.slane %v3253, 1
      %v3256 = vsel %vm468, %v3252, %v3255
      %v3257 = vshrl.u32 %v2837, 16
      %v3259 = vor.u32 %v3257, %v3255
      %v3260 = vshll.u32 %v2838, 16
      %v3262 = vrot.slane %v3260, 1
      %v3263 = vsel %vm468, %v3259, %v3262
      %v3264 = vshrl.u32 %v2838, 16
      %v3266 = vor.u32 %v3264, %v3262
      %v3267 = vshll.u32 %v2839, 16
      %v3269 = vrot.slane %v3267, 1
      %v3270 = vsel %vm468, %v3266, %v3269
      %v3271 = vshrl.u32 %v2839, 16
      %v3273 = vor.u32 %v3271, %v3269
      %v3274 = vshll.u32 %v2840, 16
      %v3276 = vrot.slane %v3274, 1
      %v3277 = vsel %vm468, %v3273, %v3276
      %v3278 = vshrl.u32 %v2840, 16
      %v3280 = vor.u32 %v3278, %v3276
      %v3282 = vshll.u32 %v3141, 16
      %v3284 = vrot.slane %v3282, 1
      %v3285 = vsel %vm468, %v3280, %v3284
      %v3287 = vsel %vm633, %v3151, 0
      %v3290 = vsel %vm633, %v3158, 0
      %v3293 = vsel %vm633, %v3165, 0
      %v3296 = vsel %vm633, %v3172, 0
      %v3299 = vsel %vm633, %v3179, 0
      %v3302 = vsel %vm633, %v3186, 0
      %v3305 = vsel %vm633, %v3193, 0
      %v3308 = vsel %vm633, %v3200, 0
      %v3311 = vsel %vm633, %v3207, 0
      %v3314 = vsel %vm633, %v3214, 0
      %v3317 = vsel %vm633, %v3221, 0
      %v3320 = vsel %vm633, %v3228, 0
      %v3323 = vsel %vm633, %v3235, 0
      %v3326 = vsel %vm633, %v3242, 0
      %v3329 = vsel %vm633, %v3249, 0
      %v3332 = vsel %vm633, %v3256, 0
      %v3335 = vsel %vm633, %v3263, 0
      %v3338 = vsel %vm633, %v3270, 0
      %v3341 = vsel %vm633, %v3277, 0
      %v3344 = vsel %vm633, %v3285, 0
      %v3347 = vsel %vm694, %v3138, 0
      %3349 = vmatprep.subr.bf16.mxu0 0
      %3350 = vmatpush1.bf16.msra.mxu0 %v3347
      %3351 = vmatprep.subr.bf16.mxu0 0
      %3352 = vmatpush1.bf16.msra.mxu0 0
      %3353 = vmatprep.subr.bf16.mxu0 0
      %3354 = vmatpush1.bf16.msra.mxu0 0
      %3355 = vmatprep.subr.bf16.mxu0 0
      %3356 = vmatpush1.bf16.msra.mxu0 0
      %3357 = vmatprep.subr.bf16.mxu0 0
      %3358 = vmatpush1.bf16.msra.mxu0 0
      %3359 = vmatprep.subr.bf16.mxu0 0
      %3360 = vmatpush1.bf16.msra.mxu0 0
      %3361 = vmatprep.subr.bf16.mxu0 0
      %3362 = vmatpush1.bf16.msra.mxu0 0
      %3363 = vmatprep.subr.bf16.mxu0 0
      %3364 = vmatpush1.bf16.msra.mxu0 0
      %3365 = vmatprep.subr.bf16.mxu0 0
      %3366 = vmatpush1.bf16.msra.mxu0 0
      %3367 = vmatprep.subr.bf16.mxu0 0
      %3368 = vmatpush1.bf16.msra.mxu0 0
      %3369 = vmatprep.subr.bf16.mxu0 0
      %3370 = vmatpush1.bf16.msra.mxu0 0
      %3371 = vmatprep.subr.bf16.mxu0 0
      %3372 = vmatpush1.bf16.msra.mxu0 0
      %3373 = vmatprep.subr.bf16.mxu0 0
      %3374 = vmatpush1.bf16.msra.mxu0 0
      %3375 = vmatprep.subr.bf16.mxu0 0
      %3376 = vmatpush1.bf16.msra.mxu0 0
      %3377 = vmatprep.subr.bf16.mxu0 0
      %3378 = vmatpush1.bf16.msra.mxu0 0
      %3379 = vmatprep.subr.bf16.mxu0 0
      %3380 = vmatpush1.bf16.msra.mxu0 0
      %3381 = vmatprep.mubr.bf16.mxu0 0
      %3382 = vmatmul.mubr.bf16.gmra.mrb[0].mxu0 %v3287
      %v3383 = vpop.f32.mrb[0].mxu0
      %v3384 = vadd.f32 0.0, %v3383
      %v3385 = vpop.f32.mrb[0].mxu0
      %v3386 = vpop.f32.mrb[0].mxu0
      %v3387 = vadd.f32 0.0, %v3386
      %v3388 = vpop.f32.mrb[0].mxu0
      %3389 = vmatprep.mubr.bf16.mxu0 0
      %3390 = vmatmul.mubr.bf16.gmra.mrb[0].mxu0 %v3290
      %v3391 = vpop.f32.mrb[0].mxu0
      %v3392 = vadd.f32 0.0, %v3391
      %v3393 = vpop.f32.mrb[0].mxu0
      %v3394 = vpop.f32.mrb[0].mxu0
      %v3395 = vadd.f32 0.0, %v3394
      %v3396 = vpop.f32.mrb[0].mxu0
      %3397 = vmatprep.mubr.bf16.mxu0 0
      %3398 = vmatmul.mubr.bf16.gmra.mrb[0].mxu0 %v3293
      %v3399 = vpop.f32.mrb[0].mxu0
      %v3400 = vadd.f32 0.0, %v3399
      %v3401 = vpop.f32.mrb[0].mxu0
      %v3402 = vpop.f32.mrb[0].mxu0
      %v3403 = vadd.f32 0.0, %v3402
      %v3404 = vpop.f32.mrb[0].mxu0
      %3405 = vmatprep.mubr.bf16.mxu0 0
      %3406 = vmatmul.mubr.bf16.gmra.mrb[0].mxu0 %v3296
      %v3407 = vpop.f32.mrb[0].mxu0
      %v3408 = vadd.f32 0.0, %v3407
      %v3409 = vpop.f32.mrb[0].mxu0
      %v3410 = vpop.f32.mrb[0].mxu0
      %v3411 = vadd.f32 0.0, %v3410
      %v3412 = vpop.f32.mrb[0].mxu0
      %3413 = vmatprep.mubr.bf16.mxu0 0
      %3414 = vmatmul.mubr.bf16.gmra.mrb[0].mxu0 %v3299
      %v3415 = vpop.f32.mrb[0].mxu0
      %v3416 = vadd.f32 0.0, %v3415
      %v3417 = vpop.f32.mrb[0].mxu0
      %v3418 = vpop.f32.mrb[0].mxu0
      %v3419 = vadd.f32 0.0, %v3418
      %v3420 = vpop.f32.mrb[0].mxu0
      %3421 = vmatprep.mubr.bf16.mxu0 0
      %3422 = vmatmul.mubr.bf16.gmra.mrb[0].mxu0 %v3302
      %v3423 = vpop.f32.mrb[0].mxu0
      %v3424 = vadd.f32 0.0, %v3423
      %v3425 = vpop.f32.mrb[0].mxu0
      %v3426 = vpop.f32.mrb[0].mxu0
      %v3427 = vadd.f32 0.0, %v3426
      %v3428 = vpop.f32.mrb[0].mxu0
      %3429 = vmatprep.mubr.bf16.mxu0 0
      %3430 = vmatmul.mubr.bf16.gmra.mrb[0].mxu0 %v3305
      %v3431 = vpop.f32.mrb[0].mxu0
      %v3432 = vadd.f32 0.0, %v3431
      %v3433 = vpop.f32.mrb[0].mxu0
      %v3434 = vpop.f32.mrb[0].mxu0
      %v3435 = vadd.f32 0.0, %v3434
      %v3436 = vpop.f32.mrb[0].mxu0
      %3437 = vmatprep.mubr.bf16.mxu0 0
      %3438 = vmatmul.mubr.bf16.gmra.mrb[0].mxu0 %v3308
      %v3439 = vpop.f32.mrb[0].mxu0
      %v3440 = vadd.f32 0.0, %v3439
      %v3441 = vpop.f32.mrb[0].mxu0
      %v3442 = vpop.f32.mrb[0].mxu0
      %v3443 = vadd.f32 0.0, %v3442
      %v3444 = vpop.f32.mrb[0].mxu0
      %3445 = vmatprep.mubr.bf16.mxu0 0
      %3446 = vmatmul.mubr.bf16.gmra.mrb[0].mxu0 %v3311
      %v3447 = vpop.f32.mrb[0].mxu0
      %v3448 = vadd.f32 0.0, %v3447
      %v3449 = vpop.f32.mrb[0].mxu0
      %v3450 = vpop.f32.mrb[0].mxu0
      %v3451 = vadd.f32 0.0, %v3450
      %v3452 = vpop.f32.mrb[0].mxu0
      %3453 = vmatprep.mubr.bf16.mxu0 0
      %3454 = vmatmul.mubr.bf16.gmra.mrb[0].mxu0 %v3314
      %v3455 = vpop.f32.mrb[0].mxu0
      %v3456 = vadd.f32 0.0, %v3455
      %v3457 = vpop.f32.mrb[0].mxu0
      %v3458 = vpop.f32.mrb[0].mxu0
      %v3459 = vadd.f32 0.0, %v3458
      %v3460 = vpop.f32.mrb[0].mxu0
      %3461 = vmatprep.mubr.bf16.mxu0 0
      %3462 = vmatmul.mubr.bf16.gmra.mrb[0].mxu0 %v3317
      %v3463 = vpop.f32.mrb[0].mxu0
      %v3464 = vadd.f32 0.0, %v3463
      %v3465 = vpop.f32.mrb[0].mxu0
      %v3466 = vpop.f32.mrb[0].mxu0
      %v3467 = vadd.f32 0.0, %v3466
      %v3468 = vpop.f32.mrb[0].mxu0
      %3469 = vmatprep.mubr.bf16.mxu0 0
      %3470 = vmatmul.mubr.bf16.gmra.mrb[0].mxu0 %v3320
      %v3471 = vpop.f32.mrb[0].mxu0
      %v3472 = vadd.f32 0.0, %v3471
      %v3473 = vpop.f32.mrb[0].mxu0
      %v3474 = vpop.f32.mrb[0].mxu0
      %v3475 = vadd.f32 0.0, %v3474
      %v3476 = vpop.f32.mrb[0].mxu0
      %3477 = vmatprep.mubr.bf16.mxu0 0
      %3478 = vmatmul.mubr.bf16.gmra.mrb[0].mxu0 %v3323
      %v3479 = vpop.f32.mrb[0].mxu0
      %v3480 = vadd.f32 0.0, %v3479
      %v3481 = vpop.f32.mrb[0].mxu0
      %v3482 = vpop.f32.mrb[0].mxu0
      %v3483 = vadd.f32 0.0, %v3482
      %v3484 = vpop.f32.mrb[0].mxu0
      %3485 = vmatprep.mubr.bf16.mxu0 0
      %3486 = vmatmul.mubr.bf16.gmra.mrb[0].mxu0 %v3326
      %v3487 = vpop.f32.mrb[0].mxu0
      %v3488 = vadd.f32 0.0, %v3487
      %v3489 = vpop.f32.mrb[0].mxu0
      %v3490 = vpop.f32.mrb[0].mxu0
      %v3491 = vadd.f32 0.0, %v3490
      %v3492 = vpop.f32.mrb[0].mxu0
      %3493 = vmatprep.mubr.bf16.mxu0 0
      %3494 = vmatmul.mubr.bf16.gmra.mrb[0].mxu0 %v3329
      %v3495 = vpop.f32.mrb[0].mxu0
      %v3496 = vadd.f32 0.0, %v3495
      %v3497 = vpop.f32.mrb[0].mxu0
      %v3498 = vpop.f32.mrb[0].mxu0
      %v3499 = vadd.f32 0.0, %v3498
      %v3500 = vpop.f32.mrb[0].mxu0
      %3501 = vmatprep.mubr.bf16.mxu0 0
      %3502 = vmatmul.mubr.bf16.gmra.mrb[0].mxu0 %v3332
      %v3503 = vpop.f32.mrb[0].mxu0
      %v3504 = vadd.f32 0.0, %v3503
      %v3505 = vpop.f32.mrb[0].mxu0
      %v3506 = vpop.f32.mrb[0].mxu0
      %v3507 = vadd.f32 0.0, %v3506
      %v3508 = vpop.f32.mrb[0].mxu0
      %3509 = vmatprep.mubr.bf16.mxu0 0
      %3510 = vmatmul.mubr.bf16.gmra.mrb[0].mxu0 %v3335
      %v3511 = vpop.f32.mrb[0].mxu0
      %v3512 = vadd.f32 0.0, %v3511
      %v3513 = vpop.f32.mrb[0].mxu0
      %v3514 = vpop.f32.mrb[0].mxu0
      %v3515 = vadd.f32 0.0, %v3514
      %v3516 = vpop.f32.mrb[0].mxu0
      %3517 = vmatprep.mubr.bf16.mxu0 0
      %3518 = vmatmul.mubr.bf16.gmra.mrb[0].mxu0 %v3338
      %v3519 = vpop.f32.mrb[0].mxu0
      %v3520 = vadd.f32 0.0, %v3519
      %v3521 = vpop.f32.mrb[0].mxu0
      %v3522 = vpop.f32.mrb[0].mxu0
      %v3523 = vadd.f32 0.0, %v3522
      %v3524 = vpop.f32.mrb[0].mxu0
      %3525 = vmatprep.mubr.bf16.mxu0 0
      %3526 = vmatmul.mubr.bf16.gmra.mrb[0].mxu0 %v3341
      %v3527 = vpop.f32.mrb[0].mxu0
      %v3528 = vadd.f32 0.0, %v3527
      %v3529 = vpop.f32.mrb[0].mxu0
      %v3530 = vpop.f32.mrb[0].mxu0
      %v3531 = vadd.f32 0.0, %v3530
      %v3532 = vpop.f32.mrb[0].mxu0
      %3533 = vmatprep.mubr.bf16.mxu0 0
      %3534 = vmatmul.mubr.bf16.gmra.mrb[0].mxu0 %v3344
      %v3535 = vpop.f32.mrb[0].mxu0
      %v3536 = vadd.f32 0.0, %v3535
      %v3537 = vpop.f32.mrb[0].mxu0
      %v3538 = vpop.f32.mrb[0].mxu0
      %v3539 = vadd.f32 0.0, %v3538
      %v3540 = vpop.f32.mrb[0].mxu0
      %3541 = vdwg.mxu0
      %v3542 = vadd.f32 %v3097, %v3384
      %v3543 = vadd.f32 %v3098, %v3387
      %v3544 = vadd.f32 %v3099, %v3392
      %v3545 = vadd.f32 %v3100, %v3395
      %v3546 = vadd.f32 %v3101, %v3400
      %v3547 = vadd.f32 %v3102, %v3403
      %v3548 = vadd.f32 %v3103, %v3408
      %v3549 = vadd.f32 %v3104, %v3411
      %v3550 = vadd.f32 %v3105, %v3416
      %v3551 = vadd.f32 %v3106, %v3419
      %v3552 = vadd.f32 %v3107, %v3424
      %v3553 = vadd.f32 %v3108, %v3427
      %v3554 = vadd.f32 %v3109, %v3432
      %v3555 = vadd.f32 %v3110, %v3435
      %v3556 = vadd.f32 %v3111, %v3440
      %v3557 = vadd.f32 %v3112, %v3443
      %v3558 = vadd.f32 %v3113, %v3448
      %v3559 = vadd.f32 %v3114, %v3451
      %v3560 = vadd.f32 %v3115, %v3456
      %v3561 = vadd.f32 %v3116, %v3459
      %v3562 = vadd.f32 %v3117, %v3464
      %v3563 = vadd.f32 %v3118, %v3467
      %v3564 = vadd.f32 %v3119, %v3472
      %v3565 = vadd.f32 %v3120, %v3475
      %v3566 = vadd.f32 %v3121, %v3480
      %v3567 = vadd.f32 %v3122, %v3483
      %v3568 = vadd.f32 %v3123, %v3488
      %v3569 = vadd.f32 %v3124, %v3491
      %v3570 = vadd.f32 %v3125, %v3496
      %v3571 = vadd.f32 %v3126, %v3499
      %v3572 = vadd.f32 %v3127, %v3504
      %v3573 = vadd.f32 %v3128, %v3507
      %v3574 = vadd.f32 %v3129, %v3512
      %v3575 = vadd.f32 %v3130, %v3515
      %v3576 = vadd.f32 %v3131, %v3520
      %v3577 = vadd.f32 %v3132, %v3523
      %v3578 = vadd.f32 %v3133, %v3528
      %v3579 = vadd.f32 %v3134, %v3531
      %v3580 = vadd.f32 %v3135, %v3536
      %v3581 = vadd.f32 %v3136, %v3539
      %s3582 = scalar_lea.vmem %s2, 16
      %v3583 = vld [vmem:[%s3582] sm:$0x3]
      %v3584 = vrot.slane %v2821, 1
      %v3585 = vrot.slane %v2822, 1
      %v3586 = vsel %vm1129, %v3584, %v3585
      %v3587 = vrot.slane %v2823, 1
      %v3588 = vsel %vm1129, %v3585, %v3587
      %v3589 = vrot.slane %v2824, 1
      %v3590 = vsel %vm1129, %v3587, %v3589
      %v3591 = vrot.slane %v2825, 1
      %v3592 = vsel %vm1129, %v3589, %v3591
      %v3593 = vrot.slane %v2826, 1
      %v3594 = vsel %vm1129, %v3591, %v3593
      %v3595 = vrot.slane %v2827, 1
      %v3596 = vsel %vm1129, %v3593, %v3595
      %v3597 = vrot.slane %v2828, 1
      %v3598 = vsel %vm1129, %v3595, %v3597
      %v3599 = vrot.slane %v2829, 1
      %v3600 = vsel %vm1129, %v3597, %v3599
      %v3601 = vrot.slane %v2830, 1
      %v3602 = vsel %vm1129, %v3599, %v3601
      %v3603 = vrot.slane %v2831, 1
      %v3604 = vsel %vm1129, %v3601, %v3603
      %v3605 = vrot.slane %v2832, 1
      %v3606 = vsel %vm1129, %v3603, %v3605
      %v3607 = vrot.slane %v2833, 1
      %v3608 = vsel %vm1129, %v3605, %v3607
      %v3609 = vrot.slane %v2834, 1
      %v3610 = vsel %vm1129, %v3607, %v3609
      %v3611 = vrot.slane %v2835, 1
      %v3612 = vsel %vm1129, %v3609, %v3611
      %v3613 = vrot.slane %v2836, 1
      %v3614 = vsel %vm1129, %v3611, %v3613
      %v3615 = vrot.slane %v2837, 1
      %v3616 = vsel %vm1129, %v3613, %v3615
      %v3617 = vrot.slane %v2838, 1
      %v3618 = vsel %vm1129, %v3615, %v3617
      %v3619 = vrot.slane %v2839, 1
      %v3620 = vsel %vm1129, %v3617, %v3619
      %v3621 = vrot.slane %v2840, 1
      %v3622 = vsel %vm1129, %v3619, %v3621
      %v3623 = vrot.slane %v3141, 1
      %v3624 = vsel %vm1129, %v3621, %v3623
      %v3626 = vsel %vm633, %v3586, 0
      %v3629 = vsel %vm633, %v3588, 0
      %v3632 = vsel %vm633, %v3590, 0
      %v3635 = vsel %vm633, %v3592, 0
      %v3638 = vsel %vm633, %v3594, 0
      %v3641 = vsel %vm633, %v3596, 0
      %v3644 = vsel %vm633, %v3598, 0
      %v3647 = vsel %vm633, %v3600, 0
      %v3650 = vsel %vm633, %v3602, 0
      %v3653 = vsel %vm633, %v3604, 0
      %v3656 = vsel %vm633, %v3606, 0
      %v3659 = vsel %vm633, %v3608, 0
      %v3662 = vsel %vm633, %v3610, 0
      %v3665 = vsel %vm633, %v3612, 0
      %v3668 = vsel %vm633, %v3614, 0
      %v3671 = vsel %vm633, %v3616, 0
      %v3674 = vsel %vm633, %v3618, 0
      %v3677 = vsel %vm633, %v3620, 0
      %v3680 = vsel %vm633, %v3622, 0
      %v3683 = vsel %vm633, %v3624, 0
      %v3686 = vsel %vm694, %v3583, 0
      %3688 = vmatprep.subr.bf16.mxu0 0
      %3689 = vmatpush1.bf16.msra.mxu0 %v3686
      %3690 = vmatprep.subr.bf16.mxu0 0
      %3691 = vmatpush1.bf16.msra.mxu0 0
      %3692 = vmatprep.subr.bf16.mxu0 0
      %3693 = vmatpush1.bf16.msra.mxu0 0
      %3694 = vmatprep.subr.bf16.mxu0 0
      %3695 = vmatpush1.bf16.msra.mxu0 0
      %3696 = vmatprep.subr.bf16.mxu0 0
      %3697 = vmatpush1.bf16.msra.mxu0 0
      %3698 = vmatprep.subr.bf16.mxu0 0
      %3699 = vmatpush1.bf16.msra.mxu0 0
      %3700 = vmatprep.subr.bf16.mxu0 0
      %3701 = vmatpush1.bf16.msra.mxu0 0
      %3702 = vmatprep.subr.bf16.mxu0 0
      %3703 = vmatpush1.bf16.msra.mxu0 0
      %3704 = vmatprep.subr.bf16.mxu0 0
      %3705 = vmatpush1.bf16.msra.mxu0 0
      %3706 = vmatprep.subr.bf16.mxu0 0
      %3707 = vmatpush1.bf16.msra.mxu0 0
      %3708 = vmatprep.subr.bf16.mxu0 0
      %3709 = vmatpush1.bf16.msra.mxu0 0
      %3710 = vmatprep.subr.bf16.mxu0 0
      %3711 = vmatpush1.bf16.msra.mxu0 0
      %3712 = vmatprep.subr.bf16.mxu0 0
      %3713 = vmatpush1.bf16.msra.mxu0 0
      %3714 = vmatprep.subr.bf16.mxu0 0
      %3715 = vmatpush1.bf16.msra.mxu0 0
      %3716 = vmatprep.subr.bf16.mxu0 0
      %3717 = vmatpush1.bf16.msra.mxu0 0
      %3718 = vmatprep.subr.bf16.mxu0 0
      %3719 = vmatpush1.bf16.msra.mxu0 0
      %3720 = vmatprep.mubr.bf16.mxu0 0
      %3721 = vmatmul.mubr.bf16.gmra.mrb[0].mxu0 %v3626
      %v3722 = vpop.f32.mrb[0].mxu0
      %v3723 = vadd.f32 0.0, %v3722
      %v3724 = vpop.f32.mrb[0].mxu0
      %v3725 = vpop.f32.mrb[0].mxu0
      %v3726 = vadd.f32 0.0, %v3725
      %v3727 = vpop.f32.mrb[0].mxu0
      %3728 = vmatprep.mubr.bf16.mxu0 0
      %3729 = vmatmul.mubr.bf16.gmra.mrb[0].mxu0 %v3629
      %v3730 = vpop.f32.mrb[0].mxu0
      %v3731 = vadd.f32 0.0, %v3730
      %v3732 = vpop.f32.mrb[0].mxu0
      %v3733 = vpop.f32.mrb[0].mxu0
      %v3734 = vadd.f32 0.0, %v3733
      %v3735 = vpop.f32.mrb[0].mxu0
      %3736 = vmatprep.mubr.bf16.mxu0 0
      %3737 = vmatmul.mubr.bf16.gmra.mrb[0].mxu0 %v3632
      %v3738 = vpop.f32.mrb[0].mxu0
      %v3739 = vadd.f32 0.0, %v3738
      %v3740 = vpop.f32.mrb[0].mxu0
      %v3741 = vpop.f32.mrb[0].mxu0
      %v3742 = vadd.f32 0.0, %v3741
      %v3743 = vpop.f32.mrb[0].mxu0
      %3744 = vmatprep.mubr.bf16.mxu0 0
      %3745 = vmatmul.mubr.bf16.gmra.mrb[0].mxu0 %v3635
      %v3746 = vpop.f32.mrb[0].mxu0
      %v3747 = vadd.f32 0.0, %v3746
      %v3748 = vpop.f32.mrb[0].mxu0
      %v3749 = vpop.f32.mrb[0].mxu0
      %v3750 = vadd.f32 0.0, %v3749
      %v3751 = vpop.f32.mrb[0].mxu0
      %3752 = vmatprep.mubr.bf16.mxu0 0
      %3753 = vmatmul.mubr.bf16.gmra.mrb[0].mxu0 %v3638
      %v3754 = vpop.f32.mrb[0].mxu0
      %v3755 = vadd.f32 0.0, %v3754
      %v3756 = vpop.f32.mrb[0].mxu0
      %v3757 = vpop.f32.mrb[0].mxu0
      %v3758 = vadd.f32 0.0, %v3757
      %v3759 = vpop.f32.mrb[0].mxu0
      %3760 = vmatprep.mubr.bf16.mxu0 0
      %3761 = vmatmul.mubr.bf16.gmra.mrb[0].mxu0 %v3641
      %v3762 = vpop.f32.mrb[0].mxu0
      %v3763 = vadd.f32 0.0, %v3762
      %v3764 = vpop.f32.mrb[0].mxu0
      %v3765 = vpop.f32.mrb[0].mxu0
      %v3766 = vadd.f32 0.0, %v3765
      %v3767 = vpop.f32.mrb[0].mxu0
      %3768 = vmatprep.mubr.bf16.mxu0 0
      %3769 = vmatmul.mubr.bf16.gmra.mrb[0].mxu0 %v3644
      %v3770 = vpop.f32.mrb[0].mxu0
      %v3771 = vadd.f32 0.0, %v3770
      %v3772 = vpop.f32.mrb[0].mxu0
      %v3773 = vpop.f32.mrb[0].mxu0
      %v3774 = vadd.f32 0.0, %v3773
      %v3775 = vpop.f32.mrb[0].mxu0
      %3776 = vmatprep.mubr.bf16.mxu0 0
      %3777 = vmatmul.mubr.bf16.gmra.mrb[0].mxu0 %v3647
      %v3778 = vpop.f32.mrb[0].mxu0
      %v3779 = vadd.f32 0.0, %v3778
      %v3780 = vpop.f32.mrb[0].mxu0
      %v3781 = vpop.f32.mrb[0].mxu0
      %v3782 = vadd.f32 0.0, %v3781
      %v3783 = vpop.f32.mrb[0].mxu0
      %3784 = vmatprep.mubr.bf16.mxu0 0
      %3785 = vmatmul.mubr.bf16.gmra.mrb[0].mxu0 %v3650
      %v3786 = vpop.f32.mrb[0].mxu0
      %v3787 = vadd.f32 0.0, %v3786
      %v3788 = vpop.f32.mrb[0].mxu0
      %v3789 = vpop.f32.mrb[0].mxu0
      %v3790 = vadd.f32 0.0, %v3789
      %v3791 = vpop.f32.mrb[0].mxu0
      %3792 = vmatprep.mubr.bf16.mxu0 0
      %3793 = vmatmul.mubr.bf16.gmra.mrb[0].mxu0 %v3653
      %v3794 = vpop.f32.mrb[0].mxu0
      %v3795 = vadd.f32 0.0, %v3794
      %v3796 = vpop.f32.mrb[0].mxu0
      %v3797 = vpop.f32.mrb[0].mxu0
      %v3798 = vadd.f32 0.0, %v3797
      %v3799 = vpop.f32.mrb[0].mxu0
      %3800 = vmatprep.mubr.bf16.mxu0 0
      %3801 = vmatmul.mubr.bf16.gmra.mrb[0].mxu0 %v3656
      %v3802 = vpop.f32.mrb[0].mxu0
      %v3803 = vadd.f32 0.0, %v3802
      %v3804 = vpop.f32.mrb[0].mxu0
      %v3805 = vpop.f32.mrb[0].mxu0
      %v3806 = vadd.f32 0.0, %v3805
      %v3807 = vpop.f32.mrb[0].mxu0
      %3808 = vmatprep.mubr.bf16.mxu0 0
      %3809 = vmatmul.mubr.bf16.gmra.mrb[0].mxu0 %v3659
      %v3810 = vpop.f32.mrb[0].mxu0
      %v3811 = vadd.f32 0.0, %v3810
      %v3812 = vpop.f32.mrb[0].mxu0
      %v3813 = vpop.f32.mrb[0].mxu0
      %v3814 = vadd.f32 0.0, %v3813
      %v3815 = vpop.f32.mrb[0].mxu0
      %3816 = vmatprep.mubr.bf16.mxu0 0
      %3817 = vmatmul.mubr.bf16.gmra.mrb[0].mxu0 %v3662
      %v3818 = vpop.f32.mrb[0].mxu0
      %v3819 = vadd.f32 0.0, %v3818
      %v3820 = vpop.f32.mrb[0].mxu0
      %v3821 = vpop.f32.mrb[0].mxu0
      %v3822 = vadd.f32 0.0, %v3821
      %v3823 = vpop.f32.mrb[0].mxu0
      %3824 = vmatprep.mubr.bf16.mxu0 0
      %3825 = vmatmul.mubr.bf16.gmra.mrb[0].mxu0 %v3665
      %v3826 = vpop.f32.mrb[0].mxu0
      %v3827 = vadd.f32 0.0, %v3826
      %v3828 = vpop.f32.mrb[0].mxu0
      %v3829 = vpop.f32.mrb[0].mxu0
      %v3830 = vadd.f32 0.0, %v3829
      %v3831 = vpop.f32.mrb[0].mxu0
      %3832 = vmatprep.mubr.bf16.mxu0 0
      %3833 = vmatmul.mubr.bf16.gmra.mrb[0].mxu0 %v3668
      %v3834 = vpop.f32.mrb[0].mxu0
      %v3835 = vadd.f32 0.0, %v3834
      %v3836 = vpop.f32.mrb[0].mxu0
      %v3837 = vpop.f32.mrb[0].mxu0
      %v3838 = vadd.f32 0.0, %v3837
      %v3839 = vpop.f32.mrb[0].mxu0
      %3840 = vmatprep.mubr.bf16.mxu0 0
      %3841 = vmatmul.mubr.bf16.gmra.mrb[0].mxu0 %v3671
      %v3842 = vpop.f32.mrb[0].mxu0
      %v3843 = vadd.f32 0.0, %v3842
      %v3844 = vpop.f32.mrb[0].mxu0
      %v3845 = vpop.f32.mrb[0].mxu0
      %v3846 = vadd.f32 0.0, %v3845
      %v3847 = vpop.f32.mrb[0].mxu0
      %3848 = vmatprep.mubr.bf16.mxu0 0
      %3849 = vmatmul.mubr.bf16.gmra.mrb[0].mxu0 %v3674
      %v3850 = vpop.f32.mrb[0].mxu0
      %v3851 = vadd.f32 0.0, %v3850
      %v3852 = vpop.f32.mrb[0].mxu0
      %v3853 = vpop.f32.mrb[0].mxu0
      %v3854 = vadd.f32 0.0, %v3853
      %v3855 = vpop.f32.mrb[0].mxu0
      %3856 = vmatprep.mubr.bf16.mxu0 0
      %3857 = vmatmul.mubr.bf16.gmra.mrb[0].mxu0 %v3677
      %v3858 = vpop.f32.mrb[0].mxu0
      %v3859 = vadd.f32 0.0, %v3858
      %v3860 = vpop.f32.mrb[0].mxu0
      %v3861 = vpop.f32.mrb[0].mxu0
      %v3862 = vadd.f32 0.0, %v3861
      %v3863 = vpop.f32.mrb[0].mxu0
      %3864 = vmatprep.mubr.bf16.mxu0 0
      %3865 = vmatmul.mubr.bf16.gmra.mrb[0].mxu0 %v3680
      %v3866 = vpop.f32.mrb[0].mxu0
      %v3867 = vadd.f32 0.0, %v3866
      %v3868 = vpop.f32.mrb[0].mxu0
      %v3869 = vpop.f32.mrb[0].mxu0
      %v3870 = vadd.f32 0.0, %v3869
      %v3871 = vpop.f32.mrb[0].mxu0
      %3872 = vmatprep.mubr.bf16.mxu0 0
      %3873 = vmatmul.mubr.bf16.gmra.mrb[0].mxu0 %v3683
      %v3874 = vpop.f32.mrb[0].mxu0
      %v3875 = vadd.f32 0.0, %v3874
      %v3876 = vpop.f32.mrb[0].mxu0
      %v3877 = vpop.f32.mrb[0].mxu0
      %v3878 = vadd.f32 0.0, %v3877
      %v3879 = vpop.f32.mrb[0].mxu0
      %3880 = vdwg.mxu0
      %v3881 = vadd.f32 %v3542, %v3723
      %v3882 = vadd.f32 %v3543, %v3726
      %v3883 = vadd.f32 %v3544, %v3731
      %v3884 = vadd.f32 %v3545, %v3734
      %v3885 = vadd.f32 %v3546, %v3739
      %v3886 = vadd.f32 %v3547, %v3742
      %v3887 = vadd.f32 %v3548, %v3747
      %v3888 = vadd.f32 %v3549, %v3750
      %v3889 = vadd.f32 %v3550, %v3755
      %v3890 = vadd.f32 %v3551, %v3758
      %v3891 = vadd.f32 %v3552, %v3763
      %v3892 = vadd.f32 %v3553, %v3766
      %v3893 = vadd.f32 %v3554, %v3771
      %v3894 = vadd.f32 %v3555, %v3774
      %v3895 = vadd.f32 %v3556, %v3779
      %v3896 = vadd.f32 %v3557, %v3782
      %v3897 = vadd.f32 %v3558, %v3787
      %v3898 = vadd.f32 %v3559, %v3790
      %v3899 = vadd.f32 %v3560, %v3795
      %v3900 = vadd.f32 %v3561, %v3798
      %v3901 = vadd.f32 %v3562, %v3803
      %v3902 = vadd.f32 %v3563, %v3806
      %v3903 = vadd.f32 %v3564, %v3811
      %v3904 = vadd.f32 %v3565, %v3814
      %v3905 = vadd.f32 %v3566, %v3819
      %v3906 = vadd.f32 %v3567, %v3822
      %v3907 = vadd.f32 %v3568, %v3827
      %v3908 = vadd.f32 %v3569, %v3830
      %v3909 = vadd.f32 %v3570, %v3835
      %v3910 = vadd.f32 %v3571, %v3838
      %v3911 = vadd.f32 %v3572, %v3843
      %v3912 = vadd.f32 %v3573, %v3846
      %v3913 = vadd.f32 %v3574, %v3851
      %v3914 = vadd.f32 %v3575, %v3854
      %v3915 = vadd.f32 %v3576, %v3859
      %v3916 = vadd.f32 %v3577, %v3862
      %v3917 = vadd.f32 %v3578, %v3867
      %v3918 = vadd.f32 %v3579, %v3870
      %v3919 = vadd.f32 %v3580, %v3875
      %v3920 = vadd.f32 %v3581, %v3878
      %v3921 = vld [vmem:[%s3] sm:$0x1]
      %v3923 = vlaneseq
      %v3924 = vshrl.u32 %v3923, 7
      %v3925 = vsub.s32 0, %v3924
      %v3926 = vrot.slane %v3921, %v3925
      %v3928 = vadd.f32 %v3881, %v3926
      %v3929 = vadd.f32 %v3882, %v3926
      %v3930 = vadd.f32 %v3883, %v3926
      %v3931 = vadd.f32 %v3884, %v3926
      %v3932 = vadd.f32 %v3885, %v3926
      %v3933 = vadd.f32 %v3886, %v3926
      %v3934 = vadd.f32 %v3887, %v3926
      %v3935 = vadd.f32 %v3888, %v3926
      %v3936 = vadd.f32 %v3889, %v3926
      %v3937 = vadd.f32 %v3890, %v3926
      %v3938 = vadd.f32 %v3891, %v3926
      %v3939 = vadd.f32 %v3892, %v3926
      %v3940 = vadd.f32 %v3893, %v3926
      %v3941 = vadd.f32 %v3894, %v3926
      %v3942 = vadd.f32 %v3895, %v3926
      %v3943 = vadd.f32 %v3896, %v3926
      %v3944 = vadd.f32 %v3897, %v3926
      %v3945 = vadd.f32 %v3898, %v3926
      %v3946 = vadd.f32 %v3899, %v3926
      %v3947 = vadd.f32 %v3900, %v3926
      %v3948 = vadd.f32 %v3901, %v3926
      %v3949 = vadd.f32 %v3902, %v3926
      %v3950 = vadd.f32 %v3903, %v3926
      %v3951 = vadd.f32 %v3904, %v3926
      %v3952 = vadd.f32 %v3905, %v3926
      %v3953 = vadd.f32 %v3906, %v3926
      %v3954 = vadd.f32 %v3907, %v3926
      %v3955 = vadd.f32 %v3908, %v3926
      %v3956 = vadd.f32 %v3909, %v3926
      %v3957 = vadd.f32 %v3910, %v3926
      %v3958 = vadd.f32 %v3911, %v3926
      %v3959 = vadd.f32 %v3912, %v3926
      %v3960 = vadd.f32 %v3913, %v3926
      %v3961 = vadd.f32 %v3914, %v3926
      %v3962 = vadd.f32 %v3915, %v3926
      %v3963 = vadd.f32 %v3916, %v3926
      %v3964 = vadd.f32 %v3917, %v3926
      %v3965 = vadd.f32 %v3918, %v3926
      %v3966 = vadd.f32 %v3919, %v3926
      %v3967 = vadd.f32 %v3920, %v3926
      %v3968 = vsub.f32 0.0, %v3928
      %v3969 = vsub.f32 0.0, %v3929
      %v3970 = vsub.f32 0.0, %v3930
      %v3971 = vsub.f32 0.0, %v3931
      %v3972 = vsub.f32 0.0, %v3932
      %v3973 = vsub.f32 0.0, %v3933
      %v3974 = vsub.f32 0.0, %v3934
      %v3975 = vsub.f32 0.0, %v3935
      %v3976 = vsub.f32 0.0, %v3936
      %v3977 = vsub.f32 0.0, %v3937
      %v3978 = vsub.f32 0.0, %v3938
      %v3979 = vsub.f32 0.0, %v3939
      %v3980 = vsub.f32 0.0, %v3940
      %v3981 = vsub.f32 0.0, %v3941
      %v3982 = vsub.f32 0.0, %v3942
      %v3983 = vsub.f32 0.0, %v3943
      %v3984 = vsub.f32 0.0, %v3944
      %v3985 = vsub.f32 0.0, %v3945
      %v3986 = vsub.f32 0.0, %v3946
      %v3987 = vsub.f32 0.0, %v3947
      %v3988 = vsub.f32 0.0, %v3948
      %v3989 = vsub.f32 0.0, %v3949
      %v3990 = vsub.f32 0.0, %v3950
      %v3991 = vsub.f32 0.0, %v3951
      %v3992 = vsub.f32 0.0, %v3952
      %v3993 = vsub.f32 0.0, %v3953
      %v3994 = vsub.f32 0.0, %v3954
      %v3995 = vsub.f32 0.0, %v3955
      %v3996 = vsub.f32 0.0, %v3956
      %v3997 = vsub.f32 0.0, %v3957
      %v3998 = vsub.f32 0.0, %v3958
      %v3999 = vsub.f32 0.0, %v3959
      %v4000 = vsub.f32 0.0, %v3960
      %v4001 = vsub.f32 0.0, %v3961
      %v4002 = vsub.f32 0.0, %v3962
      %v4003 = vsub.f32 0.0, %v3963
      %v4004 = vsub.f32 0.0, %v3964
      %v4005 = vsub.f32 0.0, %v3965
      %v4006 = vsub.f32 0.0, %v3966
      %v4007 = vsub.f32 0.0, %v3967
      %v4008 = vmul.f32 %v3968, 1.442695
      %v4009 = vpow.pop %v4008
      %v4010 = vmul.f32 %v3969, 1.442695
      %v4011 = vpow.pop %v4010
      %v4012 = vmul.f32 %v3970, 1.442695
      %v4013 = vpow.pop %v4012
      %v4014 = vmul.f32 %v3971, 1.442695
      %v4015 = vpow.pop %v4014
      %v4016 = vmul.f32 %v3972, 1.442695
      %v4017 = vpow.pop %v4016
      %v4018 = vmul.f32 %v3973, 1.442695
      %v4019 = vpow.pop %v4018
      %v4020 = vmul.f32 %v3974, 1.442695
      %v4021 = vpow.pop %v4020
      %v4022 = vmul.f32 %v3975, 1.442695
      %v4023 = vpow.pop %v4022
      %v4024 = vmul.f32 %v3976, 1.442695
      %v4025 = vpow.pop %v4024
      %v4026 = vmul.f32 %v3977, 1.442695
      %v4027 = vpow.pop %v4026
      %v4028 = vmul.f32 %v3978, 1.442695
      %v4029 = vpow.pop %v4028
      %v4030 = vmul.f32 %v3979, 1.442695
      %v4031 = vpow.pop %v4030
      %v4032 = vmul.f32 %v3980, 1.442695
      %v4033 = vpow.pop %v4032
      %v4034 = vmul.f32 %v3981, 1.442695
      %v4035 = vpow.pop %v4034
      %v4036 = vmul.f32 %v3982, 1.442695
      %v4037 = vpow.pop %v4036
      %v4038 = vmul.f32 %v3983, 1.442695
      %v4039 = vpow.pop %v4038
      %v4040 = vmul.f32 %v3984, 1.442695
      %v4041 = vpow.pop %v4040
      %v4042 = vmul.f32 %v3985, 1.442695
      %v4043 = vpow.pop %v4042
      %v4044 = vmul.f32 %v3986, 1.442695
      %v4045 = vpow.pop %v4044
      %v4046 = vmul.f32 %v3987, 1.442695
      %v4047 = vpow.pop %v4046
      %v4048 = vmul.f32 %v3988, 1.442695
      %v4049 = vpow.pop %v4048
      %v4050 = vmul.f32 %v3989, 1.442695
      %v4051 = vpow.pop %v4050
      %v4052 = vmul.f32 %v3990, 1.442695
      %v4053 = vpow.pop %v4052
      %v4054 = vmul.f32 %v3991, 1.442695
      %v4055 = vpow.pop %v4054
      %v4056 = vmul.f32 %v3992, 1.442695
      %v4057 = vpow.pop %v4056
      %v4058 = vmul.f32 %v3993, 1.442695
      %v4059 = vpow.pop %v4058
      %v4060 = vmul.f32 %v3994, 1.442695
      %v4061 = vpow.pop %v4060
      %v4062 = vmul.f32 %v3995, 1.442695
      %v4063 = vpow.pop %v4062
      %v4064 = vmul.f32 %v3996, 1.442695
      %v4065 = vpow.pop %v4064
      %v4066 = vmul.f32 %v3997, 1.442695
      %v4067 = vpow.pop %v4066
      %v4068 = vmul.f32 %v3998, 1.442695
      %v4069 = vpow.pop %v4068
      %v4070 = vmul.f32 %v3999, 1.442695
      %v4071 = vpow.pop %v4070
      %v4072 = vmul.f32 %v4000, 1.442695
      %v4073 = vpow.pop %v4072
      %v4074 = vmul.f32 %v4001, 1.442695
      %v4075 = vpow.pop %v4074
      %v4076 = vmul.f32 %v4002, 1.442695
      %v4077 = vpow.pop %v4076
      %v4078 = vmul.f32 %v4003, 1.442695
      %v4079 = vpow.pop %v4078
      %v4080 = vmul.f32 %v4004, 1.442695
      %v4081 = vpow.pop %v4080
      %v4082 = vmul.f32 %v4005, 1.442695
      %v4083 = vpow.pop %v4082
      %v4084 = vmul.f32 %v4006, 1.442695
      %v4085 = vpow.pop %v4084
      %v4086 = vmul.f32 %v4007, 1.442695
      %v4087 = vpow.pop %v4086
      %v4088 = vadd.f32 %v4009, 1.0
      %v4089 = vadd.f32 %v4011, 1.0
      %v4090 = vadd.f32 %v4013, 1.0
      %v4091 = vadd.f32 %v4015, 1.0
      %v4092 = vadd.f32 %v4017, 1.0
      %v4093 = vadd.f32 %v4019, 1.0
      %v4094 = vadd.f32 %v4021, 1.0
      %v4095 = vadd.f32 %v4023, 1.0
      %v4096 = vadd.f32 %v4025, 1.0
      %v4097 = vadd.f32 %v4027, 1.0
      %v4098 = vadd.f32 %v4029, 1.0
      %v4099 = vadd.f32 %v4031, 1.0
      %v4100 = vadd.f32 %v4033, 1.0
      %v4101 = vadd.f32 %v4035, 1.0
      %v4102 = vadd.f32 %v4037, 1.0
      %v4103 = vadd.f32 %v4039, 1.0
      %v4104 = vadd.f32 %v4041, 1.0
      %v4105 = vadd.f32 %v4043, 1.0
      %v4106 = vadd.f32 %v4045, 1.0
      %v4107 = vadd.f32 %v4047, 1.0
      %v4108 = vadd.f32 %v4049, 1.0
      %v4109 = vadd.f32 %v4051, 1.0
      %v4110 = vadd.f32 %v4053, 1.0
      %v4111 = vadd.f32 %v4055, 1.0
      %v4112 = vadd.f32 %v4057, 1.0
      %v4113 = vadd.f32 %v4059, 1.0
      %v4114 = vadd.f32 %v4061, 1.0
      %v4115 = vadd.f32 %v4063, 1.0
      %v4116 = vadd.f32 %v4065, 1.0
      %v4117 = vadd.f32 %v4067, 1.0
      %v4118 = vadd.f32 %v4069, 1.0
      %v4119 = vadd.f32 %v4071, 1.0
      %v4120 = vadd.f32 %v4073, 1.0
      %v4121 = vadd.f32 %v4075, 1.0
      %v4122 = vadd.f32 %v4077, 1.0
      %v4123 = vadd.f32 %v4079, 1.0
      %v4124 = vadd.f32 %v4081, 1.0
      %v4125 = vadd.f32 %v4083, 1.0
      %v4126 = vadd.f32 %v4085, 1.0
      %v4127 = vadd.f32 %v4087, 1.0
      %v4128 = vrcp.pop %v4088
      %v4129 = vrcp.pop %v4089
      %v4130 = vrcp.pop %v4090
      %v4131 = vrcp.pop %v4091
      %v4132 = vrcp.pop %v4092
      %v4133 = vrcp.pop %v4093
      %v4134 = vrcp.pop %v4094
      %v4135 = vrcp.pop %v4095
      %v4136 = vrcp.pop %v4096
      %v4137 = vrcp.pop %v4097
      %v4138 = vrcp.pop %v4098
      %v4139 = vrcp.pop %v4099
      %v4140 = vrcp.pop %v4100
      %v4141 = vrcp.pop %v4101
      %v4142 = vrcp.pop %v4102
      %v4143 = vrcp.pop %v4103
      %v4144 = vrcp.pop %v4104
      %v4145 = vrcp.pop %v4105
      %v4146 = vrcp.pop %v4106
      %v4147 = vrcp.pop %v4107
      %v4148 = vrcp.pop %v4108
      %v4149 = vrcp.pop %v4109
      %v4150 = vrcp.pop %v4110
      %v4151 = vrcp.pop %v4111
      %v4152 = vrcp.pop %v4112
      %v4153 = vrcp.pop %v4113
      %v4154 = vrcp.pop %v4114
      %v4155 = vrcp.pop %v4115
      %v4156 = vrcp.pop %v4116
      %v4157 = vrcp.pop %v4117
      %v4158 = vrcp.pop %v4118
      %v4159 = vrcp.pop %v4119
      %v4160 = vrcp.pop %v4120
      %v4161 = vrcp.pop %v4121
      %v4162 = vrcp.pop %v4122
      %v4163 = vrcp.pop %v4123
      %v4164 = vrcp.pop %v4124
      %v4165 = vrcp.pop %v4125
      %v4166 = vrcp.pop %v4126
      %v4167 = vrcp.pop %v4127
      %v4168 = vmul.f32 %v3928, %v4128
      %v4169 = vmul.f32 %v3929, %v4129
      %v4170 = vmul.f32 %v3930, %v4130
      %v4171 = vmul.f32 %v3931, %v4131
      %v4172 = vmul.f32 %v3932, %v4132
      %v4173 = vmul.f32 %v3933, %v4133
      %v4174 = vmul.f32 %v3934, %v4134
      %v4175 = vmul.f32 %v3935, %v4135
      %v4176 = vmul.f32 %v3936, %v4136
      %v4177 = vmul.f32 %v3937, %v4137
      %v4178 = vmul.f32 %v3938, %v4138
      %v4179 = vmul.f32 %v3939, %v4139
      %v4180 = vmul.f32 %v3940, %v4140
      %v4181 = vmul.f32 %v3941, %v4141
      %v4182 = vmul.f32 %v3942, %v4142
      %v4183 = vmul.f32 %v3943, %v4143
      %v4184 = vmul.f32 %v3944, %v4144
      %v4185 = vmul.f32 %v3945, %v4145
      %v4186 = vmul.f32 %v3946, %v4146
      %v4187 = vmul.f32 %v3947, %v4147
      %v4188 = vmul.f32 %v3948, %v4148
      %v4189 = vmul.f32 %v3949, %v4149
      %v4190 = vmul.f32 %v3950, %v4150
      %v4191 = vmul.f32 %v3951, %v4151
      %v4192 = vmul.f32 %v3952, %v4152
      %v4193 = vmul.f32 %v3953, %v4153
      %v4194 = vmul.f32 %v3954, %v4154
      %v4195 = vmul.f32 %v3955, %v4155
      %v4196 = vmul.f32 %v3956, %v4156
      %v4197 = vmul.f32 %v3957, %v4157
      %v4198 = vmul.f32 %v3958, %v4158
      %v4199 = vmul.f32 %v3959, %v4159
      %v4200 = vmul.f32 %v3960, %v4160
      %v4201 = vmul.f32 %v3961, %v4161
      %v4202 = vmul.f32 %v3962, %v4162
      %v4203 = vmul.f32 %v3963, %v4163
      %v4204 = vmul.f32 %v3964, %v4164
      %v4205 = vmul.f32 %v3965, %v4165
      %v4206 = vmul.f32 %v3966, %v4166
      %v4207 = vmul.f32 %v3967, %v4167
      %v4208 = vlaneseq
      %v4209 = vshrl.u32 %v4208, 7
      %v4210 = vadd.s32 %v4209, 8
      %v4211 = vadd.s32 %v4209, 16
      %v4212 = vadd.s32 %v4209, 24
      %s4213 = ssub.s32 %s317, 1
      %v4214 = vstv %s4213
      %v4215 = vadd.s32 %v4214, 1
      %v4216 = vadd.s32 %v4214, 2
      %v4217 = vadd.s32 %v4214, 3
      %v4218 = vadd.s32 %v4214, 4
      %v4219 = vadd.s32 %v4214, 5
      %v4220 = vadd.s32 %v4214, 6
      %v4221 = vadd.s32 %v4214, 7
      %v4222 = vadd.s32 %v4214, 8
      %v4223 = vadd.s32 %v4214, 9
      %vm4224 = vcmp.ge.s32.totalorder %v4214, 0
      %vm4225 = vcmp.ge.s32.totalorder %v4215, 0
      %vm4226 = vcmp.ge.s32.totalorder %v4216, 0
      %vm4227 = vcmp.ge.s32.totalorder %v4217, 0
      %vm4228 = vcmp.ge.s32.totalorder %v4218, 0
      %vm4229 = vcmp.ge.s32.totalorder %v4219, 0
      %vm4230 = vcmp.ge.s32.totalorder %v4220, 0
      %vm4231 = vcmp.ge.s32.totalorder %v4221, 0
      %vm4232 = vcmp.ge.s32.totalorder %v4222, 0
      %vm4233 = vcmp.ge.s32.totalorder %v4223, 0
      %vm4234 = vcmp.lt.s32.totalorder %v4214, 16
      %vm4235 = vcmp.lt.s32.totalorder %v4215, 16
      %vm4236 = vcmp.lt.s32.totalorder %v4216, 16
      %vm4237 = vcmp.lt.s32.totalorder %v4217, 16
      %vm4238 = vcmp.lt.s32.totalorder %v4218, 16
      %vm4239 = vcmp.lt.s32.totalorder %v4219, 16
      %vm4240 = vcmp.lt.s32.totalorder %v4220, 16
      %vm4241 = vcmp.lt.s32.totalorder %v4221, 16
      %vm4242 = vcmp.lt.s32.totalorder %v4222, 16
      %vm4243 = vcmp.lt.s32.totalorder %v4223, 16
      %vm4244 = vmand %vm4224, %vm4234
      %vm4245 = vmand %vm4225, %vm4235
      %vm4246 = vmand %vm4226, %vm4236
      %vm4247 = vmand %vm4227, %vm4237
      %vm4248 = vmand %vm4228, %vm4238
      %vm4249 = vmand %vm4229, %vm4239
      %vm4250 = vmand %vm4230, %vm4240
      %vm4251 = vmand %vm4231, %vm4241
      %vm4252 = vmand %vm4232, %vm4242
      %vm4253 = vmand %vm4233, %vm4243
      %vm4254 = vcmp.ge.s32.totalorder %v4209, 1
      %vm4255 = vcmp.ge.s32.totalorder %v4210, 1
      %vm4256 = vcmp.ge.s32.totalorder %v4211, 1
      %vm4257 = vcmp.ge.s32.totalorder %v4212, 1
      %vm4258 = vcmp.lt.s32.totalorder %v4209, 17
      %vm4259 = vcmp.lt.s32.totalorder %v4210, 17
      %vm4260 = vcmp.lt.s32.totalorder %v4211, 17
      %vm4261 = vcmp.lt.s32.totalorder %v4212, 17
      %vm4262 = vmand %vm4254, %vm4258
      %vm4263 = vmand %vm4255, %vm4259
      %vm4264 = vmand %vm4256, %vm4260
      %vm4265 = vmand %vm4257, %vm4261
      %vm4266 = vmand %vm4244, %vm4262
      %vm4267 = vmand %vm4244, %vm4263
      %vm4268 = vmand %vm4244, %vm4264
      %vm4269 = vmand %vm4244, %vm4265
      %vm4270 = vmand %vm4245, %vm4262
      %vm4271 = vmand %vm4245, %vm4263
      %vm4272 = vmand %vm4245, %vm4264
      %vm4273 = vmand %vm4245, %vm4265
      %vm4274 = vmand %vm4246, %vm4262
      %vm4275 = vmand %vm4246, %vm4263
      %vm4276 = vmand %vm4246, %vm4264
      %vm4277 = vmand %vm4246, %vm4265
      %vm4278 = vmand %vm4247, %vm4262
      %vm4279 = vmand %vm4247, %vm4263
      %vm4280 = vmand %vm4247, %vm4264
      %vm4281 = vmand %vm4247, %vm4265
      %vm4282 = vmand %vm4248, %vm4262
      %vm4283 = vmand %vm4248, %vm4263
      %vm4284 = vmand %vm4248, %vm4264
      %vm4285 = vmand %vm4248, %vm4265
      %vm4286 = vmand %vm4249, %vm4262
      %vm4287 = vmand %vm4249, %vm4263
      %vm4288 = vmand %vm4249, %vm4264
      %vm4289 = vmand %vm4249, %vm4265
      %vm4290 = vmand %vm4250, %vm4262
      %vm4291 = vmand %vm4250, %vm4263
      %vm4292 = vmand %vm4250, %vm4264
      %vm4293 = vmand %vm4250, %vm4265
      %vm4294 = vmand %vm4251, %vm4262
      %vm4295 = vmand %vm4251, %vm4263
      %vm4296 = vmand %vm4251, %vm4264
      %vm4297 = vmand %vm4251, %vm4265
      %vm4298 = vmand %vm4252, %vm4262
      %vm4299 = vmand %vm4252, %vm4263
      %vm4300 = vmand %vm4252, %vm4264
      %vm4301 = vmand %vm4252, %vm4265
      %vm4302 = vmand %vm4253, %vm4262
      %vm4303 = vmand %vm4253, %vm4263
      %vm4304 = vmand %vm4253, %vm4264
      %vm4305 = vmand %vm4253, %vm4265
      %v4306 = vsel %vm4266, 1, 0
      %v4307 = vsel %vm4267, 1, 0
      %v4308 = vsel %vm4268, 1, 0
      %v4309 = vsel %vm4269, 1, 0
      %v4310 = vsel %vm4270, 1, 0
      %v4311 = vsel %vm4271, 1, 0
      %v4312 = vsel %vm4272, 1, 0
      %v4313 = vsel %vm4273, 1, 0
      %v4314 = vsel %vm4274, 1, 0
      %v4315 = vsel %vm4275, 1, 0
      %v4316 = vsel %vm4276, 1, 0
      %v4317 = vsel %vm4277, 1, 0
      %v4318 = vsel %vm4278, 1, 0
      %v4319 = vsel %vm4279, 1, 0
      %v4320 = vsel %vm4280, 1, 0
      %v4321 = vsel %vm4281, 1, 0
      %v4322 = vsel %vm4282, 1, 0
      %v4323 = vsel %vm4283, 1, 0
      %v4324 = vsel %vm4284, 1, 0
      %v4325 = vsel %vm4285, 1, 0
      %v4326 = vsel %vm4286, 1, 0
      %v4327 = vsel %vm4287, 1, 0
      %v4328 = vsel %vm4288, 1, 0
      %v4329 = vsel %vm4289, 1, 0
      %v4330 = vsel %vm4290, 1, 0
      %v4331 = vsel %vm4291, 1, 0
      %v4332 = vsel %vm4292, 1, 0
      %v4333 = vsel %vm4293, 1, 0
      %v4334 = vsel %vm4294, 1, 0
      %v4335 = vsel %vm4295, 1, 0
      %v4336 = vsel %vm4296, 1, 0
      %v4337 = vsel %vm4297, 1, 0
      %v4338 = vsel %vm4298, 1, 0
      %v4339 = vsel %vm4299, 1, 0
      %v4340 = vsel %vm4300, 1, 0
      %v4341 = vsel %vm4301, 1, 0
      %v4342 = vsel %vm4302, 1, 0
      %v4343 = vsel %vm4303, 1, 0
      %v4344 = vsel %vm4304, 1, 0
      %v4345 = vsel %vm4305, 1, 0
      %vm4346 = vcmp.eq.s32.totalorder %v4306, 1
      %vm4347 = vcmp.eq.s32.totalorder %v4307, 1
      %vm4348 = vcmp.eq.s32.totalorder %v4308, 1
      %vm4349 = vcmp.eq.s32.totalorder %v4309, 1
      %vm4350 = vcmp.eq.s32.totalorder %v4310, 1
      %vm4351 = vcmp.eq.s32.totalorder %v4311, 1
      %vm4352 = vcmp.eq.s32.totalorder %v4312, 1
      %vm4353 = vcmp.eq.s32.totalorder %v4313, 1
      %vm4354 = vcmp.eq.s32.totalorder %v4314, 1
      %vm4355 = vcmp.eq.s32.totalorder %v4315, 1
      %vm4356 = vcmp.eq.s32.totalorder %v4316, 1
      %vm4357 = vcmp.eq.s32.totalorder %v4317, 1
      %vm4358 = vcmp.eq.s32.totalorder %v4318, 1
      %vm4359 = vcmp.eq.s32.totalorder %v4319, 1
      %vm4360 = vcmp.eq.s32.totalorder %v4320, 1
      %vm4361 = vcmp.eq.s32.totalorder %v4321, 1
      %vm4362 = vcmp.eq.s32.totalorder %v4322, 1
      %vm4363 = vcmp.eq.s32.totalorder %v4323, 1
      %vm4364 = vcmp.eq.s32.totalorder %v4324, 1
      %vm4365 = vcmp.eq.s32.totalorder %v4325, 1
      %vm4366 = vcmp.eq.s32.totalorder %v4326, 1
      %vm4367 = vcmp.eq.s32.totalorder %v4327, 1
      %vm4368 = vcmp.eq.s32.totalorder %v4328, 1
      %vm4369 = vcmp.eq.s32.totalorder %v4329, 1
      %vm4370 = vcmp.eq.s32.totalorder %v4330, 1
      %vm4371 = vcmp.eq.s32.totalorder %v4331, 1
      %vm4372 = vcmp.eq.s32.totalorder %v4332, 1
      %vm4373 = vcmp.eq.s32.totalorder %v4333, 1
      %vm4374 = vcmp.eq.s32.totalorder %v4334, 1
      %vm4375 = vcmp.eq.s32.totalorder %v4335, 1
      %vm4376 = vcmp.eq.s32.totalorder %v4336, 1
      %vm4377 = vcmp.eq.s32.totalorder %v4337, 1
      %vm4378 = vcmp.eq.s32.totalorder %v4338, 1
      %vm4379 = vcmp.eq.s32.totalorder %v4339, 1
      %vm4380 = vcmp.eq.s32.totalorder %v4340, 1
      %vm4381 = vcmp.eq.s32.totalorder %v4341, 1
      %vm4382 = vcmp.eq.s32.totalorder %v4342, 1
      %vm4383 = vcmp.eq.s32.totalorder %v4343, 1
      %vm4384 = vcmp.eq.s32.totalorder %v4344, 1
      %vm4385 = vcmp.eq.s32.totalorder %v4345, 1
      %v4386 = vsel %vm4346, %v4168, 0.0
      %v4387 = vsel %vm4347, %v4169, 0.0
      %v4388 = vsel %vm4348, %v4170, 0.0
      %v4389 = vsel %vm4349, %v4171, 0.0
      %v4390 = vsel %vm4350, %v4172, 0.0
      %v4391 = vsel %vm4351, %v4173, 0.0
      %v4392 = vsel %vm4352, %v4174, 0.0
      %v4393 = vsel %vm4353, %v4175, 0.0
      %v4394 = vsel %vm4354, %v4176, 0.0
      %v4395 = vsel %vm4355, %v4177, 0.0
      %v4396 = vsel %vm4356, %v4178, 0.0
      %v4397 = vsel %vm4357, %v4179, 0.0
      %v4398 = vsel %vm4358, %v4180, 0.0
      %v4399 = vsel %vm4359, %v4181, 0.0
      %v4400 = vsel %vm4360, %v4182, 0.0
      %v4401 = vsel %vm4361, %v4183, 0.0
      %v4402 = vsel %vm4362, %v4184, 0.0
      %v4403 = vsel %vm4363, %v4185, 0.0
      %v4404 = vsel %vm4364, %v4186, 0.0
      %v4405 = vsel %vm4365, %v4187, 0.0
      %v4406 = vsel %vm4366, %v4188, 0.0
      %v4407 = vsel %vm4367, %v4189, 0.0
      %v4408 = vsel %vm4368, %v4190, 0.0
      %v4409 = vsel %vm4369, %v4191, 0.0
      %v4410 = vsel %vm4370, %v4192, 0.0
      %v4411 = vsel %vm4371, %v4193, 0.0
      %v4412 = vsel %vm4372, %v4194, 0.0
      %v4413 = vsel %vm4373, %v4195, 0.0
      %v4414 = vsel %vm4374, %v4196, 0.0
      %v4415 = vsel %vm4375, %v4197, 0.0
      %v4416 = vsel %vm4376, %v4198, 0.0
      %v4417 = vsel %vm4377, %v4199, 0.0
      %v4418 = vsel %vm4378, %v4200, 0.0
      %v4419 = vsel %vm4379, %v4201, 0.0
      %v4420 = vsel %vm4380, %v4202, 0.0
      %v4421 = vsel %vm4381, %v4203, 0.0
      %v4422 = vsel %vm4382, %v4204, 0.0
      %v4423 = vsel %vm4383, %v4205, 0.0
      %v4424 = vsel %vm4384, %v4206, 0.0
      %v4425 = vsel %vm4385, %v4207, 0.0
      %v4426 = vpack.c.bf16 %v4387, %v4386
      %v4427 = vpack.c.bf16 %v4389, %v4388
      %v4428 = vpack.c.bf16 %v4391, %v4390
      %v4429 = vpack.c.bf16 %v4393, %v4392
      %v4430 = vpack.c.bf16 %v4395, %v4394
      %v4431 = vpack.c.bf16 %v4397, %v4396
      %v4432 = vpack.c.bf16 %v4399, %v4398
      %v4433 = vpack.c.bf16 %v4401, %v4400
      %v4434 = vpack.c.bf16 %v4403, %v4402
      %v4435 = vpack.c.bf16 %v4405, %v4404
      %v4436 = vpack.c.bf16 %v4407, %v4406
      %v4437 = vpack.c.bf16 %v4409, %v4408
      %v4438 = vpack.c.bf16 %v4411, %v4410
      %v4439 = vpack.c.bf16 %v4413, %v4412
      %v4440 = vpack.c.bf16 %v4415, %v4414
      %v4441 = vpack.c.bf16 %v4417, %v4416
      %v4442 = vpack.c.bf16 %v4419, %v4418
      %v4443 = vpack.c.bf16 %v4421, %v4420
      %v4444 = vpack.c.bf16 %v4423, %v4422
      %v4445 = vpack.c.bf16 %v4425, %v4424
      %vm4446 = vcmask 15360
      %4447 = vst.msk [vmem:[#allocation2] sm:$0xff] %vm4446, %v4426
      %4448 = vst.msk [vmem:[#allocation2 + $0x8] sm:$0xff] %vm4446, %v4427
      %4449 = vst.msk [vmem:[#allocation2 + $0x10] sm:$0xff] %vm4446, %v4428
      %4450 = vst.msk [vmem:[#allocation2 + $0x18] sm:$0xff] %vm4446, %v4429
      %4451 = vst.msk [vmem:[#allocation2 + $0x20] sm:$0xff] %vm4446, %v4430
      %4452 = vst.msk [vmem:[#allocation2 + $0x28] sm:$0xff] %vm4446, %v4431
      %4453 = vst.msk [vmem:[#allocation2 + $0x30] sm:$0xff] %vm4446, %v4432
      %4454 = vst.msk [vmem:[#allocation2 + $0x38] sm:$0xff] %vm4446, %v4433
      %4455 = vst.msk [vmem:[#allocation2 + $0x40] sm:$0xff] %vm4446, %v4434
      %4456 = vst.msk [vmem:[#allocation2 + $0x48] sm:$0xff] %vm4446, %v4435
      %4457 = vst.msk [vmem:[#allocation2 + $0x50] sm:$0xff] %vm4446, %v4436
      %4458 = vst.msk [vmem:[#allocation2 + $0x58] sm:$0xff] %vm4446, %v4437
      %4459 = vst.msk [vmem:[#allocation2 + $0x60] sm:$0xff] %vm4446, %v4438
      %4460 = vst.msk [vmem:[#allocation2 + $0x68] sm:$0xff] %vm4446, %v4439
      %4461 = vst.msk [vmem:[#allocation2 + $0x70] sm:$0xff] %vm4446, %v4440
      %4462 = vst.msk [vmem:[#allocation2 + $0x78] sm:$0xff] %vm4446, %v4441
      %4463 = vst.msk [vmem:[#allocation2 + $0x80] sm:$0xff] %vm4446, %v4442
      %4464 = vst.msk [vmem:[#allocation2 + $0x88] sm:$0xff] %vm4446, %v4443
      %4465 = vst.msk [vmem:[#allocation2 + $0x90] sm:$0xff] %vm4446, %v4444
      %4466 = vst.msk [vmem:[#allocation2 + $0x98] sm:$0xff] %vm4446, %v4445
      %4467 = vst.msk [vmem:[#allocation2 + $0xa0] sm:$0xff] %vm4446, 0
      %v4468 = vld [vmem:[#allocation2] sm:$0xff]
      %v4469 = vld [vmem:[#allocation2 + $0x8] sm:$0xff]
      %v4470 = vld [vmem:[#allocation2 + $0x10] sm:$0xff]
      %v4471 = vld [vmem:[#allocation2 + $0x18] sm:$0xff]
      %v4472 = vld [vmem:[#allocation2 + $0x20] sm:$0xff]
      %v4473 = vld [vmem:[#allocation2 + $0x28] sm:$0xff]
      %v4474 = vld [vmem:[#allocation2 + $0x30] sm:$0xff]
      %v4475 = vld [vmem:[#allocation2 + $0x38] sm:$0xff]
      %v4476 = vld [vmem:[#allocation2 + $0x40] sm:$0xff]
      %v4477 = vld [vmem:[#allocation2 + $0x48] sm:$0xff]
      %v4478 = vld [vmem:[#allocation2 + $0x50] sm:$0xff]
      %v4479 = vld [vmem:[#allocation2 + $0x58] sm:$0xff]
      %v4480 = vld [vmem:[#allocation2 + $0x60] sm:$0xff]
      %v4481 = vld [vmem:[#allocation2 + $0x68] sm:$0xff]
      %v4482 = vld [vmem:[#allocation2 + $0x70] sm:$0xff]
      %v4483 = vld [vmem:[#allocation2 + $0x78] sm:$0xff]
      %v4484 = vld [vmem:[#allocation2 + $0x80] sm:$0xff]
      %v4485 = vld [vmem:[%s4] sm:$0x1]
      %s4486 = scalar_lea.vmem %s4, 1
      %v4487 = vld [vmem:[%s4486] sm:$0x1]
      %v4489 = vshrl.u32 %v4468, 16
      %v4491 = vshll.u32 %v4468, 16
      %v4493 = vrot.slane %v4491, 1
      %v4494 = vor.u32 %v4489, %v4493
      %v4496 = vshll.u32 %v4469, 16
      %v4498 = vrot.slane %v4496, 1
      %v4499 = vsel %vm468, %v4494, %v4498
      %v4500 = vshrl.u32 %v4469, 16
      %v4502 = vor.u32 %v4500, %v4498
      %v4504 = vshll.u32 %v4470, 16
      %v4506 = vrot.slane %v4504, 1
      %v4507 = vsel %vm468, %v4502, %v4506
      %v4508 = vshrl.u32 %v4470, 16
      %v4510 = vor.u32 %v4508, %v4506
      %v4512 = vshll.u32 %v4471, 16
      %v4514 = vrot.slane %v4512, 1
      %v4515 = vsel %vm468, %v4510, %v4514
      %v4516 = vshrl.u32 %v4471, 16
      %v4518 = vor.u32 %v4516, %v4514
      %v4520 = vshll.u32 %v4472, 16
      %v4522 = vrot.slane %v4520, 1
      %v4523 = vsel %vm468, %v4518, %v4522
      %v4524 = vshrl.u32 %v4472, 16
      %v4526 = vor.u32 %v4524, %v4522
      %v4528 = vshll.u32 %v4473, 16
      %v4530 = vrot.slane %v4528, 1
      %v4531 = vsel %vm468, %v4526, %v4530
      %v4532 = vshrl.u32 %v4473, 16
      %v4534 = vor.u32 %v4532, %v4530
      %v4536 = vshll.u32 %v4474, 16
      %v4538 = vrot.slane %v4536, 1
      %v4539 = vsel %vm468, %v4534, %v4538
      %v4540 = vshrl.u32 %v4474, 16
      %v4542 = vor.u32 %v4540, %v4538
      %v4544 = vshll.u32 %v4475, 16
      %v4546 = vrot.slane %v4544, 1
      %v4547 = vsel %vm468, %v4542, %v4546
      %v4548 = vshrl.u32 %v4475, 16
      %v4550 = vor.u32 %v4548, %v4546
      %v4552 = vshll.u32 %v4476, 16
      %v4554 = vrot.slane %v4552, 1
      %v4555 = vsel %vm468, %v4550, %v4554
      %v4556 = vshrl.u32 %v4476, 16
      %v4558 = vor.u32 %v4556, %v4554
      %v4560 = vshll.u32 %v4477, 16
      %v4562 = vrot.slane %v4560, 1
      %v4563 = vsel %vm468, %v4558, %v4562
      %v4564 = vshrl.u32 %v4477, 16
      %v4566 = vor.u32 %v4564, %v4562
      %v4568 = vshll.u32 %v4478, 16
      %v4570 = vrot.slane %v4568, 1
      %v4571 = vsel %vm468, %v4566, %v4570
      %v4572 = vshrl.u32 %v4478, 16
      %v4574 = vor.u32 %v4572, %v4570
      %v4576 = vshll.u32 %v4479, 16
      %v4578 = vrot.slane %v4576, 1
      %v4579 = vsel %vm468, %v4574, %v4578
      %v4580 = vshrl.u32 %v4479, 16
      %v4582 = vor.u32 %v4580, %v4578
      %v4584 = vshll.u32 %v4480, 16
      %v4586 = vrot.slane %v4584, 1
      %v4587 = vsel %vm468, %v4582, %v4586
      %v4588 = vshrl.u32 %v4480, 16
      %v4590 = vor.u32 %v4588, %v4586
      %v4592 = vshll.u32 %v4481, 16
      %v4594 = vrot.slane %v4592, 1
      %v4595 = vsel %vm468, %v4590, %v4594
      %v4596 = vshrl.u32 %v4481, 16
      %v4598 = vor.u32 %v4596, %v4594
      %v4600 = vshll.u32 %v4482, 16
      %v4602 = vrot.slane %v4600, 1
      %v4603 = vsel %vm468, %v4598, %v4602
      %v4604 = vshrl.u32 %v4482, 16
      %v4606 = vor.u32 %v4604, %v4602
      %v4608 = vshll.u32 %v4483, 16
      %v4610 = vrot.slane %v4608, 1
      %v4611 = vsel %vm468, %v4606, %v4610
      %v4612 = vshrl.u32 %v4483, 16
      %v4614 = vor.u32 %v4612, %v4610
      %v4616 = vshll.u32 %v4484, 16
      %v4618 = vrot.slane %v4616, 1
      %v4619 = vsel %vm468, %v4614, %v4618
      %v4621 = vsel %vm4446, %v4499, 0
      %v4624 = vsel %vm4446, %v4507, 0
      %v4627 = vsel %vm4446, %v4515, 0
      %v4630 = vsel %vm4446, %v4523, 0
      %v4633 = vsel %vm4446, %v4531, 0
      %v4636 = vsel %vm4446, %v4539, 0
      %v4639 = vsel %vm4446, %v4547, 0
      %v4642 = vsel %vm4446, %v4555, 0
      %v4645 = vsel %vm4446, %v4563, 0
      %v4648 = vsel %vm4446, %v4571, 0
      %v4651 = vsel %vm4446, %v4579, 0
      %v4654 = vsel %vm4446, %v4587, 0
      %v4657 = vsel %vm4446, %v4595, 0
      %v4660 = vsel %vm4446, %v4603, 0
      %v4663 = vsel %vm4446, %v4611, 0
      %v4666 = vsel %vm4446, %v4619, 0
      %vm4668 = vcmask 1040384
      %v4670 = vsel %vm4668, %v4487, 0
      %4672 = vmatprep.subr.bf16.mxu0 0
      %4673 = vmatpush1.bf16.msra.mxu0 %v4670
      %4674 = vmatprep.subr.bf16.mxu0 0
      %4675 = vmatpush1.bf16.msra.mxu0 0
      %4676 = vmatprep.subr.bf16.mxu0 0
      %4677 = vmatpush1.bf16.msra.mxu0 0
      %4678 = vmatprep.subr.bf16.mxu0 0
      %4679 = vmatpush1.bf16.msra.mxu0 0
      %4680 = vmatprep.subr.bf16.mxu0 0
      %4681 = vmatpush1.bf16.msra.mxu0 0
      %4682 = vmatprep.subr.bf16.mxu0 0
      %4683 = vmatpush1.bf16.msra.mxu0 0
      %4684 = vmatprep.subr.bf16.mxu0 0
      %4685 = vmatpush1.bf16.msra.mxu0 0
      %4686 = vmatprep.subr.bf16.mxu0 0
      %4687 = vmatpush1.bf16.msra.mxu0 0
      %4688 = vmatprep.subr.bf16.mxu0 0
      %4689 = vmatpush1.bf16.msra.mxu0 0
      %4690 = vmatprep.subr.bf16.mxu0 0
      %4691 = vmatpush1.bf16.msra.mxu0 0
      %4692 = vmatprep.subr.bf16.mxu0 0
      %4693 = vmatpush1.bf16.msra.mxu0 0
      %4694 = vmatprep.subr.bf16.mxu0 0
      %4695 = vmatpush1.bf16.msra.mxu0 0
      %4696 = vmatprep.subr.bf16.mxu0 0
      %4697 = vmatpush1.bf16.msra.mxu0 0
      %4698 = vmatprep.subr.bf16.mxu0 0
      %4699 = vmatpush1.bf16.msra.mxu0 0
      %4700 = vmatprep.subr.bf16.mxu0 0
      %4701 = vmatpush1.bf16.msra.mxu0 0
      %4702 = vmatprep.subr.bf16.mxu0 0
      %4703 = vmatpush1.bf16.msra.mxu0 0
      %4704 = vmatprep.mubr.bf16.mxu0 0
      %4705 = vmatmul.mubr.bf16.gmra.mrb[0].mxu0 %v4621
      %v4706 = vpop.f32.mrb[0].mxu0
      %v4707 = vadd.f32 0.0, %v4706
      %v4708 = vpop.f32.mrb[0].mxu0
      %v4709 = vpop.f32.mrb[0].mxu0
      %v4710 = vadd.f32 0.0, %v4709
      %v4711 = vpop.f32.mrb[0].mxu0
      %4712 = vmatprep.mubr.bf16.mxu0 0
      %4713 = vmatmul.mubr.bf16.gmra.mrb[0].mxu0 %v4624
      %v4714 = vpop.f32.mrb[0].mxu0
      %v4715 = vpop.f32.mrb[0].mxu0
      %v4716 = vpop.f32.mrb[0].mxu0
      %v4717 = vpop.f32.mrb[0].mxu0
      %4718 = vmatprep.mubr.bf16.mxu0 0
      %4719 = vmatmul.mubr.bf16.gmra.mrb[0].mxu0 %v4627
      %v4720 = vpop.f32.mrb[0].mxu0
      %v4721 = vadd.f32 0.0, %v4720
      %v4722 = vpop.f32.mrb[0].mxu0
      %v4723 = vpop.f32.mrb[0].mxu0
      %v4724 = vadd.f32 0.0, %v4723
      %v4725 = vpop.f32.mrb[0].mxu0
      %4726 = vmatprep.mubr.bf16.mxu0 0
      %4727 = vmatmul.mubr.bf16.gmra.mrb[0].mxu0 %v4630
      %v4728 = vpop.f32.mrb[0].mxu0
      %v4729 = vpop.f32.mrb[0].mxu0
      %v4730 = vpop.f32.mrb[0].mxu0
      %v4731 = vpop.f32.mrb[0].mxu0
      %4732 = vmatprep.mubr.bf16.mxu0 0
      %4733 = vmatmul.mubr.bf16.gmra.mrb[0].mxu0 %v4633
      %v4734 = vpop.f32.mrb[0].mxu0
      %v4735 = vadd.f32 0.0, %v4734
      %v4736 = vpop.f32.mrb[0].mxu0
      %v4737 = vpop.f32.mrb[0].mxu0
      %v4738 = vadd.f32 0.0, %v4737
      %v4739 = vpop.f32.mrb[0].mxu0
      %4740 = vmatprep.mubr.bf16.mxu0 0
      %4741 = vmatmul.mubr.bf16.gmra.mrb[0].mxu0 %v4636
      %v4742 = vpop.f32.mrb[0].mxu0
      %v4743 = vpop.f32.mrb[0].mxu0
      %v4744 = vpop.f32.mrb[0].mxu0
      %v4745 = vpop.f32.mrb[0].mxu0
      %4746 = vmatprep.mubr.bf16.mxu0 0
      %4747 = vmatmul.mubr.bf16.gmra.mrb[0].mxu0 %v4639
      %v4748 = vpop.f32.mrb[0].mxu0
      %v4749 = vadd.f32 0.0, %v4748
      %v4750 = vpop.f32.mrb[0].mxu0
      %v4751 = vpop.f32.mrb[0].mxu0
      %v4752 = vadd.f32 0.0, %v4751
      %v4753 = vpop.f32.mrb[0].mxu0
      %4754 = vmatprep.mubr.bf16.mxu0 0
      %4755 = vmatmul.mubr.bf16.gmra.mrb[0].mxu0 %v4642
      %v4756 = vpop.f32.mrb[0].mxu0
      %v4757 = vpop.f32.mrb[0].mxu0
      %v4758 = vpop.f32.mrb[0].mxu0
      %v4759 = vpop.f32.mrb[0].mxu0
      %4760 = vmatprep.mubr.bf16.mxu0 0
      %4761 = vmatmul.mubr.bf16.gmra.mrb[0].mxu0 %v4645
      %v4762 = vpop.f32.mrb[0].mxu0
      %v4763 = vadd.f32 0.0, %v4762
      %v4764 = vpop.f32.mrb[0].mxu0
      %v4765 = vpop.f32.mrb[0].mxu0
      %v4766 = vadd.f32 0.0, %v4765
      %v4767 = vpop.f32.mrb[0].mxu0
      %4768 = vmatprep.mubr.bf16.mxu0 0
      %4769 = vmatmul.mubr.bf16.gmra.mrb[0].mxu0 %v4648
      %v4770 = vpop.f32.mrb[0].mxu0
      %v4771 = vpop.f32.mrb[0].mxu0
      %v4772 = vpop.f32.mrb[0].mxu0
      %v4773 = vpop.f32.mrb[0].mxu0
      %4774 = vmatprep.mubr.bf16.mxu0 0
      %4775 = vmatmul.mubr.bf16.gmra.mrb[0].mxu0 %v4651
      %v4776 = vpop.f32.mrb[0].mxu0
      %v4777 = vadd.f32 0.0, %v4776
      %v4778 = vpop.f32.mrb[0].mxu0
      %v4779 = vpop.f32.mrb[0].mxu0
      %v4780 = vadd.f32 0.0, %v4779
      %v4781 = vpop.f32.mrb[0].mxu0
      %4782 = vmatprep.mubr.bf16.mxu0 0
      %4783 = vmatmul.mubr.bf16.gmra.mrb[0].mxu0 %v4654
      %v4784 = vpop.f32.mrb[0].mxu0
      %v4785 = vpop.f32.mrb[0].mxu0
      %v4786 = vpop.f32.mrb[0].mxu0
      %v4787 = vpop.f32.mrb[0].mxu0
      %4788 = vmatprep.mubr.bf16.mxu0 0
      %4789 = vmatmul.mubr.bf16.gmra.mrb[0].mxu0 %v4657
      %v4790 = vpop.f32.mrb[0].mxu0
      %v4791 = vadd.f32 0.0, %v4790
      %v4792 = vpop.f32.mrb[0].mxu0
      %v4793 = vpop.f32.mrb[0].mxu0
      %v4794 = vadd.f32 0.0, %v4793
      %v4795 = vpop.f32.mrb[0].mxu0
      %4796 = vmatprep.mubr.bf16.mxu0 0
      %4797 = vmatmul.mubr.bf16.gmra.mrb[0].mxu0 %v4660
      %v4798 = vpop.f32.mrb[0].mxu0
      %v4799 = vpop.f32.mrb[0].mxu0
      %v4800 = vpop.f32.mrb[0].mxu0
      %v4801 = vpop.f32.mrb[0].mxu0
      %4802 = vmatprep.mubr.bf16.mxu0 0
      %4803 = vmatmul.mubr.bf16.gmra.mrb[0].mxu0 %v4663
      %v4804 = vpop.f32.mrb[0].mxu0
      %v4805 = vadd.f32 0.0, %v4804
      %v4806 = vpop.f32.mrb[0].mxu0
      %v4807 = vpop.f32.mrb[0].mxu0
      %v4808 = vadd.f32 0.0, %v4807
      %v4809 = vpop.f32.mrb[0].mxu0
      %4810 = vmatprep.mubr.bf16.mxu0 0
      %4811 = vmatmul.mubr.bf16.gmra.mrb[0].mxu0 %v4666
      %v4812 = vpop.f32.mrb[0].mxu0
      %v4813 = vpop.f32.mrb[0].mxu0
      %v4814 = vpop.f32.mrb[0].mxu0
      %v4815 = vpop.f32.mrb[0].mxu0
      %4816 = vdwg.mxu0
      %v4817 = vsel %vm4446, %v4468, 0
      %v4819 = vsel %vm4446, %v4469, 0
      %v4821 = vsel %vm4446, %v4470, 0
      %v4823 = vsel %vm4446, %v4471, 0
      %v4825 = vsel %vm4446, %v4472, 0
      %v4827 = vsel %vm4446, %v4473, 0
      %v4829 = vsel %vm4446, %v4474, 0
      %v4831 = vsel %vm4446, %v4475, 0
      %v4833 = vsel %vm4446, %v4476, 0
      %v4835 = vsel %vm4446, %v4477, 0
      %v4837 = vsel %vm4446, %v4478, 0
      %v4839 = vsel %vm4446, %v4479, 0
      %v4841 = vsel %vm4446, %v4480, 0
      %v4843 = vsel %vm4446, %v4481, 0
      %v4845 = vsel %vm4446, %v4482, 0
      %v4847 = vsel %vm4446, %v4483, 0
      %v4850 = vsel %vm4668, %v4485, 0
      %4852 = vmatprep.subr.bf16.mxu0 0
      %4853 = vmatpush1.bf16.msra.mxu0 %v4850
      %4854 = vmatprep.subr.bf16.mxu0 0
      %4855 = vmatpush1.bf16.msra.mxu0 0
      %4856 = vmatprep.subr.bf16.mxu0 0
      %4857 = vmatpush1.bf16.msra.mxu0 0
      %4858 = vmatprep.subr.bf16.mxu0 0
      %4859 = vmatpush1.bf16.msra.mxu0 0
      %4860 = vmatprep.subr.bf16.mxu0 0
      %4861 = vmatpush1.bf16.msra.mxu0 0
      %4862 = vmatprep.subr.bf16.mxu0 0
      %4863 = vmatpush1.bf16.msra.mxu0 0
      %4864 = vmatprep.subr.bf16.mxu0 0
      %4865 = vmatpush1.bf16.msra.mxu0 0
      %4866 = vmatprep.subr.bf16.mxu0 0
      %4867 = vmatpush1.bf16.msra.mxu0 0
      %4868 = vmatprep.subr.bf16.mxu0 0
      %4869 = vmatpush1.bf16.msra.mxu0 0
      %4870 = vmatprep.subr.bf16.mxu0 0
      %4871 = vmatpush1.bf16.msra.mxu0 0
      %4872 = vmatprep.subr.bf16.mxu0 0
      %4873 = vmatpush1.bf16.msra.mxu0 0
      %4874 = vmatprep.subr.bf16.mxu0 0
      %4875 = vmatpush1.bf16.msra.mxu0 0
      %4876 = vmatprep.subr.bf16.mxu0 0
      %4877 = vmatpush1.bf16.msra.mxu0 0
      %4878 = vmatprep.subr.bf16.mxu0 0
      %4879 = vmatpush1.bf16.msra.mxu0 0
      %4880 = vmatprep.subr.bf16.mxu0 0
      %4881 = vmatpush1.bf16.msra.mxu0 0
      %4882 = vmatprep.subr.bf16.mxu0 0
      %4883 = vmatpush1.bf16.msra.mxu0 0
      %4884 = vmatprep.mubr.bf16.mxu0 0
      %4885 = vmatmul.mubr.bf16.gmra.mrb[0].mxu0 %v4817
      %v4886 = vpop.f32.mrb[0].mxu0
      %v4887 = vadd.f32 %v4707, %v4886
      %v4888 = vpop.f32.mrb[0].mxu0
      %v4889 = vpop.f32.mrb[0].mxu0
      %v4890 = vadd.f32 %v4710, %v4889
      %v4891 = vpop.f32.mrb[0].mxu0
      %4892 = vmatprep.mubr.bf16.mxu0 0
      %4893 = vmatmul.mubr.bf16.gmra.mrb[0].mxu0 %v4819
      %v4894 = vpop.f32.mrb[0].mxu0
      %v4895 = vpop.f32.mrb[0].mxu0
      %v4896 = vpop.f32.mrb[0].mxu0
      %v4897 = vpop.f32.mrb[0].mxu0
      %4898 = vmatprep.mubr.bf16.mxu0 0
      %4899 = vmatmul.mubr.bf16.gmra.mrb[0].mxu0 %v4821
      %v4900 = vpop.f32.mrb[0].mxu0
      %v4901 = vadd.f32 %v4721, %v4900
      %v4902 = vpop.f32.mrb[0].mxu0
      %v4903 = vpop.f32.mrb[0].mxu0
      %v4904 = vadd.f32 %v4724, %v4903
      %v4905 = vpop.f32.mrb[0].mxu0
      %4906 = vmatprep.mubr.bf16.mxu0 0
      %4907 = vmatmul.mubr.bf16.gmra.mrb[0].mxu0 %v4823
      %v4908 = vpop.f32.mrb[0].mxu0
      %v4909 = vpop.f32.mrb[0].mxu0
      %v4910 = vpop.f32.mrb[0].mxu0
      %v4911 = vpop.f32.mrb[0].mxu0
      %4912 = vmatprep.mubr.bf16.mxu0 0
      %4913 = vmatmul.mubr.bf16.gmra.mrb[0].mxu0 %v4825
      %v4914 = vpop.f32.mrb[0].mxu0
      %v4915 = vadd.f32 %v4735, %v4914
      %v4916 = vpop.f32.mrb[0].mxu0
      %v4917 = vpop.f32.mrb[0].mxu0
      %v4918 = vadd.f32 %v4738, %v4917
      %v4919 = vpop.f32.mrb[0].mxu0
      %4920 = vmatprep.mubr.bf16.mxu0 0
      %4921 = vmatmul.mubr.bf16.gmra.mrb[0].mxu0 %v4827
      %v4922 = vpop.f32.mrb[0].mxu0
      %v4923 = vpop.f32.mrb[0].mxu0
      %v4924 = vpop.f32.mrb[0].mxu0
      %v4925 = vpop.f32.mrb[0].mxu0
      %4926 = vmatprep.mubr.bf16.mxu0 0
      %4927 = vmatmul.mubr.bf16.gmra.mrb[0].mxu0 %v4829
      %v4928 = vpop.f32.mrb[0].mxu0
      %v4929 = vadd.f32 %v4749, %v4928
      %v4930 = vpop.f32.mrb[0].mxu0
      %v4931 = vpop.f32.mrb[0].mxu0
      %v4932 = vadd.f32 %v4752, %v4931
      %v4933 = vpop.f32.mrb[0].mxu0
      %4934 = vmatprep.mubr.bf16.mxu0 0
      %4935 = vmatmul.mubr.bf16.gmra.mrb[0].mxu0 %v4831
      %v4936 = vpop.f32.mrb[0].mxu0
      %v4937 = vpop.f32.mrb[0].mxu0
      %v4938 = vpop.f32.mrb[0].mxu0
      %v4939 = vpop.f32.mrb[0].mxu0
      %4940 = vmatprep.mubr.bf16.mxu0 0
      %4941 = vmatmul.mubr.bf16.gmra.mrb[0].mxu0 %v4833
      %v4942 = vpop.f32.mrb[0].mxu0
      %v4943 = vadd.f32 %v4763, %v4942
      %v4944 = vpop.f32.mrb[0].mxu0
      %v4945 = vpop.f32.mrb[0].mxu0
      %v4946 = vadd.f32 %v4766, %v4945
      %v4947 = vpop.f32.mrb[0].mxu0
      %4948 = vmatprep.mubr.bf16.mxu0 0
      %4949 = vmatmul.mubr.bf16.gmra.mrb[0].mxu0 %v4835
      %v4950 = vpop.f32.mrb[0].mxu0
      %v4951 = vpop.f32.mrb[0].mxu0
      %v4952 = vpop.f32.mrb[0].mxu0
      %v4953 = vpop.f32.mrb[0].mxu0
      %4954 = vmatprep.mubr.bf16.mxu0 0
      %4955 = vmatmul.mubr.bf16.gmra.mrb[0].mxu0 %v4837
      %v4956 = vpop.f32.mrb[0].mxu0
      %v4957 = vadd.f32 %v4777, %v4956
      %v4958 = vpop.f32.mrb[0].mxu0
      %v4959 = vpop.f32.mrb[0].mxu0
      %v4960 = vadd.f32 %v4780, %v4959
      %v4961 = vpop.f32.mrb[0].mxu0
      %4962 = vmatprep.mubr.bf16.mxu0 0
      %4963 = vmatmul.mubr.bf16.gmra.mrb[0].mxu0 %v4839
      %v4964 = vpop.f32.mrb[0].mxu0
      %v4965 = vpop.f32.mrb[0].mxu0
      %v4966 = vpop.f32.mrb[0].mxu0
      %v4967 = vpop.f32.mrb[0].mxu0
      %4968 = vmatprep.mubr.bf16.mxu0 0
      %4969 = vmatmul.mubr.bf16.gmra.mrb[0].mxu0 %v4841
      %v4970 = vpop.f32.mrb[0].mxu0
      %v4971 = vadd.f32 %v4791, %v4970
      %v4972 = vpop.f32.mrb[0].mxu0
      %v4973 = vpop.f32.mrb[0].mxu0
      %v4974 = vadd.f32 %v4794, %v4973
      %v4975 = vpop.f32.mrb[0].mxu0
      %4976 = vmatprep.mubr.bf16.mxu0 0
      %4977 = vmatmul.mubr.bf16.gmra.mrb[0].mxu0 %v4843
      %v4978 = vpop.f32.mrb[0].mxu0
      %v4979 = vpop.f32.mrb[0].mxu0
      %v4980 = vpop.f32.mrb[0].mxu0
      %v4981 = vpop.f32.mrb[0].mxu0
      %4982 = vmatprep.mubr.bf16.mxu0 0
      %4983 = vmatmul.mubr.bf16.gmra.mrb[0].mxu0 %v4845
      %v4984 = vpop.f32.mrb[0].mxu0
      %v4985 = vadd.f32 %v4805, %v4984
      %v4986 = vpop.f32.mrb[0].mxu0
      %v4987 = vpop.f32.mrb[0].mxu0
      %v4988 = vadd.f32 %v4808, %v4987
      %v4989 = vpop.f32.mrb[0].mxu0
      %4990 = vmatprep.mubr.bf16.mxu0 0
      %4991 = vmatmul.mubr.bf16.gmra.mrb[0].mxu0 %v4847
      %v4992 = vpop.f32.mrb[0].mxu0
      %v4993 = vpop.f32.mrb[0].mxu0
      %v4994 = vpop.f32.mrb[0].mxu0
      %v4995 = vpop.f32.mrb[0].mxu0
      %4996 = vdwg.mxu0
      %s4997 = scalar_lea.vmem %s4, 2
      %v4998 = vld [vmem:[%s4997] sm:$0x1]
      %v5016 = vrot.slane %v4468, 1
      %v5017 = vrot.slane %v4469, 1
      %v5018 = vsel %vm1129, %v5016, %v5017
      %v5019 = vrot.slane %v4470, 1
      %v5020 = vsel %vm1129, %v5017, %v5019
      %v5021 = vrot.slane %v4471, 1
      %v5022 = vsel %vm1129, %v5019, %v5021
      %v5023 = vrot.slane %v4472, 1
      %v5024 = vsel %vm1129, %v5021, %v5023
      %v5025 = vrot.slane %v4473, 1
      %v5026 = vsel %vm1129, %v5023, %v5025
      %v5027 = vrot.slane %v4474, 1
      %v5028 = vsel %vm1129, %v5025, %v5027
      %v5029 = vrot.slane %v4475, 1
      %v5030 = vsel %vm1129, %v5027, %v5029
      %v5031 = vrot.slane %v4476, 1
      %v5032 = vsel %vm1129, %v5029, %v5031
      %v5033 = vrot.slane %v4477, 1
      %v5034 = vsel %vm1129, %v5031, %v5033
      %v5035 = vrot.slane %v4478, 1
      %v5036 = vsel %vm1129, %v5033, %v5035
      %v5037 = vrot.slane %v4479, 1
      %v5038 = vsel %vm1129, %v5035, %v5037
      %v5039 = vrot.slane %v4480, 1
      %v5040 = vsel %vm1129, %v5037, %v5039
      %v5041 = vrot.slane %v4481, 1
      %v5042 = vsel %vm1129, %v5039, %v5041
      %v5043 = vrot.slane %v4482, 1
      %v5044 = vsel %vm1129, %v5041, %v5043
      %v5045 = vrot.slane %v4483, 1
      %v5046 = vsel %vm1129, %v5043, %v5045
      %v5047 = vrot.slane %v4484, 1
      %v5048 = vsel %vm1129, %v5045, %v5047
      %v5050 = vsel %vm4446, %v5018, 0
      %v5053 = vsel %vm4446, %v5020, 0
      %v5056 = vsel %vm4446, %v5022, 0
      %v5059 = vsel %vm4446, %v5024, 0
      %v5062 = vsel %vm4446, %v5026, 0
      %v5065 = vsel %vm4446, %v5028, 0
      %v5068 = vsel %vm4446, %v5030, 0
      %v5071 = vsel %vm4446, %v5032, 0
      %v5074 = vsel %vm4446, %v5034, 0
      %v5077 = vsel %vm4446, %v5036, 0
      %v5080 = vsel %vm4446, %v5038, 0
      %v5083 = vsel %vm4446, %v5040, 0
      %v5086 = vsel %vm4446, %v5042, 0
      %v5089 = vsel %vm4446, %v5044, 0
      %v5092 = vsel %vm4446, %v5046, 0
      %v5095 = vsel %vm4446, %v5048, 0
      %v5098 = vsel %vm4668, %v4998, 0
      %5100 = vmatprep.subr.bf16.mxu0 0
      %5101 = vmatpush1.bf16.msra.mxu0 %v5098
      %5102 = vmatprep.subr.bf16.mxu0 0
      %5103 = vmatpush1.bf16.msra.mxu0 0
      %5104 = vmatprep.subr.bf16.mxu0 0
      %5105 = vmatpush1.bf16.msra.mxu0 0
      %5106 = vmatprep.subr.bf16.mxu0 0
      %5107 = vmatpush1.bf16.msra.mxu0 0
      %5108 = vmatprep.subr.bf16.mxu0 0
      %5109 = vmatpush1.bf16.msra.mxu0 0
      %5110 = vmatprep.subr.bf16.mxu0 0
      %5111 = vmatpush1.bf16.msra.mxu0 0
      %5112 = vmatprep.subr.bf16.mxu0 0
      %5113 = vmatpush1.bf16.msra.mxu0 0
      %5114 = vmatprep.subr.bf16.mxu0 0
      %5115 = vmatpush1.bf16.msra.mxu0 0
      %5116 = vmatprep.subr.bf16.mxu0 0
      %5117 = vmatpush1.bf16.msra.mxu0 0
      %5118 = vmatprep.subr.bf16.mxu0 0
      %5119 = vmatpush1.bf16.msra.mxu0 0
      %5120 = vmatprep.subr.bf16.mxu0 0
      %5121 = vmatpush1.bf16.msra.mxu0 0
      %5122 = vmatprep.subr.bf16.mxu0 0
      %5123 = vmatpush1.bf16.msra.mxu0 0
      %5124 = vmatprep.subr.bf16.mxu0 0
      %5125 = vmatpush1.bf16.msra.mxu0 0
      %5126 = vmatprep.subr.bf16.mxu0 0
      %5127 = vmatpush1.bf16.msra.mxu0 0
      %5128 = vmatprep.subr.bf16.mxu0 0
      %5129 = vmatpush1.bf16.msra.mxu0 0
      %5130 = vmatprep.subr.bf16.mxu0 0
      %5131 = vmatpush1.bf16.msra.mxu0 0
      %5132 = vmatprep.mubr.bf16.mxu0 0
      %5133 = vmatmul.mubr.bf16.gmra.mrb[0].mxu0 %v5050
      %v5134 = vpop.f32.mrb[0].mxu0
      %v5135 = vadd.f32 0.0, %v5134
      %v5136 = vpop.f32.mrb[0].mxu0
      %v5137 = vpop.f32.mrb[0].mxu0
      %v5138 = vadd.f32 0.0, %v5137
      %v5139 = vpop.f32.mrb[0].mxu0
      %5140 = vmatprep.mubr.bf16.mxu0 0
      %5141 = vmatmul.mubr.bf16.gmra.mrb[0].mxu0 %v5053
      %v5142 = vpop.f32.mrb[0].mxu0
      %v5143 = vpop.f32.mrb[0].mxu0
      %v5144 = vpop.f32.mrb[0].mxu0
      %v5145 = vpop.f32.mrb[0].mxu0
      %5146 = vmatprep.mubr.bf16.mxu0 0
      %5147 = vmatmul.mubr.bf16.gmra.mrb[0].mxu0 %v5056
      %v5148 = vpop.f32.mrb[0].mxu0
      %v5149 = vadd.f32 0.0, %v5148
      %v5150 = vpop.f32.mrb[0].mxu0
      %v5151 = vpop.f32.mrb[0].mxu0
      %v5152 = vadd.f32 0.0, %v5151
      %v5153 = vpop.f32.mrb[0].mxu0
      %5154 = vmatprep.mubr.bf16.mxu0 0
      %5155 = vmatmul.mubr.bf16.gmra.mrb[0].mxu0 %v5059
      %v5156 = vpop.f32.mrb[0].mxu0
      %v5157 = vpop.f32.mrb[0].mxu0
      %v5158 = vpop.f32.mrb[0].mxu0
      %v5159 = vpop.f32.mrb[0].mxu0
      %5160 = vmatprep.mubr.bf16.mxu0 0
      %5161 = vmatmul.mubr.bf16.gmra.mrb[0].mxu0 %v5062
      %v5162 = vpop.f32.mrb[0].mxu0
      %v5163 = vadd.f32 0.0, %v5162
      %v5164 = vpop.f32.mrb[0].mxu0
      %v5165 = vpop.f32.mrb[0].mxu0
      %v5166 = vadd.f32 0.0, %v5165
      %v5167 = vpop.f32.mrb[0].mxu0
      %5168 = vmatprep.mubr.bf16.mxu0 0
      %5169 = vmatmul.mubr.bf16.gmra.mrb[0].mxu0 %v5065
      %v5170 = vpop.f32.mrb[0].mxu0
      %v5171 = vpop.f32.mrb[0].mxu0
      %v5172 = vpop.f32.mrb[0].mxu0
      %v5173 = vpop.f32.mrb[0].mxu0
      %5174 = vmatprep.mubr.bf16.mxu0 0
      %5175 = vmatmul.mubr.bf16.gmra.mrb[0].mxu0 %v5068
      %v5176 = vpop.f32.mrb[0].mxu0
      %v5177 = vadd.f32 0.0, %v5176
      %v5178 = vpop.f32.mrb[0].mxu0
      %v5179 = vpop.f32.mrb[0].mxu0
      %v5180 = vadd.f32 0.0, %v5179
      %v5181 = vpop.f32.mrb[0].mxu0
      %5182 = vmatprep.mubr.bf16.mxu0 0
      %5183 = vmatmul.mubr.bf16.gmra.mrb[0].mxu0 %v5071
      %v5184 = vpop.f32.mrb[0].mxu0
      %v5185 = vpop.f32.mrb[0].mxu0
      %v5186 = vpop.f32.mrb[0].mxu0
      %v5187 = vpop.f32.mrb[0].mxu0
      %5188 = vmatprep.mubr.bf16.mxu0 0
      %5189 = vmatmul.mubr.bf16.gmra.mrb[0].mxu0 %v5074
      %v5190 = vpop.f32.mrb[0].mxu0
      %v5191 = vadd.f32 0.0, %v5190
      %v5192 = vpop.f32.mrb[0].mxu0
      %v5193 = vpop.f32.mrb[0].mxu0
      %v5194 = vadd.f32 0.0, %v5193
      %v5195 = vpop.f32.mrb[0].mxu0
      %5196 = vmatprep.mubr.bf16.mxu0 0
      %5197 = vmatmul.mubr.bf16.gmra.mrb[0].mxu0 %v5077
      %v5198 = vpop.f32.mrb[0].mxu0
      %v5199 = vpop.f32.mrb[0].mxu0
      %v5200 = vpop.f32.mrb[0].mxu0
      %v5201 = vpop.f32.mrb[0].mxu0
      %5202 = vmatprep.mubr.bf16.mxu0 0
      %5203 = vmatmul.mubr.bf16.gmra.mrb[0].mxu0 %v5080
      %v5204 = vpop.f32.mrb[0].mxu0
      %v5205 = vadd.f32 0.0, %v5204
      %v5206 = vpop.f32.mrb[0].mxu0
      %v5207 = vpop.f32.mrb[0].mxu0
      %v5208 = vadd.f32 0.0, %v5207
      %v5209 = vpop.f32.mrb[0].mxu0
      %5210 = vmatprep.mubr.bf16.mxu0 0
      %5211 = vmatmul.mubr.bf16.gmra.mrb[0].mxu0 %v5083
      %v5212 = vpop.f32.mrb[0].mxu0
      %v5213 = vpop.f32.mrb[0].mxu0
      %v5214 = vpop.f32.mrb[0].mxu0
      %v5215 = vpop.f32.mrb[0].mxu0
      %5216 = vmatprep.mubr.bf16.mxu0 0
      %5217 = vmatmul.mubr.bf16.gmra.mrb[0].mxu0 %v5086
      %v5218 = vpop.f32.mrb[0].mxu0
      %v5219 = vadd.f32 0.0, %v5218
      %v5220 = vpop.f32.mrb[0].mxu0
      %v5221 = vpop.f32.mrb[0].mxu0
      %v5222 = vadd.f32 0.0, %v5221
      %v5223 = vpop.f32.mrb[0].mxu0
      %5224 = vmatprep.mubr.bf16.mxu0 0
      %5225 = vmatmul.mubr.bf16.gmra.mrb[0].mxu0 %v5089
      %v5226 = vpop.f32.mrb[0].mxu0
      %v5227 = vpop.f32.mrb[0].mxu0
      %v5228 = vpop.f32.mrb[0].mxu0
      %v5229 = vpop.f32.mrb[0].mxu0
      %5230 = vmatprep.mubr.bf16.mxu0 0
      %5231 = vmatmul.mubr.bf16.gmra.mrb[0].mxu0 %v5092
      %v5232 = vpop.f32.mrb[0].mxu0
      %v5233 = vadd.f32 0.0, %v5232
      %v5234 = vpop.f32.mrb[0].mxu0
      %v5235 = vpop.f32.mrb[0].mxu0
      %v5236 = vadd.f32 0.0, %v5235
      %v5237 = vpop.f32.mrb[0].mxu0
      %5238 = vmatprep.mubr.bf16.mxu0 0
      %5239 = vmatmul.mubr.bf16.gmra.mrb[0].mxu0 %v5095
      %v5240 = vpop.f32.mrb[0].mxu0
      %v5241 = vpop.f32.mrb[0].mxu0
      %v5242 = vpop.f32.mrb[0].mxu0
      %v5243 = vpop.f32.mrb[0].mxu0
      %5244 = vdwg.mxu0
      %v5245 = vadd.f32 %v4887, %v5135
      %v5246 = vadd.f32 %v4890, %v5138
      %v5247 = vadd.f32 %v4901, %v5149
      %v5248 = vadd.f32 %v4904, %v5152
      %v5249 = vadd.f32 %v4915, %v5163
      %v5250 = vadd.f32 %v4918, %v5166
      %v5251 = vadd.f32 %v4929, %v5177
      %v5252 = vadd.f32 %v4932, %v5180
      %v5253 = vadd.f32 %v4943, %v5191
      %v5254 = vadd.f32 %v4946, %v5194
      %v5255 = vadd.f32 %v4957, %v5205
      %v5256 = vadd.f32 %v4960, %v5208
      %v5257 = vadd.f32 %v4971, %v5219
      %v5258 = vadd.f32 %v4974, %v5222
      %v5259 = vadd.f32 %v4985, %v5233
      %v5260 = vadd.f32 %v4988, %v5236
      %v5261 = vld [vmem:[#allocation2 + $0x10] sm:$0xff]
      %v5262 = vld [vmem:[#allocation2 + $0x18] sm:$0xff]
      %v5263 = vld [vmem:[#allocation2 + $0x20] sm:$0xff]
      %v5264 = vld [vmem:[#allocation2 + $0x28] sm:$0xff]
      %v5265 = vld [vmem:[#allocation2 + $0x30] sm:$0xff]
      %v5266 = vld [vmem:[#allocation2 + $0x38] sm:$0xff]
      %v5267 = vld [vmem:[#allocation2 + $0x40] sm:$0xff]
      %v5268 = vld [vmem:[#allocation2 + $0x48] sm:$0xff]
      %v5269 = vld [vmem:[#allocation2 + $0x50] sm:$0xff]
      %v5270 = vld [vmem:[#allocation2 + $0x58] sm:$0xff]
      %v5271 = vld [vmem:[#allocation2 + $0x60] sm:$0xff]
      %v5272 = vld [vmem:[#allocation2 + $0x68] sm:$0xff]
      %v5273 = vld [vmem:[#allocation2 + $0x70] sm:$0xff]
      %v5274 = vld [vmem:[#allocation2 + $0x78] sm:$0xff]
      %v5275 = vld [vmem:[#allocation2 + $0x80] sm:$0xff]
      %v5276 = vld [vmem:[#allocation2 + $0x88] sm:$0xff]
      %v5277 = vld [vmem:[#allocation2 + $0x90] sm:$0xff]
      %s5278 = scalar_lea.vmem %s4, 3
      %v5279 = vld [vmem:[%s5278] sm:$0x1]
      %v5281 = vsel %vm4446, %v5261, 0
      %v5284 = vsel %vm4446, %v5262, 0
      %v5287 = vsel %vm4446, %v5263, 0
      %v5290 = vsel %vm4446, %v5264, 0
      %v5293 = vsel %vm4446, %v5265, 0
      %v5296 = vsel %vm4446, %v5266, 0
      %v5299 = vsel %vm4446, %v5267, 0
      %v5302 = vsel %vm4446, %v5268, 0
      %v5305 = vsel %vm4446, %v5269, 0
      %v5308 = vsel %vm4446, %v5270, 0
      %v5311 = vsel %vm4446, %v5271, 0
      %v5314 = vsel %vm4446, %v5272, 0
      %v5317 = vsel %vm4446, %v5273, 0
      %v5320 = vsel %vm4446, %v5274, 0
      %v5323 = vsel %vm4446, %v5275, 0
      %v5326 = vsel %vm4446, %v5276, 0
      %v5329 = vsel %vm4668, %v5279, 0
      %5331 = vmatprep.subr.bf16.mxu0 0
      %5332 = vmatpush1.bf16.msra.mxu0 %v5329
      %5333 = vmatprep.subr.bf16.mxu0 0
      %5334 = vmatpush1.bf16.msra.mxu0 0
      %5335 = vmatprep.subr.bf16.mxu0 0
      %5336 = vmatpush1.bf16.msra.mxu0 0
      %5337 = vmatprep.subr.bf16.mxu0 0
      %5338 = vmatpush1.bf16.msra.mxu0 0
      %5339 = vmatprep.subr.bf16.mxu0 0
      %5340 = vmatpush1.bf16.msra.mxu0 0
      %5341 = vmatprep.subr.bf16.mxu0 0
      %5342 = vmatpush1.bf16.msra.mxu0 0
      %5343 = vmatprep.subr.bf16.mxu0 0
      %5344 = vmatpush1.bf16.msra.mxu0 0
      %5345 = vmatprep.subr.bf16.mxu0 0
      %5346 = vmatpush1.bf16.msra.mxu0 0
      %5347 = vmatprep.subr.bf16.mxu0 0
      %5348 = vmatpush1.bf16.msra.mxu0 0
      %5349 = vmatprep.subr.bf16.mxu0 0
      %5350 = vmatpush1.bf16.msra.mxu0 0
      %5351 = vmatprep.subr.bf16.mxu0 0
      %5352 = vmatpush1.bf16.msra.mxu0 0
      %5353 = vmatprep.subr.bf16.mxu0 0
      %5354 = vmatpush1.bf16.msra.mxu0 0
      %5355 = vmatprep.subr.bf16.mxu0 0
      %5356 = vmatpush1.bf16.msra.mxu0 0
      %5357 = vmatprep.subr.bf16.mxu0 0
      %5358 = vmatpush1.bf16.msra.mxu0 0
      %5359 = vmatprep.subr.bf16.mxu0 0
      %5360 = vmatpush1.bf16.msra.mxu0 0
      %5361 = vmatprep.subr.bf16.mxu0 0
      %5362 = vmatpush1.bf16.msra.mxu0 0
      %5363 = vmatprep.mubr.bf16.mxu0 0
      %5364 = vmatmul.mubr.bf16.gmra.mrb[0].mxu0 %v5281
      %v5365 = vpop.f32.mrb[0].mxu0
      %v5366 = vadd.f32 0.0, %v5365
      %v5367 = vpop.f32.mrb[0].mxu0
      %v5368 = vpop.f32.mrb[0].mxu0
      %v5369 = vadd.f32 0.0, %v5368
      %v5370 = vpop.f32.mrb[0].mxu0
      %5371 = vmatprep.mubr.bf16.mxu0 0
      %5372 = vmatmul.mubr.bf16.gmra.mrb[0].mxu0 %v5284
      %v5373 = vpop.f32.mrb[0].mxu0
      %v5374 = vpop.f32.mrb[0].mxu0
      %v5375 = vpop.f32.mrb[0].mxu0
      %v5376 = vpop.f32.mrb[0].mxu0
      %5377 = vmatprep.mubr.bf16.mxu0 0
      %5378 = vmatmul.mubr.bf16.gmra.mrb[0].mxu0 %v5287
      %v5379 = vpop.f32.mrb[0].mxu0
      %v5380 = vadd.f32 0.0, %v5379
      %v5381 = vpop.f32.mrb[0].mxu0
      %v5382 = vpop.f32.mrb[0].mxu0
      %v5383 = vadd.f32 0.0, %v5382
      %v5384 = vpop.f32.mrb[0].mxu0
      %5385 = vmatprep.mubr.bf16.mxu0 0
      %5386 = vmatmul.mubr.bf16.gmra.mrb[0].mxu0 %v5290
      %v5387 = vpop.f32.mrb[0].mxu0
      %v5388 = vpop.f32.mrb[0].mxu0
      %v5389 = vpop.f32.mrb[0].mxu0
      %v5390 = vpop.f32.mrb[0].mxu0
      %5391 = vmatprep.mubr.bf16.mxu0 0
      %5392 = vmatmul.mubr.bf16.gmra.mrb[0].mxu0 %v5293
      %v5393 = vpop.f32.mrb[0].mxu0
      %v5394 = vadd.f32 0.0, %v5393
      %v5395 = vpop.f32.mrb[0].mxu0
      %v5396 = vpop.f32.mrb[0].mxu0
      %v5397 = vadd.f32 0.0, %v5396
      %v5398 = vpop.f32.mrb[0].mxu0
      %5399 = vmatprep.mubr.bf16.mxu0 0
      %5400 = vmatmul.mubr.bf16.gmra.mrb[0].mxu0 %v5296
      %v5401 = vpop.f32.mrb[0].mxu0
      %v5402 = vpop.f32.mrb[0].mxu0
      %v5403 = vpop.f32.mrb[0].mxu0
      %v5404 = vpop.f32.mrb[0].mxu0
      %5405 = vmatprep.mubr.bf16.mxu0 0
      %5406 = vmatmul.mubr.bf16.gmra.mrb[0].mxu0 %v5299
      %v5407 = vpop.f32.mrb[0].mxu0
      %v5408 = vadd.f32 0.0, %v5407
      %v5409 = vpop.f32.mrb[0].mxu0
      %v5410 = vpop.f32.mrb[0].mxu0
      %v5411 = vadd.f32 0.0, %v5410
      %v5412 = vpop.f32.mrb[0].mxu0
      %5413 = vmatprep.mubr.bf16.mxu0 0
      %5414 = vmatmul.mubr.bf16.gmra.mrb[0].mxu0 %v5302
      %v5415 = vpop.f32.mrb[0].mxu0
      %v5416 = vpop.f32.mrb[0].mxu0
      %v5417 = vpop.f32.mrb[0].mxu0
      %v5418 = vpop.f32.mrb[0].mxu0
      %5419 = vmatprep.mubr.bf16.mxu0 0
      %5420 = vmatmul.mubr.bf16.gmra.mrb[0].mxu0 %v5305
      %v5421 = vpop.f32.mrb[0].mxu0
      %v5422 = vadd.f32 0.0, %v5421
      %v5423 = vpop.f32.mrb[0].mxu0
      %v5424 = vpop.f32.mrb[0].mxu0
      %v5425 = vadd.f32 0.0, %v5424
      %v5426 = vpop.f32.mrb[0].mxu0
      %5427 = vmatprep.mubr.bf16.mxu0 0
      %5428 = vmatmul.mubr.bf16.gmra.mrb[0].mxu0 %v5308
      %v5429 = vpop.f32.mrb[0].mxu0
      %v5430 = vpop.f32.mrb[0].mxu0
      %v5431 = vpop.f32.mrb[0].mxu0
      %v5432 = vpop.f32.mrb[0].mxu0
      %5433 = vmatprep.mubr.bf16.mxu0 0
      %5434 = vmatmul.mubr.bf16.gmra.mrb[0].mxu0 %v5311
      %v5435 = vpop.f32.mrb[0].mxu0
      %v5436 = vadd.f32 0.0, %v5435
      %v5437 = vpop.f32.mrb[0].mxu0
      %v5438 = vpop.f32.mrb[0].mxu0
      %v5439 = vadd.f32 0.0, %v5438
      %v5440 = vpop.f32.mrb[0].mxu0
      %5441 = vmatprep.mubr.bf16.mxu0 0
      %5442 = vmatmul.mubr.bf16.gmra.mrb[0].mxu0 %v5314
      %v5443 = vpop.f32.mrb[0].mxu0
      %v5444 = vpop.f32.mrb[0].mxu0
      %v5445 = vpop.f32.mrb[0].mxu0
      %v5446 = vpop.f32.mrb[0].mxu0
      %5447 = vmatprep.mubr.bf16.mxu0 0
      %5448 = vmatmul.mubr.bf16.gmra.mrb[0].mxu0 %v5317
      %v5449 = vpop.f32.mrb[0].mxu0
      %v5450 = vadd.f32 0.0, %v5449
      %v5451 = vpop.f32.mrb[0].mxu0
      %v5452 = vpop.f32.mrb[0].mxu0
      %v5453 = vadd.f32 0.0, %v5452
      %v5454 = vpop.f32.mrb[0].mxu0
      %5455 = vmatprep.mubr.bf16.mxu0 0
      %5456 = vmatmul.mubr.bf16.gmra.mrb[0].mxu0 %v5320
      %v5457 = vpop.f32.mrb[0].mxu0
      %v5458 = vpop.f32.mrb[0].mxu0
      %v5459 = vpop.f32.mrb[0].mxu0
      %v5460 = vpop.f32.mrb[0].mxu0
      %5461 = vmatprep.mubr.bf16.mxu0 0
      %5462 = vmatmul.mubr.bf16.gmra.mrb[0].mxu0 %v5323
      %v5463 = vpop.f32.mrb[0].mxu0
      %v5464 = vadd.f32 0.0, %v5463
      %v5465 = vpop.f32.mrb[0].mxu0
      %v5466 = vpop.f32.mrb[0].mxu0
      %v5467 = vadd.f32 0.0, %v5466
      %v5468 = vpop.f32.mrb[0].mxu0
      %5469 = vmatprep.mubr.bf16.mxu0 0
      %5470 = vmatmul.mubr.bf16.gmra.mrb[0].mxu0 %v5326
      %v5471 = vpop.f32.mrb[0].mxu0
      %v5472 = vpop.f32.mrb[0].mxu0
      %v5473 = vpop.f32.mrb[0].mxu0
      %v5474 = vpop.f32.mrb[0].mxu0
      %5475 = vdwg.mxu0
      %v5476 = vadd.f32 %v5245, %v5366
      %v5477 = vadd.f32 %v5246, %v5369
      %v5478 = vadd.f32 %v5247, %v5380
      %v5479 = vadd.f32 %v5248, %v5383
      %v5480 = vadd.f32 %v5249, %v5394
      %v5481 = vadd.f32 %v5250, %v5397
      %v5482 = vadd.f32 %v5251, %v5408
      %v5483 = vadd.f32 %v5252, %v5411
      %v5484 = vadd.f32 %v5253, %v5422
      %v5485 = vadd.f32 %v5254, %v5425
      %v5486 = vadd.f32 %v5255, %v5436
      %v5487 = vadd.f32 %v5256, %v5439
      %v5488 = vadd.f32 %v5257, %v5450
      %v5489 = vadd.f32 %v5258, %v5453
      %v5490 = vadd.f32 %v5259, %v5464
      %v5491 = vadd.f32 %v5260, %v5467
      %s5492 = scalar_lea.vmem %s4, 4
      %v5493 = vld [vmem:[%s5492] sm:$0x1]
      %v5494 = vshrl.u32 %v5261, 16
      %v5496 = vshll.u32 %v5261, 16
      %v5498 = vrot.slane %v5496, 1
      %v5499 = vor.u32 %v5494, %v5498
      %v5500 = vshll.u32 %v5262, 16
      %v5502 = vrot.slane %v5500, 1
      %v5503 = vsel %vm468, %v5499, %v5502
      %v5504 = vshrl.u32 %v5262, 16
      %v5506 = vor.u32 %v5504, %v5502
      %v5507 = vshll.u32 %v5263, 16
      %v5509 = vrot.slane %v5507, 1
      %v5510 = vsel %vm468, %v5506, %v5509
      %v5511 = vshrl.u32 %v5263, 16
      %v5513 = vor.u32 %v5511, %v5509
      %v5514 = vshll.u32 %v5264, 16
      %v5516 = vrot.slane %v5514, 1
      %v5517 = vsel %vm468, %v5513, %v5516
      %v5518 = vshrl.u32 %v5264, 16
      %v5520 = vor.u32 %v5518, %v5516
      %v5521 = vshll.u32 %v5265, 16
      %v5523 = vrot.slane %v5521, 1
      %v5524 = vsel %vm468, %v5520, %v5523
      %v5525 = vshrl.u32 %v5265, 16
      %v5527 = vor.u32 %v5525, %v5523
      %v5528 = vshll.u32 %v5266, 16
      %v5530 = vrot.slane %v5528, 1
      %v5531 = vsel %vm468, %v5527, %v5530
      %v5532 = vshrl.u32 %v5266, 16
      %v5534 = vor.u32 %v5532, %v5530
      %v5535 = vshll.u32 %v5267, 16
      %v5537 = vrot.slane %v5535, 1
      %v5538 = vsel %vm468, %v5534, %v5537
      %v5539 = vshrl.u32 %v5267, 16
      %v5541 = vor.u32 %v5539, %v5537
      %v5542 = vshll.u32 %v5268, 16
      %v5544 = vrot.slane %v5542, 1
      %v5545 = vsel %vm468, %v5541, %v5544
      %v5546 = vshrl.u32 %v5268, 16
      %v5548 = vor.u32 %v5546, %v5544
      %v5549 = vshll.u32 %v5269, 16
      %v5551 = vrot.slane %v5549, 1
      %v5552 = vsel %vm468, %v5548, %v5551
      %v5553 = vshrl.u32 %v5269, 16
      %v5555 = vor.u32 %v5553, %v5551
      %v5556 = vshll.u32 %v5270, 16
      %v5558 = vrot.slane %v5556, 1
      %v5559 = vsel %vm468, %v5555, %v5558
      %v5560 = vshrl.u32 %v5270, 16
      %v5562 = vor.u32 %v5560, %v5558
      %v5563 = vshll.u32 %v5271, 16
      %v5565 = vrot.slane %v5563, 1
      %v5566 = vsel %vm468, %v5562, %v5565
      %v5567 = vshrl.u32 %v5271, 16
      %v5569 = vor.u32 %v5567, %v5565
      %v5570 = vshll.u32 %v5272, 16
      %v5572 = vrot.slane %v5570, 1
      %v5573 = vsel %vm468, %v5569, %v5572
      %v5574 = vshrl.u32 %v5272, 16
      %v5576 = vor.u32 %v5574, %v5572
      %v5577 = vshll.u32 %v5273, 16
      %v5579 = vrot.slane %v5577, 1
      %v5580 = vsel %vm468, %v5576, %v5579
      %v5581 = vshrl.u32 %v5273, 16
      %v5583 = vor.u32 %v5581, %v5579
      %v5584 = vshll.u32 %v5274, 16
      %v5586 = vrot.slane %v5584, 1
      %v5587 = vsel %vm468, %v5583, %v5586
      %v5588 = vshrl.u32 %v5274, 16
      %v5590 = vor.u32 %v5588, %v5586
      %v5591 = vshll.u32 %v5275, 16
      %v5593 = vrot.slane %v5591, 1
      %v5594 = vsel %vm468, %v5590, %v5593
      %v5595 = vshrl.u32 %v5275, 16
      %v5597 = vor.u32 %v5595, %v5593
      %v5598 = vshll.u32 %v5276, 16
      %v5600 = vrot.slane %v5598, 1
      %v5601 = vsel %vm468, %v5597, %v5600
      %v5602 = vshrl.u32 %v5276, 16
      %v5604 = vor.u32 %v5602, %v5600
      %v5606 = vshll.u32 %v5277, 16
      %v5608 = vrot.slane %v5606, 1
      %v5609 = vsel %vm468, %v5604, %v5608
      %v5611 = vsel %vm4446, %v5503, 0
      %v5614 = vsel %vm4446, %v5510, 0
      %v5617 = vsel %vm4446, %v5517, 0
      %v5620 = vsel %vm4446, %v5524, 0
      %v5623 = vsel %vm4446, %v5531, 0
      %v5626 = vsel %vm4446, %v5538, 0
      %v5629 = vsel %vm4446, %v5545, 0
      %v5632 = vsel %vm4446, %v5552, 0
      %v5635 = vsel %vm4446, %v5559, 0
      %v5638 = vsel %vm4446, %v5566, 0
      %v5641 = vsel %vm4446, %v5573, 0
      %v5644 = vsel %vm4446, %v5580, 0
      %v5647 = vsel %vm4446, %v5587, 0
      %v5650 = vsel %vm4446, %v5594, 0
      %v5653 = vsel %vm4446, %v5601, 0
      %v5656 = vsel %vm4446, %v5609, 0
      %v5659 = vsel %vm4668, %v5493, 0
      %5661 = vmatprep.subr.bf16.mxu0 0
      %5662 = vmatpush1.bf16.msra.mxu0 %v5659
      %5663 = vmatprep.subr.bf16.mxu0 0
      %5664 = vmatpush1.bf16.msra.mxu0 0
      %5665 = vmatprep.subr.bf16.mxu0 0
      %5666 = vmatpush1.bf16.msra.mxu0 0
      %5667 = vmatprep.subr.bf16.mxu0 0
      %5668 = vmatpush1.bf16.msra.mxu0 0
      %5669 = vmatprep.subr.bf16.mxu0 0
      %5670 = vmatpush1.bf16.msra.mxu0 0
      %5671 = vmatprep.subr.bf16.mxu0 0
      %5672 = vmatpush1.bf16.msra.mxu0 0
      %5673 = vmatprep.subr.bf16.mxu0 0
      %5674 = vmatpush1.bf16.msra.mxu0 0
      %5675 = vmatprep.subr.bf16.mxu0 0
      %5676 = vmatpush1.bf16.msra.mxu0 0
      %5677 = vmatprep.subr.bf16.mxu0 0
      %5678 = vmatpush1.bf16.msra.mxu0 0
      %5679 = vmatprep.subr.bf16.mxu0 0
      %5680 = vmatpush1.bf16.msra.mxu0 0
      %5681 = vmatprep.subr.bf16.mxu0 0
      %5682 = vmatpush1.bf16.msra.mxu0 0
      %5683 = vmatprep.subr.bf16.mxu0 0
      %5684 = vmatpush1.bf16.msra.mxu0 0
      %5685 = vmatprep.subr.bf16.mxu0 0
      %5686 = vmatpush1.bf16.msra.mxu0 0
      %5687 = vmatprep.subr.bf16.mxu0 0
      %5688 = vmatpush1.bf16.msra.mxu0 0
      %5689 = vmatprep.subr.bf16.mxu0 0
      %5690 = vmatpush1.bf16.msra.mxu0 0
      %5691 = vmatprep.subr.bf16.mxu0 0
      %5692 = vmatpush1.bf16.msra.mxu0 0
      %5693 = vmatprep.mubr.bf16.mxu0 0
      %5694 = vmatmul.mubr.bf16.gmra.mrb[0].mxu0 %v5611
      %v5695 = vpop.f32.mrb[0].mxu0
      %v5696 = vadd.f32 0.0, %v5695
      %v5697 = vpop.f32.mrb[0].mxu0
      %v5698 = vpop.f32.mrb[0].mxu0
      %v5699 = vadd.f32 0.0, %v5698
      %v5700 = vpop.f32.mrb[0].mxu0
      %5701 = vmatprep.mubr.bf16.mxu0 0
      %5702 = vmatmul.mubr.bf16.gmra.mrb[0].mxu0 %v5614
      %v5703 = vpop.f32.mrb[0].mxu0
      %v5704 = vpop.f32.mrb[0].mxu0
      %v5705 = vpop.f32.mrb[0].mxu0
      %v5706 = vpop.f32.mrb[0].mxu0
      %5707 = vmatprep.mubr.bf16.mxu0 0
      %5708 = vmatmul.mubr.bf16.gmra.mrb[0].mxu0 %v5617
      %v5709 = vpop.f32.mrb[0].mxu0
      %v5710 = vadd.f32 0.0, %v5709
      %v5711 = vpop.f32.mrb[0].mxu0
      %v5712 = vpop.f32.mrb[0].mxu0
      %v5713 = vadd.f32 0.0, %v5712
      %v5714 = vpop.f32.mrb[0].mxu0
      %5715 = vmatprep.mubr.bf16.mxu0 0
      %5716 = vmatmul.mubr.bf16.gmra.mrb[0].mxu0 %v5620
      %v5717 = vpop.f32.mrb[0].mxu0
      %v5718 = vpop.f32.mrb[0].mxu0
      %v5719 = vpop.f32.mrb[0].mxu0
      %v5720 = vpop.f32.mrb[0].mxu0
      %5721 = vmatprep.mubr.bf16.mxu0 0
      %5722 = vmatmul.mubr.bf16.gmra.mrb[0].mxu0 %v5623
      %v5723 = vpop.f32.mrb[0].mxu0
      %v5724 = vadd.f32 0.0, %v5723
      %v5725 = vpop.f32.mrb[0].mxu0
      %v5726 = vpop.f32.mrb[0].mxu0
      %v5727 = vadd.f32 0.0, %v5726
      %v5728 = vpop.f32.mrb[0].mxu0
      %5729 = vmatprep.mubr.bf16.mxu0 0
      %5730 = vmatmul.mubr.bf16.gmra.mrb[0].mxu0 %v5626
      %v5731 = vpop.f32.mrb[0].mxu0
      %v5732 = vpop.f32.mrb[0].mxu0
      %v5733 = vpop.f32.mrb[0].mxu0
      %v5734 = vpop.f32.mrb[0].mxu0
      %5735 = vmatprep.mubr.bf16.mxu0 0
      %5736 = vmatmul.mubr.bf16.gmra.mrb[0].mxu0 %v5629
      %v5737 = vpop.f32.mrb[0].mxu0
      %v5738 = vadd.f32 0.0, %v5737
      %v5739 = vpop.f32.mrb[0].mxu0
      %v5740 = vpop.f32.mrb[0].mxu0
      %v5741 = vadd.f32 0.0, %v5740
      %v5742 = vpop.f32.mrb[0].mxu0
      %5743 = vmatprep.mubr.bf16.mxu0 0
      %5744 = vmatmul.mubr.bf16.gmra.mrb[0].mxu0 %v5632
      %v5745 = vpop.f32.mrb[0].mxu0
      %v5746 = vpop.f32.mrb[0].mxu0
      %v5747 = vpop.f32.mrb[0].mxu0
      %v5748 = vpop.f32.mrb[0].mxu0
      %5749 = vmatprep.mubr.bf16.mxu0 0
      %5750 = vmatmul.mubr.bf16.gmra.mrb[0].mxu0 %v5635
      %v5751 = vpop.f32.mrb[0].mxu0
      %v5752 = vadd.f32 0.0, %v5751
      %v5753 = vpop.f32.mrb[0].mxu0
      %v5754 = vpop.f32.mrb[0].mxu0
      %v5755 = vadd.f32 0.0, %v5754
      %v5756 = vpop.f32.mrb[0].mxu0
      %5757 = vmatprep.mubr.bf16.mxu0 0
      %5758 = vmatmul.mubr.bf16.gmra.mrb[0].mxu0 %v5638
      %v5759 = vpop.f32.mrb[0].mxu0
      %v5760 = vpop.f32.mrb[0].mxu0
      %v5761 = vpop.f32.mrb[0].mxu0
      %v5762 = vpop.f32.mrb[0].mxu0
      %5763 = vmatprep.mubr.bf16.mxu0 0
      %5764 = vmatmul.mubr.bf16.gmra.mrb[0].mxu0 %v5641
      %v5765 = vpop.f32.mrb[0].mxu0
      %v5766 = vadd.f32 0.0, %v5765
      %v5767 = vpop.f32.mrb[0].mxu0
      %v5768 = vpop.f32.mrb[0].mxu0
      %v5769 = vadd.f32 0.0, %v5768
      %v5770 = vpop.f32.mrb[0].mxu0
      %5771 = vmatprep.mubr.bf16.mxu0 0
      %5772 = vmatmul.mubr.bf16.gmra.mrb[0].mxu0 %v5644
      %v5773 = vpop.f32.mrb[0].mxu0
      %v5774 = vpop.f32.mrb[0].mxu0
      %v5775 = vpop.f32.mrb[0].mxu0
      %v5776 = vpop.f32.mrb[0].mxu0
      %5777 = vmatprep.mubr.bf16.mxu0 0
      %5778 = vmatmul.mubr.bf16.gmra.mrb[0].mxu0 %v5647
      %v5779 = vpop.f32.mrb[0].mxu0
      %v5780 = vadd.f32 0.0, %v5779
      %v5781 = vpop.f32.mrb[0].mxu0
      %v5782 = vpop.f32.mrb[0].mxu0
      %v5783 = vadd.f32 0.0, %v5782
      %v5784 = vpop.f32.mrb[0].mxu0
      %5785 = vmatprep.mubr.bf16.mxu0 0
      %5786 = vmatmul.mubr.bf16.gmra.mrb[0].mxu0 %v5650
      %v5787 = vpop.f32.mrb[0].mxu0
      %v5788 = vpop.f32.mrb[0].mxu0
      %v5789 = vpop.f32.mrb[0].mxu0
      %v5790 = vpop.f32.mrb[0].mxu0
      %5791 = vmatprep.mubr.bf16.mxu0 0
      %5792 = vmatmul.mubr.bf16.gmra.mrb[0].mxu0 %v5653
      %v5793 = vpop.f32.mrb[0].mxu0
      %v5794 = vadd.f32 0.0, %v5793
      %v5795 = vpop.f32.mrb[0].mxu0
      %v5796 = vpop.f32.mrb[0].mxu0
      %v5797 = vadd.f32 0.0, %v5796
      %v5798 = vpop.f32.mrb[0].mxu0
      %5799 = vmatprep.mubr.bf16.mxu0 0
      %5800 = vmatmul.mubr.bf16.gmra.mrb[0].mxu0 %v5656
      %v5801 = vpop.f32.mrb[0].mxu0
      %v5802 = vpop.f32.mrb[0].mxu0
      %v5803 = vpop.f32.mrb[0].mxu0
      %v5804 = vpop.f32.mrb[0].mxu0
      %5805 = vdwg.mxu0
      %v5806 = vadd.f32 %v5476, %v5696
      %v5807 = vadd.f32 %v5477, %v5699
      %v5808 = vadd.f32 %v5478, %v5710
      %v5809 = vadd.f32 %v5479, %v5713
      %v5810 = vadd.f32 %v5480, %v5724
      %v5811 = vadd.f32 %v5481, %v5727
      %v5812 = vadd.f32 %v5482, %v5738
      %v5813 = vadd.f32 %v5483, %v5741
      %v5814 = vadd.f32 %v5484, %v5752
      %v5815 = vadd.f32 %v5485, %v5755
      %v5816 = vadd.f32 %v5486, %v5766
      %v5817 = vadd.f32 %v5487, %v5769
      %v5818 = vadd.f32 %v5488, %v5780
      %v5819 = vadd.f32 %v5489, %v5783
      %v5820 = vadd.f32 %v5490, %v5794
      %v5821 = vadd.f32 %v5491, %v5797
      %s5822 = scalar_lea.vmem %s4, 5
      %v5823 = vld [vmem:[%s5822] sm:$0x1]
      %v5841 = vrot.slane %v5261, 1
      %v5842 = vrot.slane %v5262, 1
      %v5843 = vsel %vm1129, %v5841, %v5842
      %v5844 = vrot.slane %v5263, 1
      %v5845 = vsel %vm1129, %v5842, %v5844
      %v5846 = vrot.slane %v5264, 1
      %v5847 = vsel %vm1129, %v5844, %v5846
      %v5848 = vrot.slane %v5265, 1
      %v5849 = vsel %vm1129, %v5846, %v5848
      %v5850 = vrot.slane %v5266, 1
      %v5851 = vsel %vm1129, %v5848, %v5850
      %v5852 = vrot.slane %v5267, 1
      %v5853 = vsel %vm1129, %v5850, %v5852
      %v5854 = vrot.slane %v5268, 1
      %v5855 = vsel %vm1129, %v5852, %v5854
      %v5856 = vrot.slane %v5269, 1
      %v5857 = vsel %vm1129, %v5854, %v5856
      %v5858 = vrot.slane %v5270, 1
      %v5859 = vsel %vm1129, %v5856, %v5858
      %v5860 = vrot.slane %v5271, 1
      %v5861 = vsel %vm1129, %v5858, %v5860
      %v5862 = vrot.slane %v5272, 1
      %v5863 = vsel %vm1129, %v5860, %v5862
      %v5864 = vrot.slane %v5273, 1
      %v5865 = vsel %vm1129, %v5862, %v5864
      %v5866 = vrot.slane %v5274, 1
      %v5867 = vsel %vm1129, %v5864, %v5866
      %v5868 = vrot.slane %v5275, 1
      %v5869 = vsel %vm1129, %v5866, %v5868
      %v5870 = vrot.slane %v5276, 1
      %v5871 = vsel %vm1129, %v5868, %v5870
      %v5872 = vrot.slane %v5277, 1
      %v5873 = vsel %vm1129, %v5870, %v5872
      %v5875 = vsel %vm4446, %v5843, 0
      %v5878 = vsel %vm4446, %v5845, 0
      %v5881 = vsel %vm4446, %v5847, 0
      %v5884 = vsel %vm4446, %v5849, 0
      %v5887 = vsel %vm4446, %v5851, 0
      %v5890 = vsel %vm4446, %v5853, 0
      %v5893 = vsel %vm4446, %v5855, 0
      %v5896 = vsel %vm4446, %v5857, 0
      %v5899 = vsel %vm4446, %v5859, 0
      %v5902 = vsel %vm4446, %v5861, 0
      %v5905 = vsel %vm4446, %v5863, 0
      %v5908 = vsel %vm4446, %v5865, 0
      %v5911 = vsel %vm4446, %v5867, 0
      %v5914 = vsel %vm4446, %v5869, 0
      %v5917 = vsel %vm4446, %v5871, 0
      %v5920 = vsel %vm4446, %v5873, 0
      %v5923 = vsel %vm4668, %v5823, 0
      %5925 = vmatprep.subr.bf16.mxu0 0
      %5926 = vmatpush1.bf16.msra.mxu0 %v5923
      %5927 = vmatprep.subr.bf16.mxu0 0
      %5928 = vmatpush1.bf16.msra.mxu0 0
      %5929 = vmatprep.subr.bf16.mxu0 0
      %5930 = vmatpush1.bf16.msra.mxu0 0
      %5931 = vmatprep.subr.bf16.mxu0 0
      %5932 = vmatpush1.bf16.msra.mxu0 0
      %5933 = vmatprep.subr.bf16.mxu0 0
      %5934 = vmatpush1.bf16.msra.mxu0 0
      %5935 = vmatprep.subr.bf16.mxu0 0
      %5936 = vmatpush1.bf16.msra.mxu0 0
      %5937 = vmatprep.subr.bf16.mxu0 0
      %5938 = vmatpush1.bf16.msra.mxu0 0
      %5939 = vmatprep.subr.bf16.mxu0 0
      %5940 = vmatpush1.bf16.msra.mxu0 0
      %5941 = vmatprep.subr.bf16.mxu0 0
      %5942 = vmatpush1.bf16.msra.mxu0 0
      %5943 = vmatprep.subr.bf16.mxu0 0
      %5944 = vmatpush1.bf16.msra.mxu0 0
      %5945 = vmatprep.subr.bf16.mxu0 0
      %5946 = vmatpush1.bf16.msra.mxu0 0
      %5947 = vmatprep.subr.bf16.mxu0 0
      %5948 = vmatpush1.bf16.msra.mxu0 0
      %5949 = vmatprep.subr.bf16.mxu0 0
      %5950 = vmatpush1.bf16.msra.mxu0 0
      %5951 = vmatprep.subr.bf16.mxu0 0
      %5952 = vmatpush1.bf16.msra.mxu0 0
      %5953 = vmatprep.subr.bf16.mxu0 0
      %5954 = vmatpush1.bf16.msra.mxu0 0
      %5955 = vmatprep.subr.bf16.mxu0 0
      %5956 = vmatpush1.bf16.msra.mxu0 0
      %5957 = vmatprep.mubr.bf16.mxu0 0
      %5958 = vmatmul.mubr.bf16.gmra.mrb[0].mxu0 %v5875
      %v5959 = vpop.f32.mrb[0].mxu0
      %v5960 = vadd.f32 0.0, %v5959
      %v5961 = vpop.f32.mrb[0].mxu0
      %v5962 = vpop.f32.mrb[0].mxu0
      %v5963 = vadd.f32 0.0, %v5962
      %v5964 = vpop.f32.mrb[0].mxu0
      %5965 = vmatprep.mubr.bf16.mxu0 0
      %5966 = vmatmul.mubr.bf16.gmra.mrb[0].mxu0 %v5878
      %v5967 = vpop.f32.mrb[0].mxu0
      %v5968 = vpop.f32.mrb[0].mxu0
      %v5969 = vpop.f32.mrb[0].mxu0
      %v5970 = vpop.f32.mrb[0].mxu0
      %5971 = vmatprep.mubr.bf16.mxu0 0
      %5972 = vmatmul.mubr.bf16.gmra.mrb[0].mxu0 %v5881
      %v5973 = vpop.f32.mrb[0].mxu0
      %v5974 = vadd.f32 0.0, %v5973
      %v5975 = vpop.f32.mrb[0].mxu0
      %v5976 = vpop.f32.mrb[0].mxu0
      %v5977 = vadd.f32 0.0, %v5976
      %v5978 = vpop.f32.mrb[0].mxu0
      %5979 = vmatprep.mubr.bf16.mxu0 0
      %5980 = vmatmul.mubr.bf16.gmra.mrb[0].mxu0 %v5884
      %v5981 = vpop.f32.mrb[0].mxu0
      %v5982 = vpop.f32.mrb[0].mxu0
      %v5983 = vpop.f32.mrb[0].mxu0
      %v5984 = vpop.f32.mrb[0].mxu0
      %5985 = vmatprep.mubr.bf16.mxu0 0
      %5986 = vmatmul.mubr.bf16.gmra.mrb[0].mxu0 %v5887
      %v5987 = vpop.f32.mrb[0].mxu0
      %v5988 = vadd.f32 0.0, %v5987
      %v5989 = vpop.f32.mrb[0].mxu0
      %v5990 = vpop.f32.mrb[0].mxu0
      %v5991 = vadd.f32 0.0, %v5990
      %v5992 = vpop.f32.mrb[0].mxu0
      %5993 = vmatprep.mubr.bf16.mxu0 0
      %5994 = vmatmul.mubr.bf16.gmra.mrb[0].mxu0 %v5890
      %v5995 = vpop.f32.mrb[0].mxu0
      %v5996 = vpop.f32.mrb[0].mxu0
      %v5997 = vpop.f32.mrb[0].mxu0
      %v5998 = vpop.f32.mrb[0].mxu0
      %5999 = vmatprep.mubr.bf16.mxu0 0
      %6000 = vmatmul.mubr.bf16.gmra.mrb[0].mxu0 %v5893
      %v6001 = vpop.f32.mrb[0].mxu0
      %v6002 = vadd.f32 0.0, %v6001
      %v6003 = vpop.f32.mrb[0].mxu0
      %v6004 = vpop.f32.mrb[0].mxu0
      %v6005 = vadd.f32 0.0, %v6004
      %v6006 = vpop.f32.mrb[0].mxu0
      %6007 = vmatprep.mubr.bf16.mxu0 0
      %6008 = vmatmul.mubr.bf16.gmra.mrb[0].mxu0 %v5896
      %v6009 = vpop.f32.mrb[0].mxu0
      %v6010 = vpop.f32.mrb[0].mxu0
      %v6011 = vpop.f32.mrb[0].mxu0
      %v6012 = vpop.f32.mrb[0].mxu0
      %6013 = vmatprep.mubr.bf16.mxu0 0
      %6014 = vmatmul.mubr.bf16.gmra.mrb[0].mxu0 %v5899
      %v6015 = vpop.f32.mrb[0].mxu0
      %v6016 = vadd.f32 0.0, %v6015
      %v6017 = vpop.f32.mrb[0].mxu0
      %v6018 = vpop.f32.mrb[0].mxu0
      %v6019 = vadd.f32 0.0, %v6018
      %v6020 = vpop.f32.mrb[0].mxu0
      %6021 = vmatprep.mubr.bf16.mxu0 0
      %6022 = vmatmul.mubr.bf16.gmra.mrb[0].mxu0 %v5902
      %v6023 = vpop.f32.mrb[0].mxu0
      %v6024 = vpop.f32.mrb[0].mxu0
      %v6025 = vpop.f32.mrb[0].mxu0
      %v6026 = vpop.f32.mrb[0].mxu0
      %6027 = vmatprep.mubr.bf16.mxu0 0
      %6028 = vmatmul.mubr.bf16.gmra.mrb[0].mxu0 %v5905
      %v6029 = vpop.f32.mrb[0].mxu0
      %v6030 = vadd.f32 0.0, %v6029
      %v6031 = vpop.f32.mrb[0].mxu0
      %v6032 = vpop.f32.mrb[0].mxu0
      %v6033 = vadd.f32 0.0, %v6032
      %v6034 = vpop.f32.mrb[0].mxu0
      %6035 = vmatprep.mubr.bf16.mxu0 0
      %6036 = vmatmul.mubr.bf16.gmra.mrb[0].mxu0 %v5908
      %v6037 = vpop.f32.mrb[0].mxu0
      %v6038 = vpop.f32.mrb[0].mxu0
      %v6039 = vpop.f32.mrb[0].mxu0
      %v6040 = vpop.f32.mrb[0].mxu0
      %6041 = vmatprep.mubr.bf16.mxu0 0
      %6042 = vmatmul.mubr.bf16.gmra.mrb[0].mxu0 %v5911
      %v6043 = vpop.f32.mrb[0].mxu0
      %v6044 = vadd.f32 0.0, %v6043
      %v6045 = vpop.f32.mrb[0].mxu0
      %v6046 = vpop.f32.mrb[0].mxu0
      %v6047 = vadd.f32 0.0, %v6046
      %v6048 = vpop.f32.mrb[0].mxu0
      %6049 = vmatprep.mubr.bf16.mxu0 0
      %6050 = vmatmul.mubr.bf16.gmra.mrb[0].mxu0 %v5914
      %v6051 = vpop.f32.mrb[0].mxu0
      %v6052 = vpop.f32.mrb[0].mxu0
      %v6053 = vpop.f32.mrb[0].mxu0
      %v6054 = vpop.f32.mrb[0].mxu0
      %6055 = vmatprep.mubr.bf16.mxu0 0
      %6056 = vmatmul.mubr.bf16.gmra.mrb[0].mxu0 %v5917
      %v6057 = vpop.f32.mrb[0].mxu0
      %v6058 = vadd.f32 0.0, %v6057
      %v6059 = vpop.f32.mrb[0].mxu0
      %v6060 = vpop.f32.mrb[0].mxu0
      %v6061 = vadd.f32 0.0, %v6060
      %v6062 = vpop.f32.mrb[0].mxu0
      %6063 = vmatprep.mubr.bf16.mxu0 0
      %6064 = vmatmul.mubr.bf16.gmra.mrb[0].mxu0 %v5920
      %v6065 = vpop.f32.mrb[0].mxu0
      %v6066 = vpop.f32.mrb[0].mxu0
      %v6067 = vpop.f32.mrb[0].mxu0
      %v6068 = vpop.f32.mrb[0].mxu0
      %6069 = vdwg.mxu0
      %v6070 = vadd.f32 %v5806, %v5960
      %v6071 = vadd.f32 %v5807, %v5963
      %v6072 = vadd.f32 %v5808, %v5974
      %v6073 = vadd.f32 %v5809, %v5977
      %v6074 = vadd.f32 %v5810, %v5988
      %v6075 = vadd.f32 %v5811, %v5991
      %v6076 = vadd.f32 %v5812, %v6002
      %v6077 = vadd.f32 %v5813, %v6005
      %v6078 = vadd.f32 %v5814, %v6016
      %v6079 = vadd.f32 %v5815, %v6019
      %v6080 = vadd.f32 %v5816, %v6030
      %v6081 = vadd.f32 %v5817, %v6033
      %v6082 = vadd.f32 %v5818, %v6044
      %v6083 = vadd.f32 %v5819, %v6047
      %v6084 = vadd.f32 %v5820, %v6058
      %v6085 = vadd.f32 %v5821, %v6061
      %v6086 = vld [vmem:[#allocation2 + $0x20] sm:$0xff]
      %v6087 = vld [vmem:[#allocation2 + $0x28] sm:$0xff]
      %v6088 = vld [vmem:[#allocation2 + $0x30] sm:$0xff]
      %v6089 = vld [vmem:[#allocation2 + $0x38] sm:$0xff]
      %v6090 = vld [vmem:[#allocation2 + $0x40] sm:$0xff]
      %v6091 = vld [vmem:[#allocation2 + $0x48] sm:$0xff]
      %v6092 = vld [vmem:[#allocation2 + $0x50] sm:$0xff]
      %v6093 = vld [vmem:[#allocation2 + $0x58] sm:$0xff]
      %v6094 = vld [vmem:[#allocation2 + $0x60] sm:$0xff]
      %v6095 = vld [vmem:[#allocation2 + $0x68] sm:$0xff]
      %v6096 = vld [vmem:[#allocation2 + $0x70] sm:$0xff]
      %v6097 = vld [vmem:[#allocation2 + $0x78] sm:$0xff]
      %v6098 = vld [vmem:[#allocation2 + $0x80] sm:$0xff]
      %v6099 = vld [vmem:[#allocation2 + $0x88] sm:$0xff]
      %v6100 = vld [vmem:[#allocation2 + $0x90] sm:$0xff]
      %v6101 = vld [vmem:[#allocation2 + $0x98] sm:$0xff]
      %v6102 = vld [vmem:[#allocation2 + $0xa0] sm:$0xff]
      %s6103 = scalar_lea.vmem %s4, 6
      %v6104 = vld [vmem:[%s6103] sm:$0x1]
      %v6106 = vsel %vm4446, %v6086, 0
      %v6109 = vsel %vm4446, %v6087, 0
      %v6112 = vsel %vm4446, %v6088, 0
      %v6115 = vsel %vm4446, %v6089, 0
      %v6118 = vsel %vm4446, %v6090, 0
      %v6121 = vsel %vm4446, %v6091, 0
      %v6124 = vsel %vm4446, %v6092, 0
      %v6127 = vsel %vm4446, %v6093, 0
      %v6130 = vsel %vm4446, %v6094, 0
      %v6133 = vsel %vm4446, %v6095, 0
      %v6136 = vsel %vm4446, %v6096, 0
      %v6139 = vsel %vm4446, %v6097, 0
      %v6142 = vsel %vm4446, %v6098, 0
      %v6145 = vsel %vm4446, %v6099, 0
      %v6148 = vsel %vm4446, %v6100, 0
      %v6151 = vsel %vm4446, %v6101, 0
      %v6154 = vsel %vm4668, %v6104, 0
      %6156 = vmatprep.subr.bf16.mxu0 0
      %6157 = vmatpush1.bf16.msra.mxu0 %v6154
      %6158 = vmatprep.subr.bf16.mxu0 0
      %6159 = vmatpush1.bf16.msra.mxu0 0
      %6160 = vmatprep.subr.bf16.mxu0 0
      %6161 = vmatpush1.bf16.msra.mxu0 0
      %6162 = vmatprep.subr.bf16.mxu0 0
      %6163 = vmatpush1.bf16.msra.mxu0 0
      %6164 = vmatprep.subr.bf16.mxu0 0
      %6165 = vmatpush1.bf16.msra.mxu0 0
      %6166 = vmatprep.subr.bf16.mxu0 0
      %6167 = vmatpush1.bf16.msra.mxu0 0
      %6168 = vmatprep.subr.bf16.mxu0 0
      %6169 = vmatpush1.bf16.msra.mxu0 0
      %6170 = vmatprep.subr.bf16.mxu0 0
      %6171 = vmatpush1.bf16.msra.mxu0 0
      %6172 = vmatprep.subr.bf16.mxu0 0
      %6173 = vmatpush1.bf16.msra.mxu0 0
      %6174 = vmatprep.subr.bf16.mxu0 0
      %6175 = vmatpush1.bf16.msra.mxu0 0
      %6176 = vmatprep.subr.bf16.mxu0 0
      %6177 = vmatpush1.bf16.msra.mxu0 0
      %6178 = vmatprep.subr.bf16.mxu0 0
      %6179 = vmatpush1.bf16.msra.mxu0 0
      %6180 = vmatprep.subr.bf16.mxu0 0
      %6181 = vmatpush1.bf16.msra.mxu0 0
      %6182 = vmatprep.subr.bf16.mxu0 0
      %6183 = vmatpush1.bf16.msra.mxu0 0
      %6184 = vmatprep.subr.bf16.mxu0 0
      %6185 = vmatpush1.bf16.msra.mxu0 0
      %6186 = vmatprep.subr.bf16.mxu0 0
      %6187 = vmatpush1.bf16.msra.mxu0 0
      %6188 = vmatprep.mubr.bf16.mxu0 0
      %6189 = vmatmul.mubr.bf16.gmra.mrb[0].mxu0 %v6106
      %v6190 = vpop.f32.mrb[0].mxu0
      %v6191 = vadd.f32 0.0, %v6190
      %v6192 = vpop.f32.mrb[0].mxu0
      %v6193 = vpop.f32.mrb[0].mxu0
      %v6194 = vadd.f32 0.0, %v6193
      %v6195 = vpop.f32.mrb[0].mxu0
      %6196 = vmatprep.mubr.bf16.mxu0 0
      %6197 = vmatmul.mubr.bf16.gmra.mrb[0].mxu0 %v6109
      %v6198 = vpop.f32.mrb[0].mxu0
      %v6199 = vpop.f32.mrb[0].mxu0
      %v6200 = vpop.f32.mrb[0].mxu0
      %v6201 = vpop.f32.mrb[0].mxu0
      %6202 = vmatprep.mubr.bf16.mxu0 0
      %6203 = vmatmul.mubr.bf16.gmra.mrb[0].mxu0 %v6112
      %v6204 = vpop.f32.mrb[0].mxu0
      %v6205 = vadd.f32 0.0, %v6204
      %v6206 = vpop.f32.mrb[0].mxu0
      %v6207 = vpop.f32.mrb[0].mxu0
      %v6208 = vadd.f32 0.0, %v6207
      %v6209 = vpop.f32.mrb[0].mxu0
      %6210 = vmatprep.mubr.bf16.mxu0 0
      %6211 = vmatmul.mubr.bf16.gmra.mrb[0].mxu0 %v6115
      %v6212 = vpop.f32.mrb[0].mxu0
      %v6213 = vpop.f32.mrb[0].mxu0
      %v6214 = vpop.f32.mrb[0].mxu0
      %v6215 = vpop.f32.mrb[0].mxu0
      %6216 = vmatprep.mubr.bf16.mxu0 0
      %6217 = vmatmul.mubr.bf16.gmra.mrb[0].mxu0 %v6118
      %v6218 = vpop.f32.mrb[0].mxu0
      %v6219 = vadd.f32 0.0, %v6218
      %v6220 = vpop.f32.mrb[0].mxu0
      %v6221 = vpop.f32.mrb[0].mxu0
      %v6222 = vadd.f32 0.0, %v6221
      %v6223 = vpop.f32.mrb[0].mxu0
      %6224 = vmatprep.mubr.bf16.mxu0 0
      %6225 = vmatmul.mubr.bf16.gmra.mrb[0].mxu0 %v6121
      %v6226 = vpop.f32.mrb[0].mxu0
      %v6227 = vpop.f32.mrb[0].mxu0
      %v6228 = vpop.f32.mrb[0].mxu0
      %v6229 = vpop.f32.mrb[0].mxu0
      %6230 = vmatprep.mubr.bf16.mxu0 0
      %6231 = vmatmul.mubr.bf16.gmra.mrb[0].mxu0 %v6124
      %v6232 = vpop.f32.mrb[0].mxu0
      %v6233 = vadd.f32 0.0, %v6232
      %v6234 = vpop.f32.mrb[0].mxu0
      %v6235 = vpop.f32.mrb[0].mxu0
      %v6236 = vadd.f32 0.0, %v6235
      %v6237 = vpop.f32.mrb[0].mxu0
      %6238 = vmatprep.mubr.bf16.mxu0 0
      %6239 = vmatmul.mubr.bf16.gmra.mrb[0].mxu0 %v6127
      %v6240 = vpop.f32.mrb[0].mxu0
      %v6241 = vpop.f32.mrb[0].mxu0
      %v6242 = vpop.f32.mrb[0].mxu0
      %v6243 = vpop.f32.mrb[0].mxu0
      %6244 = vmatprep.mubr.bf16.mxu0 0
      %6245 = vmatmul.mubr.bf16.gmra.mrb[0].mxu0 %v6130
      %v6246 = vpop.f32.mrb[0].mxu0
      %v6247 = vadd.f32 0.0, %v6246
      %v6248 = vpop.f32.mrb[0].mxu0
      %v6249 = vpop.f32.mrb[0].mxu0
      %v6250 = vadd.f32 0.0, %v6249
      %v6251 = vpop.f32.mrb[0].mxu0
      %6252 = vmatprep.mubr.bf16.mxu0 0
      %6253 = vmatmul.mubr.bf16.gmra.mrb[0].mxu0 %v6133
      %v6254 = vpop.f32.mrb[0].mxu0
      %v6255 = vpop.f32.mrb[0].mxu0
      %v6256 = vpop.f32.mrb[0].mxu0
      %v6257 = vpop.f32.mrb[0].mxu0
      %6258 = vmatprep.mubr.bf16.mxu0 0
      %6259 = vmatmul.mubr.bf16.gmra.mrb[0].mxu0 %v6136
      %v6260 = vpop.f32.mrb[0].mxu0
      %v6261 = vadd.f32 0.0, %v6260
      %v6262 = vpop.f32.mrb[0].mxu0
      %v6263 = vpop.f32.mrb[0].mxu0
      %v6264 = vadd.f32 0.0, %v6263
      %v6265 = vpop.f32.mrb[0].mxu0
      %6266 = vmatprep.mubr.bf16.mxu0 0
      %6267 = vmatmul.mubr.bf16.gmra.mrb[0].mxu0 %v6139
      %v6268 = vpop.f32.mrb[0].mxu0
      %v6269 = vpop.f32.mrb[0].mxu0
      %v6270 = vpop.f32.mrb[0].mxu0
      %v6271 = vpop.f32.mrb[0].mxu0
      %6272 = vmatprep.mubr.bf16.mxu0 0
      %6273 = vmatmul.mubr.bf16.gmra.mrb[0].mxu0 %v6142
      %v6274 = vpop.f32.mrb[0].mxu0
      %v6275 = vadd.f32 0.0, %v6274
      %v6276 = vpop.f32.mrb[0].mxu0
      %v6277 = vpop.f32.mrb[0].mxu0
      %v6278 = vadd.f32 0.0, %v6277
      %v6279 = vpop.f32.mrb[0].mxu0
      %6280 = vmatprep.mubr.bf16.mxu0 0
      %6281 = vmatmul.mubr.bf16.gmra.mrb[0].mxu0 %v6145
      %v6282 = vpop.f32.mrb[0].mxu0
      %v6283 = vpop.f32.mrb[0].mxu0
      %v6284 = vpop.f32.mrb[0].mxu0
      %v6285 = vpop.f32.mrb[0].mxu0
      %6286 = vmatprep.mubr.bf16.mxu0 0
      %6287 = vmatmul.mubr.bf16.gmra.mrb[0].mxu0 %v6148
      %v6288 = vpop.f32.mrb[0].mxu0
      %v6289 = vadd.f32 0.0, %v6288
      %v6290 = vpop.f32.mrb[0].mxu0
      %v6291 = vpop.f32.mrb[0].mxu0
      %v6292 = vadd.f32 0.0, %v6291
      %v6293 = vpop.f32.mrb[0].mxu0
      %6294 = vmatprep.mubr.bf16.mxu0 0
      %6295 = vmatmul.mubr.bf16.gmra.mrb[0].mxu0 %v6151
      %v6296 = vpop.f32.mrb[0].mxu0
      %v6297 = vpop.f32.mrb[0].mxu0
      %v6298 = vpop.f32.mrb[0].mxu0
      %v6299 = vpop.f32.mrb[0].mxu0
      %6300 = vdwg.mxu0
      %v6301 = vadd.f32 %v6070, %v6191
      %v6302 = vadd.f32 %v6071, %v6194
      %v6303 = vadd.f32 %v6072, %v6205
      %v6304 = vadd.f32 %v6073, %v6208
      %v6305 = vadd.f32 %v6074, %v6219
      %v6306 = vadd.f32 %v6075, %v6222
      %v6307 = vadd.f32 %v6076, %v6233
      %v6308 = vadd.f32 %v6077, %v6236
      %v6309 = vadd.f32 %v6078, %v6247
      %v6310 = vadd.f32 %v6079, %v6250
      %v6311 = vadd.f32 %v6080, %v6261
      %v6312 = vadd.f32 %v6081, %v6264
      %v6313 = vadd.f32 %v6082, %v6275
      %v6314 = vadd.f32 %v6083, %v6278
      %v6315 = vadd.f32 %v6084, %v6289
      %v6316 = vadd.f32 %v6085, %v6292
      %s6317 = scalar_lea.vmem %s4, 7
      %v6318 = vld [vmem:[%s6317] sm:$0x1]
      %v6319 = vshrl.u32 %v6086, 16
      %v6321 = vshll.u32 %v6086, 16
      %v6323 = vrot.slane %v6321, 1
      %v6324 = vor.u32 %v6319, %v6323
      %v6325 = vshll.u32 %v6087, 16
      %v6327 = vrot.slane %v6325, 1
      %v6328 = vsel %vm468, %v6324, %v6327
      %v6329 = vshrl.u32 %v6087, 16
      %v6331 = vor.u32 %v6329, %v6327
      %v6332 = vshll.u32 %v6088, 16
      %v6334 = vrot.slane %v6332, 1
      %v6335 = vsel %vm468, %v6331, %v6334
      %v6336 = vshrl.u32 %v6088, 16
      %v6338 = vor.u32 %v6336, %v6334
      %v6339 = vshll.u32 %v6089, 16
      %v6341 = vrot.slane %v6339, 1
      %v6342 = vsel %vm468, %v6338, %v6341
      %v6343 = vshrl.u32 %v6089, 16
      %v6345 = vor.u32 %v6343, %v6341
      %v6346 = vshll.u32 %v6090, 16
      %v6348 = vrot.slane %v6346, 1
      %v6349 = vsel %vm468, %v6345, %v6348
      %v6350 = vshrl.u32 %v6090, 16
      %v6352 = vor.u32 %v6350, %v6348
      %v6353 = vshll.u32 %v6091, 16
      %v6355 = vrot.slane %v6353, 1
      %v6356 = vsel %vm468, %v6352, %v6355
      %v6357 = vshrl.u32 %v6091, 16
      %v6359 = vor.u32 %v6357, %v6355
      %v6360 = vshll.u32 %v6092, 16
      %v6362 = vrot.slane %v6360, 1
      %v6363 = vsel %vm468, %v6359, %v6362
      %v6364 = vshrl.u32 %v6092, 16
      %v6366 = vor.u32 %v6364, %v6362
      %v6367 = vshll.u32 %v6093, 16
      %v6369 = vrot.slane %v6367, 1
      %v6370 = vsel %vm468, %v6366, %v6369
      %v6371 = vshrl.u32 %v6093, 16
      %v6373 = vor.u32 %v6371, %v6369
      %v6374 = vshll.u32 %v6094, 16
      %v6376 = vrot.slane %v6374, 1
      %v6377 = vsel %vm468, %v6373, %v6376
      %v6378 = vshrl.u32 %v6094, 16
      %v6380 = vor.u32 %v6378, %v6376
      %v6381 = vshll.u32 %v6095, 16
      %v6383 = vrot.slane %v6381, 1
      %v6384 = vsel %vm468, %v6380, %v6383
      %v6385 = vshrl.u32 %v6095, 16
      %v6387 = vor.u32 %v6385, %v6383
      %v6388 = vshll.u32 %v6096, 16
      %v6390 = vrot.slane %v6388, 1
      %v6391 = vsel %vm468, %v6387, %v6390
      %v6392 = vshrl.u32 %v6096, 16
      %v6394 = vor.u32 %v6392, %v6390
      %v6395 = vshll.u32 %v6097, 16
      %v6397 = vrot.slane %v6395, 1
      %v6398 = vsel %vm468, %v6394, %v6397
      %v6399 = vshrl.u32 %v6097, 16
      %v6401 = vor.u32 %v6399, %v6397
      %v6402 = vshll.u32 %v6098, 16
      %v6404 = vrot.slane %v6402, 1
      %v6405 = vsel %vm468, %v6401, %v6404
      %v6406 = vshrl.u32 %v6098, 16
      %v6408 = vor.u32 %v6406, %v6404
      %v6409 = vshll.u32 %v6099, 16
      %v6411 = vrot.slane %v6409, 1
      %v6412 = vsel %vm468, %v6408, %v6411
      %v6413 = vshrl.u32 %v6099, 16
      %v6415 = vor.u32 %v6413, %v6411
      %v6416 = vshll.u32 %v6100, 16
      %v6418 = vrot.slane %v6416, 1
      %v6419 = vsel %vm468, %v6415, %v6418
      %v6420 = vshrl.u32 %v6100, 16
      %v6422 = vor.u32 %v6420, %v6418
      %v6423 = vshll.u32 %v6101, 16
      %v6425 = vrot.slane %v6423, 1
      %v6426 = vsel %vm468, %v6422, %v6425
      %v6427 = vshrl.u32 %v6101, 16
      %v6429 = vor.u32 %v6427, %v6425
      %v6431 = vshll.u32 %v6102, 16
      %v6433 = vrot.slane %v6431, 1
      %v6434 = vsel %vm468, %v6429, %v6433
      %v6436 = vsel %vm4446, %v6328, 0
      %v6439 = vsel %vm4446, %v6335, 0
      %v6442 = vsel %vm4446, %v6342, 0
      %v6445 = vsel %vm4446, %v6349, 0
      %v6448 = vsel %vm4446, %v6356, 0
      %v6451 = vsel %vm4446, %v6363, 0
      %v6454 = vsel %vm4446, %v6370, 0
      %v6457 = vsel %vm4446, %v6377, 0
      %v6460 = vsel %vm4446, %v6384, 0
      %v6463 = vsel %vm4446, %v6391, 0
      %v6466 = vsel %vm4446, %v6398, 0
      %v6469 = vsel %vm4446, %v6405, 0
      %v6472 = vsel %vm4446, %v6412, 0
      %v6475 = vsel %vm4446, %v6419, 0
      %v6478 = vsel %vm4446, %v6426, 0
      %v6481 = vsel %vm4446, %v6434, 0
      %v6484 = vsel %vm4668, %v6318, 0
      %6486 = vmatprep.subr.bf16.mxu0 0
      %6487 = vmatpush1.bf16.msra.mxu0 %v6484
      %6488 = vmatprep.subr.bf16.mxu0 0
      %6489 = vmatpush1.bf16.msra.mxu0 0
      %6490 = vmatprep.subr.bf16.mxu0 0
      %6491 = vmatpush1.bf16.msra.mxu0 0
      %6492 = vmatprep.subr.bf16.mxu0 0
      %6493 = vmatpush1.bf16.msra.mxu0 0
      %6494 = vmatprep.subr.bf16.mxu0 0
      %6495 = vmatpush1.bf16.msra.mxu0 0
      %6496 = vmatprep.subr.bf16.mxu0 0
      %6497 = vmatpush1.bf16.msra.mxu0 0
      %6498 = vmatprep.subr.bf16.mxu0 0
      %6499 = vmatpush1.bf16.msra.mxu0 0
      %6500 = vmatprep.subr.bf16.mxu0 0
      %6501 = vmatpush1.bf16.msra.mxu0 0
      %6502 = vmatprep.subr.bf16.mxu0 0
      %6503 = vmatpush1.bf16.msra.mxu0 0
      %6504 = vmatprep.subr.bf16.mxu0 0
      %6505 = vmatpush1.bf16.msra.mxu0 0
      %6506 = vmatprep.subr.bf16.mxu0 0
      %6507 = vmatpush1.bf16.msra.mxu0 0
      %6508 = vmatprep.subr.bf16.mxu0 0
      %6509 = vmatpush1.bf16.msra.mxu0 0
      %6510 = vmatprep.subr.bf16.mxu0 0
      %6511 = vmatpush1.bf16.msra.mxu0 0
      %6512 = vmatprep.subr.bf16.mxu0 0
      %6513 = vmatpush1.bf16.msra.mxu0 0
      %6514 = vmatprep.subr.bf16.mxu0 0
      %6515 = vmatpush1.bf16.msra.mxu0 0
      %6516 = vmatprep.subr.bf16.mxu0 0
      %6517 = vmatpush1.bf16.msra.mxu0 0
      %6518 = vmatprep.mubr.bf16.mxu0 0
      %6519 = vmatmul.mubr.bf16.gmra.mrb[0].mxu0 %v6436
      %v6520 = vpop.f32.mrb[0].mxu0
      %v6521 = vadd.f32 0.0, %v6520
      %v6522 = vpop.f32.mrb[0].mxu0
      %v6523 = vpop.f32.mrb[0].mxu0
      %v6524 = vadd.f32 0.0, %v6523
      %v6525 = vpop.f32.mrb[0].mxu0
      %6526 = vmatprep.mubr.bf16.mxu0 0
      %6527 = vmatmul.mubr.bf16.gmra.mrb[0].mxu0 %v6439
      %v6528 = vpop.f32.mrb[0].mxu0
      %v6529 = vpop.f32.mrb[0].mxu0
      %v6530 = vpop.f32.mrb[0].mxu0
      %v6531 = vpop.f32.mrb[0].mxu0
      %6532 = vmatprep.mubr.bf16.mxu0 0
      %6533 = vmatmul.mubr.bf16.gmra.mrb[0].mxu0 %v6442
      %v6534 = vpop.f32.mrb[0].mxu0
      %v6535 = vadd.f32 0.0, %v6534
      %v6536 = vpop.f32.mrb[0].mxu0
      %v6537 = vpop.f32.mrb[0].mxu0
      %v6538 = vadd.f32 0.0, %v6537
      %v6539 = vpop.f32.mrb[0].mxu0
      %6540 = vmatprep.mubr.bf16.mxu0 0
      %6541 = vmatmul.mubr.bf16.gmra.mrb[0].mxu0 %v6445
      %v6542 = vpop.f32.mrb[0].mxu0
      %v6543 = vpop.f32.mrb[0].mxu0
      %v6544 = vpop.f32.mrb[0].mxu0
      %v6545 = vpop.f32.mrb[0].mxu0
      %6546 = vmatprep.mubr.bf16.mxu0 0
      %6547 = vmatmul.mubr.bf16.gmra.mrb[0].mxu0 %v6448
      %v6548 = vpop.f32.mrb[0].mxu0
      %v6549 = vadd.f32 0.0, %v6548
      %v6550 = vpop.f32.mrb[0].mxu0
      %v6551 = vpop.f32.mrb[0].mxu0
      %v6552 = vadd.f32 0.0, %v6551
      %v6553 = vpop.f32.mrb[0].mxu0
      %6554 = vmatprep.mubr.bf16.mxu0 0
      %6555 = vmatmul.mubr.bf16.gmra.mrb[0].mxu0 %v6451
      %v6556 = vpop.f32.mrb[0].mxu0
      %v6557 = vpop.f32.mrb[0].mxu0
      %v6558 = vpop.f32.mrb[0].mxu0
      %v6559 = vpop.f32.mrb[0].mxu0
      %6560 = vmatprep.mubr.bf16.mxu0 0
      %6561 = vmatmul.mubr.bf16.gmra.mrb[0].mxu0 %v6454
      %v6562 = vpop.f32.mrb[0].mxu0
      %v6563 = vadd.f32 0.0, %v6562
      %v6564 = vpop.f32.mrb[0].mxu0
      %v6565 = vpop.f32.mrb[0].mxu0
      %v6566 = vadd.f32 0.0, %v6565
      %v6567 = vpop.f32.mrb[0].mxu0
      %6568 = vmatprep.mubr.bf16.mxu0 0
      %6569 = vmatmul.mubr.bf16.gmra.mrb[0].mxu0 %v6457
      %v6570 = vpop.f32.mrb[0].mxu0
      %v6571 = vpop.f32.mrb[0].mxu0
      %v6572 = vpop.f32.mrb[0].mxu0
      %v6573 = vpop.f32.mrb[0].mxu0
      %6574 = vmatprep.mubr.bf16.mxu0 0
      %6575 = vmatmul.mubr.bf16.gmra.mrb[0].mxu0 %v6460
      %v6576 = vpop.f32.mrb[0].mxu0
      %v6577 = vadd.f32 0.0, %v6576
      %v6578 = vpop.f32.mrb[0].mxu0
      %v6579 = vpop.f32.mrb[0].mxu0
      %v6580 = vadd.f32 0.0, %v6579
      %v6581 = vpop.f32.mrb[0].mxu0
      %6582 = vmatprep.mubr.bf16.mxu0 0
      %6583 = vmatmul.mubr.bf16.gmra.mrb[0].mxu0 %v6463
      %v6584 = vpop.f32.mrb[0].mxu0
      %v6585 = vpop.f32.mrb[0].mxu0
      %v6586 = vpop.f32.mrb[0].mxu0
      %v6587 = vpop.f32.mrb[0].mxu0
      %6588 = vmatprep.mubr.bf16.mxu0 0
      %6589 = vmatmul.mubr.bf16.gmra.mrb[0].mxu0 %v6466
      %v6590 = vpop.f32.mrb[0].mxu0
      %v6591 = vadd.f32 0.0, %v6590
      %v6592 = vpop.f32.mrb[0].mxu0
      %v6593 = vpop.f32.mrb[0].mxu0
      %v6594 = vadd.f32 0.0, %v6593
      %v6595 = vpop.f32.mrb[0].mxu0
      %6596 = vmatprep.mubr.bf16.mxu0 0
      %6597 = vmatmul.mubr.bf16.gmra.mrb[0].mxu0 %v6469
      %v6598 = vpop.f32.mrb[0].mxu0
      %v6599 = vpop.f32.mrb[0].mxu0
      %v6600 = vpop.f32.mrb[0].mxu0
      %v6601 = vpop.f32.mrb[0].mxu0
      %6602 = vmatprep.mubr.bf16.mxu0 0
      %6603 = vmatmul.mubr.bf16.gmra.mrb[0].mxu0 %v6472
      %v6604 = vpop.f32.mrb[0].mxu0
      %v6605 = vadd.f32 0.0, %v6604
      %v6606 = vpop.f32.mrb[0].mxu0
      %v6607 = vpop.f32.mrb[0].mxu0
      %v6608 = vadd.f32 0.0, %v6607
      %v6609 = vpop.f32.mrb[0].mxu0
      %6610 = vmatprep.mubr.bf16.mxu0 0
      %6611 = vmatmul.mubr.bf16.gmra.mrb[0].mxu0 %v6475
      %v6612 = vpop.f32.mrb[0].mxu0
      %v6613 = vpop.f32.mrb[0].mxu0
      %v6614 = vpop.f32.mrb[0].mxu0
      %v6615 = vpop.f32.mrb[0].mxu0
      %6616 = vmatprep.mubr.bf16.mxu0 0
      %6617 = vmatmul.mubr.bf16.gmra.mrb[0].mxu0 %v6478
      %v6618 = vpop.f32.mrb[0].mxu0
      %v6619 = vadd.f32 0.0, %v6618
      %v6620 = vpop.f32.mrb[0].mxu0
      %v6621 = vpop.f32.mrb[0].mxu0
      %v6622 = vadd.f32 0.0, %v6621
      %v6623 = vpop.f32.mrb[0].mxu0
      %6624 = vmatprep.mubr.bf16.mxu0 0
      %6625 = vmatmul.mubr.bf16.gmra.mrb[0].mxu0 %v6481
      %v6626 = vpop.f32.mrb[0].mxu0
      %v6627 = vpop.f32.mrb[0].mxu0
      %v6628 = vpop.f32.mrb[0].mxu0
      %v6629 = vpop.f32.mrb[0].mxu0
      %6630 = vdwg.mxu0
      %v6631 = vadd.f32 %v6301, %v6521
      %v6632 = vadd.f32 %v6302, %v6524
      %v6633 = vadd.f32 %v6303, %v6535
      %v6634 = vadd.f32 %v6304, %v6538
      %v6635 = vadd.f32 %v6305, %v6549
      %v6636 = vadd.f32 %v6306, %v6552
      %v6637 = vadd.f32 %v6307, %v6563
      %v6638 = vadd.f32 %v6308, %v6566
      %v6639 = vadd.f32 %v6309, %v6577
      %v6640 = vadd.f32 %v6310, %v6580
      %v6641 = vadd.f32 %v6311, %v6591
      %v6642 = vadd.f32 %v6312, %v6594
      %v6643 = vadd.f32 %v6313, %v6605
      %v6644 = vadd.f32 %v6314, %v6608
      %v6645 = vadd.f32 %v6315, %v6619
      %v6646 = vadd.f32 %v6316, %v6622
      %s6647 = scalar_lea.vmem %s4, 8
      %v6648 = vld [vmem:[%s6647] sm:$0x1]
      %v6666 = vrot.slane %v6086, 1
      %v6667 = vrot.slane %v6087, 1
      %v6668 = vsel %vm1129, %v6666, %v6667
      %v6669 = vrot.slane %v6088, 1
      %v6670 = vsel %vm1129, %v6667, %v6669
      %v6671 = vrot.slane %v6089, 1
      %v6672 = vsel %vm1129, %v6669, %v6671
      %v6673 = vrot.slane %v6090, 1
      %v6674 = vsel %vm1129, %v6671, %v6673
      %v6675 = vrot.slane %v6091, 1
      %v6676 = vsel %vm1129, %v6673, %v6675
      %v6677 = vrot.slane %v6092, 1
      %v6678 = vsel %vm1129, %v6675, %v6677
      %v6679 = vrot.slane %v6093, 1
      %v6680 = vsel %vm1129, %v6677, %v6679
      %v6681 = vrot.slane %v6094, 1
      %v6682 = vsel %vm1129, %v6679, %v6681
      %v6683 = vrot.slane %v6095, 1
      %v6684 = vsel %vm1129, %v6681, %v6683
      %v6685 = vrot.slane %v6096, 1
      %v6686 = vsel %vm1129, %v6683, %v6685
      %v6687 = vrot.slane %v6097, 1
      %v6688 = vsel %vm1129, %v6685, %v6687
      %v6689 = vrot.slane %v6098, 1
      %v6690 = vsel %vm1129, %v6687, %v6689
      %v6691 = vrot.slane %v6099, 1
      %v6692 = vsel %vm1129, %v6689, %v6691
      %v6693 = vrot.slane %v6100, 1
      %v6694 = vsel %vm1129, %v6691, %v6693
      %v6695 = vrot.slane %v6101, 1
      %v6696 = vsel %vm1129, %v6693, %v6695
      %v6697 = vrot.slane %v6102, 1
      %v6698 = vsel %vm1129, %v6695, %v6697
      %v6700 = vsel %vm4446, %v6668, 0
      %v6703 = vsel %vm4446, %v6670, 0
      %v6706 = vsel %vm4446, %v6672, 0
      %v6709 = vsel %vm4446, %v6674, 0
      %v6712 = vsel %vm4446, %v6676, 0
      %v6715 = vsel %vm4446, %v6678, 0
      %v6718 = vsel %vm4446, %v6680, 0
      %v6721 = vsel %vm4446, %v6682, 0
      %v6724 = vsel %vm4446, %v6684, 0
      %v6727 = vsel %vm4446, %v6686, 0
      %v6730 = vsel %vm4446, %v6688, 0
      %v6733 = vsel %vm4446, %v6690, 0
      %v6736 = vsel %vm4446, %v6692, 0
      %v6739 = vsel %vm4446, %v6694, 0
      %v6742 = vsel %vm4446, %v6696, 0
      %v6745 = vsel %vm4446, %v6698, 0
      %v6748 = vsel %vm4668, %v6648, 0
      %6750 = vmatprep.subr.bf16.mxu0 0
      %6751 = vmatpush1.bf16.msra.mxu0 %v6748
      %6752 = vmatprep.subr.bf16.mxu0 0
      %6753 = vmatpush1.bf16.msra.mxu0 0
      %6754 = vmatprep.subr.bf16.mxu0 0
      %6755 = vmatpush1.bf16.msra.mxu0 0
      %6756 = vmatprep.subr.bf16.mxu0 0
      %6757 = vmatpush1.bf16.msra.mxu0 0
      %6758 = vmatprep.subr.bf16.mxu0 0
      %6759 = vmatpush1.bf16.msra.mxu0 0
      %6760 = vmatprep.subr.bf16.mxu0 0
      %6761 = vmatpush1.bf16.msra.mxu0 0
      %6762 = vmatprep.subr.bf16.mxu0 0
      %6763 = vmatpush1.bf16.msra.mxu0 0
      %6764 = vmatprep.subr.bf16.mxu0 0
      %6765 = vmatpush1.bf16.msra.mxu0 0
      %6766 = vmatprep.subr.bf16.mxu0 0
      %6767 = vmatpush1.bf16.msra.mxu0 0
      %6768 = vmatprep.subr.bf16.mxu0 0
      %6769 = vmatpush1.bf16.msra.mxu0 0
      %6770 = vmatprep.subr.bf16.mxu0 0
      %6771 = vmatpush1.bf16.msra.mxu0 0
      %6772 = vmatprep.subr.bf16.mxu0 0
      %6773 = vmatpush1.bf16.msra.mxu0 0
      %6774 = vmatprep.subr.bf16.mxu0 0
      %6775 = vmatpush1.bf16.msra.mxu0 0
      %6776 = vmatprep.subr.bf16.mxu0 0
      %6777 = vmatpush1.bf16.msra.mxu0 0
      %6778 = vmatprep.subr.bf16.mxu0 0
      %6779 = vmatpush1.bf16.msra.mxu0 0
      %6780 = vmatprep.subr.bf16.mxu0 0
      %6781 = vmatpush1.bf16.msra.mxu0 0
      %6782 = vmatprep.mubr.bf16.mxu0 0
      %6783 = vmatmul.mubr.bf16.gmra.mrb[0].mxu0 %v6700
      %v6784 = vpop.f32.mrb[0].mxu0
      %v6785 = vadd.f32 0.0, %v6784
      %v6786 = vpop.f32.mrb[0].mxu0
      %v6787 = vpop.f32.mrb[0].mxu0
      %v6788 = vadd.f32 0.0, %v6787
      %v6789 = vpop.f32.mrb[0].mxu0
      %6790 = vmatprep.mubr.bf16.mxu0 0
      %6791 = vmatmul.mubr.bf16.gmra.mrb[0].mxu0 %v6703
      %v6792 = vpop.f32.mrb[0].mxu0
      %v6793 = vpop.f32.mrb[0].mxu0
      %v6794 = vpop.f32.mrb[0].mxu0
      %v6795 = vpop.f32.mrb[0].mxu0
      %6796 = vmatprep.mubr.bf16.mxu0 0
      %6797 = vmatmul.mubr.bf16.gmra.mrb[0].mxu0 %v6706
      %v6798 = vpop.f32.mrb[0].mxu0
      %v6799 = vadd.f32 0.0, %v6798
      %v6800 = vpop.f32.mrb[0].mxu0
      %v6801 = vpop.f32.mrb[0].mxu0
      %v6802 = vadd.f32 0.0, %v6801
      %v6803 = vpop.f32.mrb[0].mxu0
      %6804 = vmatprep.mubr.bf16.mxu0 0
      %6805 = vmatmul.mubr.bf16.gmra.mrb[0].mxu0 %v6709
      %v6806 = vpop.f32.mrb[0].mxu0
      %v6807 = vpop.f32.mrb[0].mxu0
      %v6808 = vpop.f32.mrb[0].mxu0
      %v6809 = vpop.f32.mrb[0].mxu0
      %6810 = vmatprep.mubr.bf16.mxu0 0
      %6811 = vmatmul.mubr.bf16.gmra.mrb[0].mxu0 %v6712
      %v6812 = vpop.f32.mrb[0].mxu0
      %v6813 = vadd.f32 0.0, %v6812
      %v6814 = vpop.f32.mrb[0].mxu0
      %v6815 = vpop.f32.mrb[0].mxu0
      %v6816 = vadd.f32 0.0, %v6815
      %v6817 = vpop.f32.mrb[0].mxu0
      %6818 = vmatprep.mubr.bf16.mxu0 0
      %6819 = vmatmul.mubr.bf16.gmra.mrb[0].mxu0 %v6715
      %v6820 = vpop.f32.mrb[0].mxu0
      %v6821 = vpop.f32.mrb[0].mxu0
      %v6822 = vpop.f32.mrb[0].mxu0
      %v6823 = vpop.f32.mrb[0].mxu0
      %6824 = vmatprep.mubr.bf16.mxu0 0
      %6825 = vmatmul.mubr.bf16.gmra.mrb[0].mxu0 %v6718
      %v6826 = vpop.f32.mrb[0].mxu0
      %v6827 = vadd.f32 0.0, %v6826
      %v6828 = vpop.f32.mrb[0].mxu0
      %v6829 = vpop.f32.mrb[0].mxu0
      %v6830 = vadd.f32 0.0, %v6829
      %v6831 = vpop.f32.mrb[0].mxu0
      %6832 = vmatprep.mubr.bf16.mxu0 0
      %6833 = vmatmul.mubr.bf16.gmra.mrb[0].mxu0 %v6721
      %v6834 = vpop.f32.mrb[0].mxu0
      %v6835 = vpop.f32.mrb[0].mxu0
      %v6836 = vpop.f32.mrb[0].mxu0
      %v6837 = vpop.f32.mrb[0].mxu0
      %6838 = vmatprep.mubr.bf16.mxu0 0
      %6839 = vmatmul.mubr.bf16.gmra.mrb[0].mxu0 %v6724
      %v6840 = vpop.f32.mrb[0].mxu0
      %v6841 = vadd.f32 0.0, %v6840
      %v6842 = vpop.f32.mrb[0].mxu0
      %v6843 = vpop.f32.mrb[0].mxu0
      %v6844 = vadd.f32 0.0, %v6843
      %v6845 = vpop.f32.mrb[0].mxu0
      %6846 = vmatprep.mubr.bf16.mxu0 0
      %6847 = vmatmul.mubr.bf16.gmra.mrb[0].mxu0 %v6727
      %v6848 = vpop.f32.mrb[0].mxu0
      %v6849 = vpop.f32.mrb[0].mxu0
      %v6850 = vpop.f32.mrb[0].mxu0
      %v6851 = vpop.f32.mrb[0].mxu0
      %6852 = vmatprep.mubr.bf16.mxu0 0
      %6853 = vmatmul.mubr.bf16.gmra.mrb[0].mxu0 %v6730
      %v6854 = vpop.f32.mrb[0].mxu0
      %v6855 = vadd.f32 0.0, %v6854
      %v6856 = vpop.f32.mrb[0].mxu0
      %v6857 = vpop.f32.mrb[0].mxu0
      %v6858 = vadd.f32 0.0, %v6857
      %v6859 = vpop.f32.mrb[0].mxu0
      %6860 = vmatprep.mubr.bf16.mxu0 0
      %6861 = vmatmul.mubr.bf16.gmra.mrb[0].mxu0 %v6733
      %v6862 = vpop.f32.mrb[0].mxu0
      %v6863 = vpop.f32.mrb[0].mxu0
      %v6864 = vpop.f32.mrb[0].mxu0
      %v6865 = vpop.f32.mrb[0].mxu0
      %6866 = vmatprep.mubr.bf16.mxu0 0
      %6867 = vmatmul.mubr.bf16.gmra.mrb[0].mxu0 %v6736
      %v6868 = vpop.f32.mrb[0].mxu0
      %v6869 = vadd.f32 0.0, %v6868
      %v6870 = vpop.f32.mrb[0].mxu0
      %v6871 = vpop.f32.mrb[0].mxu0
      %v6872 = vadd.f32 0.0, %v6871
      %v6873 = vpop.f32.mrb[0].mxu0
      %6874 = vmatprep.mubr.bf16.mxu0 0
      %6875 = vmatmul.mubr.bf16.gmra.mrb[0].mxu0 %v6739
      %v6876 = vpop.f32.mrb[0].mxu0
      %v6877 = vpop.f32.mrb[0].mxu0
      %v6878 = vpop.f32.mrb[0].mxu0
      %v6879 = vpop.f32.mrb[0].mxu0
      %6880 = vmatprep.mubr.bf16.mxu0 0
      %6881 = vmatmul.mubr.bf16.gmra.mrb[0].mxu0 %v6742
      %v6882 = vpop.f32.mrb[0].mxu0
      %v6883 = vadd.f32 0.0, %v6882
      %v6884 = vpop.f32.mrb[0].mxu0
      %v6885 = vpop.f32.mrb[0].mxu0
      %v6886 = vadd.f32 0.0, %v6885
      %v6887 = vpop.f32.mrb[0].mxu0
      %6888 = vmatprep.mubr.bf16.mxu0 0
      %6889 = vmatmul.mubr.bf16.gmra.mrb[0].mxu0 %v6745
      %v6890 = vpop.f32.mrb[0].mxu0
      %v6891 = vpop.f32.mrb[0].mxu0
      %v6892 = vpop.f32.mrb[0].mxu0
      %v6893 = vpop.f32.mrb[0].mxu0
      %6894 = vdwg.mxu0
      %v6895 = vadd.f32 %v6631, %v6785
      %v6896 = vadd.f32 %v6632, %v6788
      %v6897 = vadd.f32 %v6633, %v6799
      %v6898 = vadd.f32 %v6634, %v6802
      %v6899 = vadd.f32 %v6635, %v6813
      %v6900 = vadd.f32 %v6636, %v6816
      %v6901 = vadd.f32 %v6637, %v6827
      %v6902 = vadd.f32 %v6638, %v6830
      %v6903 = vadd.f32 %v6639, %v6841
      %v6904 = vadd.f32 %v6640, %v6844
      %v6905 = vadd.f32 %v6641, %v6855
      %v6906 = vadd.f32 %v6642, %v6858
      %v6907 = vadd.f32 %v6643, %v6869
      %v6908 = vadd.f32 %v6644, %v6872
      %v6909 = vadd.f32 %v6645, %v6883
      %v6910 = vadd.f32 %v6646, %v6886
      %v6911 = vld [vmem:[%s5] sm:$0x1]
      %v6913 = vlaneseq
      %v6914 = vshrl.u32 %v6913, 7
      %v6915 = vsub.s32 0, %v6914
      %v6916 = vrot.slane %v6911, %v6915
      %v6918 = vadd.f32 %v6895, %v6916
      %v6919 = vadd.f32 %v6896, %v6916
      %v6920 = vadd.f32 %v6897, %v6916
      %v6921 = vadd.f32 %v6898, %v6916
      %v6922 = vadd.f32 %v6899, %v6916
      %v6923 = vadd.f32 %v6900, %v6916
      %v6924 = vadd.f32 %v6901, %v6916
      %v6925 = vadd.f32 %v6902, %v6916
      %v6926 = vadd.f32 %v6903, %v6916
      %v6927 = vadd.f32 %v6904, %v6916
      %v6928 = vadd.f32 %v6905, %v6916
      %v6929 = vadd.f32 %v6906, %v6916
      %v6930 = vadd.f32 %v6907, %v6916
      %v6931 = vadd.f32 %v6908, %v6916
      %v6932 = vadd.f32 %v6909, %v6916
      %v6933 = vadd.f32 %v6910, %v6916
      %v6934 = vsub.f32 0.0, %v6918
      %v6935 = vsub.f32 0.0, %v6919
      %v6936 = vsub.f32 0.0, %v6920
      %v6937 = vsub.f32 0.0, %v6921
      %v6938 = vsub.f32 0.0, %v6922
      %v6939 = vsub.f32 0.0, %v6923
      %v6940 = vsub.f32 0.0, %v6924
      %v6941 = vsub.f32 0.0, %v6925
      %v6942 = vsub.f32 0.0, %v6926
      %v6943 = vsub.f32 0.0, %v6927
      %v6944 = vsub.f32 0.0, %v6928
      %v6945 = vsub.f32 0.0, %v6929
      %v6946 = vsub.f32 0.0, %v6930
      %v6947 = vsub.f32 0.0, %v6931
      %v6948 = vsub.f32 0.0, %v6932
      %v6949 = vsub.f32 0.0, %v6933
      %v6950 = vmul.f32 %v6934, 1.442695
      %v6951 = vpow.pop %v6950
      %v6952 = vmul.f32 %v6935, 1.442695
      %v6953 = vpow.pop %v6952
      %v6954 = vmul.f32 %v6936, 1.442695
      %v6955 = vpow.pop %v6954
      %v6956 = vmul.f32 %v6937, 1.442695
      %v6957 = vpow.pop %v6956
      %v6958 = vmul.f32 %v6938, 1.442695
      %v6959 = vpow.pop %v6958
      %v6960 = vmul.f32 %v6939, 1.442695
      %v6961 = vpow.pop %v6960
      %v6962 = vmul.f32 %v6940, 1.442695
      %v6963 = vpow.pop %v6962
      %v6964 = vmul.f32 %v6941, 1.442695
      %v6965 = vpow.pop %v6964
      %v6966 = vmul.f32 %v6942, 1.442695
      %v6967 = vpow.pop %v6966
      %v6968 = vmul.f32 %v6943, 1.442695
      %v6969 = vpow.pop %v6968
      %v6970 = vmul.f32 %v6944, 1.442695
      %v6971 = vpow.pop %v6970
      %v6972 = vmul.f32 %v6945, 1.442695
      %v6973 = vpow.pop %v6972
      %v6974 = vmul.f32 %v6946, 1.442695
      %v6975 = vpow.pop %v6974
      %v6976 = vmul.f32 %v6947, 1.442695
      %v6977 = vpow.pop %v6976
      %v6978 = vmul.f32 %v6948, 1.442695
      %v6979 = vpow.pop %v6978
      %v6980 = vmul.f32 %v6949, 1.442695
      %v6981 = vpow.pop %v6980
      %v6982 = vadd.f32 %v6951, 1.0
      %v6983 = vadd.f32 %v6953, 1.0
      %v6984 = vadd.f32 %v6955, 1.0
      %v6985 = vadd.f32 %v6957, 1.0
      %v6986 = vadd.f32 %v6959, 1.0
      %v6987 = vadd.f32 %v6961, 1.0
      %v6988 = vadd.f32 %v6963, 1.0
      %v6989 = vadd.f32 %v6965, 1.0
      %v6990 = vadd.f32 %v6967, 1.0
      %v6991 = vadd.f32 %v6969, 1.0
      %v6992 = vadd.f32 %v6971, 1.0
      %v6993 = vadd.f32 %v6973, 1.0
      %v6994 = vadd.f32 %v6975, 1.0
      %v6995 = vadd.f32 %v6977, 1.0
      %v6996 = vadd.f32 %v6979, 1.0
      %v6997 = vadd.f32 %v6981, 1.0
      %v6998 = vrcp.pop %v6982
      %v6999 = vrcp.pop %v6983
      %v7000 = vrcp.pop %v6984
      %v7001 = vrcp.pop %v6985
      %v7002 = vrcp.pop %v6986
      %v7003 = vrcp.pop %v6987
      %v7004 = vrcp.pop %v6988
      %v7005 = vrcp.pop %v6989
      %v7006 = vrcp.pop %v6990
      %v7007 = vrcp.pop %v6991
      %v7008 = vrcp.pop %v6992
      %v7009 = vrcp.pop %v6993
      %v7010 = vrcp.pop %v6994
      %v7011 = vrcp.pop %v6995
      %v7012 = vrcp.pop %v6996
      %v7013 = vrcp.pop %v6997
      %v7014 = vmul.f32 %v6918, %v6998
      %v7015 = vmul.f32 %v6919, %v6999
      %v7016 = vmul.f32 %v6920, %v7000
      %v7017 = vmul.f32 %v6921, %v7001
      %v7018 = vmul.f32 %v6922, %v7002
      %v7019 = vmul.f32 %v6923, %v7003
      %v7020 = vmul.f32 %v6924, %v7004
      %v7021 = vmul.f32 %v6925, %v7005
      %v7022 = vmul.f32 %v6926, %v7006
      %v7023 = vmul.f32 %v6927, %v7007
      %v7024 = vmul.f32 %v6928, %v7008
      %v7025 = vmul.f32 %v6929, %v7009
      %v7026 = vmul.f32 %v6930, %v7010
      %v7027 = vmul.f32 %v6931, %v7011
      %v7028 = vmul.f32 %v6932, %v7012
      %v7029 = vmul.f32 %v6933, %v7013
      %v7030 = vld [vmem:[%s303] sm:$0xff]
      %v7031 = vld [vmem:[%s303 + $0x8] sm:$0xff]
      %v7032 = vld [vmem:[%s303 + $0x10] sm:$0xff]
      %v7033 = vld [vmem:[%s303 + $0x18] sm:$0xff]
      %v7034 = vld [vmem:[%s303 + $0x20] sm:$0xff]
      %v7035 = vld [vmem:[%s303 + $0x28] sm:$0xff]
      %v7036 = vld [vmem:[%s303 + $0x30] sm:$0xff]
      %v7037 = vld [vmem:[%s303 + $0x38] sm:$0xff]
      %v7038 = vld [vmem:[%s303 + $0x40] sm:$0xff]
      %v7039 = vld [vmem:[%s303 + $0x48] sm:$0xff]
      %v7040 = vld [vmem:[%s303 + $0x50] sm:$0xff]
      %v7041 = vld [vmem:[%s303 + $0x58] sm:$0xff]
      %v7042 = vld [vmem:[%s303 + $0x60] sm:$0xff]
      %v7043 = vld [vmem:[%s303 + $0x68] sm:$0xff]
      %v7044 = vld [vmem:[%s303 + $0x70] sm:$0xff]
      %v7045 = vld [vmem:[%s303 + $0x78] sm:$0xff]
      %v7046 = vadd.f32 %v7030, %v7014
      %v7047 = vadd.f32 %v7031, %v7015
      %v7048 = vadd.f32 %v7032, %v7016
      %v7049 = vadd.f32 %v7033, %v7017
      %v7050 = vadd.f32 %v7034, %v7018
      %v7051 = vadd.f32 %v7035, %v7019
      %v7052 = vadd.f32 %v7036, %v7020
      %v7053 = vadd.f32 %v7037, %v7021
      %v7054 = vadd.f32 %v7038, %v7022
      %v7055 = vadd.f32 %v7039, %v7023
      %v7056 = vadd.f32 %v7040, %v7024
      %v7057 = vadd.f32 %v7041, %v7025
      %v7058 = vadd.f32 %v7042, %v7026
      %v7059 = vadd.f32 %v7043, %v7027
      %v7060 = vadd.f32 %v7044, %v7028
      %v7061 = vadd.f32 %v7045, %v7029
      %7062 = vst.msk [vmem:[%s314] sm:$0xff] %vm633, %v7046
      %7063 = vst.msk [vmem:[%s314 + $0x8] sm:$0xff] %vm633, %v7047
      %7064 = vst.msk [vmem:[%s314 + $0x10] sm:$0xff] %vm633, %v7048
      %7065 = vst.msk [vmem:[%s314 + $0x18] sm:$0xff] %vm633, %v7049
      %7066 = vst.msk [vmem:[%s314 + $0x20] sm:$0xff] %vm633, %v7050
      %7067 = vst.msk [vmem:[%s314 + $0x28] sm:$0xff] %vm633, %v7051
      %7068 = vst.msk [vmem:[%s314 + $0x30] sm:$0xff] %vm633, %v7052
      %7069 = vst.msk [vmem:[%s314 + $0x38] sm:$0xff] %vm633, %v7053
      %7070 = vst.msk [vmem:[%s314 + $0x40] sm:$0xff] %vm633, %v7054
      %7071 = vst.msk [vmem:[%s314 + $0x48] sm:$0xff] %vm633, %v7055
      %7072 = vst.msk [vmem:[%s314 + $0x50] sm:$0xff] %vm633, %v7056
      %7073 = vst.msk [vmem:[%s314 + $0x58] sm:$0xff] %vm633, %v7057
      %7074 = vst.msk [vmem:[%s314 + $0x60] sm:$0xff] %vm633, %v7058
      %7075 = vst.msk [vmem:[%s314 + $0x68] sm:$0xff] %vm633, %v7059
      %7076 = vst.msk [vmem:[%s314 + $0x70] sm:$0xff] %vm633, %v7060
      %7077 = vst.msk [vmem:[%s314 + $0x78] sm:$0xff] %vm633, %v7061
      %s7078 = smul.u32 8, %s22
      %p7079 = scmp.lt.s32.totalorder %s21, 1
      %s7080 = scalar_select %p7079, %s21, 1
      %p7081 = scmp.lt.s32.totalorder %s7078, 15
      %s7082 = scalar_select %p7081, %s7078, 15
      %s7083 = smul.addr %s7082, 2
      %s7084 = smul.addr %s7080, 32
      %s7085 = sadd.s32 %s7083, %s7084
      %s7086 = smul.addr %s7085, 8
      %s7087 = scalar_lea.vmem %s6, %s7086
      // Predicated region
      $region45: #{tpu_custom_call.1} parent=43 // pred_check
        %p7088 = pneg %p187
      $region46: #{tpu_custom_call.1} parent=43 // pred_check_branch
        %7090 = sbr.rel (%p7088) target = $region48
      $region47: #{tpu_custom_call.1} parent=43 // pred_region
        %s7091 = smul.u32 8, %s22
      $region48: #{tpu_custom_call.1} parent=43 // pred_fallthru
        _
    $region44: #{tpu_custom_call.1} parent=5 // pred_fallthru
      _
    %p7092 = scmp.le.s32.totalorder 2, %s12
    // Predicated region
    $region49: #{tpu_custom_call.1} parent=5 // pred_check
      %p7093 = pneg %p7092
    $region50: #{tpu_custom_call.1} parent=5 // pred_check_branch
      %7095 = sbr.rel (%p7093) target = $region52
    $region51: #{tpu_custom_call.1} parent=5 // pred_region
      %s7096 = ssub.s32 %s12, 2
      // Predicated region
      $region53: #{tpu_custom_call.1} parent=51 // pred_check
        %p7097 = pneg %p193
      $region54: #{tpu_custom_call.1} parent=51 // pred_check_branch
        %7099 = sbr.rel (%p7097) target = $region56
      $region55: #{tpu_custom_call.1} parent=51 // pred_region
        %s7100 = smul.u32 8, %s24
        %p7101 = scmp.lt.s32.totalorder %s23, 1
        %s7102 = scalar_select %p7101, %s23, 1
        %p7103 = scmp.lt.s32.totalorder %s7100, 15
        %s7104 = scalar_select %p7103, %s7100, 15
        %s7105 = smul.addr %s7104, 2
        %s7106 = smul.addr %s7102, 32
        %s7107 = sadd.s32 %s7105, %s7106
        %s7108 = smul.addr %s7107, 8
        %s7109 = scalar_lea.vmem %s6, %s7108
      $region56: #{tpu_custom_call.1} parent=51 // pred_fallthru
        _
    $region52: #{tpu_custom_call.1} parent=5 // pred_fallthru
      _
  $region6: #{tpu_custom_call.1} parent=0 // loop_footer
    %s16 = sadd.s32 1, %s12
  $region7: #{tpu_custom_call.1} parent=0 // loop_footer_branch
    %11 = sbr.rel target = $region3
  $region8: #{tpu_custom_call.1} parent=0 // loop_exit
    _

</llo_original>
